<compile_context>
chip_gen: v6e
topology: v6e:2x2x1
jax: 0.10.0
libtpu: 0.0.40
codegen_flags: <defaults>
</compile_context>

<pallas_src>
import math

import jax
import jax.numpy as jnp
from jax.experimental import pallas as pl
from jax.experimental.pallas import tpu as pltpu

_EPS = 1e-5  # torch.nn.LayerNorm default eps


# ----------------------------- in-kernel helpers -----------------------------
def _layer_norm(x, g, b):
    mu = jnp.mean(x, axis=-1, keepdims=True)
    var = jnp.mean((x - mu) ** 2, axis=-1, keepdims=True)
    return (x - mu) * jax.lax.rsqrt(var + _EPS) * g + b


def _softmax_last(x):
    m = jnp.max(x, axis=-1, keepdims=True)
    e = jnp.exp(x - m)
    s = jnp.sum(e, axis=-1, keepdims=True)
    # reciprocal on the EUP slot instead of a vector divide (review opt 6)
    return e * pl.reciprocal(s, approx=True)


def _matmul(a, b):
    return jnp.dot(a, b, preferred_element_type=jnp.float32)


def _matmul_nt(a, b):
    # 2D: a @ b.T without materializing the transpose.
    return jax.lax.dot_general(
        a, b, (((1,), (1,)), ((), ())), preferred_element_type=jnp.float32)


def _bmm_nt(a, b):
    # batched: (B,N,D),(B,M,D) -> (B,N,M)
    return jnp.einsum("bnd,bmd->bnm", a, b, preferred_element_type=jnp.float32)


# --------------------------------- the kernel ---------------------------------
def _graph_learn_kernel(
        fusion_ref, ns_ref, ndy_ref,
        asg_ref, asb_ref, sig_ref, sib_ref,
        bn_g_ref, bn_b_ref, w_ref,
        wq_ref, bq_ref, wk_ref, bk_ref, bsum_ref,
        skip_g_ref, skip_b_ref,
        attn_g_ref, attn_b_ref,
        lin_g_ref, lin_b_ref,
        attn_lin_ref, attn_lin1_ref,
        an1_g_ref, an1_b_ref,
        an2_g_ref, an2_b_ref,
        adj_dyn_ref, adj_static_ref):
    bt, N, d = fusion_ref.shape
    D = wq_ref.shape[1]

    # ---- static graphs (batch independent). Recomputed per grid step so the
    # batch axis stays safely "parallel"; the extra cost is two tiny K=d
    # matmuls per step (one step at the default batch_tile=B). ----
    ns = ns_ref[...]
    adj_s = _softmax_last(jnp.maximum(
        _layer_norm(_matmul_nt(ns, ns), asg_ref[...], asb_ref[...]), 0.0))
    adj_static_ref[...] = jnp.broadcast_to(adj_s[None], (bt, N, N))

    ndy = ndy_ref[...]
    static_inf = _layer_norm(_matmul_nt(ndy, ndy), sig_ref[...], sib_ref[...])

    # ---- dynamic graph ----
    # nodevec_fusion = self.bn(nodevec_fusion)
    x = _layer_norm(fusion_ref[...], bn_g_ref[...], bn_b_ref[...])       # (bt,N,d)

    # nodevec1_1 = einsum('bnd,nl->bnl', x, w) + x  == rowsum_d(x) * w + x
    rs = jnp.sum(x, axis=-1, keepdims=True)                              # (bt,N,1)
    nv11 = rs * w_ref[...] + x                                           # (bt,N,d)
    skip = _layer_norm(_bmm_nt(nv11, nv11), skip_g_ref[...], skip_b_ref[...])

    # query/key 1x1 convs, batch-stacked so M = bt*N fills the MXU.
    # wq/bq were pre-scaled per head in the wrapper so a SINGLE q @ k^T matmul
    # yields sum_h[ mlp(attention) + attention ]_h directly (head-mix fold).
    x2 = x.reshape(bt * N, d)
    q = _matmul(x2, wq_ref[...]) + bq_ref[...]                           # (bt*N,D)
    k = _matmul(x2, wk_ref[...]) + bk_ref[...]                           # (bt*N,D)
    summed = _bmm_nt(q.reshape(bt, N, D), k.reshape(bt, N, D)) + bsum_ref[0, 0]

    # adj_bf = attn_norm(sum_h attention) + skip_atten
    adj_bf = _layer_norm(summed, attn_g_ref[...], attn_b_ref[...]) + skip

    # adj_af = relu(linear_norm(adj_bf) @ attn_linear) @ attn_linear_1
    # (batch-stacked: (bt*N, N) @ (N, N) -> M = bt*N)
    t = _layer_norm(adj_bf, lin_g_ref[...], lin_b_ref[...]).reshape(bt * N, N)
    af = jnp.maximum(_matmul(t, attn_lin_ref[...]), 0.0)
    adj_af = _matmul(af, attn_lin1_ref[...]).reshape(bt, N, N)

    # dropout = identity in eval mode
    dy_adj_inf = _layer_norm(adj_af + adj_bf, an1_g_ref[...], an1_b_ref[...])
    dy_adj = _layer_norm(dy_adj_inf + static_inf[None],
                         an2_g_ref[...], an2_b_ref[...])
    adj_dyn_ref[...] = _softmax_last(jnp.maximum(dy_adj, 0.0))


# ---------------------------------- wrapper ----------------------------------
def graph_learn_forward(params, nodevec_fusion, nodevec_s, node_input, nodevec_dy,
                        batch_tile=None):
    del node_input  # only consumed by the training-only graph loss (eval mode)
    B, N, d = nodevec_fusion.shape
    H, hd = params["heads"], params["head_dim"]
    D = H * hd
    bt = B if batch_tile is None else min(batch_tile, B)
    grid = (pl.cdiv(B, bt),)

    # Head-mix fold (review opt 1):
    #   summed = sum_hp (1 + sum_h mlp_w[h,hp]) / sqrt(hd) * (q_hp @ k_hp^T)
    #            + sum_h mlp_b[h]
    # -> pre-scale the query projection's output columns per head.
    coef = (1.0 + jnp.sum(params["mlp_w"], axis=0)) / math.sqrt(hd)      # (H,)
    coef_d = jnp.repeat(coef, hd)[None, :]                               # (1,D)
    wq_t_s = params["wq_t"] * coef_d                                     # (d,D)
    bq_s = params["bq"] * coef_d                                         # (1,D)
    bias_sum = jnp.sum(params["mlp_b"]).reshape(1, 1).astype(jnp.float32)

    def full(shape):
        return pl.BlockSpec(shape, lambda b, _n=len(shape): (0,) * _n)

    def batched(shape):
        return pl.BlockSpec((bt,) + shape,
                            lambda b, _n=len(shape): (b,) + (0,) * _n)

    in_specs = [
        batched((N, d)),                                   # nodevec_fusion
        full((N, d)), full((N, d)),                        # nodevec_s, nodevec_dy
        full((1, N)), full((1, N)),                        # attn_static LN
        full((1, N)), full((1, N)),                        # static_inf LN
        full((1, d)), full((1, d)),                        # bn LN
        full((N, d)),                                      # w
        full((d, D)), full((1, D)),                        # scaled query W^T, bias
        full((d, D)), full((1, D)),                        # key W^T, bias
        pl.BlockSpec(memory_space=pltpu.MemorySpace.SMEM), # bias_sum scalar (1,1)
        full((1, N)), full((1, N)),                        # skip_norm
        full((1, N)), full((1, N)),                        # attn_norm
        full((1, N)), full((1, N)),                        # linear_norm
        full((N, N)), full((N, N)),                        # attn_linear, attn_linear_1
        full((1, N)), full((1, N)),                        # attn_norm_1
        full((1, N)), full((1, N)),                        # attn_norm_2
    ]
    out_specs = (batched((N, N)), batched((N, N)))
    out_shape = (jax.ShapeDtypeStruct((B, N, N), jnp.float32),
                 jax.ShapeDtypeStruct((B, N, N), jnp.float32))

    adj_dynamic, adj_static = pl.pallas_call(
        _graph_learn_kernel,
        grid=grid,
        in_specs=in_specs,
        out_specs=out_specs,
        out_shape=out_shape,
        compiler_params=pltpu.CompilerParams(
            dimension_semantics=("parallel",),
            vmem_limit_bytes=32 * 1024 * 1024),
    )(nodevec_fusion, nodevec_s, nodevec_dy,
      params["attn_static_g"], params["attn_static_b"],
      params["static_inf_g"], params["static_inf_b"],
      params["bn_g"], params["bn_b"], params["w"],
      wq_t_s, bq_s, params["wk_t"], params["bk"], bias_sum,
      params["skip_g"], params["skip_b"],
      params["attn_g"], params["attn_b"],
      params["lin_g"], params["lin_b"],
      params["attn_linear"], params["attn_linear_1"],
      params["an1_g"], params["an1_b"],
      params["an2_g"], params["an2_b"])

    gl_loss = None  # TODO(synk): graph_loss_orginal is training-only; eval returns None.
    return adj_dynamic, adj_static, nodevec_s, gl_loss


# ------------------------------ parameter init ------------------------------
def init_params(key, node_dim, heads, head_dim, nodes):
    D = heads * head_dim
    ks = jax.random.split(key, 9)

    def xavier(k, shape, gain=1.0):
        fan_out, fan_in = shape[0], shape[1]
        lim = gain * math.sqrt(6.0 / (fan_in + fan_out))
        return jax.random.uniform(k, shape, jnp.float32, -lim, lim)

    ones = lambda n: jnp.ones((1, n), jnp.float32)
    zeros = lambda n: jnp.zeros((1, n), jnp.float32)

    wq = xavier(ks[0], (D, node_dim))   # query 1x1 conv weight (out, in)
    wk = xavier(ks[1], (D, node_dim))   # key   1x1 conv weight (out, in)
    # NOTE: the `value` fc_layer exists in __init__ but is unused in forward.

    return dict(
        heads=heads, head_dim=head_dim,
        bn_g=ones(node_dim), bn_b=zeros(node_dim),
        w=xavier(ks[2], (nodes, node_dim), gain=1.414),
        wq_t=wq.T, bq=0.1 * jax.random.normal(ks[6], (1, D), jnp.float32),
        wk_t=wk.T, bk=0.1 * jax.random.normal(ks[7], (1, D), jnp.float32),
        mlp_w=xavier(ks[3], (heads, heads)),
        mlp_b=0.1 * jax.random.normal(ks[8], (1, heads), jnp.float32),
        skip_g=ones(nodes), skip_b=zeros(nodes),
        attn_g=ones(nodes), attn_b=zeros(nodes),
        lin_g=ones(nodes), lin_b=zeros(nodes),
        attn_linear=xavier(ks[4], (nodes, nodes), gain=1.414),
        attn_linear_1=xavier(ks[5], (nodes, nodes), gain=1.414),
        an1_g=ones(nodes), an1_b=zeros(nodes),
        an2_g=ones(nodes), an2_b=zeros(nodes),
        attn_static_g=ones(nodes), attn_static_b=zeros(nodes),
        static_inf_g=ones(nodes), static_inf_b=zeros(nodes),
    )


# -------------------------- pure-JAX eval reference --------------------------
def _reference_forward(params, nodevec_fusion, nodevec_s, nodevec_dy):
    """Unfused pure-JAX reference, faithful to the PyTorch eval-mode forward."""
    hp = dict(precision=jax.lax.Precision.HIGHEST)

    def ln(x, g, b):
        mu = jnp.mean(x, axis=-1, keepdims=True)
        var = jnp.mean((x - mu) ** 2, axis=-1, keepdims=True)
        return (x - mu) / jnp.sqrt(var + _EPS) * g + b

    def softmax(x):
        m = jnp.max(x, axis=-1, keepdims=True)
        e = jnp.exp(x - m)
        return e / jnp.sum(e, axis=-1, keepdims=True)

    B, N, _ = nodevec_fusion.shape
    H, hd = params["heads"], params["head_dim"]

    adj_static = softmax(jax.nn.relu(ln(
        jnp.matmul(nodevec_s, nodevec_s.T, **hp),
        params["attn_static_g"], params["attn_static_b"])))
    x = ln(nodevec_fusion, params["bn_g"], params["bn_b"])
    static_inf = ln(jnp.matmul(nodevec_dy, nodevec_dy.T, **hp),
                    params["static_inf_g"], params["static_inf_b"])
    nv11 = jnp.einsum("bnd,nl->bnl", x, params["w"], **hp) + x
    skip = ln(jnp.einsum("bnd,bmd->bnm", nv11, nv11, **hp),
              params["skip_g"], params["skip_b"])
    q = jnp.einsum("bnd,de->bne", x, params["wq_t"], **hp) + params["bq"]
    k = jnp.einsum("bnd,de->bne", x, params["wk_t"], **hp) + params["bk"]
    q = q.reshape(B, N, H, hd).transpose(0, 2, 1, 3)      # (B,H,N,hd)
    k = k.reshape(B, N, H, hd).transpose(0, 2, 1, 3)
    att = jnp.einsum("bhnd,bhmd->bhnm", q, k, **hp) / math.sqrt(hd)
    mixed = (jnp.einsum("ij,bjnm->binm", params["mlp_w"], att, **hp)
             + params["mlp_b"][0][None, :, None, None])
    summed = jnp.sum(mixed + att, axis=1)
    adj_bf = ln(summed, params["attn_g"], params["attn_b"]) + skip
    t = ln(adj_bf, params["lin_g"], params["lin_b"])
    adj_af = jax.nn.relu(jnp.einsum("bnm,ml->bnl", t, params["attn_linear"], **hp))
    adj_af = jnp.einsum("bnm,ml->bnl", adj_af, params["attn_linear_1"], **hp)
    dy_adj_inf = ln(adj_af + adj_bf, params["an1_g"], params["an1_b"])
    dy_adj = ln(dy_adj_inf + static_inf[None], params["an2_g"], params["an2_b"])
    adj_dynamic = softmax(jax.nn.relu(dy_adj))
    return adj_dynamic, jnp.broadcast_to(adj_static[None], (B, N, N))


if __name__ == "__main__":
    B, N, d = 2, 128, 32          # batch, nodes, node_dim (nodes lane-aligned)
    heads, head_dim = 4, 8        # D = 32

    key = jax.random.PRNGKey(0)
    k1, k2, k3, k4, kp = jax.random.split(key, 5)
    nodevec_fusion = jax.random.normal(k1, (B, N, d), jnp.float32)
    nodevec_s = jax.random.normal(k2, (N, d), jnp.float32)
    nodevec_dy = jax.random.normal(k3, (N, d), jnp.float32)
    node_input = jax.random.normal(k4, (B, N, d), jnp.float32)  # unused in eval

    params = init_params(kp, d, heads, head_dim, N)

    adj_dynamic, adj_static, node_orginal, gl_loss = graph_learn_forward(
        params, nodevec_fusion, nodevec_s, node_input, nodevec_dy)
    jax.block_until_ready((adj_dynamic, adj_static, node_orginal))

    assert adj_dynamic.shape == (B, N, N)
    assert adj_static.shape == (B, N, N)
    assert node_orginal.shape == (N, d)
    assert gl_loss is None
    assert bool(jnp.all(jnp.isfinite(adj_dynamic)))
    # softmax rows must sum to ~1 (approx-reciprocal softmax -> loose tolerance)
    assert bool(jnp.allclose(jnp.sum(adj_dynamic, axis=-1), 1.0, atol=1e-2))
    assert bool(jnp.allclose(jnp.sum(adj_static, axis=-1), 1.0, atol=1e-2))

    # end-to-end check vs an unfused pure-JAX reference (also validates the
    # head-mix / query-scaling algebraic fold)
    ref_dyn, ref_static = _reference_forward(
        params, nodevec_fusion, nodevec_s, nodevec_dy)
    assert float(jnp.max(jnp.abs(adj_dynamic - ref_dyn))) < 3e-2
    assert float(jnp.max(jnp.abs(adj_static - ref_static))) < 3e-2

    print("KERNEL_OK")
</pallas_src>

<mosaic_0001>
module attributes {stable_mosaic.version = 11 : i64} {
  func.func @_graph_learn_kernel(%arg0: i32, %arg1: memref<2x128x32xf32, #tpu.memory_space<vmem>>, %arg2: memref<128x32xf32, #tpu.memory_space<vmem>>, %arg3: memref<128x32xf32, #tpu.memory_space<vmem>>, %arg4: memref<1x128xf32, #tpu.memory_space<vmem>>, %arg5: memref<1x128xf32, #tpu.memory_space<vmem>>, %arg6: memref<1x128xf32, #tpu.memory_space<vmem>>, %arg7: memref<1x128xf32, #tpu.memory_space<vmem>>, %arg8: memref<1x32xf32, #tpu.memory_space<vmem>>, %arg9: memref<1x32xf32, #tpu.memory_space<vmem>>, %arg10: memref<128x32xf32, #tpu.memory_space<vmem>>, %arg11: memref<32x32xf32, #tpu.memory_space<vmem>>, %arg12: memref<1x32xf32, #tpu.memory_space<vmem>>, %arg13: memref<32x32xf32, #tpu.memory_space<vmem>>, %arg14: memref<1x32xf32, #tpu.memory_space<vmem>>, %arg15: memref<1x1xf32, #tpu.memory_space<smem>>, %arg16: memref<1x128xf32, #tpu.memory_space<vmem>>, %arg17: memref<1x128xf32, #tpu.memory_space<vmem>>, %arg18: memref<1x128xf32, #tpu.memory_space<vmem>>, %arg19: memref<1x128xf32, #tpu.memory_space<vmem>>, %arg20: memref<1x128xf32, #tpu.memory_space<vmem>>, %arg21: memref<1x128xf32, #tpu.memory_space<vmem>>, %arg22: memref<128x128xf32, #tpu.memory_space<vmem>>, %arg23: memref<128x128xf32, #tpu.memory_space<vmem>>, %arg24: memref<1x128xf32, #tpu.memory_space<vmem>>, %arg25: memref<1x128xf32, #tpu.memory_space<vmem>>, %arg26: memref<1x128xf32, #tpu.memory_space<vmem>>, %arg27: memref<1x128xf32, #tpu.memory_space<vmem>>, %arg28: memref<2x128x128xf32, #tpu.memory_space<vmem>>, %arg29: memref<2x128x128xf32, #tpu.memory_space<vmem>>) attributes {dimension_semantics = [#tpu.dimension_semantics<parallel>], iteration_bounds = array<i64: 1>, scalar_prefetch = 0 : i64, scratch_operands = 0 : i64, tpu.core_type = #tpu.core_type<tc>, window_params = [{transform_indices = @transform_0, window_bounds = array<i64: 2, 128, 32>}, {pipeline_mode = #tpu.pipeline_mode<synchronous>, transform_indices = @transform_1, window_bounds = array<i64: 128, 32>}, {pipeline_mode = #tpu.pipeline_mode<synchronous>, transform_indices = @transform_2, window_bounds = array<i64: 128, 32>}, {pipeline_mode = #tpu.pipeline_mode<synchronous>, transform_indices = @transform_3, window_bounds = array<i64: 1, 128>}, {pipeline_mode = #tpu.pipeline_mode<synchronous>, transform_indices = @transform_4, window_bounds = array<i64: 1, 128>}, {pipeline_mode = #tpu.pipeline_mode<synchronous>, transform_indices = @transform_5, window_bounds = array<i64: 1, 128>}, {pipeline_mode = #tpu.pipeline_mode<synchronous>, transform_indices = @transform_6, window_bounds = array<i64: 1, 128>}, {pipeline_mode = #tpu.pipeline_mode<synchronous>, transform_indices = @transform_7, window_bounds = array<i64: 1, 32>}, {pipeline_mode = #tpu.pipeline_mode<synchronous>, transform_indices = @transform_8, window_bounds = array<i64: 1, 32>}, {pipeline_mode = #tpu.pipeline_mode<synchronous>, transform_indices = @transform_9, window_bounds = array<i64: 128, 32>}, {pipeline_mode = #tpu.pipeline_mode<synchronous>, transform_indices = @transform_10, window_bounds = array<i64: 32, 32>}, {pipeline_mode = #tpu.pipeline_mode<synchronous>, transform_indices = @transform_11, window_bounds = array<i64: 1, 32>}, {pipeline_mode = #tpu.pipeline_mode<synchronous>, transform_indices = @transform_12, window_bounds = array<i64: 32, 32>}, {pipeline_mode = #tpu.pipeline_mode<synchronous>, transform_indices = @transform_13, window_bounds = array<i64: 1, 32>}, {transform_indices = @transform_14, window_bounds = array<i64: 1, 1>}, {pipeline_mode = #tpu.pipeline_mode<synchronous>, transform_indices = @transform_15, window_bounds = array<i64: 1, 128>}, {pipeline_mode = #tpu.pipeline_mode<synchronous>, transform_indices = @transform_16, window_bounds = array<i64: 1, 128>}, {pipeline_mode = #tpu.pipeline_mode<synchronous>, transform_indices = @transform_17, window_bounds = array<i64: 1, 128>}, {pipeline_mode = #tpu.pipeline_mode<synchronous>, transform_indices = @transform_18, window_bounds = array<i64: 1, 128>}, {pipeline_mode = #tpu.pipeline_mode<synchronous>, transform_indices = @transform_19, window_bounds = array<i64: 1, 128>}, {pipeline_mode = #tpu.pipeline_mode<synchronous>, transform_indices = @transform_20, window_bounds = array<i64: 1, 128>}, {pipeline_mode = #tpu.pipeline_mode<synchronous>, transform_indices = @transform_21, window_bounds = array<i64: 128, 128>}, {pipeline_mode = #tpu.pipeline_mode<synchronous>, transform_indices = @transform_22, window_bounds = array<i64: 128, 128>}, {pipeline_mode = #tpu.pipeline_mode<synchronous>, transform_indices = @transform_23, window_bounds = array<i64: 1, 128>}, {pipeline_mode = #tpu.pipeline_mode<synchronous>, transform_indices = @transform_24, window_bounds = array<i64: 1, 128>}, {pipeline_mode = #tpu.pipeline_mode<synchronous>, transform_indices = @transform_25, window_bounds = array<i64: 1, 128>}, {pipeline_mode = #tpu.pipeline_mode<synchronous>, transform_indices = @transform_26, window_bounds = array<i64: 1, 128>}, {transform_indices = @transform_27, window_bounds = array<i64: 2, 128, 128>}, {transform_indices = @transform_28, window_bounds = array<i64: 2, 128, 128>}]} {
    %c0 = arith.constant 0 : index
    %c0_0 = arith.constant 0 : index
    %0 = vector.load %arg2[%c0, %c0_0] : memref<128x32xf32, #tpu.memory_space<vmem>>, vector<128x32xf32>
    %cst = arith.constant dense<0.000000e+00> : vector<128x128xf32>
    %1 = tpu.matmul %0, %0, %cst {dimension_numbers = #tpu.dot_dimension_numbers<[1], [1], [0], [0], [0, 0, 1, 0], [], []>} : vector<128x32xf32>, vector<128x32xf32>, vector<128x128xf32> -> vector<128x128xf32>
    %c0_1 = arith.constant 0 : index
    %c0_2 = arith.constant 0 : index
    %2 = vector.load %arg4[%c0_1, %c0_2] : memref<1x128xf32, #tpu.memory_space<vmem>>, vector<1x128xf32>
    %c0_3 = arith.constant 0 : index
    %c0_4 = arith.constant 0 : index
    %3 = vector.load %arg5[%c0_3, %c0_4] : memref<1x128xf32, #tpu.memory_space<vmem>>, vector<1x128xf32>
    %cst_5 = arith.constant dense<0.000000e+00> : vector<128xf32>
    %4 = vector.multi_reduction <add>, %1, %cst_5 [1] : vector<128x128xf32> to vector<128xf32>
    %5 = vector.shape_cast %4 : vector<128xf32> to vector<128x1xf32>
    %cst_6 = arith.constant 1.280000e+02 : f32
    %6 = vector.broadcast %cst_6 : f32 to vector<128x1xf32>
    %7 = arith.divf %5, %6 : vector<128x1xf32>
    %8 = vector.broadcast %7 : vector<128x1xf32> to vector<128x128xf32>
    %9 = arith.subf %1, %8 : vector<128x128xf32>
    %10 = arith.mulf %9, %9 : vector<128x128xf32>
    %cst_7 = arith.constant dense<0.000000e+00> : vector<128xf32>
    %11 = vector.multi_reduction <add>, %10, %cst_7 [1] : vector<128x128xf32> to vector<128xf32>
    %12 = vector.shape_cast %11 : vector<128xf32> to vector<128x1xf32>
    %cst_8 = arith.constant 1.280000e+02 : f32
    %13 = vector.broadcast %cst_8 : f32 to vector<128x1xf32>
    %14 = arith.divf %12, %13 : vector<128x1xf32>
    %15 = vector.broadcast %7 : vector<128x1xf32> to vector<128x128xf32>
    %16 = arith.subf %1, %15 : vector<128x128xf32>
    %cst_9 = arith.constant 9.99999974E-6 : f32
    %17 = vector.broadcast %cst_9 : f32 to vector<128x1xf32>
    %18 = arith.addf %14, %17 : vector<128x1xf32>
    %19 = math.rsqrt %18 : vector<128x1xf32>
    %20 = vector.broadcast %19 : vector<128x1xf32> to vector<128x128xf32>
    %21 = arith.mulf %16, %20 : vector<128x128xf32>
    %22 = vector.broadcast %2 : vector<1x128xf32> to vector<128x128xf32>
    %23 = arith.mulf %21, %22 : vector<128x128xf32>
    %24 = vector.broadcast %3 : vector<1x128xf32> to vector<128x128xf32>
    %25 = arith.addf %23, %24 : vector<128x128xf32>
    %cst_10 = arith.constant 0.000000e+00 : f32
    %26 = vector.broadcast %cst_10 : f32 to vector<128x128xf32>
    %27 = arith.maximumf %25, %26 : vector<128x128xf32>
    %cst_11 = arith.constant dense<0xFF800000> : vector<128xf32>
    %28 = vector.multi_reduction <maximumf>, %27, %cst_11 [1] : vector<128x128xf32> to vector<128xf32>
    %29 = vector.shape_cast %28 : vector<128xf32> to vector<128x1xf32>
    %30 = vector.broadcast %29 : vector<128x1xf32> to vector<128x128xf32>
    %31 = arith.subf %27, %30 : vector<128x128xf32>
    %32 = math.exp %31 : vector<128x128xf32>
    %cst_12 = arith.constant dense<0.000000e+00> : vector<128xf32>
    %33 = vector.multi_reduction <add>, %32, %cst_12 [1] : vector<128x128xf32> to vector<128xf32>
    %34 = vector.shape_cast %33 : vector<128xf32> to vector<128x1xf32>
    %35 = tpu.reciprocal %34 {approx = true} : vector<128x1xf32> -> vector<128x1xf32>
    %36 = vector.broadcast %35 : vector<128x1xf32> to vector<128x128xf32>
    %37 = arith.mulf %32, %36 : vector<128x128xf32>
    %38 = vector.shape_cast %37 : vector<128x128xf32> to vector<1x128x128xf32>
    %39 = vector.shape_cast %38 : vector<1x128x128xf32> to vector<1x128x128xf32>
    %40 = vector.broadcast %39 : vector<1x128x128xf32> to vector<2x128x128xf32>
    %c0_13 = arith.constant 0 : index
    %c0_14 = arith.constant 0 : index
    %c0_15 = arith.constant 0 : index
    %41 = vector.load %arg29[%c0_13, %c0_14, %c0_15] : memref<2x128x128xf32, #tpu.memory_space<vmem>>, vector<2x128x128xf32>
    tpu.vector_store %arg29[%c0_13, %c0_14, %c0_15], %40 {strides = array<i32>} : memref<2x128x128xf32, #tpu.memory_space<vmem>>, vector<2x128x128xf32>,
    %c0_16 = arith.constant 0 : index
    %c0_17 = arith.constant 0 : index
    %42 = vector.load %arg3[%c0_16, %c0_17] : memref<128x32xf32, #tpu.memory_space<vmem>>, vector<128x32xf32>
    %cst_18 = arith.constant dense<0.000000e+00> : vector<128x128xf32>
    %43 = tpu.matmul %42, %42, %cst_18 {dimension_numbers = #tpu.dot_dimension_numbers<[1], [1], [0], [0], [0, 0, 1, 0], [], []>} : vector<128x32xf32>, vector<128x32xf32>, vector<128x128xf32> -> vector<128x128xf32>
    %c0_19 = arith.constant 0 : index
    %c0_20 = arith.constant 0 : index
    %44 = vector.load %arg6[%c0_19, %c0_20] : memref<1x128xf32, #tpu.memory_space<vmem>>, vector<1x128xf32>
    %c0_21 = arith.constant 0 : index
    %c0_22 = arith.constant 0 : index
    %45 = vector.load %arg7[%c0_21, %c0_22] : memref<1x128xf32, #tpu.memory_space<vmem>>, vector<1x128xf32>
    %cst_23 = arith.constant dense<0.000000e+00> : vector<128xf32>
    %46 = vector.multi_reduction <add>, %43, %cst_23 [1] : vector<128x128xf32> to vector<128xf32>
    %47 = vector.shape_cast %46 : vector<128xf32> to vector<128x1xf32>
    %cst_24 = arith.constant 1.280000e+02 : f32
    %48 = vector.broadcast %cst_24 : f32 to vector<128x1xf32>
    %49 = arith.divf %47, %48 : vector<128x1xf32>
    %50 = vector.broadcast %49 : vector<128x1xf32> to vector<128x128xf32>
    %51 = arith.subf %43, %50 : vector<128x128xf32>
    %52 = arith.mulf %51, %51 : vector<128x128xf32>
    %cst_25 = arith.constant dense<0.000000e+00> : vector<128xf32>
    %53 = vector.multi_reduction <add>, %52, %cst_25 [1] : vector<128x128xf32> to vector<128xf32>
    %54 = vector.shape_cast %53 : vector<128xf32> to vector<128x1xf32>
    %cst_26 = arith.constant 1.280000e+02 : f32
    %55 = vector.broadcast %cst_26 : f32 to vector<128x1xf32>
    %56 = arith.divf %54, %55 : vector<128x1xf32>
    %57 = vector.broadcast %49 : vector<128x1xf32> to vector<128x128xf32>
    %58 = arith.subf %43, %57 : vector<128x128xf32>
    %cst_27 = arith.constant 9.99999974E-6 : f32
    %59 = vector.broadcast %cst_27 : f32 to vector<128x1xf32>
    %60 = arith.addf %56, %59 : vector<128x1xf32>
    %61 = math.rsqrt %60 : vector<128x1xf32>
    %62 = vector.broadcast %61 : vector<128x1xf32> to vector<128x128xf32>
    %63 = arith.mulf %58, %62 : vector<128x128xf32>
    %64 = vector.broadcast %44 : vector<1x128xf32> to vector<128x128xf32>
    %65 = arith.mulf %63, %64 : vector<128x128xf32>
    %66 = vector.broadcast %45 : vector<1x128xf32> to vector<128x128xf32>
    %67 = arith.addf %65, %66 : vector<128x128xf32>
    %c0_28 = arith.constant 0 : index
    %c0_29 = arith.constant 0 : index
    %c0_30 = arith.constant 0 : index
    %68 = vector.load %arg1[%c0_28, %c0_29, %c0_30] : memref<2x128x32xf32, #tpu.memory_space<vmem>>, vector<2x128x32xf32>
    %c0_31 = arith.constant 0 : index
    %c0_32 = arith.constant 0 : index
    %69 = vector.load %arg8[%c0_31, %c0_32] : memref<1x32xf32, #tpu.memory_space<vmem>>, vector<1x32xf32>
    %c0_33 = arith.constant 0 : index
    %c0_34 = arith.constant 0 : index
    %70 = vector.load %arg9[%c0_33, %c0_34] : memref<1x32xf32, #tpu.memory_space<vmem>>, vector<1x32xf32>
    %cst_35 = arith.constant dense<0.000000e+00> : vector<2x128xf32>
    %71 = vector.multi_reduction <add>, %68, %cst_35 [2] : vector<2x128x32xf32> to vector<2x128xf32>
    %72 = vector.shape_cast %71 : vector<2x128xf32> to vector<2x128x1xf32>
    %cst_36 = arith.constant 3.200000e+01 : f32
    %73 = vector.broadcast %cst_36 : f32 to vector<2x128x1xf32>
    %74 = arith.divf %72, %73 : vector<2x128x1xf32>
    %75 = vector.broadcast %74 : vector<2x128x1xf32> to vector<2x128x32xf32>
    %76 = arith.subf %68, %75 : vector<2x128x32xf32>
    %77 = arith.mulf %76, %76 : vector<2x128x32xf32>
    %cst_37 = arith.constant dense<0.000000e+00> : vector<2x128xf32>
    %78 = vector.multi_reduction <add>, %77, %cst_37 [2] : vector<2x128x32xf32> to vector<2x128xf32>
    %79 = vector.shape_cast %78 : vector<2x128xf32> to vector<2x128x1xf32>
    %cst_38 = arith.constant 3.200000e+01 : f32
    %80 = vector.broadcast %cst_38 : f32 to vector<2x128x1xf32>
    %81 = arith.divf %79, %80 : vector<2x128x1xf32>
    %82 = vector.broadcast %74 : vector<2x128x1xf32> to vector<2x128x32xf32>
    %83 = arith.subf %68, %82 : vector<2x128x32xf32>
    %cst_39 = arith.constant 9.99999974E-6 : f32
    %84 = vector.broadcast %cst_39 : f32 to vector<2x128x1xf32>
    %85 = arith.addf %81, %84 : vector<2x128x1xf32>
    %86 = math.rsqrt %85 : vector<2x128x1xf32>
    %87 = vector.broadcast %86 : vector<2x128x1xf32> to vector<2x128x32xf32>
    %88 = arith.mulf %83, %87 : vector<2x128x32xf32>
    %89 = vector.shape_cast %69 : vector<1x32xf32> to vector<1x1x32xf32>
    %90 = vector.broadcast %89 : vector<1x1x32xf32> to vector<2x128x32xf32>
    %91 = arith.mulf %88, %90 : vector<2x128x32xf32>
    %92 = vector.shape_cast %70 : vector<1x32xf32> to vector<1x1x32xf32>
    %93 = vector.broadcast %92 : vector<1x1x32xf32> to vector<2x128x32xf32>
    %94 = arith.addf %91, %93 : vector<2x128x32xf32>
    %cst_40 = arith.constant dense<0.000000e+00> : vector<2x128xf32>
    %95 = vector.multi_reduction <add>, %94, %cst_40 [2] : vector<2x128x32xf32> to vector<2x128xf32>
    %96 = vector.shape_cast %95 : vector<2x128xf32> to vector<2x128x1xf32>
    %c0_41 = arith.constant 0 : index
    %c0_42 = arith.constant 0 : index
    %97 = vector.load %arg10[%c0_41, %c0_42] : memref<128x32xf32, #tpu.memory_space<vmem>>, vector<128x32xf32>
    %98 = vector.shape_cast %97 : vector<128x32xf32> to vector<1x128x32xf32>
    %99 = vector.broadcast %96 : vector<2x128x1xf32> to vector<2x128x32xf32>
    %100 = vector.broadcast %98 : vector<1x128x32xf32> to vector<2x128x32xf32>
    %101 = arith.mulf %99, %100 : vector<2x128x32xf32>
    %102 = arith.addf %101, %94 : vector<2x128x32xf32>
    "tpu.trace_start"() <{level = 10 : i32, message = "bnd,bmd->bnm"}> : () -> ()
    %cst_43 = arith.constant dense<0.000000e+00> : vector<2x128x128xf32>
    %103 = tpu.matmul %102, %102, %cst_43 {dimension_numbers = #tpu.dot_dimension_numbers<[2], [2], [1], [1], [0, 0, 0, 1, 1, 1], [0], [0]>} : vector<2x128x32xf32>, vector<2x128x32xf32>, vector<2x128x128xf32> -> vector<2x128x128xf32>
    "tpu.trace_stop"() : () -> ()
    %c0_44 = arith.constant 0 : index
    %c0_45 = arith.constant 0 : index
    %104 = vector.load %arg16[%c0_44, %c0_45] : memref<1x128xf32, #tpu.memory_space<vmem>>, vector<1x128xf32>
    %c0_46 = arith.constant 0 : index
    %c0_47 = arith.constant 0 : index
    %105 = vector.load %arg17[%c0_46, %c0_47] : memref<1x128xf32, #tpu.memory_space<vmem>>, vector<1x128xf32>
    %cst_48 = arith.constant dense<0.000000e+00> : vector<2x128xf32>
    %106 = vector.multi_reduction <add>, %103, %cst_48 [2] : vector<2x128x128xf32> to vector<2x128xf32>
    %107 = vector.shape_cast %106 : vector<2x128xf32> to vector<2x128x1xf32>
    %cst_49 = arith.constant 1.280000e+02 : f32
    %108 = vector.broadcast %cst_49 : f32 to vector<2x128x1xf32>
    %109 = arith.divf %107, %108 : vector<2x128x1xf32>
    %110 = vector.broadcast %109 : vector<2x128x1xf32> to vector<2x128x128xf32>
    %111 = arith.subf %103, %110 : vector<2x128x128xf32>
    %112 = arith.mulf %111, %111 : vector<2x128x128xf32>
    %cst_50 = arith.constant dense<0.000000e+00> : vector<2x128xf32>
    %113 = vector.multi_reduction <add>, %112, %cst_50 [2] : vector<2x128x128xf32> to vector<2x128xf32>
    %114 = vector.shape_cast %113 : vector<2x128xf32> to vector<2x128x1xf32>
    %cst_51 = arith.constant 1.280000e+02 : f32
    %115 = vector.broadcast %cst_51 : f32 to vector<2x128x1xf32>
    %116 = arith.divf %114, %115 : vector<2x128x1xf32>
    %117 = vector.broadcast %109 : vector<2x128x1xf32> to vector<2x128x128xf32>
    %118 = arith.subf %103, %117 : vector<2x128x128xf32>
    %cst_52 = arith.constant 9.99999974E-6 : f32
    %119 = vector.broadcast %cst_52 : f32 to vector<2x128x1xf32>
    %120 = arith.addf %116, %119 : vector<2x128x1xf32>
    %121 = math.rsqrt %120 : vector<2x128x1xf32>
    %122 = vector.broadcast %121 : vector<2x128x1xf32> to vector<2x128x128xf32>
    %123 = arith.mulf %118, %122 : vector<2x128x128xf32>
    %124 = vector.shape_cast %104 : vector<1x128xf32> to vector<1x1x128xf32>
    %125 = vector.broadcast %124 : vector<1x1x128xf32> to vector<2x128x128xf32>
    %126 = arith.mulf %123, %125 : vector<2x128x128xf32>
    %127 = vector.shape_cast %105 : vector<1x128xf32> to vector<1x1x128xf32>
    %128 = vector.broadcast %127 : vector<1x1x128xf32> to vector<2x128x128xf32>
    %129 = arith.addf %126, %128 : vector<2x128x128xf32>
    %130 = vector.shape_cast %94 : vector<2x128x32xf32> to vector<256x32xf32>
    %c0_53 = arith.constant 0 : index
    %c0_54 = arith.constant 0 : index
    %131 = vector.load %arg11[%c0_53, %c0_54] : memref<32x32xf32, #tpu.memory_space<vmem>>, vector<32x32xf32>
    %cst_55 = arith.constant dense<0.000000e+00> : vector<256x32xf32>
    %132 = tpu.matmul %130, %131, %cst_55 {dimension_numbers = #tpu.dot_dimension_numbers<[1], [0], [0], [1], [0, 0, 1, 1], [], []>} : vector<256x32xf32>, vector<32x32xf32>, vector<256x32xf32> -> vector<256x32xf32>
    %c0_56 = arith.constant 0 : index
    %c0_57 = arith.constant 0 : index
    %133 = vector.load %arg12[%c0_56, %c0_57] : memref<1x32xf32, #tpu.memory_space<vmem>>, vector<1x32xf32>
    %134 = vector.broadcast %133 : vector<1x32xf32> to vector<256x32xf32>
    %135 = arith.addf %132, %134 : vector<256x32xf32>
    %c0_58 = arith.constant 0 : index
    %c0_59 = arith.constant 0 : index
    %136 = vector.load %arg13[%c0_58, %c0_59] : memref<32x32xf32, #tpu.memory_space<vmem>>, vector<32x32xf32>
    %cst_60 = arith.constant dense<0.000000e+00> : vector<256x32xf32>
    %137 = tpu.matmul %130, %136, %cst_60 {dimension_numbers = #tpu.dot_dimension_numbers<[1], [0], [0], [1], [0, 0, 1, 1], [], []>} : vector<256x32xf32>, vector<32x32xf32>, vector<256x32xf32> -> vector<256x32xf32>
    %c0_61 = arith.constant 0 : index
    %c0_62 = arith.constant 0 : index
    %138 = vector.load %arg14[%c0_61, %c0_62] : memref<1x32xf32, #tpu.memory_space<vmem>>, vector<1x32xf32>
    %139 = vector.broadcast %138 : vector<1x32xf32> to vector<256x32xf32>
    %140 = arith.addf %137, %139 : vector<256x32xf32>
    %141 = vector.shape_cast %135 : vector<256x32xf32> to vector<2x128x32xf32>
    %142 = vector.shape_cast %140 : vector<256x32xf32> to vector<2x128x32xf32>
    "tpu.trace_start"() <{level = 10 : i32, message = "bnd,bmd->bnm"}> : () -> ()
    %cst_63 = arith.constant dense<0.000000e+00> : vector<2x128x128xf32>
    %143 = tpu.matmul %141, %142, %cst_63 {dimension_numbers = #tpu.dot_dimension_numbers<[2], [2], [1], [1], [0, 0, 0, 1, 1, 1], [0], [0]>} : vector<2x128x32xf32>, vector<2x128x32xf32>, vector<2x128x128xf32> -> vector<2x128x128xf32>
    "tpu.trace_stop"() : () -> ()
    %c0_64 = arith.constant 0 : index
    %c0_65 = arith.constant 0 : index
    %144 = memref.load %arg15[%c0_64, %c0_65] : memref<1x1xf32, #tpu.memory_space<smem>>
    %145 = vector.broadcast %144 : f32 to vector<2x128x128xf32>
    %146 = arith.addf %143, %145 : vector<2x128x128xf32>
    %c0_66 = arith.constant 0 : index
    %c0_67 = arith.constant 0 : index
    %147 = vector.load %arg18[%c0_66, %c0_67] : memref<1x128xf32, #tpu.memory_space<vmem>>, vector<1x128xf32>
    %c0_68 = arith.constant 0 : index
    %c0_69 = arith.constant 0 : index
    %148 = vector.load %arg19[%c0_68, %c0_69] : memref<1x128xf32, #tpu.memory_space<vmem>>, vector<1x128xf32>
    %cst_70 = arith.constant dense<0.000000e+00> : vector<2x128xf32>
    %149 = vector.multi_reduction <add>, %146, %cst_70 [2] : vector<2x128x128xf32> to vector<2x128xf32>
    %150 = vector.shape_cast %149 : vector<2x128xf32> to vector<2x128x1xf32>
    %cst_71 = arith.constant 1.280000e+02 : f32
    %151 = vector.broadcast %cst_71 : f32 to vector<2x128x1xf32>
    %152 = arith.divf %150, %151 : vector<2x128x1xf32>
    %153 = vector.broadcast %152 : vector<2x128x1xf32> to vector<2x128x128xf32>
    %154 = arith.subf %146, %153 : vector<2x128x128xf32>
    %155 = arith.mulf %154, %154 : vector<2x128x128xf32>
    %cst_72 = arith.constant dense<0.000000e+00> : vector<2x128xf32>
    %156 = vector.multi_reduction <add>, %155, %cst_72 [2] : vector<2x128x128xf32> to vector<2x128xf32>
    %157 = vector.shape_cast %156 : vector<2x128xf32> to vector<2x128x1xf32>
    %cst_73 = arith.constant 1.280000e+02 : f32
    %158 = vector.broadcast %cst_73 : f32 to vector<2x128x1xf32>
    %159 = arith.divf %157, %158 : vector<2x128x1xf32>
    %160 = vector.broadcast %152 : vector<2x128x1xf32> to vector<2x128x128xf32>
    %161 = arith.subf %146, %160 : vector<2x128x128xf32>
    %cst_74 = arith.constant 9.99999974E-6 : f32
    %162 = vector.broadcast %cst_74 : f32 to vector<2x128x1xf32>
    %163 = arith.addf %159, %162 : vector<2x128x1xf32>
    %164 = math.rsqrt %163 : vector<2x128x1xf32>
    %165 = vector.broadcast %164 : vector<2x128x1xf32> to vector<2x128x128xf32>
    %166 = arith.mulf %161, %165 : vector<2x128x128xf32>
    %167 = vector.shape_cast %147 : vector<1x128xf32> to vector<1x1x128xf32>
    %168 = vector.broadcast %167 : vector<1x1x128xf32> to vector<2x128x128xf32>
    %169 = arith.mulf %166, %168 : vector<2x128x128xf32>
    %170 = vector.shape_cast %148 : vector<1x128xf32> to vector<1x1x128xf32>
    %171 = vector.broadcast %170 : vector<1x1x128xf32> to vector<2x128x128xf32>
    %172 = arith.addf %169, %171 : vector<2x128x128xf32>
    %173 = arith.addf %172, %129 : vector<2x128x128xf32>
    %c0_75 = arith.constant 0 : index
    %c0_76 = arith.constant 0 : index
    %174 = vector.load %arg20[%c0_75, %c0_76] : memref<1x128xf32, #tpu.memory_space<vmem>>, vector<1x128xf32>
    %c0_77 = arith.constant 0 : index
    %c0_78 = arith.constant 0 : index
    %175 = vector.load %arg21[%c0_77, %c0_78] : memref<1x128xf32, #tpu.memory_space<vmem>>, vector<1x128xf32>
    %cst_79 = arith.constant dense<0.000000e+00> : vector<2x128xf32>
    %176 = vector.multi_reduction <add>, %173, %cst_79 [2] : vector<2x128x128xf32> to vector<2x128xf32>
    %177 = vector.shape_cast %176 : vector<2x128xf32> to vector<2x128x1xf32>
    %cst_80 = arith.constant 1.280000e+02 : f32
    %178 = vector.broadcast %cst_80 : f32 to vector<2x128x1xf32>
    %179 = arith.divf %177, %178 : vector<2x128x1xf32>
    %180 = vector.broadcast %179 : vector<2x128x1xf32> to vector<2x128x128xf32>
    %181 = arith.subf %173, %180 : vector<2x128x128xf32>
    %182 = arith.mulf %181, %181 : vector<2x128x128xf32>
    %cst_81 = arith.constant dense<0.000000e+00> : vector<2x128xf32>
    %183 = vector.multi_reduction <add>, %182, %cst_81 [2] : vector<2x128x128xf32> to vector<2x128xf32>
    %184 = vector.shape_cast %183 : vector<2x128xf32> to vector<2x128x1xf32>
    %cst_82 = arith.constant 1.280000e+02 : f32
    %185 = vector.broadcast %cst_82 : f32 to vector<2x128x1xf32>
    %186 = arith.divf %184, %185 : vector<2x128x1xf32>
    %187 = vector.broadcast %179 : vector<2x128x1xf32> to vector<2x128x128xf32>
    %188 = arith.subf %173, %187 : vector<2x128x128xf32>
    %cst_83 = arith.constant 9.99999974E-6 : f32
    %189 = vector.broadcast %cst_83 : f32 to vector<2x128x1xf32>
    %190 = arith.addf %186, %189 : vector<2x128x1xf32>
    %191 = math.rsqrt %190 : vector<2x128x1xf32>
    %192 = vector.broadcast %191 : vector<2x128x1xf32> to vector<2x128x128xf32>
    %193 = arith.mulf %188, %192 : vector<2x128x128xf32>
    %194 = vector.shape_cast %174 : vector<1x128xf32> to vector<1x1x128xf32>
    %195 = vector.broadcast %194 : vector<1x1x128xf32> to vector<2x128x128xf32>
    %196 = arith.mulf %193, %195 : vector<2x128x128xf32>
    %197 = vector.shape_cast %175 : vector<1x128xf32> to vector<1x1x128xf32>
    %198 = vector.broadcast %197 : vector<1x1x128xf32> to vector<2x128x128xf32>
    %199 = arith.addf %196, %198 : vector<2x128x128xf32>
    %200 = vector.shape_cast %199 : vector<2x128x128xf32> to vector<256x128xf32>
    %c0_84 = arith.constant 0 : index
    %c0_85 = arith.constant 0 : index
    %201 = vector.load %arg22[%c0_84, %c0_85] : memref<128x128xf32, #tpu.memory_space<vmem>>, vector<128x128xf32>
    %cst_86 = arith.constant dense<0.000000e+00> : vector<256x128xf32>
    %202 = tpu.matmul %200, %201, %cst_86 {dimension_numbers = #tpu.dot_dimension_numbers<[1], [0], [0], [1], [0, 0, 1, 1], [], []>} : vector<256x128xf32>, vector<128x128xf32>, vector<256x128xf32> -> vector<256x128xf32>
    %cst_87 = arith.constant 0.000000e+00 : f32
    %203 = vector.broadcast %cst_87 : f32 to vector<256x128xf32>
    %204 = arith.maximumf %202, %203 : vector<256x128xf32>
    %c0_88 = arith.constant 0 : index
    %c0_89 = arith.constant 0 : index
    %205 = vector.load %arg23[%c0_88, %c0_89] : memref<128x128xf32, #tpu.memory_space<vmem>>, vector<128x128xf32>
    %cst_90 = arith.constant dense<0.000000e+00> : vector<256x128xf32>
    %206 = tpu.matmul %204, %205, %cst_90 {dimension_numbers = #tpu.dot_dimension_numbers<[1], [0], [0], [1], [0, 0, 1, 1], [], []>} : vector<256x128xf32>, vector<128x128xf32>, vector<256x128xf32> -> vector<256x128xf32>
    %207 = vector.shape_cast %206 : vector<256x128xf32> to vector<2x128x128xf32>
    %208 = arith.addf %207, %173 : vector<2x128x128xf32>
    %c0_91 = arith.constant 0 : index
    %c0_92 = arith.constant 0 : index
    %209 = vector.load %arg24[%c0_91, %c0_92] : memref<1x128xf32, #tpu.memory_space<vmem>>, vector<1x128xf32>
    %c0_93 = arith.constant 0 : index
    %c0_94 = arith.constant 0 : index
    %210 = vector.load %arg25[%c0_93, %c0_94] : memref<1x128xf32, #tpu.memory_space<vmem>>, vector<1x128xf32>
    %cst_95 = arith.constant dense<0.000000e+00> : vector<2x128xf32>
    %211 = vector.multi_reduction <add>, %208, %cst_95 [2] : vector<2x128x128xf32> to vector<2x128xf32>
    %212 = vector.shape_cast %211 : vector<2x128xf32> to vector<2x128x1xf32>
    %cst_96 = arith.constant 1.280000e+02 : f32
    %213 = vector.broadcast %cst_96 : f32 to vector<2x128x1xf32>
    %214 = arith.divf %212, %213 : vector<2x128x1xf32>
    %215 = vector.broadcast %214 : vector<2x128x1xf32> to vector<2x128x128xf32>
    %216 = arith.subf %208, %215 : vector<2x128x128xf32>
    %217 = arith.mulf %216, %216 : vector<2x128x128xf32>
    %cst_97 = arith.constant dense<0.000000e+00> : vector<2x128xf32>
    %218 = vector.multi_reduction <add>, %217, %cst_97 [2] : vector<2x128x128xf32> to vector<2x128xf32>
    %219 = vector.shape_cast %218 : vector<2x128xf32> to vector<2x128x1xf32>
    %cst_98 = arith.constant 1.280000e+02 : f32
    %220 = vector.broadcast %cst_98 : f32 to vector<2x128x1xf32>
    %221 = arith.divf %219, %220 : vector<2x128x1xf32>
    %222 = vector.broadcast %214 : vector<2x128x1xf32> to vector<2x128x128xf32>
    %223 = arith.subf %208, %222 : vector<2x128x128xf32>
    %cst_99 = arith.constant 9.99999974E-6 : f32
    %224 = vector.broadcast %cst_99 : f32 to vector<2x128x1xf32>
    %225 = arith.addf %221, %224 : vector<2x128x1xf32>
    %226 = math.rsqrt %225 : vector<2x128x1xf32>
    %227 = vector.broadcast %226 : vector<2x128x1xf32> to vector<2x128x128xf32>
    %228 = arith.mulf %223, %227 : vector<2x128x128xf32>
    %229 = vector.shape_cast %209 : vector<1x128xf32> to vector<1x1x128xf32>
    %230 = vector.broadcast %229 : vector<1x1x128xf32> to vector<2x128x128xf32>
    %231 = arith.mulf %228, %230 : vector<2x128x128xf32>
    %232 = vector.shape_cast %210 : vector<1x128xf32> to vector<1x1x128xf32>
    %233 = vector.broadcast %232 : vector<1x1x128xf32> to vector<2x128x128xf32>
    %234 = arith.addf %231, %233 : vector<2x128x128xf32>
    %235 = vector.shape_cast %67 : vector<128x128xf32> to vector<1x128x128xf32>
    %236 = vector.broadcast %235 : vector<1x128x128xf32> to vector<2x128x128xf32>
    %237 = arith.addf %234, %236 : vector<2x128x128xf32>
    %c0_100 = arith.constant 0 : index
    %c0_101 = arith.constant 0 : index
    %238 = vector.load %arg26[%c0_100, %c0_101] : memref<1x128xf32, #tpu.memory_space<vmem>>, vector<1x128xf32>
    %c0_102 = arith.constant 0 : index
    %c0_103 = arith.constant 0 : index
    %239 = vector.load %arg27[%c0_102, %c0_103] : memref<1x128xf32, #tpu.memory_space<vmem>>, vector<1x128xf32>
    %cst_104 = arith.constant dense<0.000000e+00> : vector<2x128xf32>
    %240 = vector.multi_reduction <add>, %237, %cst_104 [2] : vector<2x128x128xf32> to vector<2x128xf32>
    %241 = vector.shape_cast %240 : vector<2x128xf32> to vector<2x128x1xf32>
    %cst_105 = arith.constant 1.280000e+02 : f32
    %242 = vector.broadcast %cst_105 : f32 to vector<2x128x1xf32>
    %243 = arith.divf %241, %242 : vector<2x128x1xf32>
    %244 = vector.broadcast %243 : vector<2x128x1xf32> to vector<2x128x128xf32>
    %245 = arith.subf %237, %244 : vector<2x128x128xf32>
    %246 = arith.mulf %245, %245 : vector<2x128x128xf32>
    %cst_106 = arith.constant dense<0.000000e+00> : vector<2x128xf32>
    %247 = vector.multi_reduction <add>, %246, %cst_106 [2] : vector<2x128x128xf32> to vector<2x128xf32>
    %248 = vector.shape_cast %247 : vector<2x128xf32> to vector<2x128x1xf32>
    %cst_107 = arith.constant 1.280000e+02 : f32
    %249 = vector.broadcast %cst_107 : f32 to vector<2x128x1xf32>
    %250 = arith.divf %248, %249 : vector<2x128x1xf32>
    %251 = vector.broadcast %243 : vector<2x128x1xf32> to vector<2x128x128xf32>
    %252 = arith.subf %237, %251 : vector<2x128x128xf32>
    %cst_108 = arith.constant 9.99999974E-6 : f32
    %253 = vector.broadcast %cst_108 : f32 to vector<2x128x1xf32>
    %254 = arith.addf %250, %253 : vector<2x128x1xf32>
    %255 = math.rsqrt %254 : vector<2x128x1xf32>
    %256 = vector.broadcast %255 : vector<2x128x1xf32> to vector<2x128x128xf32>
    %257 = arith.mulf %252, %256 : vector<2x128x128xf32>
    %258 = vector.shape_cast %238 : vector<1x128xf32> to vector<1x1x128xf32>
    %259 = vector.broadcast %258 : vector<1x1x128xf32> to vector<2x128x128xf32>
    %260 = arith.mulf %257, %259 : vector<2x128x128xf32>
    %261 = vector.shape_cast %239 : vector<1x128xf32> to vector<1x1x128xf32>
    %262 = vector.broadcast %261 : vector<1x1x128xf32> to vector<2x128x128xf32>
    %263 = arith.addf %260, %262 : vector<2x128x128xf32>
    %cst_109 = arith.constant 0.000000e+00 : f32
    %264 = vector.broadcast %cst_109 : f32 to vector<2x128x128xf32>
    %265 = arith.maximumf %263, %264 : vector<2x128x128xf32>
    %cst_110 = arith.constant dense<0xFF800000> : vector<2x128xf32>
    %266 = vector.multi_reduction <maximumf>, %265, %cst_110 [2] : vector<2x128x128xf32> to vector<2x128xf32>
    %267 = vector.shape_cast %266 : vector<2x128xf32> to vector<2x128x1xf32>
    %268 = vector.broadcast %267 : vector<2x128x1xf32> to vector<2x128x128xf32>
    %269 = arith.subf %265, %268 : vector<2x128x128xf32>
    %270 = math.exp %269 : vector<2x128x128xf32>
    %cst_111 = arith.constant dense<0.000000e+00> : vector<2x128xf32>
    %271 = vector.multi_reduction <add>, %270, %cst_111 [2] : vector<2x128x128xf32> to vector<2x128xf32>
    %272 = vector.shape_cast %271 : vector<2x128xf32> to vector<2x128x1xf32>
    %273 = tpu.reciprocal %272 {approx = true} : vector<2x128x1xf32> -> vector<2x128x1xf32>
    %274 = vector.broadcast %273 : vector<2x128x1xf32> to vector<2x128x128xf32>
    %275 = arith.mulf %270, %274 : vector<2x128x128xf32>
    %c0_112 = arith.constant 0 : index
    %c0_113 = arith.constant 0 : index
    %c0_114 = arith.constant 0 : index
    %276 = vector.load %arg28[%c0_112, %c0_113, %c0_114] : memref<2x128x128xf32, #tpu.memory_space<vmem>>, vector<2x128x128xf32>
    tpu.vector_store %arg28[%c0_112, %c0_113, %c0_114], %275 {strides = array<i32>} : memref<2x128x128xf32, #tpu.memory_space<vmem>>, vector<2x128x128xf32>,
    return
  }
  func.func @transform_0(%arg0: i32) -> (i32, i32, i32) {
    %c0_i32 = arith.constant 0 : i32
    %c0_i32_0 = arith.constant 0 : i32
    %c0_i32_1 = arith.constant 0 : i32
    return %arg0, %c0_i32, %c0_i32_0 : i32, i32, i32
  }
  func.func @transform_1(%arg0: i32) -> (i32, i32) {
    %c0_i32 = arith.constant 0 : i32
    %c0_i32_0 = arith.constant 0 : i32
    %c0_i32_1 = arith.constant 0 : i32
    return %c0_i32, %c0_i32_0 : i32, i32
  }
  func.func @transform_2(%arg0: i32) -> (i32, i32) {
    %c0_i32 = arith.constant 0 : i32
    %c0_i32_0 = arith.constant 0 : i32
    %c0_i32_1 = arith.constant 0 : i32
    return %c0_i32, %c0_i32_0 : i32, i32
  }
  func.func @transform_3(%arg0: i32) -> (i32, i32) {
    %c0_i32 = arith.constant 0 : i32
    %c0_i32_0 = arith.constant 0 : i32
    %c0_i32_1 = arith.constant 0 : i32
    return %c0_i32, %c0_i32_0 : i32, i32
  }
  func.func @transform_4(%arg0: i32) -> (i32, i32) {
    %c0_i32 = arith.constant 0 : i32
    %c0_i32_0 = arith.constant 0 : i32
    %c0_i32_1 = arith.constant 0 : i32
    return %c0_i32, %c0_i32_0 : i32, i32
  }
  func.func @transform_5(%arg0: i32) -> (i32, i32) {
    %c0_i32 = arith.constant 0 : i32
    %c0_i32_0 = arith.constant 0 : i32
    %c0_i32_1 = arith.constant 0 : i32
    return %c0_i32, %c0_i32_0 : i32, i32
  }
  func.func @transform_6(%arg0: i32) -> (i32, i32) {
    %c0_i32 = arith.constant 0 : i32
    %c0_i32_0 = arith.constant 0 : i32
    %c0_i32_1 = arith.constant 0 : i32
    return %c0_i32, %c0_i32_0 : i32, i32
  }
  func.func @transform_7(%arg0: i32) -> (i32, i32) {
    %c0_i32 = arith.constant 0 : i32
    %c0_i32_0 = arith.constant 0 : i32
    %c0_i32_1 = arith.constant 0 : i32
    return %c0_i32, %c0_i32_0 : i32, i32
  }
  func.func @transform_8(%arg0: i32) -> (i32, i32) {
    %c0_i32 = arith.constant 0 : i32
    %c0_i32_0 = arith.constant 0 : i32
    %c0_i32_1 = arith.constant 0 : i32
    return %c0_i32, %c0_i32_0 : i32, i32
  }
  func.func @transform_9(%arg0: i32) -> (i32, i32) {
    %c0_i32 = arith.constant 0 : i32
    %c0_i32_0 = arith.constant 0 : i32
    %c0_i32_1 = arith.constant 0 : i32
    return %c0_i32, %c0_i32_0 : i32, i32
  }
  func.func @transform_10(%arg0: i32) -> (i32, i32) {
    %c0_i32 = arith.constant 0 : i32
    %c0_i32_0 = arith.constant 0 : i32
    %c0_i32_1 = arith.constant 0 : i32
    return %c0_i32, %c0_i32_0 : i32, i32
  }
  func.func @transform_11(%arg0: i32) -> (i32, i32) {
    %c0_i32 = arith.constant 0 : i32
    %c0_i32_0 = arith.constant 0 : i32
    %c0_i32_1 = arith.constant 0 : i32
    return %c0_i32, %c0_i32_0 : i32, i32
  }
  func.func @transform_12(%arg0: i32) -> (i32, i32) {
    %c0_i32 = arith.constant 0 : i32
    %c0_i32_0 = arith.constant 0 : i32
    %c0_i32_1 = arith.constant 0 : i32
    return %c0_i32, %c0_i32_0 : i32, i32
  }
  func.func @transform_13(%arg0: i32) -> (i32, i32) {
    %c0_i32 = arith.constant 0 : i32
    %c0_i32_0 = arith.constant 0 : i32
    %c0_i32_1 = arith.constant 0 : i32
    return %c0_i32, %c0_i32_0 : i32, i32
  }
  func.func @transform_14(%arg0: i32) -> (i32, i32) {
    %c0_i32 = arith.constant 0 : i32
    %c0_i32_0 = arith.constant 0 : i32
    %c0_i32_1 = arith.constant 0 : i32
    return %c0_i32, %c0_i32_0 : i32, i32
  }
  func.func @transform_15(%arg0: i32) -> (i32, i32) {
    %c0_i32 = arith.constant 0 : i32
    %c0_i32_0 = arith.constant 0 : i32
    %c0_i32_1 = arith.constant 0 : i32
    return %c0_i32, %c0_i32_0 : i32, i32
  }
  func.func @transform_16(%arg0: i32) -> (i32, i32) {
    %c0_i32 = arith.constant 0 : i32
    %c0_i32_0 = arith.constant 0 : i32
    %c0_i32_1 = arith.constant 0 : i32
    return %c0_i32, %c0_i32_0 : i32, i32
  }
  func.func @transform_17(%arg0: i32) -> (i32, i32) {
    %c0_i32 = arith.constant 0 : i32
    %c0_i32_0 = arith.constant 0 : i32
    %c0_i32_1 = arith.constant 0 : i32
    return %c0_i32, %c0_i32_0 : i32, i32
  }
  func.func @transform_18(%arg0: i32) -> (i32, i32) {
    %c0_i32 = arith.constant 0 : i32
    %c0_i32_0 = arith.constant 0 : i32
    %c0_i32_1 = arith.constant 0 : i32
    return %c0_i32, %c0_i32_0 : i32, i32
  }
  func.func @transform_19(%arg0: i32) -> (i32, i32) {
    %c0_i32 = arith.constant 0 : i32
    %c0_i32_0 = arith.constant 0 : i32
    %c0_i32_1 = arith.constant 0 : i32
    return %c0_i32, %c0_i32_0 : i32, i32
  }
  func.func @transform_20(%arg0: i32) -> (i32, i32) {
    %c0_i32 = arith.constant 0 : i32
    %c0_i32_0 = arith.constant 0 : i32
    %c0_i32_1 = arith.constant 0 : i32
    return %c0_i32, %c0_i32_0 : i32, i32
  }
  func.func @transform_21(%arg0: i32) -> (i32, i32) {
    %c0_i32 = arith.constant 0 : i32
    %c0_i32_0 = arith.constant 0 : i32
    %c0_i32_1 = arith.constant 0 : i32
    return %c0_i32, %c0_i32_0 : i32, i32
  }
  func.func @transform_22(%arg0: i32) -> (i32, i32) {
    %c0_i32 = arith.constant 0 : i32
    %c0_i32_0 = arith.constant 0 : i32
    %c0_i32_1 = arith.constant 0 : i32
    return %c0_i32, %c0_i32_0 : i32, i32
  }
  func.func @transform_23(%arg0: i32) -> (i32, i32) {
    %c0_i32 = arith.constant 0 : i32
    %c0_i32_0 = arith.constant 0 : i32
    %c0_i32_1 = arith.constant 0 : i32
    return %c0_i32, %c0_i32_0 : i32, i32
  }
  func.func @transform_24(%arg0: i32) -> (i32, i32) {
    %c0_i32 = arith.constant 0 : i32
    %c0_i32_0 = arith.constant 0 : i32
    %c0_i32_1 = arith.constant 0 : i32
    return %c0_i32, %c0_i32_0 : i32, i32
  }
  func.func @transform_25(%arg0: i32) -> (i32, i32) {
    %c0_i32 = arith.constant 0 : i32
    %c0_i32_0 = arith.constant 0 : i32
    %c0_i32_1 = arith.constant 0 : i32
    return %c0_i32, %c0_i32_0 : i32, i32
  }
  func.func @transform_26(%arg0: i32) -> (i32, i32) {
    %c0_i32 = arith.constant 0 : i32
    %c0_i32_0 = arith.constant 0 : i32
    %c0_i32_1 = arith.constant 0 : i32
    return %c0_i32, %c0_i32_0 : i32, i32
  }
  func.func @transform_27(%arg0: i32) -> (i32, i32, i32) {
    %c0_i32 = arith.constant 0 : i32
    %c0_i32_0 = arith.constant 0 : i32
    %c0_i32_1 = arith.constant 0 : i32
    return %arg0, %c0_i32, %c0_i32_0 : i32, i32, i32
  }
  func.func @transform_28(%arg0: i32) -> (i32, i32, i32) {
    %c0_i32 = arith.constant 0 : i32
    %c0_i32_0 = arith.constant 0 : i32
    %c0_i32_1 = arith.constant 0 : i32
    return %arg0, %c0_i32, %c0_i32_0 : i32, i32, i32
  }
}

</mosaic_0001>

<llo_original>
// kernel: tpu_custom_call.1
$region0: #{tpu_custom_call.1}
  #allocation0 [shape = 'u32[]', space=smem, size = 0x4, offset = 0x4, fixed_abs, tag = 'smem constant byte address 0x4 - core index']
  #allocation1 [shape = 'u32[144,128]{1,0:T(1,128)}', space=vmem, size = 0x12000, scoped, tag = 'internal scratch']
  #allocation2 [shape = 'f32[1,1]{1,0:T(1,128)S(6)}', space=smem, size = 0x200, scoped, tag = 'scoped memory for tpu_custom_call.1']
  %s0 = inlined_call_operand.vmem [shape: f32[2,128,32], index: 0, kind: input, shape index: {}]
  %s1 = inlined_call_operand.vmem [shape: f32[128,32], index: 1, kind: input, shape index: {}]
  %s2 = inlined_call_operand.vmem [shape: f32[128,32], index: 2, kind: input, shape index: {}]
  %s3 = inlined_call_operand.vmem [shape: f32[1,128], index: 3, kind: input, shape index: {}]
  %s4 = inlined_call_operand.vmem [shape: f32[1,128], index: 4, kind: input, shape index: {}]
  %s5 = inlined_call_operand.vmem [shape: f32[1,128], index: 5, kind: input, shape index: {}]
  %s6 = inlined_call_operand.vmem [shape: f32[1,128], index: 6, kind: input, shape index: {}]
  %s7 = inlined_call_operand.vmem [shape: f32[1,32], index: 7, kind: input, shape index: {}]
  %s8 = inlined_call_operand.vmem [shape: f32[1,32], index: 8, kind: input, shape index: {}]
  %s9 = inlined_call_operand.vmem [shape: f32[128,32], index: 9, kind: input, shape index: {}]
  %s10 = inlined_call_operand.vmem [shape: f32[32,32], index: 10, kind: input, shape index: {}]
  %s11 = inlined_call_operand.vmem [shape: f32[1,32], index: 11, kind: input, shape index: {}]
  %s12 = inlined_call_operand.vmem [shape: f32[32,32], index: 12, kind: input, shape index: {}]
  %s13 = inlined_call_operand.vmem [shape: f32[1,32], index: 13, kind: input, shape index: {}]
  %s14 = inlined_call_operand.<no memory space> [shape: f32[1,1], index: 14, kind: input, shape index: {}]
  %s15 = inlined_call_operand.vmem [shape: f32[1,128], index: 15, kind: input, shape index: {}]
  %s16 = inlined_call_operand.vmem [shape: f32[1,128], index: 16, kind: input, shape index: {}]
  %s17 = inlined_call_operand.vmem [shape: f32[1,128], index: 17, kind: input, shape index: {}]
  %s18 = inlined_call_operand.vmem [shape: f32[1,128], index: 18, kind: input, shape index: {}]
  %s19 = inlined_call_operand.vmem [shape: f32[1,128], index: 19, kind: input, shape index: {}]
  %s20 = inlined_call_operand.vmem [shape: f32[1,128], index: 20, kind: input, shape index: {}]
  %s21 = inlined_call_operand.vmem [shape: f32[128,128], index: 21, kind: input, shape index: {}]
  %s22 = inlined_call_operand.vmem [shape: f32[128,128], index: 22, kind: input, shape index: {}]
  %s23 = inlined_call_operand.vmem [shape: f32[1,128], index: 23, kind: input, shape index: {}]
  %s24 = inlined_call_operand.vmem [shape: f32[1,128], index: 24, kind: input, shape index: {}]
  %s25 = inlined_call_operand.vmem [shape: f32[1,128], index: 25, kind: input, shape index: {}]
  %s26 = inlined_call_operand.vmem [shape: f32[1,128], index: 26, kind: input, shape index: {}]
  %s27 = inlined_call_operand.hbm [shape: f32[2,128,128], index: 27, kind: output, shape index: {0}]
  %s28 = inlined_call_operand.hbm [shape: f32[2,128,128], index: 28, kind: output, shape index: {1}]
  %29 = xla_tuple %s27, %s28
  %s30 = sld [smem:[#allocation0]]
  $region126: #{tpu_custom_call.1} parent=0
    _
  %s32 = ssub.s32 1, %s30
  %s33 = scalar_select 0, %s32, %s30
  %34 = sst [smem:[#allocation2]] %s14
  $region1: #{tpu_custom_call.1} parent=0
    #allocation3 [shape = 'u8[131072]{0}', space=vmem, size = 0x20000, scoped, tag = 'output window, operand 0, single buffered']
    #allocation4 [shape = 's32[1]{0}', space=sflag, size = 0x4, scoped, tag = 'scoped memory for tpu_custom_call.1']
    #allocation5 [shape = 'u8[131072]{0}', space=vmem, size = 0x20000, scoped, tag = 'output window, operand 1, single buffered']
    #allocation6 [shape = 's32[1]{0}', space=sflag, size = 0x4, scoped, tag = 'scoped memory for tpu_custom_call.1']
    %35 = vsyncpa [#allocation4], 0
    %36 = vsyncpa [#allocation6], 0
    // Predicated region
    $region2: #{tpu_custom_call.1} parent=1 // pred_check
      _
    $region3: #{tpu_custom_call.1} parent=1 // pred_check_branch
      %38 = sbr.rel (0) target = $region5
    $region4: #{tpu_custom_call.1} parent=1 // pred_region
      _
    $region5: #{tpu_custom_call.1} parent=1 // pred_fallthru
      _
    // Predicated region
    $region6: #{tpu_custom_call.1} parent=1 // pred_check
      _
    $region7: #{tpu_custom_call.1} parent=1 // pred_check_branch
      %40 = sbr.rel (0) target = $region9
    $region8: #{tpu_custom_call.1} parent=1 // pred_region
      _
    $region9: #{tpu_custom_call.1} parent=1 // pred_fallthru
      _
    // Predicated region
    $region10: #{tpu_custom_call.1} parent=1 // pred_check
      _
    $region11: #{tpu_custom_call.1} parent=1 // pred_check_branch
      %42 = sbr.rel (0) target = $region13
    $region12: #{tpu_custom_call.1} parent=1 // pred_region
      _
    $region13: #{tpu_custom_call.1} parent=1 // pred_fallthru
      _
    // Predicated region
    $region14: #{tpu_custom_call.1} parent=1 // pred_check
      _
    $region15: #{tpu_custom_call.1} parent=1 // pred_check_branch
      %44 = sbr.rel (0) target = $region17
    $region16: #{tpu_custom_call.1} parent=1 // pred_region
      _
    $region17: #{tpu_custom_call.1} parent=1 // pred_fallthru
      _
    // Predicated region
    $region18: #{tpu_custom_call.1} parent=1 // pred_check
      _
    $region19: #{tpu_custom_call.1} parent=1 // pred_check_branch
      %46 = sbr.rel (0) target = $region21
    $region20: #{tpu_custom_call.1} parent=1 // pred_region
      _
    $region21: #{tpu_custom_call.1} parent=1 // pred_fallthru
      _
    // Predicated region
    $region22: #{tpu_custom_call.1} parent=1 // pred_check
      _
    $region23: #{tpu_custom_call.1} parent=1 // pred_check_branch
      %48 = sbr.rel (0) target = $region25
    $region24: #{tpu_custom_call.1} parent=1 // pred_region
      _
    $region25: #{tpu_custom_call.1} parent=1 // pred_fallthru
      _
    // Predicated region
    $region26: #{tpu_custom_call.1} parent=1 // pred_check
      _
    $region27: #{tpu_custom_call.1} parent=1 // pred_check_branch
      %50 = sbr.rel (0) target = $region29
    $region28: #{tpu_custom_call.1} parent=1 // pred_region
      _
    $region29: #{tpu_custom_call.1} parent=1 // pred_fallthru
      _
    // Predicated region
    $region30: #{tpu_custom_call.1} parent=1 // pred_check
      _
    $region31: #{tpu_custom_call.1} parent=1 // pred_check_branch
      %52 = sbr.rel (0) target = $region33
    $region32: #{tpu_custom_call.1} parent=1 // pred_region
      _
    $region33: #{tpu_custom_call.1} parent=1 // pred_fallthru
      _
    // Predicated region
    $region34: #{tpu_custom_call.1} parent=1 // pred_check
      _
    $region35: #{tpu_custom_call.1} parent=1 // pred_check_branch
      %54 = sbr.rel (0) target = $region37
    $region36: #{tpu_custom_call.1} parent=1 // pred_region
      _
    $region37: #{tpu_custom_call.1} parent=1 // pred_fallthru
      _
    // Predicated region
    $region38: #{tpu_custom_call.1} parent=1 // pred_check
      _
    $region39: #{tpu_custom_call.1} parent=1 // pred_check_branch
      %56 = sbr.rel (0) target = $region41
    $region40: #{tpu_custom_call.1} parent=1 // pred_region
      _
    $region41: #{tpu_custom_call.1} parent=1 // pred_fallthru
      _
    // Predicated region
    $region42: #{tpu_custom_call.1} parent=1 // pred_check
      _
    $region43: #{tpu_custom_call.1} parent=1 // pred_check_branch
      %58 = sbr.rel (0) target = $region45
    $region44: #{tpu_custom_call.1} parent=1 // pred_region
      _
    $region45: #{tpu_custom_call.1} parent=1 // pred_fallthru
      _
    // Predicated region
    $region46: #{tpu_custom_call.1} parent=1 // pred_check
      _
    $region47: #{tpu_custom_call.1} parent=1 // pred_check_branch
      %60 = sbr.rel (0) target = $region49
    $region48: #{tpu_custom_call.1} parent=1 // pred_region
      _
    $region49: #{tpu_custom_call.1} parent=1 // pred_fallthru
      _
    // Predicated region
    $region50: #{tpu_custom_call.1} parent=1 // pred_check
      _
    $region51: #{tpu_custom_call.1} parent=1 // pred_check_branch
      %62 = sbr.rel (0) target = $region53
    $region52: #{tpu_custom_call.1} parent=1 // pred_region
      _
    $region53: #{tpu_custom_call.1} parent=1 // pred_fallthru
      _
    // Predicated region
    $region54: #{tpu_custom_call.1} parent=1 // pred_check
      _
    $region55: #{tpu_custom_call.1} parent=1 // pred_check_branch
      %64 = sbr.rel (0) target = $region57
    $region56: #{tpu_custom_call.1} parent=1 // pred_region
      _
    $region57: #{tpu_custom_call.1} parent=1 // pred_fallthru
      _
    // Predicated region
    $region58: #{tpu_custom_call.1} parent=1 // pred_check
      _
    $region59: #{tpu_custom_call.1} parent=1 // pred_check_branch
      %66 = sbr.rel (0) target = $region61
    $region60: #{tpu_custom_call.1} parent=1 // pred_region
      _
    $region61: #{tpu_custom_call.1} parent=1 // pred_fallthru
      _
    // Predicated region
    $region62: #{tpu_custom_call.1} parent=1 // pred_check
      _
    $region63: #{tpu_custom_call.1} parent=1 // pred_check_branch
      %68 = sbr.rel (0) target = $region65
    $region64: #{tpu_custom_call.1} parent=1 // pred_region
      _
    $region65: #{tpu_custom_call.1} parent=1 // pred_fallthru
      _
    // Predicated region
    $region66: #{tpu_custom_call.1} parent=1 // pred_check
      _
    $region67: #{tpu_custom_call.1} parent=1 // pred_check_branch
      %70 = sbr.rel (0) target = $region69
    $region68: #{tpu_custom_call.1} parent=1 // pred_region
      _
    $region69: #{tpu_custom_call.1} parent=1 // pred_fallthru
      _
    // Predicated region
    $region70: #{tpu_custom_call.1} parent=1 // pred_check
      _
    $region71: #{tpu_custom_call.1} parent=1 // pred_check_branch
      %72 = sbr.rel (0) target = $region73
    $region72: #{tpu_custom_call.1} parent=1 // pred_region
      _
    $region73: #{tpu_custom_call.1} parent=1 // pred_fallthru
      _
    // Predicated region
    $region74: #{tpu_custom_call.1} parent=1 // pred_check
      _
    $region75: #{tpu_custom_call.1} parent=1 // pred_check_branch
      %74 = sbr.rel (0) target = $region77
    $region76: #{tpu_custom_call.1} parent=1 // pred_region
      _
    $region77: #{tpu_custom_call.1} parent=1 // pred_fallthru
      _
    // Predicated region
    $region78: #{tpu_custom_call.1} parent=1 // pred_check
      _
    $region79: #{tpu_custom_call.1} parent=1 // pred_check_branch
      %76 = sbr.rel (0) target = $region81
    $region80: #{tpu_custom_call.1} parent=1 // pred_region
      _
    $region81: #{tpu_custom_call.1} parent=1 // pred_fallthru
      _
    // Predicated region
    $region82: #{tpu_custom_call.1} parent=1 // pred_check
      _
    $region83: #{tpu_custom_call.1} parent=1 // pred_check_branch
      %78 = sbr.rel (0) target = $region85
    $region84: #{tpu_custom_call.1} parent=1 // pred_region
      _
    $region85: #{tpu_custom_call.1} parent=1 // pred_fallthru
      _
    // Predicated region
    $region86: #{tpu_custom_call.1} parent=1 // pred_check
      _
    $region87: #{tpu_custom_call.1} parent=1 // pred_check_branch
      %80 = sbr.rel (0) target = $region89
    $region88: #{tpu_custom_call.1} parent=1 // pred_region
      _
    $region89: #{tpu_custom_call.1} parent=1 // pred_fallthru
      _
    // Predicated region
    $region90: #{tpu_custom_call.1} parent=1 // pred_check
      _
    $region91: #{tpu_custom_call.1} parent=1 // pred_check_branch
      %82 = sbr.rel (0) target = $region93
    $region92: #{tpu_custom_call.1} parent=1 // pred_region
      _
    $region93: #{tpu_custom_call.1} parent=1 // pred_fallthru
      _
    // Predicated region
    $region94: #{tpu_custom_call.1} parent=1 // pred_check
      _
    $region95: #{tpu_custom_call.1} parent=1 // pred_check_branch
      %84 = sbr.rel (0) target = $region97
    $region96: #{tpu_custom_call.1} parent=1 // pred_region
      _
    $region97: #{tpu_custom_call.1} parent=1 // pred_fallthru
      _
    // Predicated region
    $region98: #{tpu_custom_call.1} parent=1 // pred_check
      _
    $region99: #{tpu_custom_call.1} parent=1 // pred_check_branch
      %86 = sbr.rel (0) target = $region101
    $region100: #{tpu_custom_call.1} parent=1 // pred_region
      _
    $region101: #{tpu_custom_call.1} parent=1 // pred_fallthru
      _
    // Predicated region
    $region102: #{tpu_custom_call.1} parent=1 // pred_check
      _
    $region103: #{tpu_custom_call.1} parent=1 // pred_check_branch
      %88 = sbr.rel (0) target = $region105
    $region104: #{tpu_custom_call.1} parent=1 // pred_region
      _
    $region105: #{tpu_custom_call.1} parent=1 // pred_fallthru
      _
    // Predicated region
    $region106: #{tpu_custom_call.1} parent=1 // pred_check
      _
    $region107: #{tpu_custom_call.1} parent=1 // pred_check_branch
      %90 = sbr.rel (0) target = $region109
    $region108: #{tpu_custom_call.1} parent=1 // pred_region
      _
    $region109: #{tpu_custom_call.1} parent=1 // pred_fallthru
      _
    %v91 = vld [vmem:[%s1] sm:$0xff]
    %v92 = vld [vmem:[%s1 + $0x8] sm:$0xff]
    %v93 = vld [vmem:[%s1 + $0x10] sm:$0xff]
    %v94 = vld [vmem:[%s1 + $0x18] sm:$0xff]
    %v95 = vld [vmem:[%s1 + $0x20] sm:$0xff]
    %v96 = vld [vmem:[%s1 + $0x28] sm:$0xff]
    %v97 = vld [vmem:[%s1 + $0x30] sm:$0xff]
    %v98 = vld [vmem:[%s1 + $0x38] sm:$0xff]
    %v99 = vld [vmem:[%s1 + $0x40] sm:$0xff]
    %v100 = vld [vmem:[%s1 + $0x48] sm:$0xff]
    %v101 = vld [vmem:[%s1 + $0x50] sm:$0xff]
    %v102 = vld [vmem:[%s1 + $0x58] sm:$0xff]
    %v103 = vld [vmem:[%s1 + $0x60] sm:$0xff]
    %v104 = vld [vmem:[%s1 + $0x68] sm:$0xff]
    %v105 = vld [vmem:[%s1 + $0x70] sm:$0xff]
    %v106 = vld [vmem:[%s1 + $0x78] sm:$0xff]
    %vm107 = vcmask 261120
    %v109 = vsel %vm107, %v91, 0
    %v112 = vsel %vm107, %v92, 0
    %v115 = vsel %vm107, %v93, 0
    %v118 = vsel %vm107, %v94, 0
    %v121 = vsel %vm107, %v95, 0
    %v124 = vsel %vm107, %v96, 0
    %v127 = vsel %vm107, %v97, 0
    %v130 = vsel %vm107, %v98, 0
    %v133 = vsel %vm107, %v99, 0
    %v136 = vsel %vm107, %v100, 0
    %v139 = vsel %vm107, %v101, 0
    %v142 = vsel %vm107, %v102, 0
    %v145 = vsel %vm107, %v103, 0
    %v148 = vsel %vm107, %v104, 0
    %v151 = vsel %vm107, %v105, 0
    %v154 = vsel %vm107, %v106, 0
    %156 = vmatprep.subr.mxu0 0.0
    %157 = vmatpush1.xpose.msra.mxu0 %v154
    %158 = vmatprep.subr.mxu0 0.0
    %159 = vmatpush1.xpose.msra.mxu0 %v151
    %160 = vmatprep.subr.mxu0 0.0
    %161 = vmatpush1.xpose.msra.mxu0 %v148
    %162 = vmatprep.subr.mxu0 0.0
    %163 = vmatpush1.xpose.msra.mxu0 %v145
    %164 = vmatprep.subr.mxu0 0.0
    %165 = vmatpush1.xpose.msra.mxu0 %v142
    %166 = vmatprep.subr.mxu0 0.0
    %167 = vmatpush1.xpose.msra.mxu0 %v139
    %168 = vmatprep.subr.mxu0 0.0
    %169 = vmatpush1.xpose.msra.mxu0 %v136
    %170 = vmatprep.subr.mxu0 0.0
    %171 = vmatpush1.xpose.msra.mxu0 %v133
    %172 = vmatprep.subr.mxu0 0.0
    %173 = vmatpush1.xpose.msra.mxu0 %v130
    %174 = vmatprep.subr.mxu0 0.0
    %175 = vmatpush1.xpose.msra.mxu0 %v127
    %176 = vmatprep.subr.mxu0 0.0
    %177 = vmatpush1.xpose.msra.mxu0 %v124
    %178 = vmatprep.subr.mxu0 0.0
    %179 = vmatpush1.xpose.msra.mxu0 %v121
    %180 = vmatprep.subr.mxu0 0.0
    %181 = vmatpush1.xpose.msra.mxu0 %v118
    %182 = vmatprep.subr.mxu0 0.0
    %183 = vmatpush1.xpose.msra.mxu0 %v115
    %184 = vmatprep.subr.mxu0 0.0
    %185 = vmatpush1.xpose.msra.mxu0 %v112
    %186 = vmatprep.subr.mxu0 0.0
    %187 = vmatpush1.xpose.msra.mxu0 %v109
    %188 = vmatprep.subr.mxu0 0.0
    %189 = vmatpush2.xpose.msra.mxu0 0.0
    %190 = vmatprep.subr.mxu0 0.0
    %191 = vmatpush2.xpose.msra.mxu0 0.0
    %192 = vmatprep.subr.mxu0 0.0
    %193 = vmatpush2.xpose.msra.mxu0 0.0
    %194 = vmatprep.subr.mxu0 0.0
    %195 = vmatpush2.xpose.msra.mxu0 0.0
    %196 = vmatprep.subr.mxu0 0.0
    %197 = vmatpush2.xpose.msra.mxu0 0.0
    %198 = vmatprep.subr.mxu0 0.0
    %199 = vmatpush2.xpose.msra.mxu0 0.0
    %200 = vmatprep.subr.mxu0 0.0
    %201 = vmatpush2.xpose.msra.mxu0 0.0
    %202 = vmatprep.subr.mxu0 0.0
    %203 = vmatpush2.xpose.msra.mxu0 0.0
    %204 = vmatprep.subr.mxu0 0.0
    %205 = vmatpush2.xpose.msra.mxu0 0.0
    %206 = vmatprep.subr.mxu0 0.0
    %207 = vmatpush2.xpose.msra.mxu0 0.0
    %208 = vmatprep.subr.mxu0 0.0
    %209 = vmatpush2.xpose.msra.mxu0 0.0
    %210 = vmatprep.subr.mxu0 0.0
    %211 = vmatpush2.xpose.msra.mxu0 0.0
    %212 = vmatprep.subr.mxu0 0.0
    %213 = vmatpush2.xpose.msra.mxu0 0.0
    %214 = vmatprep.subr.mxu0 0.0
    %215 = vmatpush2.xpose.msra.mxu0 0.0
    %216 = vmatprep.subr.mxu0 0.0
    %217 = vmatpush2.xpose.msra.mxu0 0.0
    %218 = vmatprep.subr.mxu0 0.0
    %219 = vmatpush2.xpose.msra.mxu0 0.0
    %220 = vmatprep.mubr.f32.mxu0 0.0
    %221 = vmatmul.mubr.f32.gmra.mxu0 %v109
    %v222 = vpop.f32.mrf.mxu0
    %v223 = vadd.f32 0.0, %v222
    %v224 = vpop.f32.mrf.mxu0
    %225 = vmatprep.mubr.f32.mxu0 0.0
    %226 = vmatmul.mubr.f32.gmra.mxu0 %v112
    %v227 = vpop.f32.mrf.mxu0
    %v228 = vadd.f32 0.0, %v227
    %v229 = vpop.f32.mrf.mxu0
    %230 = vmatprep.mubr.f32.mxu0 0.0
    %231 = vmatmul.mubr.f32.gmra.mxu0 %v115
    %v232 = vpop.f32.mrf.mxu0
    %v233 = vadd.f32 0.0, %v232
    %v234 = vpop.f32.mrf.mxu0
    %235 = vmatprep.mubr.f32.mxu0 0.0
    %236 = vmatmul.mubr.f32.gmra.mxu0 %v118
    %v237 = vpop.f32.mrf.mxu0
    %v238 = vadd.f32 0.0, %v237
    %v239 = vpop.f32.mrf.mxu0
    %240 = vmatprep.mubr.f32.mxu0 0.0
    %241 = vmatmul.mubr.f32.gmra.mxu0 %v121
    %v242 = vpop.f32.mrf.mxu0
    %v243 = vadd.f32 0.0, %v242
    %v244 = vpop.f32.mrf.mxu0
    %245 = vmatprep.mubr.f32.mxu0 0.0
    %246 = vmatmul.mubr.f32.gmra.mxu0 %v124
    %v247 = vpop.f32.mrf.mxu0
    %v248 = vadd.f32 0.0, %v247
    %v249 = vpop.f32.mrf.mxu0
    %250 = vmatprep.mubr.f32.mxu0 0.0
    %251 = vmatmul.mubr.f32.gmra.mxu0 %v127
    %v252 = vpop.f32.mrf.mxu0
    %v253 = vadd.f32 0.0, %v252
    %v254 = vpop.f32.mrf.mxu0
    %255 = vmatprep.mubr.f32.mxu0 0.0
    %256 = vmatmul.mubr.f32.gmra.mxu0 %v130
    %v257 = vpop.f32.mrf.mxu0
    %v258 = vadd.f32 0.0, %v257
    %v259 = vpop.f32.mrf.mxu0
    %260 = vmatprep.mubr.f32.mxu0 0.0
    %261 = vmatmul.mubr.f32.gmra.mxu0 %v133
    %v262 = vpop.f32.mrf.mxu0
    %v263 = vadd.f32 0.0, %v262
    %v264 = vpop.f32.mrf.mxu0
    %265 = vmatprep.mubr.f32.mxu0 0.0
    %266 = vmatmul.mubr.f32.gmra.mxu0 %v136
    %v267 = vpop.f32.mrf.mxu0
    %v268 = vadd.f32 0.0, %v267
    %v269 = vpop.f32.mrf.mxu0
    %270 = vmatprep.mubr.f32.mxu0 0.0
    %271 = vmatmul.mubr.f32.gmra.mxu0 %v139
    %v272 = vpop.f32.mrf.mxu0
    %v273 = vadd.f32 0.0, %v272
    %v274 = vpop.f32.mrf.mxu0
    %275 = vmatprep.mubr.f32.mxu0 0.0
    %276 = vmatmul.mubr.f32.gmra.mxu0 %v142
    %v277 = vpop.f32.mrf.mxu0
    %v278 = vadd.f32 0.0, %v277
    %v279 = vpop.f32.mrf.mxu0
    %280 = vmatprep.mubr.f32.mxu0 0.0
    %281 = vmatmul.mubr.f32.gmra.mxu0 %v145
    %v282 = vpop.f32.mrf.mxu0
    %v283 = vadd.f32 0.0, %v282
    %v284 = vpop.f32.mrf.mxu0
    %285 = vmatprep.mubr.f32.mxu0 0.0
    %286 = vmatmul.mubr.f32.gmra.mxu0 %v148
    %v287 = vpop.f32.mrf.mxu0
    %v288 = vadd.f32 0.0, %v287
    %v289 = vpop.f32.mrf.mxu0
    %290 = vmatprep.mubr.f32.mxu0 0.0
    %291 = vmatmul.mubr.f32.gmra.mxu0 %v151
    %v292 = vpop.f32.mrf.mxu0
    %v293 = vadd.f32 0.0, %v292
    %v294 = vpop.f32.mrf.mxu0
    %295 = vmatprep.mubr.f32.mxu0 0.0
    %296 = vmatmul.mubr.f32.gmra.mxu0 %v154
    %v297 = vpop.f32.mrf.mxu0
    %v298 = vadd.f32 0.0, %v297
    %v299 = vpop.f32.mrf.mxu0
    %300 = vdwg.mxu0
    %v301 = vld [vmem:[%s3] sm:$0x1]
    %v302 = vld [vmem:[%s4] sm:$0x1]
    %303 = vadd.xlane.f32.xlu0 %v223
    %v304 = vpop.xlane.xlu0 %303
    %305 = vadd.xlane.f32.xlu0 %v228
    %v306 = vpop.xlane.xlu0 %305
    %307 = vadd.xlane.f32.xlu0 %v233
    %v308 = vpop.xlane.xlu0 %307
    %309 = vadd.xlane.f32.xlu0 %v238
    %v310 = vpop.xlane.xlu0 %309
    %311 = vadd.xlane.f32.xlu0 %v243
    %v312 = vpop.xlane.xlu0 %311
    %313 = vadd.xlane.f32.xlu0 %v248
    %v314 = vpop.xlane.xlu0 %313
    %315 = vadd.xlane.f32.xlu0 %v253
    %v316 = vpop.xlane.xlu0 %315
    %317 = vadd.xlane.f32.xlu0 %v258
    %v318 = vpop.xlane.xlu0 %317
    %319 = vadd.xlane.f32.xlu0 %v263
    %v320 = vpop.xlane.xlu0 %319
    %321 = vadd.xlane.f32.xlu0 %v268
    %v322 = vpop.xlane.xlu0 %321
    %323 = vadd.xlane.f32.xlu0 %v273
    %v324 = vpop.xlane.xlu0 %323
    %325 = vadd.xlane.f32.xlu0 %v278
    %v326 = vpop.xlane.xlu0 %325
    %327 = vadd.xlane.f32.xlu0 %v283
    %v328 = vpop.xlane.xlu0 %327
    %329 = vadd.xlane.f32.xlu0 %v288
    %v330 = vpop.xlane.xlu0 %329
    %331 = vadd.xlane.f32.xlu0 %v293
    %v332 = vpop.xlane.xlu0 %331
    %333 = vadd.xlane.f32.xlu0 %v298
    %v334 = vpop.xlane.xlu0 %333
    %v335 = vrcp.pop 128.0
    %v336 = vmul.f32 %v304, %v335
    %v337 = vmul.f32 %v306, %v335
    %v338 = vmul.f32 %v308, %v335
    %v339 = vmul.f32 %v310, %v335
    %v340 = vmul.f32 %v312, %v335
    %v341 = vmul.f32 %v314, %v335
    %v342 = vmul.f32 %v316, %v335
    %v343 = vmul.f32 %v318, %v335
    %v344 = vmul.f32 %v320, %v335
    %v345 = vmul.f32 %v322, %v335
    %v346 = vmul.f32 %v324, %v335
    %v347 = vmul.f32 %v326, %v335
    %v348 = vmul.f32 %v328, %v335
    %v349 = vmul.f32 %v330, %v335
    %v350 = vmul.f32 %v332, %v335
    %v351 = vmul.f32 %v334, %v335
    %v352 = vsub.f32 %v223, %v336
    %v353 = vsub.f32 %v228, %v337
    %v354 = vsub.f32 %v233, %v338
    %v355 = vsub.f32 %v238, %v339
    %v356 = vsub.f32 %v243, %v340
    %v357 = vsub.f32 %v248, %v341
    %v358 = vsub.f32 %v253, %v342
    %v359 = vsub.f32 %v258, %v343
    %v360 = vsub.f32 %v263, %v344
    %v361 = vsub.f32 %v268, %v345
    %v362 = vsub.f32 %v273, %v346
    %v363 = vsub.f32 %v278, %v347
    %v364 = vsub.f32 %v283, %v348
    %v365 = vsub.f32 %v288, %v349
    %v366 = vsub.f32 %v293, %v350
    %v367 = vsub.f32 %v298, %v351
    %v368 = vmul.f32 %v352, %v352
    %v369 = vmul.f32 %v353, %v353
    %v370 = vmul.f32 %v354, %v354
    %v371 = vmul.f32 %v355, %v355
    %v372 = vmul.f32 %v356, %v356
    %v373 = vmul.f32 %v357, %v357
    %v374 = vmul.f32 %v358, %v358
    %v375 = vmul.f32 %v359, %v359
    %v376 = vmul.f32 %v360, %v360
    %v377 = vmul.f32 %v361, %v361
    %v378 = vmul.f32 %v362, %v362
    %v379 = vmul.f32 %v363, %v363
    %v380 = vmul.f32 %v364, %v364
    %v381 = vmul.f32 %v365, %v365
    %v382 = vmul.f32 %v366, %v366
    %v383 = vmul.f32 %v367, %v367
    %384 = vadd.xlane.f32.xlu0 %v368
    %v385 = vpop.xlane.xlu0 %384
    %386 = vadd.xlane.f32.xlu0 %v369
    %v387 = vpop.xlane.xlu0 %386
    %388 = vadd.xlane.f32.xlu0 %v370
    %v389 = vpop.xlane.xlu0 %388
    %390 = vadd.xlane.f32.xlu0 %v371
    %v391 = vpop.xlane.xlu0 %390
    %392 = vadd.xlane.f32.xlu0 %v372
    %v393 = vpop.xlane.xlu0 %392
    %394 = vadd.xlane.f32.xlu0 %v373
    %v395 = vpop.xlane.xlu0 %394
    %396 = vadd.xlane.f32.xlu0 %v374
    %v397 = vpop.xlane.xlu0 %396
    %398 = vadd.xlane.f32.xlu0 %v375
    %v399 = vpop.xlane.xlu0 %398
    %400 = vadd.xlane.f32.xlu0 %v376
    %v401 = vpop.xlane.xlu0 %400
    %402 = vadd.xlane.f32.xlu0 %v377
    %v403 = vpop.xlane.xlu0 %402
    %404 = vadd.xlane.f32.xlu0 %v378
    %v405 = vpop.xlane.xlu0 %404
    %406 = vadd.xlane.f32.xlu0 %v379
    %v407 = vpop.xlane.xlu0 %406
    %408 = vadd.xlane.f32.xlu0 %v380
    %v409 = vpop.xlane.xlu0 %408
    %410 = vadd.xlane.f32.xlu0 %v381
    %v411 = vpop.xlane.xlu0 %410
    %412 = vadd.xlane.f32.xlu0 %v382
    %v413 = vpop.xlane.xlu0 %412
    %414 = vadd.xlane.f32.xlu0 %v383
    %v415 = vpop.xlane.xlu0 %414
    %v416 = vmul.f32 %v385, %v335
    %v417 = vmul.f32 %v387, %v335
    %v418 = vmul.f32 %v389, %v335
    %v419 = vmul.f32 %v391, %v335
    %v420 = vmul.f32 %v393, %v335
    %v421 = vmul.f32 %v395, %v335
    %v422 = vmul.f32 %v397, %v335
    %v423 = vmul.f32 %v399, %v335
    %v424 = vmul.f32 %v401, %v335
    %v425 = vmul.f32 %v403, %v335
    %v426 = vmul.f32 %v405, %v335
    %v427 = vmul.f32 %v407, %v335
    %v428 = vmul.f32 %v409, %v335
    %v429 = vmul.f32 %v411, %v335
    %v430 = vmul.f32 %v413, %v335
    %v431 = vmul.f32 %v415, %v335
    %v432 = vadd.f32 %v416, 1e-05
    %v433 = vadd.f32 %v417, 1e-05
    %v434 = vadd.f32 %v418, 1e-05
    %v435 = vadd.f32 %v419, 1e-05
    %v436 = vadd.f32 %v420, 1e-05
    %v437 = vadd.f32 %v421, 1e-05
    %v438 = vadd.f32 %v422, 1e-05
    %v439 = vadd.f32 %v423, 1e-05
    %v440 = vadd.f32 %v424, 1e-05
    %v441 = vadd.f32 %v425, 1e-05
    %v442 = vadd.f32 %v426, 1e-05
    %v443 = vadd.f32 %v427, 1e-05
    %v444 = vadd.f32 %v428, 1e-05
    %v445 = vadd.f32 %v429, 1e-05
    %v446 = vadd.f32 %v430, 1e-05
    %v447 = vadd.f32 %v431, 1e-05
    %v448 = vrsqrt.pop %v432
    %v449 = vrsqrt.pop %v433
    %v450 = vrsqrt.pop %v434
    %v451 = vrsqrt.pop %v435
    %v452 = vrsqrt.pop %v436
    %v453 = vrsqrt.pop %v437
    %v454 = vrsqrt.pop %v438
    %v455 = vrsqrt.pop %v439
    %v456 = vrsqrt.pop %v440
    %v457 = vrsqrt.pop %v441
    %v458 = vrsqrt.pop %v442
    %v459 = vrsqrt.pop %v443
    %v460 = vrsqrt.pop %v444
    %v461 = vrsqrt.pop %v445
    %v462 = vrsqrt.pop %v446
    %v463 = vrsqrt.pop %v447
    %v464 = vmul.f32 %v352, %v448
    %v465 = vmul.f32 %v353, %v449
    %v466 = vmul.f32 %v354, %v450
    %v467 = vmul.f32 %v355, %v451
    %v468 = vmul.f32 %v356, %v452
    %v469 = vmul.f32 %v357, %v453
    %v470 = vmul.f32 %v358, %v454
    %v471 = vmul.f32 %v359, %v455
    %v472 = vmul.f32 %v360, %v456
    %v473 = vmul.f32 %v361, %v457
    %v474 = vmul.f32 %v362, %v458
    %v475 = vmul.f32 %v363, %v459
    %v476 = vmul.f32 %v364, %v460
    %v477 = vmul.f32 %v365, %v461
    %v478 = vmul.f32 %v366, %v462
    %v479 = vmul.f32 %v367, %v463
    %v481 = vlaneseq
    %v482 = vshrl.u32 %v481, 7
    %v483 = vsub.s32 0, %v482
    %v484 = vrot.slane %v301, %v483
    %v486 = vmul.f32 %v464, %v484
    %v487 = vmul.f32 %v465, %v484
    %v488 = vmul.f32 %v466, %v484
    %v489 = vmul.f32 %v467, %v484
    %v490 = vmul.f32 %v468, %v484
    %v491 = vmul.f32 %v469, %v484
    %v492 = vmul.f32 %v470, %v484
    %v493 = vmul.f32 %v471, %v484
    %v494 = vmul.f32 %v472, %v484
    %v495 = vmul.f32 %v473, %v484
    %v496 = vmul.f32 %v474, %v484
    %v497 = vmul.f32 %v475, %v484
    %v498 = vmul.f32 %v476, %v484
    %v499 = vmul.f32 %v477, %v484
    %v500 = vmul.f32 %v478, %v484
    %v501 = vmul.f32 %v479, %v484
    %v503 = vlaneseq
    %v504 = vshrl.u32 %v503, 7
    %v505 = vsub.s32 0, %v504
    %v506 = vrot.slane %v302, %v505
    %v508 = vadd.f32 %v486, %v506
    %v509 = vadd.f32 %v487, %v506
    %v510 = vadd.f32 %v488, %v506
    %v511 = vadd.f32 %v489, %v506
    %v512 = vadd.f32 %v490, %v506
    %v513 = vadd.f32 %v491, %v506
    %v514 = vadd.f32 %v492, %v506
    %v515 = vadd.f32 %v493, %v506
    %v516 = vadd.f32 %v494, %v506
    %v517 = vadd.f32 %v495, %v506
    %v518 = vadd.f32 %v496, %v506
    %v519 = vadd.f32 %v497, %v506
    %v520 = vadd.f32 %v498, %v506
    %v521 = vadd.f32 %v499, %v506
    %v522 = vadd.f32 %v500, %v506
    %v523 = vadd.f32 %v501, %v506
    %v524 = vmax.f32 %v508, 0.0
    %v525 = vmax.f32 %v509, 0.0
    %v526 = vmax.f32 %v510, 0.0
    %v527 = vmax.f32 %v511, 0.0
    %v528 = vmax.f32 %v512, 0.0
    %v529 = vmax.f32 %v513, 0.0
    %v530 = vmax.f32 %v514, 0.0
    %v531 = vmax.f32 %v515, 0.0
    %v532 = vmax.f32 %v516, 0.0
    %v533 = vmax.f32 %v517, 0.0
    %v534 = vmax.f32 %v518, 0.0
    %v535 = vmax.f32 %v519, 0.0
    %v536 = vmax.f32 %v520, 0.0
    %v537 = vmax.f32 %v521, 0.0
    %v538 = vmax.f32 %v522, 0.0
    %v539 = vmax.f32 %v523, 0.0
    %540 = vmax.xlane.f32.xlu0 %v524
    %v541 = vpop.xlane.xlu0 %540
    %542 = vmax.xlane.f32.xlu0 %v525
    %v543 = vpop.xlane.xlu0 %542
    %544 = vmax.xlane.f32.xlu0 %v526
    %v545 = vpop.xlane.xlu0 %544
    %546 = vmax.xlane.f32.xlu0 %v527
    %v547 = vpop.xlane.xlu0 %546
    %548 = vmax.xlane.f32.xlu0 %v528
    %v549 = vpop.xlane.xlu0 %548
    %550 = vmax.xlane.f32.xlu0 %v529
    %v551 = vpop.xlane.xlu0 %550
    %552 = vmax.xlane.f32.xlu0 %v530
    %v553 = vpop.xlane.xlu0 %552
    %554 = vmax.xlane.f32.xlu0 %v531
    %v555 = vpop.xlane.xlu0 %554
    %556 = vmax.xlane.f32.xlu0 %v532
    %v557 = vpop.xlane.xlu0 %556
    %558 = vmax.xlane.f32.xlu0 %v533
    %v559 = vpop.xlane.xlu0 %558
    %560 = vmax.xlane.f32.xlu0 %v534
    %v561 = vpop.xlane.xlu0 %560
    %562 = vmax.xlane.f32.xlu0 %v535
    %v563 = vpop.xlane.xlu0 %562
    %564 = vmax.xlane.f32.xlu0 %v536
    %v565 = vpop.xlane.xlu0 %564
    %566 = vmax.xlane.f32.xlu0 %v537
    %v567 = vpop.xlane.xlu0 %566
    %568 = vmax.xlane.f32.xlu0 %v538
    %v569 = vpop.xlane.xlu0 %568
    %570 = vmax.xlane.f32.xlu0 %v539
    %v571 = vpop.xlane.xlu0 %570
    %v572 = vsub.f32 %v524, %v541
    %v573 = vsub.f32 %v525, %v543
    %v574 = vsub.f32 %v526, %v545
    %v575 = vsub.f32 %v527, %v547
    %v576 = vsub.f32 %v528, %v549
    %v577 = vsub.f32 %v529, %v551
    %v578 = vsub.f32 %v530, %v553
    %v579 = vsub.f32 %v531, %v555
    %v580 = vsub.f32 %v532, %v557
    %v581 = vsub.f32 %v533, %v559
    %v582 = vsub.f32 %v534, %v561
    %v583 = vsub.f32 %v535, %v563
    %v584 = vsub.f32 %v536, %v565
    %v585 = vsub.f32 %v537, %v567
    %v586 = vsub.f32 %v538, %v569
    %v587 = vsub.f32 %v539, %v571
    %v588 = vmul.f32 %v572, 1.442695
    %v589 = vpow.pop %v588
    %v590 = vmul.f32 %v573, 1.442695
    %v591 = vpow.pop %v590
    %v592 = vmul.f32 %v574, 1.442695
    %v593 = vpow.pop %v592
    %v594 = vmul.f32 %v575, 1.442695
    %v595 = vpow.pop %v594
    %v596 = vmul.f32 %v576, 1.442695
    %v597 = vpow.pop %v596
    %v598 = vmul.f32 %v577, 1.442695
    %v599 = vpow.pop %v598
    %v600 = vmul.f32 %v578, 1.442695
    %v601 = vpow.pop %v600
    %v602 = vmul.f32 %v579, 1.442695
    %v603 = vpow.pop %v602
    %v604 = vmul.f32 %v580, 1.442695
    %v605 = vpow.pop %v604
    %v606 = vmul.f32 %v581, 1.442695
    %v607 = vpow.pop %v606
    %v608 = vmul.f32 %v582, 1.442695
    %v609 = vpow.pop %v608
    %v610 = vmul.f32 %v583, 1.442695
    %v611 = vpow.pop %v610
    %v612 = vmul.f32 %v584, 1.442695
    %v613 = vpow.pop %v612
    %v614 = vmul.f32 %v585, 1.442695
    %v615 = vpow.pop %v614
    %v616 = vmul.f32 %v586, 1.442695
    %v617 = vpow.pop %v616
    %v618 = vmul.f32 %v587, 1.442695
    %v619 = vpow.pop %v618
    %620 = vadd.xlane.f32.xlu0 %v589
    %v621 = vpop.xlane.xlu0 %620
    %622 = vadd.xlane.f32.xlu0 %v591
    %v623 = vpop.xlane.xlu0 %622
    %624 = vadd.xlane.f32.xlu0 %v593
    %v625 = vpop.xlane.xlu0 %624
    %626 = vadd.xlane.f32.xlu0 %v595
    %v627 = vpop.xlane.xlu0 %626
    %628 = vadd.xlane.f32.xlu0 %v597
    %v629 = vpop.xlane.xlu0 %628
    %630 = vadd.xlane.f32.xlu0 %v599
    %v631 = vpop.xlane.xlu0 %630
    %632 = vadd.xlane.f32.xlu0 %v601
    %v633 = vpop.xlane.xlu0 %632
    %634 = vadd.xlane.f32.xlu0 %v603
    %v635 = vpop.xlane.xlu0 %634
    %636 = vadd.xlane.f32.xlu0 %v605
    %v637 = vpop.xlane.xlu0 %636
    %638 = vadd.xlane.f32.xlu0 %v607
    %v639 = vpop.xlane.xlu0 %638
    %640 = vadd.xlane.f32.xlu0 %v609
    %v641 = vpop.xlane.xlu0 %640
    %642 = vadd.xlane.f32.xlu0 %v611
    %v643 = vpop.xlane.xlu0 %642
    %644 = vadd.xlane.f32.xlu0 %v613
    %v645 = vpop.xlane.xlu0 %644
    %646 = vadd.xlane.f32.xlu0 %v615
    %v647 = vpop.xlane.xlu0 %646
    %648 = vadd.xlane.f32.xlu0 %v617
    %v649 = vpop.xlane.xlu0 %648
    %650 = vadd.xlane.f32.xlu0 %v619
    %v651 = vpop.xlane.xlu0 %650
    %v652 = vrcp.pop %v621
    %v653 = vrcp.pop %v623
    %v654 = vrcp.pop %v625
    %v655 = vrcp.pop %v627
    %v656 = vrcp.pop %v629
    %v657 = vrcp.pop %v631
    %v658 = vrcp.pop %v633
    %v659 = vrcp.pop %v635
    %v660 = vrcp.pop %v637
    %v661 = vrcp.pop %v639
    %v662 = vrcp.pop %v641
    %v663 = vrcp.pop %v643
    %v664 = vrcp.pop %v645
    %v665 = vrcp.pop %v647
    %v666 = vrcp.pop %v649
    %v667 = vrcp.pop %v651
    %v668 = vmul.f32 %v589, %v652
    %v669 = vmul.f32 %v591, %v653
    %v670 = vmul.f32 %v593, %v654
    %v671 = vmul.f32 %v595, %v655
    %v672 = vmul.f32 %v597, %v656
    %v673 = vmul.f32 %v599, %v657
    %v674 = vmul.f32 %v601, %v658
    %v675 = vmul.f32 %v603, %v659
    %v676 = vmul.f32 %v605, %v660
    %v677 = vmul.f32 %v607, %v661
    %v678 = vmul.f32 %v609, %v662
    %v679 = vmul.f32 %v611, %v663
    %v680 = vmul.f32 %v613, %v664
    %v681 = vmul.f32 %v615, %v665
    %v682 = vmul.f32 %v617, %v666
    %v683 = vmul.f32 %v619, %v667
    %684 = vst [vmem:[#allocation5] sm:$0xff] %v668
    %685 = vst [vmem:[#allocation5 + $0x8] sm:$0xff] %v669
    %686 = vst [vmem:[#allocation5 + $0x10] sm:$0xff] %v670
    %687 = vst [vmem:[#allocation5 + $0x18] sm:$0xff] %v671
    %688 = vst [vmem:[#allocation5 + $0x20] sm:$0xff] %v672
    %689 = vst [vmem:[#allocation5 + $0x28] sm:$0xff] %v673
    %690 = vst [vmem:[#allocation5 + $0x30] sm:$0xff] %v674
    %691 = vst [vmem:[#allocation5 + $0x38] sm:$0xff] %v675
    %692 = vst [vmem:[#allocation5 + $0x40] sm:$0xff] %v676
    %693 = vst [vmem:[#allocation5 + $0x48] sm:$0xff] %v677
    %694 = vst [vmem:[#allocation5 + $0x50] sm:$0xff] %v678
    %695 = vst [vmem:[#allocation5 + $0x58] sm:$0xff] %v679
    %696 = vst [vmem:[#allocation5 + $0x60] sm:$0xff] %v680
    %697 = vst [vmem:[#allocation5 + $0x68] sm:$0xff] %v681
    %698 = vst [vmem:[#allocation5 + $0x70] sm:$0xff] %v682
    %699 = vst [vmem:[#allocation5 + $0x78] sm:$0xff] %v683
    %700 = vst [vmem:[#allocation5 + $0x80] sm:$0xff] %v668
    %701 = vst [vmem:[#allocation5 + $0x88] sm:$0xff] %v669
    %702 = vst [vmem:[#allocation5 + $0x90] sm:$0xff] %v670
    %703 = vst [vmem:[#allocation5 + $0x98] sm:$0xff] %v671
    %704 = vst [vmem:[#allocation5 + $0xa0] sm:$0xff] %v672
    %705 = vst [vmem:[#allocation5 + $0xa8] sm:$0xff] %v673
    %706 = vst [vmem:[#allocation5 + $0xb0] sm:$0xff] %v674
    %707 = vst [vmem:[#allocation5 + $0xb8] sm:$0xff] %v675
    %708 = vst [vmem:[#allocation5 + $0xc0] sm:$0xff] %v676
    %709 = vst [vmem:[#allocation5 + $0xc8] sm:$0xff] %v677
    %710 = vst [vmem:[#allocation5 + $0xd0] sm:$0xff] %v678
    %711 = vst [vmem:[#allocation5 + $0xd8] sm:$0xff] %v679
    %712 = vst [vmem:[#allocation5 + $0xe0] sm:$0xff] %v680
    %713 = vst [vmem:[#allocation5 + $0xe8] sm:$0xff] %v681
    %714 = vst [vmem:[#allocation5 + $0xf0] sm:$0xff] %v682
    %715 = vst [vmem:[#allocation5 + $0xf8] sm:$0xff] %v683
    %v716 = vld [vmem:[%s2] sm:$0xff]
    %v717 = vld [vmem:[%s2 + $0x8] sm:$0xff]
    %v718 = vld [vmem:[%s2 + $0x10] sm:$0xff]
    %v719 = vld [vmem:[%s2 + $0x18] sm:$0xff]
    %v720 = vld [vmem:[%s2 + $0x20] sm:$0xff]
    %v721 = vld [vmem:[%s2 + $0x28] sm:$0xff]
    %v722 = vld [vmem:[%s2 + $0x30] sm:$0xff]
    %v723 = vld [vmem:[%s2 + $0x38] sm:$0xff]
    %v724 = vld [vmem:[%s2 + $0x40] sm:$0xff]
    %v725 = vld [vmem:[%s2 + $0x48] sm:$0xff]
    %v726 = vld [vmem:[%s2 + $0x50] sm:$0xff]
    %v727 = vld [vmem:[%s2 + $0x58] sm:$0xff]
    %v728 = vld [vmem:[%s2 + $0x60] sm:$0xff]
    %v729 = vld [vmem:[%s2 + $0x68] sm:$0xff]
    %v730 = vld [vmem:[%s2 + $0x70] sm:$0xff]
    %v731 = vld [vmem:[%s2 + $0x78] sm:$0xff]
    %v733 = vsel %vm107, %v716, 0
    %v736 = vsel %vm107, %v717, 0
    %v739 = vsel %vm107, %v718, 0
    %v742 = vsel %vm107, %v719, 0
    %v745 = vsel %vm107, %v720, 0
    %v748 = vsel %vm107, %v721, 0
    %v751 = vsel %vm107, %v722, 0
    %v754 = vsel %vm107, %v723, 0
    %v757 = vsel %vm107, %v724, 0
    %v760 = vsel %vm107, %v725, 0
    %v763 = vsel %vm107, %v726, 0
    %v766 = vsel %vm107, %v727, 0
    %v769 = vsel %vm107, %v728, 0
    %v772 = vsel %vm107, %v729, 0
    %v775 = vsel %vm107, %v730, 0
    %v778 = vsel %vm107, %v731, 0
    %780 = vmatprep.subr.mxu0 0.0
    %781 = vmatpush1.xpose.msra.mxu0 %v778
    %782 = vmatprep.subr.mxu0 0.0
    %783 = vmatpush1.xpose.msra.mxu0 %v775
    %784 = vmatprep.subr.mxu0 0.0
    %785 = vmatpush1.xpose.msra.mxu0 %v772
    %786 = vmatprep.subr.mxu0 0.0
    %787 = vmatpush1.xpose.msra.mxu0 %v769
    %788 = vmatprep.subr.mxu0 0.0
    %789 = vmatpush1.xpose.msra.mxu0 %v766
    %790 = vmatprep.subr.mxu0 0.0
    %791 = vmatpush1.xpose.msra.mxu0 %v763
    %792 = vmatprep.subr.mxu0 0.0
    %793 = vmatpush1.xpose.msra.mxu0 %v760
    %794 = vmatprep.subr.mxu0 0.0
    %795 = vmatpush1.xpose.msra.mxu0 %v757
    %796 = vmatprep.subr.mxu0 0.0
    %797 = vmatpush1.xpose.msra.mxu0 %v754
    %798 = vmatprep.subr.mxu0 0.0
    %799 = vmatpush1.xpose.msra.mxu0 %v751
    %800 = vmatprep.subr.mxu0 0.0
    %801 = vmatpush1.xpose.msra.mxu0 %v748
    %802 = vmatprep.subr.mxu0 0.0
    %803 = vmatpush1.xpose.msra.mxu0 %v745
    %804 = vmatprep.subr.mxu0 0.0
    %805 = vmatpush1.xpose.msra.mxu0 %v742
    %806 = vmatprep.subr.mxu0 0.0
    %807 = vmatpush1.xpose.msra.mxu0 %v739
    %808 = vmatprep.subr.mxu0 0.0
    %809 = vmatpush1.xpose.msra.mxu0 %v736
    %810 = vmatprep.subr.mxu0 0.0
    %811 = vmatpush1.xpose.msra.mxu0 %v733
    %812 = vmatprep.subr.mxu0 0.0
    %813 = vmatpush2.xpose.msra.mxu0 0.0
    %814 = vmatprep.subr.mxu0 0.0
    %815 = vmatpush2.xpose.msra.mxu0 0.0
    %816 = vmatprep.subr.mxu0 0.0
    %817 = vmatpush2.xpose.msra.mxu0 0.0
    %818 = vmatprep.subr.mxu0 0.0
    %819 = vmatpush2.xpose.msra.mxu0 0.0
    %820 = vmatprep.subr.mxu0 0.0
    %821 = vmatpush2.xpose.msra.mxu0 0.0
    %822 = vmatprep.subr.mxu0 0.0
    %823 = vmatpush2.xpose.msra.mxu0 0.0
    %824 = vmatprep.subr.mxu0 0.0
    %825 = vmatpush2.xpose.msra.mxu0 0.0
    %826 = vmatprep.subr.mxu0 0.0
    %827 = vmatpush2.xpose.msra.mxu0 0.0
    %828 = vmatprep.subr.mxu0 0.0
    %829 = vmatpush2.xpose.msra.mxu0 0.0
    %830 = vmatprep.subr.mxu0 0.0
    %831 = vmatpush2.xpose.msra.mxu0 0.0
    %832 = vmatprep.subr.mxu0 0.0
    %833 = vmatpush2.xpose.msra.mxu0 0.0
    %834 = vmatprep.subr.mxu0 0.0
    %835 = vmatpush2.xpose.msra.mxu0 0.0
    %836 = vmatprep.subr.mxu0 0.0
    %837 = vmatpush2.xpose.msra.mxu0 0.0
    %838 = vmatprep.subr.mxu0 0.0
    %839 = vmatpush2.xpose.msra.mxu0 0.0
    %840 = vmatprep.subr.mxu0 0.0
    %841 = vmatpush2.xpose.msra.mxu0 0.0
    %842 = vmatprep.subr.mxu0 0.0
    %843 = vmatpush2.xpose.msra.mxu0 0.0
    %844 = vmatprep.mubr.f32.mxu0 0.0
    %845 = vmatmul.mubr.f32.gmra.mxu0 %v733
    %v846 = vpop.f32.mrf.mxu0
    %v847 = vadd.f32 0.0, %v846
    %v848 = vpop.f32.mrf.mxu0
    %849 = vmatprep.mubr.f32.mxu0 0.0
    %850 = vmatmul.mubr.f32.gmra.mxu0 %v736
    %v851 = vpop.f32.mrf.mxu0
    %v852 = vadd.f32 0.0, %v851
    %v853 = vpop.f32.mrf.mxu0
    %854 = vmatprep.mubr.f32.mxu0 0.0
    %855 = vmatmul.mubr.f32.gmra.mxu0 %v739
    %v856 = vpop.f32.mrf.mxu0
    %v857 = vadd.f32 0.0, %v856
    %v858 = vpop.f32.mrf.mxu0
    %859 = vmatprep.mubr.f32.mxu0 0.0
    %860 = vmatmul.mubr.f32.gmra.mxu0 %v742
    %v861 = vpop.f32.mrf.mxu0
    %v862 = vadd.f32 0.0, %v861
    %v863 = vpop.f32.mrf.mxu0
    %864 = vmatprep.mubr.f32.mxu0 0.0
    %865 = vmatmul.mubr.f32.gmra.mxu0 %v745
    %v866 = vpop.f32.mrf.mxu0
    %v867 = vadd.f32 0.0, %v866
    %v868 = vpop.f32.mrf.mxu0
    %869 = vmatprep.mubr.f32.mxu0 0.0
    %870 = vmatmul.mubr.f32.gmra.mxu0 %v748
    %v871 = vpop.f32.mrf.mxu0
    %v872 = vadd.f32 0.0, %v871
    %v873 = vpop.f32.mrf.mxu0
    %874 = vmatprep.mubr.f32.mxu0 0.0
    %875 = vmatmul.mubr.f32.gmra.mxu0 %v751
    %v876 = vpop.f32.mrf.mxu0
    %v877 = vadd.f32 0.0, %v876
    %v878 = vpop.f32.mrf.mxu0
    %879 = vmatprep.mubr.f32.mxu0 0.0
    %880 = vmatmul.mubr.f32.gmra.mxu0 %v754
    %v881 = vpop.f32.mrf.mxu0
    %v882 = vadd.f32 0.0, %v881
    %v883 = vpop.f32.mrf.mxu0
    %884 = vmatprep.mubr.f32.mxu0 0.0
    %885 = vmatmul.mubr.f32.gmra.mxu0 %v757
    %v886 = vpop.f32.mrf.mxu0
    %v887 = vadd.f32 0.0, %v886
    %v888 = vpop.f32.mrf.mxu0
    %889 = vmatprep.mubr.f32.mxu0 0.0
    %890 = vmatmul.mubr.f32.gmra.mxu0 %v760
    %v891 = vpop.f32.mrf.mxu0
    %v892 = vadd.f32 0.0, %v891
    %v893 = vpop.f32.mrf.mxu0
    %894 = vmatprep.mubr.f32.mxu0 0.0
    %895 = vmatmul.mubr.f32.gmra.mxu0 %v763
    %v896 = vpop.f32.mrf.mxu0
    %v897 = vadd.f32 0.0, %v896
    %v898 = vpop.f32.mrf.mxu0
    %899 = vmatprep.mubr.f32.mxu0 0.0
    %900 = vmatmul.mubr.f32.gmra.mxu0 %v766
    %v901 = vpop.f32.mrf.mxu0
    %v902 = vadd.f32 0.0, %v901
    %v903 = vpop.f32.mrf.mxu0
    %904 = vmatprep.mubr.f32.mxu0 0.0
    %905 = vmatmul.mubr.f32.gmra.mxu0 %v769
    %v906 = vpop.f32.mrf.mxu0
    %v907 = vadd.f32 0.0, %v906
    %v908 = vpop.f32.mrf.mxu0
    %909 = vmatprep.mubr.f32.mxu0 0.0
    %910 = vmatmul.mubr.f32.gmra.mxu0 %v772
    %v911 = vpop.f32.mrf.mxu0
    %v912 = vadd.f32 0.0, %v911
    %v913 = vpop.f32.mrf.mxu0
    %914 = vmatprep.mubr.f32.mxu0 0.0
    %915 = vmatmul.mubr.f32.gmra.mxu0 %v775
    %v916 = vpop.f32.mrf.mxu0
    %v917 = vadd.f32 0.0, %v916
    %v918 = vpop.f32.mrf.mxu0
    %919 = vmatprep.mubr.f32.mxu0 0.0
    %920 = vmatmul.mubr.f32.gmra.mxu0 %v778
    %v921 = vpop.f32.mrf.mxu0
    %v922 = vadd.f32 0.0, %v921
    %v923 = vpop.f32.mrf.mxu0
    %924 = vdwg.mxu0
    %v925 = vld [vmem:[%s5] sm:$0x1]
    %v926 = vld [vmem:[%s6] sm:$0x1]
    %927 = vadd.xlane.f32.xlu0 %v847
    %v928 = vpop.xlane.xlu0 %927
    %929 = vadd.xlane.f32.xlu0 %v852
    %v930 = vpop.xlane.xlu0 %929
    %931 = vadd.xlane.f32.xlu0 %v857
    %v932 = vpop.xlane.xlu0 %931
    %933 = vadd.xlane.f32.xlu0 %v862
    %v934 = vpop.xlane.xlu0 %933
    %935 = vadd.xlane.f32.xlu0 %v867
    %v936 = vpop.xlane.xlu0 %935
    %937 = vadd.xlane.f32.xlu0 %v872
    %v938 = vpop.xlane.xlu0 %937
    %939 = vadd.xlane.f32.xlu0 %v877
    %v940 = vpop.xlane.xlu0 %939
    %941 = vadd.xlane.f32.xlu0 %v882
    %v942 = vpop.xlane.xlu0 %941
    %943 = vadd.xlane.f32.xlu0 %v887
    %v944 = vpop.xlane.xlu0 %943
    %945 = vadd.xlane.f32.xlu0 %v892
    %v946 = vpop.xlane.xlu0 %945
    %947 = vadd.xlane.f32.xlu0 %v897
    %v948 = vpop.xlane.xlu0 %947
    %949 = vadd.xlane.f32.xlu0 %v902
    %v950 = vpop.xlane.xlu0 %949
    %951 = vadd.xlane.f32.xlu0 %v907
    %v952 = vpop.xlane.xlu0 %951
    %953 = vadd.xlane.f32.xlu0 %v912
    %v954 = vpop.xlane.xlu0 %953
    %955 = vadd.xlane.f32.xlu0 %v917
    %v956 = vpop.xlane.xlu0 %955
    %957 = vadd.xlane.f32.xlu0 %v922
    %v958 = vpop.xlane.xlu0 %957
    %v959 = vmul.f32 %v928, %v335
    %v960 = vmul.f32 %v930, %v335
    %v961 = vmul.f32 %v932, %v335
    %v962 = vmul.f32 %v934, %v335
    %v963 = vmul.f32 %v936, %v335
    %v964 = vmul.f32 %v938, %v335
    %v965 = vmul.f32 %v940, %v335
    %v966 = vmul.f32 %v942, %v335
    %v967 = vmul.f32 %v944, %v335
    %v968 = vmul.f32 %v946, %v335
    %v969 = vmul.f32 %v948, %v335
    %v970 = vmul.f32 %v950, %v335
    %v971 = vmul.f32 %v952, %v335
    %v972 = vmul.f32 %v954, %v335
    %v973 = vmul.f32 %v956, %v335
    %v974 = vmul.f32 %v958, %v335
    %v975 = vsub.f32 %v847, %v959
    %v976 = vsub.f32 %v852, %v960
    %v977 = vsub.f32 %v857, %v961
    %v978 = vsub.f32 %v862, %v962
    %v979 = vsub.f32 %v867, %v963
    %v980 = vsub.f32 %v872, %v964
    %v981 = vsub.f32 %v877, %v965
    %v982 = vsub.f32 %v882, %v966
    %v983 = vsub.f32 %v887, %v967
    %v984 = vsub.f32 %v892, %v968
    %v985 = vsub.f32 %v897, %v969
    %v986 = vsub.f32 %v902, %v970
    %v987 = vsub.f32 %v907, %v971
    %v988 = vsub.f32 %v912, %v972
    %v989 = vsub.f32 %v917, %v973
    %v990 = vsub.f32 %v922, %v974
    %v991 = vmul.f32 %v975, %v975
    %v992 = vmul.f32 %v976, %v976
    %v993 = vmul.f32 %v977, %v977
    %v994 = vmul.f32 %v978, %v978
    %v995 = vmul.f32 %v979, %v979
    %v996 = vmul.f32 %v980, %v980
    %v997 = vmul.f32 %v981, %v981
    %v998 = vmul.f32 %v982, %v982
    %v999 = vmul.f32 %v983, %v983
    %v1000 = vmul.f32 %v984, %v984
    %v1001 = vmul.f32 %v985, %v985
    %v1002 = vmul.f32 %v986, %v986
    %v1003 = vmul.f32 %v987, %v987
    %v1004 = vmul.f32 %v988, %v988
    %v1005 = vmul.f32 %v989, %v989
    %v1006 = vmul.f32 %v990, %v990
    %1007 = vadd.xlane.f32.xlu0 %v991
    %v1008 = vpop.xlane.xlu0 %1007
    %1009 = vadd.xlane.f32.xlu0 %v992
    %v1010 = vpop.xlane.xlu0 %1009
    %1011 = vadd.xlane.f32.xlu0 %v993
    %v1012 = vpop.xlane.xlu0 %1011
    %1013 = vadd.xlane.f32.xlu0 %v994
    %v1014 = vpop.xlane.xlu0 %1013
    %1015 = vadd.xlane.f32.xlu0 %v995
    %v1016 = vpop.xlane.xlu0 %1015
    %1017 = vadd.xlane.f32.xlu0 %v996
    %v1018 = vpop.xlane.xlu0 %1017
    %1019 = vadd.xlane.f32.xlu0 %v997
    %v1020 = vpop.xlane.xlu0 %1019
    %1021 = vadd.xlane.f32.xlu0 %v998
    %v1022 = vpop.xlane.xlu0 %1021
    %1023 = vadd.xlane.f32.xlu0 %v999
    %v1024 = vpop.xlane.xlu0 %1023
    %1025 = vadd.xlane.f32.xlu0 %v1000
    %v1026 = vpop.xlane.xlu0 %1025
    %1027 = vadd.xlane.f32.xlu0 %v1001
    %v1028 = vpop.xlane.xlu0 %1027
    %1029 = vadd.xlane.f32.xlu0 %v1002
    %v1030 = vpop.xlane.xlu0 %1029
    %1031 = vadd.xlane.f32.xlu0 %v1003
    %v1032 = vpop.xlane.xlu0 %1031
    %1033 = vadd.xlane.f32.xlu0 %v1004
    %v1034 = vpop.xlane.xlu0 %1033
    %1035 = vadd.xlane.f32.xlu0 %v1005
    %v1036 = vpop.xlane.xlu0 %1035
    %1037 = vadd.xlane.f32.xlu0 %v1006
    %v1038 = vpop.xlane.xlu0 %1037
    %v1039 = vmul.f32 %v1008, %v335
    %v1040 = vmul.f32 %v1010, %v335
    %v1041 = vmul.f32 %v1012, %v335
    %v1042 = vmul.f32 %v1014, %v335
    %v1043 = vmul.f32 %v1016, %v335
    %v1044 = vmul.f32 %v1018, %v335
    %v1045 = vmul.f32 %v1020, %v335
    %v1046 = vmul.f32 %v1022, %v335
    %v1047 = vmul.f32 %v1024, %v335
    %v1048 = vmul.f32 %v1026, %v335
    %v1049 = vmul.f32 %v1028, %v335
    %v1050 = vmul.f32 %v1030, %v335
    %v1051 = vmul.f32 %v1032, %v335
    %v1052 = vmul.f32 %v1034, %v335
    %v1053 = vmul.f32 %v1036, %v335
    %v1054 = vmul.f32 %v1038, %v335
    %v1055 = vadd.f32 %v1039, 1e-05
    %v1056 = vadd.f32 %v1040, 1e-05
    %v1057 = vadd.f32 %v1041, 1e-05
    %v1058 = vadd.f32 %v1042, 1e-05
    %v1059 = vadd.f32 %v1043, 1e-05
    %v1060 = vadd.f32 %v1044, 1e-05
    %v1061 = vadd.f32 %v1045, 1e-05
    %v1062 = vadd.f32 %v1046, 1e-05
    %v1063 = vadd.f32 %v1047, 1e-05
    %v1064 = vadd.f32 %v1048, 1e-05
    %v1065 = vadd.f32 %v1049, 1e-05
    %v1066 = vadd.f32 %v1050, 1e-05
    %v1067 = vadd.f32 %v1051, 1e-05
    %v1068 = vadd.f32 %v1052, 1e-05
    %v1069 = vadd.f32 %v1053, 1e-05
    %v1070 = vadd.f32 %v1054, 1e-05
    %v1071 = vrsqrt.pop %v1055
    %v1072 = vrsqrt.pop %v1056
    %v1073 = vrsqrt.pop %v1057
    %v1074 = vrsqrt.pop %v1058
    %v1075 = vrsqrt.pop %v1059
    %v1076 = vrsqrt.pop %v1060
    %v1077 = vrsqrt.pop %v1061
    %v1078 = vrsqrt.pop %v1062
    %v1079 = vrsqrt.pop %v1063
    %v1080 = vrsqrt.pop %v1064
    %v1081 = vrsqrt.pop %v1065
    %v1082 = vrsqrt.pop %v1066
    %v1083 = vrsqrt.pop %v1067
    %v1084 = vrsqrt.pop %v1068
    %v1085 = vrsqrt.pop %v1069
    %v1086 = vrsqrt.pop %v1070
    %v1087 = vmul.f32 %v975, %v1071
    %v1088 = vmul.f32 %v976, %v1072
    %v1089 = vmul.f32 %v977, %v1073
    %v1090 = vmul.f32 %v978, %v1074
    %v1091 = vmul.f32 %v979, %v1075
    %v1092 = vmul.f32 %v980, %v1076
    %v1093 = vmul.f32 %v981, %v1077
    %v1094 = vmul.f32 %v982, %v1078
    %v1095 = vmul.f32 %v983, %v1079
    %v1096 = vmul.f32 %v984, %v1080
    %v1097 = vmul.f32 %v985, %v1081
    %v1098 = vmul.f32 %v986, %v1082
    %v1099 = vmul.f32 %v987, %v1083
    %v1100 = vmul.f32 %v988, %v1084
    %v1101 = vmul.f32 %v989, %v1085
    %v1102 = vmul.f32 %v990, %v1086
    %v1104 = vlaneseq
    %v1105 = vshrl.u32 %v1104, 7
    %v1106 = vsub.s32 0, %v1105
    %v1107 = vrot.slane %v925, %v1106
    %v1109 = vmul.f32 %v1087, %v1107
    %v1110 = vmul.f32 %v1088, %v1107
    %v1111 = vmul.f32 %v1089, %v1107
    %v1112 = vmul.f32 %v1090, %v1107
    %v1113 = vmul.f32 %v1091, %v1107
    %v1114 = vmul.f32 %v1092, %v1107
    %v1115 = vmul.f32 %v1093, %v1107
    %v1116 = vmul.f32 %v1094, %v1107
    %v1117 = vmul.f32 %v1095, %v1107
    %v1118 = vmul.f32 %v1096, %v1107
    %v1119 = vmul.f32 %v1097, %v1107
    %v1120 = vmul.f32 %v1098, %v1107
    %v1121 = vmul.f32 %v1099, %v1107
    %v1122 = vmul.f32 %v1100, %v1107
    %v1123 = vmul.f32 %v1101, %v1107
    %v1124 = vmul.f32 %v1102, %v1107
    %v1126 = vlaneseq
    %v1127 = vshrl.u32 %v1126, 7
    %v1128 = vsub.s32 0, %v1127
    %v1129 = vrot.slane %v926, %v1128
    %v1131 = vadd.f32 %v1109, %v1129
    %v1132 = vadd.f32 %v1110, %v1129
    %v1133 = vadd.f32 %v1111, %v1129
    %v1134 = vadd.f32 %v1112, %v1129
    %v1135 = vadd.f32 %v1113, %v1129
    %v1136 = vadd.f32 %v1114, %v1129
    %v1137 = vadd.f32 %v1115, %v1129
    %v1138 = vadd.f32 %v1116, %v1129
    %v1139 = vadd.f32 %v1117, %v1129
    %v1140 = vadd.f32 %v1118, %v1129
    %v1141 = vadd.f32 %v1119, %v1129
    %v1142 = vadd.f32 %v1120, %v1129
    %v1143 = vadd.f32 %v1121, %v1129
    %v1144 = vadd.f32 %v1122, %v1129
    %v1145 = vadd.f32 %v1123, %v1129
    %v1146 = vadd.f32 %v1124, %v1129
    %v1147 = vld [vmem:[%s0] sm:$0xff]
    %v1148 = vld [vmem:[%s0 + $0x8] sm:$0xff]
    %v1149 = vld [vmem:[%s0 + $0x10] sm:$0xff]
    %v1150 = vld [vmem:[%s0 + $0x18] sm:$0xff]
    %v1151 = vld [vmem:[%s0 + $0x20] sm:$0xff]
    %v1152 = vld [vmem:[%s0 + $0x28] sm:$0xff]
    %v1153 = vld [vmem:[%s0 + $0x30] sm:$0xff]
    %v1154 = vld [vmem:[%s0 + $0x38] sm:$0xff]
    %v1155 = vld [vmem:[%s0 + $0x40] sm:$0xff]
    %v1156 = vld [vmem:[%s0 + $0x48] sm:$0xff]
    %v1157 = vld [vmem:[%s0 + $0x50] sm:$0xff]
    %v1158 = vld [vmem:[%s0 + $0x58] sm:$0xff]
    %v1159 = vld [vmem:[%s0 + $0x60] sm:$0xff]
    %v1160 = vld [vmem:[%s0 + $0x68] sm:$0xff]
    %v1161 = vld [vmem:[%s0 + $0x70] sm:$0xff]
    %v1162 = vld [vmem:[%s0 + $0x78] sm:$0xff]
    %v1163 = vld [vmem:[%s0 + $0x80] sm:$0xff]
    %v1164 = vld [vmem:[%s0 + $0x88] sm:$0xff]
    %v1165 = vld [vmem:[%s0 + $0x90] sm:$0xff]
    %v1166 = vld [vmem:[%s0 + $0x98] sm:$0xff]
    %v1167 = vld [vmem:[%s0 + $0xa0] sm:$0xff]
    %v1168 = vld [vmem:[%s0 + $0xa8] sm:$0xff]
    %v1169 = vld [vmem:[%s0 + $0xb0] sm:$0xff]
    %v1170 = vld [vmem:[%s0 + $0xb8] sm:$0xff]
    %v1171 = vld [vmem:[%s0 + $0xc0] sm:$0xff]
    %v1172 = vld [vmem:[%s0 + $0xc8] sm:$0xff]
    %v1173 = vld [vmem:[%s0 + $0xd0] sm:$0xff]
    %v1174 = vld [vmem:[%s0 + $0xd8] sm:$0xff]
    %v1175 = vld [vmem:[%s0 + $0xe0] sm:$0xff]
    %v1176 = vld [vmem:[%s0 + $0xe8] sm:$0xff]
    %v1177 = vld [vmem:[%s0 + $0xf0] sm:$0xff]
    %v1178 = vld [vmem:[%s0 + $0xf8] sm:$0xff]
    %v1179 = vld [vmem:[%s7] sm:$0x1]
    %v1180 = vld [vmem:[%s8] sm:$0x1]
    %v1181 = vsel %vm107, %v1147, 0.0
    %1182 = vadd.xlane.f32.xlu0 %v1181
    %v1183 = vpop.xlane.xlu0 %1182
    %v1184 = vsel %vm107, %v1148, 0.0
    %1185 = vadd.xlane.f32.xlu0 %v1184
    %v1186 = vpop.xlane.xlu0 %1185
    %v1187 = vsel %vm107, %v1149, 0.0
    %1188 = vadd.xlane.f32.xlu0 %v1187
    %v1189 = vpop.xlane.xlu0 %1188
    %v1190 = vsel %vm107, %v1150, 0.0
    %1191 = vadd.xlane.f32.xlu0 %v1190
    %v1192 = vpop.xlane.xlu0 %1191
    %v1193 = vsel %vm107, %v1151, 0.0
    %1194 = vadd.xlane.f32.xlu0 %v1193
    %v1195 = vpop.xlane.xlu0 %1194
    %v1196 = vsel %vm107, %v1152, 0.0
    %1197 = vadd.xlane.f32.xlu0 %v1196
    %v1198 = vpop.xlane.xlu0 %1197
    %v1199 = vsel %vm107, %v1153, 0.0
    %1200 = vadd.xlane.f32.xlu0 %v1199
    %v1201 = vpop.xlane.xlu0 %1200
    %v1202 = vsel %vm107, %v1154, 0.0
    %1203 = vadd.xlane.f32.xlu0 %v1202
    %v1204 = vpop.xlane.xlu0 %1203
    %v1205 = vsel %vm107, %v1155, 0.0
    %1206 = vadd.xlane.f32.xlu0 %v1205
    %v1207 = vpop.xlane.xlu0 %1206
    %v1208 = vsel %vm107, %v1156, 0.0
    %1209 = vadd.xlane.f32.xlu0 %v1208
    %v1210 = vpop.xlane.xlu0 %1209
    %v1211 = vsel %vm107, %v1157, 0.0
    %1212 = vadd.xlane.f32.xlu0 %v1211
    %v1213 = vpop.xlane.xlu0 %1212
    %v1214 = vsel %vm107, %v1158, 0.0
    %1215 = vadd.xlane.f32.xlu0 %v1214
    %v1216 = vpop.xlane.xlu0 %1215
    %v1217 = vsel %vm107, %v1159, 0.0
    %1218 = vadd.xlane.f32.xlu0 %v1217
    %v1219 = vpop.xlane.xlu0 %1218
    %v1220 = vsel %vm107, %v1160, 0.0
    %1221 = vadd.xlane.f32.xlu0 %v1220
    %v1222 = vpop.xlane.xlu0 %1221
    %v1223 = vsel %vm107, %v1161, 0.0
    %1224 = vadd.xlane.f32.xlu0 %v1223
    %v1225 = vpop.xlane.xlu0 %1224
    %v1226 = vsel %vm107, %v1162, 0.0
    %1227 = vadd.xlane.f32.xlu0 %v1226
    %v1228 = vpop.xlane.xlu0 %1227
    %v1229 = vsel %vm107, %v1163, 0.0
    %1230 = vadd.xlane.f32.xlu0 %v1229
    %v1231 = vpop.xlane.xlu0 %1230
    %v1232 = vsel %vm107, %v1164, 0.0
    %1233 = vadd.xlane.f32.xlu0 %v1232
    %v1234 = vpop.xlane.xlu0 %1233
    %v1235 = vsel %vm107, %v1165, 0.0
    %1236 = vadd.xlane.f32.xlu0 %v1235
    %v1237 = vpop.xlane.xlu0 %1236
    %v1238 = vsel %vm107, %v1166, 0.0
    %1239 = vadd.xlane.f32.xlu0 %v1238
    %v1240 = vpop.xlane.xlu0 %1239
    %v1241 = vsel %vm107, %v1167, 0.0
    %1242 = vadd.xlane.f32.xlu0 %v1241
    %v1243 = vpop.xlane.xlu0 %1242
    %v1244 = vsel %vm107, %v1168, 0.0
    %1245 = vadd.xlane.f32.xlu0 %v1244
    %v1246 = vpop.xlane.xlu0 %1245
    %v1247 = vsel %vm107, %v1169, 0.0
    %1248 = vadd.xlane.f32.xlu0 %v1247
    %v1249 = vpop.xlane.xlu0 %1248
    %v1250 = vsel %vm107, %v1170, 0.0
    %1251 = vadd.xlane.f32.xlu0 %v1250
    %v1252 = vpop.xlane.xlu0 %1251
    %v1253 = vsel %vm107, %v1171, 0.0
    %1254 = vadd.xlane.f32.xlu0 %v1253
    %v1255 = vpop.xlane.xlu0 %1254
    %v1256 = vsel %vm107, %v1172, 0.0
    %1257 = vadd.xlane.f32.xlu0 %v1256
    %v1258 = vpop.xlane.xlu0 %1257
    %v1259 = vsel %vm107, %v1173, 0.0
    %1260 = vadd.xlane.f32.xlu0 %v1259
    %v1261 = vpop.xlane.xlu0 %1260
    %v1262 = vsel %vm107, %v1174, 0.0
    %1263 = vadd.xlane.f32.xlu0 %v1262
    %v1264 = vpop.xlane.xlu0 %1263
    %v1265 = vsel %vm107, %v1175, 0.0
    %1266 = vadd.xlane.f32.xlu0 %v1265
    %v1267 = vpop.xlane.xlu0 %1266
    %v1268 = vsel %vm107, %v1176, 0.0
    %1269 = vadd.xlane.f32.xlu0 %v1268
    %v1270 = vpop.xlane.xlu0 %1269
    %v1271 = vsel %vm107, %v1177, 0.0
    %1272 = vadd.xlane.f32.xlu0 %v1271
    %v1273 = vpop.xlane.xlu0 %1272
    %v1274 = vsel %vm107, %v1178, 0.0
    %1275 = vadd.xlane.f32.xlu0 %v1274
    %v1276 = vpop.xlane.xlu0 %1275
    %v1277 = vrcp.pop 32.0
    %v1278 = vmul.f32 %v1183, %v1277
    %v1279 = vmul.f32 %v1186, %v1277
    %v1280 = vmul.f32 %v1189, %v1277
    %v1281 = vmul.f32 %v1192, %v1277
    %v1282 = vmul.f32 %v1195, %v1277
    %v1283 = vmul.f32 %v1198, %v1277
    %v1284 = vmul.f32 %v1201, %v1277
    %v1285 = vmul.f32 %v1204, %v1277
    %v1286 = vmul.f32 %v1207, %v1277
    %v1287 = vmul.f32 %v1210, %v1277
    %v1288 = vmul.f32 %v1213, %v1277
    %v1289 = vmul.f32 %v1216, %v1277
    %v1290 = vmul.f32 %v1219, %v1277
    %v1291 = vmul.f32 %v1222, %v1277
    %v1292 = vmul.f32 %v1225, %v1277
    %v1293 = vmul.f32 %v1228, %v1277
    %v1294 = vmul.f32 %v1231, %v1277
    %v1295 = vmul.f32 %v1234, %v1277
    %v1296 = vmul.f32 %v1237, %v1277
    %v1297 = vmul.f32 %v1240, %v1277
    %v1298 = vmul.f32 %v1243, %v1277
    %v1299 = vmul.f32 %v1246, %v1277
    %v1300 = vmul.f32 %v1249, %v1277
    %v1301 = vmul.f32 %v1252, %v1277
    %v1302 = vmul.f32 %v1255, %v1277
    %v1303 = vmul.f32 %v1258, %v1277
    %v1304 = vmul.f32 %v1261, %v1277
    %v1305 = vmul.f32 %v1264, %v1277
    %v1306 = vmul.f32 %v1267, %v1277
    %v1307 = vmul.f32 %v1270, %v1277
    %v1308 = vmul.f32 %v1273, %v1277
    %v1309 = vmul.f32 %v1276, %v1277
    %v1310 = vsub.f32 %v1147, %v1278
    %v1311 = vsub.f32 %v1148, %v1279
    %v1312 = vsub.f32 %v1149, %v1280
    %v1313 = vsub.f32 %v1150, %v1281
    %v1314 = vsub.f32 %v1151, %v1282
    %v1315 = vsub.f32 %v1152, %v1283
    %v1316 = vsub.f32 %v1153, %v1284
    %v1317 = vsub.f32 %v1154, %v1285
    %v1318 = vsub.f32 %v1155, %v1286
    %v1319 = vsub.f32 %v1156, %v1287
    %v1320 = vsub.f32 %v1157, %v1288
    %v1321 = vsub.f32 %v1158, %v1289
    %v1322 = vsub.f32 %v1159, %v1290
    %v1323 = vsub.f32 %v1160, %v1291
    %v1324 = vsub.f32 %v1161, %v1292
    %v1325 = vsub.f32 %v1162, %v1293
    %v1326 = vsub.f32 %v1163, %v1294
    %v1327 = vsub.f32 %v1164, %v1295
    %v1328 = vsub.f32 %v1165, %v1296
    %v1329 = vsub.f32 %v1166, %v1297
    %v1330 = vsub.f32 %v1167, %v1298
    %v1331 = vsub.f32 %v1168, %v1299
    %v1332 = vsub.f32 %v1169, %v1300
    %v1333 = vsub.f32 %v1170, %v1301
    %v1334 = vsub.f32 %v1171, %v1302
    %v1335 = vsub.f32 %v1172, %v1303
    %v1336 = vsub.f32 %v1173, %v1304
    %v1337 = vsub.f32 %v1174, %v1305
    %v1338 = vsub.f32 %v1175, %v1306
    %v1339 = vsub.f32 %v1176, %v1307
    %v1340 = vsub.f32 %v1177, %v1308
    %v1341 = vsub.f32 %v1178, %v1309
    %v1342 = vmul.f32 %v1310, %v1310
    %v1343 = vmul.f32 %v1311, %v1311
    %v1344 = vmul.f32 %v1312, %v1312
    %v1345 = vmul.f32 %v1313, %v1313
    %v1346 = vmul.f32 %v1314, %v1314
    %v1347 = vmul.f32 %v1315, %v1315
    %v1348 = vmul.f32 %v1316, %v1316
    %v1349 = vmul.f32 %v1317, %v1317
    %v1350 = vmul.f32 %v1318, %v1318
    %v1351 = vmul.f32 %v1319, %v1319
    %v1352 = vmul.f32 %v1320, %v1320
    %v1353 = vmul.f32 %v1321, %v1321
    %v1354 = vmul.f32 %v1322, %v1322
    %v1355 = vmul.f32 %v1323, %v1323
    %v1356 = vmul.f32 %v1324, %v1324
    %v1357 = vmul.f32 %v1325, %v1325
    %v1358 = vmul.f32 %v1326, %v1326
    %v1359 = vmul.f32 %v1327, %v1327
    %v1360 = vmul.f32 %v1328, %v1328
    %v1361 = vmul.f32 %v1329, %v1329
    %v1362 = vmul.f32 %v1330, %v1330
    %v1363 = vmul.f32 %v1331, %v1331
    %v1364 = vmul.f32 %v1332, %v1332
    %v1365 = vmul.f32 %v1333, %v1333
    %v1366 = vmul.f32 %v1334, %v1334
    %v1367 = vmul.f32 %v1335, %v1335
    %v1368 = vmul.f32 %v1336, %v1336
    %v1369 = vmul.f32 %v1337, %v1337
    %v1370 = vmul.f32 %v1338, %v1338
    %v1371 = vmul.f32 %v1339, %v1339
    %v1372 = vmul.f32 %v1340, %v1340
    %v1373 = vmul.f32 %v1341, %v1341
    %v1374 = vsel %vm107, %v1342, 0.0
    %1375 = vadd.xlane.f32.xlu0 %v1374
    %v1376 = vpop.xlane.xlu0 %1375
    %v1377 = vsel %vm107, %v1343, 0.0
    %1378 = vadd.xlane.f32.xlu0 %v1377
    %v1379 = vpop.xlane.xlu0 %1378
    %v1380 = vsel %vm107, %v1344, 0.0
    %1381 = vadd.xlane.f32.xlu0 %v1380
    %v1382 = vpop.xlane.xlu0 %1381
    %v1383 = vsel %vm107, %v1345, 0.0
    %1384 = vadd.xlane.f32.xlu0 %v1383
    %v1385 = vpop.xlane.xlu0 %1384
    %v1386 = vsel %vm107, %v1346, 0.0
    %1387 = vadd.xlane.f32.xlu0 %v1386
    %v1388 = vpop.xlane.xlu0 %1387
    %v1389 = vsel %vm107, %v1347, 0.0
    %1390 = vadd.xlane.f32.xlu0 %v1389
    %v1391 = vpop.xlane.xlu0 %1390
    %v1392 = vsel %vm107, %v1348, 0.0
    %1393 = vadd.xlane.f32.xlu0 %v1392
    %v1394 = vpop.xlane.xlu0 %1393
    %v1395 = vsel %vm107, %v1349, 0.0
    %1396 = vadd.xlane.f32.xlu0 %v1395
    %v1397 = vpop.xlane.xlu0 %1396
    %v1398 = vsel %vm107, %v1350, 0.0
    %1399 = vadd.xlane.f32.xlu0 %v1398
    %v1400 = vpop.xlane.xlu0 %1399
    %v1401 = vsel %vm107, %v1351, 0.0
    %1402 = vadd.xlane.f32.xlu0 %v1401
    %v1403 = vpop.xlane.xlu0 %1402
    %v1404 = vsel %vm107, %v1352, 0.0
    %1405 = vadd.xlane.f32.xlu0 %v1404
    %v1406 = vpop.xlane.xlu0 %1405
    %v1407 = vsel %vm107, %v1353, 0.0
    %1408 = vadd.xlane.f32.xlu0 %v1407
    %v1409 = vpop.xlane.xlu0 %1408
    %v1410 = vsel %vm107, %v1354, 0.0
    %1411 = vadd.xlane.f32.xlu0 %v1410
    %v1412 = vpop.xlane.xlu0 %1411
    %v1413 = vsel %vm107, %v1355, 0.0
    %1414 = vadd.xlane.f32.xlu0 %v1413
    %v1415 = vpop.xlane.xlu0 %1414
    %v1416 = vsel %vm107, %v1356, 0.0
    %1417 = vadd.xlane.f32.xlu0 %v1416
    %v1418 = vpop.xlane.xlu0 %1417
    %v1419 = vsel %vm107, %v1357, 0.0
    %1420 = vadd.xlane.f32.xlu0 %v1419
    %v1421 = vpop.xlane.xlu0 %1420
    %v1422 = vsel %vm107, %v1358, 0.0
    %1423 = vadd.xlane.f32.xlu0 %v1422
    %v1424 = vpop.xlane.xlu0 %1423
    %v1425 = vsel %vm107, %v1359, 0.0
    %1426 = vadd.xlane.f32.xlu0 %v1425
    %v1427 = vpop.xlane.xlu0 %1426
    %v1428 = vsel %vm107, %v1360, 0.0
    %1429 = vadd.xlane.f32.xlu0 %v1428
    %v1430 = vpop.xlane.xlu0 %1429
    %v1431 = vsel %vm107, %v1361, 0.0
    %1432 = vadd.xlane.f32.xlu0 %v1431
    %v1433 = vpop.xlane.xlu0 %1432
    %v1434 = vsel %vm107, %v1362, 0.0
    %1435 = vadd.xlane.f32.xlu0 %v1434
    %v1436 = vpop.xlane.xlu0 %1435
    %v1437 = vsel %vm107, %v1363, 0.0
    %1438 = vadd.xlane.f32.xlu0 %v1437
    %v1439 = vpop.xlane.xlu0 %1438
    %v1440 = vsel %vm107, %v1364, 0.0
    %1441 = vadd.xlane.f32.xlu0 %v1440
    %v1442 = vpop.xlane.xlu0 %1441
    %v1443 = vsel %vm107, %v1365, 0.0
    %1444 = vadd.xlane.f32.xlu0 %v1443
    %v1445 = vpop.xlane.xlu0 %1444
    %v1446 = vsel %vm107, %v1366, 0.0
    %1447 = vadd.xlane.f32.xlu0 %v1446
    %v1448 = vpop.xlane.xlu0 %1447
    %v1449 = vsel %vm107, %v1367, 0.0
    %1450 = vadd.xlane.f32.xlu0 %v1449
    %v1451 = vpop.xlane.xlu0 %1450
    %v1452 = vsel %vm107, %v1368, 0.0
    %1453 = vadd.xlane.f32.xlu0 %v1452
    %v1454 = vpop.xlane.xlu0 %1453
    %v1455 = vsel %vm107, %v1369, 0.0
    %1456 = vadd.xlane.f32.xlu0 %v1455
    %v1457 = vpop.xlane.xlu0 %1456
    %v1458 = vsel %vm107, %v1370, 0.0
    %1459 = vadd.xlane.f32.xlu0 %v1458
    %v1460 = vpop.xlane.xlu0 %1459
    %v1461 = vsel %vm107, %v1371, 0.0
    %1462 = vadd.xlane.f32.xlu0 %v1461
    %v1463 = vpop.xlane.xlu0 %1462
    %v1464 = vsel %vm107, %v1372, 0.0
    %1465 = vadd.xlane.f32.xlu0 %v1464
    %v1466 = vpop.xlane.xlu0 %1465
    %v1467 = vsel %vm107, %v1373, 0.0
    %1468 = vadd.xlane.f32.xlu0 %v1467
    %v1469 = vpop.xlane.xlu0 %1468
    %v1470 = vmul.f32 %v1376, %v1277
    %v1471 = vmul.f32 %v1379, %v1277
    %v1472 = vmul.f32 %v1382, %v1277
    %v1473 = vmul.f32 %v1385, %v1277
    %v1474 = vmul.f32 %v1388, %v1277
    %v1475 = vmul.f32 %v1391, %v1277
    %v1476 = vmul.f32 %v1394, %v1277
    %v1477 = vmul.f32 %v1397, %v1277
    %v1478 = vmul.f32 %v1400, %v1277
    %v1479 = vmul.f32 %v1403, %v1277
    %v1480 = vmul.f32 %v1406, %v1277
    %v1481 = vmul.f32 %v1409, %v1277
    %v1482 = vmul.f32 %v1412, %v1277
    %v1483 = vmul.f32 %v1415, %v1277
    %v1484 = vmul.f32 %v1418, %v1277
    %v1485 = vmul.f32 %v1421, %v1277
    %v1486 = vmul.f32 %v1424, %v1277
    %v1487 = vmul.f32 %v1427, %v1277
    %v1488 = vmul.f32 %v1430, %v1277
    %v1489 = vmul.f32 %v1433, %v1277
    %v1490 = vmul.f32 %v1436, %v1277
    %v1491 = vmul.f32 %v1439, %v1277
    %v1492 = vmul.f32 %v1442, %v1277
    %v1493 = vmul.f32 %v1445, %v1277
    %v1494 = vmul.f32 %v1448, %v1277
    %v1495 = vmul.f32 %v1451, %v1277
    %v1496 = vmul.f32 %v1454, %v1277
    %v1497 = vmul.f32 %v1457, %v1277
    %v1498 = vmul.f32 %v1460, %v1277
    %v1499 = vmul.f32 %v1463, %v1277
    %v1500 = vmul.f32 %v1466, %v1277
    %v1501 = vmul.f32 %v1469, %v1277
    %v1502 = vadd.f32 %v1470, 1e-05
    %v1503 = vadd.f32 %v1471, 1e-05
    %v1504 = vadd.f32 %v1472, 1e-05
    %v1505 = vadd.f32 %v1473, 1e-05
    %v1506 = vadd.f32 %v1474, 1e-05
    %v1507 = vadd.f32 %v1475, 1e-05
    %v1508 = vadd.f32 %v1476, 1e-05
    %v1509 = vadd.f32 %v1477, 1e-05
    %v1510 = vadd.f32 %v1478, 1e-05
    %v1511 = vadd.f32 %v1479, 1e-05
    %v1512 = vadd.f32 %v1480, 1e-05
    %v1513 = vadd.f32 %v1481, 1e-05
    %v1514 = vadd.f32 %v1482, 1e-05
    %v1515 = vadd.f32 %v1483, 1e-05
    %v1516 = vadd.f32 %v1484, 1e-05
    %v1517 = vadd.f32 %v1485, 1e-05
    %v1518 = vadd.f32 %v1486, 1e-05
    %v1519 = vadd.f32 %v1487, 1e-05
    %v1520 = vadd.f32 %v1488, 1e-05
    %v1521 = vadd.f32 %v1489, 1e-05
    %v1522 = vadd.f32 %v1490, 1e-05
    %v1523 = vadd.f32 %v1491, 1e-05
    %v1524 = vadd.f32 %v1492, 1e-05
    %v1525 = vadd.f32 %v1493, 1e-05
    %v1526 = vadd.f32 %v1494, 1e-05
    %v1527 = vadd.f32 %v1495, 1e-05
    %v1528 = vadd.f32 %v1496, 1e-05
    %v1529 = vadd.f32 %v1497, 1e-05
    %v1530 = vadd.f32 %v1498, 1e-05
    %v1531 = vadd.f32 %v1499, 1e-05
    %v1532 = vadd.f32 %v1500, 1e-05
    %v1533 = vadd.f32 %v1501, 1e-05
    %v1534 = vrsqrt.pop %v1502
    %v1535 = vrsqrt.pop %v1503
    %v1536 = vrsqrt.pop %v1504
    %v1537 = vrsqrt.pop %v1505
    %v1538 = vrsqrt.pop %v1506
    %v1539 = vrsqrt.pop %v1507
    %v1540 = vrsqrt.pop %v1508
    %v1541 = vrsqrt.pop %v1509
    %v1542 = vrsqrt.pop %v1510
    %v1543 = vrsqrt.pop %v1511
    %v1544 = vrsqrt.pop %v1512
    %v1545 = vrsqrt.pop %v1513
    %v1546 = vrsqrt.pop %v1514
    %v1547 = vrsqrt.pop %v1515
    %v1548 = vrsqrt.pop %v1516
    %v1549 = vrsqrt.pop %v1517
    %v1550 = vrsqrt.pop %v1518
    %v1551 = vrsqrt.pop %v1519
    %v1552 = vrsqrt.pop %v1520
    %v1553 = vrsqrt.pop %v1521
    %v1554 = vrsqrt.pop %v1522
    %v1555 = vrsqrt.pop %v1523
    %v1556 = vrsqrt.pop %v1524
    %v1557 = vrsqrt.pop %v1525
    %v1558 = vrsqrt.pop %v1526
    %v1559 = vrsqrt.pop %v1527
    %v1560 = vrsqrt.pop %v1528
    %v1561 = vrsqrt.pop %v1529
    %v1562 = vrsqrt.pop %v1530
    %v1563 = vrsqrt.pop %v1531
    %v1564 = vrsqrt.pop %v1532
    %v1565 = vrsqrt.pop %v1533
    %v1566 = vmul.f32 %v1310, %v1534
    %v1567 = vmul.f32 %v1311, %v1535
    %v1568 = vmul.f32 %v1312, %v1536
    %v1569 = vmul.f32 %v1313, %v1537
    %v1570 = vmul.f32 %v1314, %v1538
    %v1571 = vmul.f32 %v1315, %v1539
    %v1572 = vmul.f32 %v1316, %v1540
    %v1573 = vmul.f32 %v1317, %v1541
    %v1574 = vmul.f32 %v1318, %v1542
    %v1575 = vmul.f32 %v1319, %v1543
    %v1576 = vmul.f32 %v1320, %v1544
    %v1577 = vmul.f32 %v1321, %v1545
    %v1578 = vmul.f32 %v1322, %v1546
    %v1579 = vmul.f32 %v1323, %v1547
    %v1580 = vmul.f32 %v1324, %v1548
    %v1581 = vmul.f32 %v1325, %v1549
    %v1582 = vmul.f32 %v1326, %v1550
    %v1583 = vmul.f32 %v1327, %v1551
    %v1584 = vmul.f32 %v1328, %v1552
    %v1585 = vmul.f32 %v1329, %v1553
    %v1586 = vmul.f32 %v1330, %v1554
    %v1587 = vmul.f32 %v1331, %v1555
    %v1588 = vmul.f32 %v1332, %v1556
    %v1589 = vmul.f32 %v1333, %v1557
    %v1590 = vmul.f32 %v1334, %v1558
    %v1591 = vmul.f32 %v1335, %v1559
    %v1592 = vmul.f32 %v1336, %v1560
    %v1593 = vmul.f32 %v1337, %v1561
    %v1594 = vmul.f32 %v1338, %v1562
    %v1595 = vmul.f32 %v1339, %v1563
    %v1596 = vmul.f32 %v1340, %v1564
    %v1597 = vmul.f32 %v1341, %v1565
    %v1599 = vlaneseq
    %v1600 = vshrl.u32 %v1599, 7
    %v1601 = vsub.s32 0, %v1600
    %v1602 = vrot.slane %v1179, %v1601
    %v1604 = vmul.f32 %v1566, %v1602
    %v1605 = vmul.f32 %v1567, %v1602
    %v1606 = vmul.f32 %v1568, %v1602
    %v1607 = vmul.f32 %v1569, %v1602
    %v1608 = vmul.f32 %v1570, %v1602
    %v1609 = vmul.f32 %v1571, %v1602
    %v1610 = vmul.f32 %v1572, %v1602
    %v1611 = vmul.f32 %v1573, %v1602
    %v1612 = vmul.f32 %v1574, %v1602
    %v1613 = vmul.f32 %v1575, %v1602
    %v1614 = vmul.f32 %v1576, %v1602
    %v1615 = vmul.f32 %v1577, %v1602
    %v1616 = vmul.f32 %v1578, %v1602
    %v1617 = vmul.f32 %v1579, %v1602
    %v1618 = vmul.f32 %v1580, %v1602
    %v1619 = vmul.f32 %v1581, %v1602
    %v1620 = vmul.f32 %v1582, %v1602
    %v1621 = vmul.f32 %v1583, %v1602
    %v1622 = vmul.f32 %v1584, %v1602
    %v1623 = vmul.f32 %v1585, %v1602
    %v1624 = vmul.f32 %v1586, %v1602
    %v1625 = vmul.f32 %v1587, %v1602
    %v1626 = vmul.f32 %v1588, %v1602
    %v1627 = vmul.f32 %v1589, %v1602
    %v1628 = vmul.f32 %v1590, %v1602
    %v1629 = vmul.f32 %v1591, %v1602
    %v1630 = vmul.f32 %v1592, %v1602
    %v1631 = vmul.f32 %v1593, %v1602
    %v1632 = vmul.f32 %v1594, %v1602
    %v1633 = vmul.f32 %v1595, %v1602
    %v1634 = vmul.f32 %v1596, %v1602
    %v1635 = vmul.f32 %v1597, %v1602
    %v1637 = vlaneseq
    %v1638 = vshrl.u32 %v1637, 7
    %v1639 = vsub.s32 0, %v1638
    %v1640 = vrot.slane %v1180, %v1639
    %v1642 = vadd.f32 %v1604, %v1640
    %v1643 = vadd.f32 %v1605, %v1640
    %v1644 = vadd.f32 %v1606, %v1640
    %v1645 = vadd.f32 %v1607, %v1640
    %v1646 = vadd.f32 %v1608, %v1640
    %v1647 = vadd.f32 %v1609, %v1640
    %v1648 = vadd.f32 %v1610, %v1640
    %v1649 = vadd.f32 %v1611, %v1640
    %v1650 = vadd.f32 %v1612, %v1640
    %v1651 = vadd.f32 %v1613, %v1640
    %v1652 = vadd.f32 %v1614, %v1640
    %v1653 = vadd.f32 %v1615, %v1640
    %v1654 = vadd.f32 %v1616, %v1640
    %v1655 = vadd.f32 %v1617, %v1640
    %v1656 = vadd.f32 %v1618, %v1640
    %v1657 = vadd.f32 %v1619, %v1640
    %v1658 = vadd.f32 %v1620, %v1640
    %v1659 = vadd.f32 %v1621, %v1640
    %v1660 = vadd.f32 %v1622, %v1640
    %v1661 = vadd.f32 %v1623, %v1640
    %v1662 = vadd.f32 %v1624, %v1640
    %v1663 = vadd.f32 %v1625, %v1640
    %v1664 = vadd.f32 %v1626, %v1640
    %v1665 = vadd.f32 %v1627, %v1640
    %v1666 = vadd.f32 %v1628, %v1640
    %v1667 = vadd.f32 %v1629, %v1640
    %v1668 = vadd.f32 %v1630, %v1640
    %v1669 = vadd.f32 %v1631, %v1640
    %v1670 = vadd.f32 %v1632, %v1640
    %v1671 = vadd.f32 %v1633, %v1640
    %v1672 = vadd.f32 %v1634, %v1640
    %v1673 = vadd.f32 %v1635, %v1640
    %v1674 = vsel %vm107, %v1642, 0.0
    %1675 = vadd.xlane.f32.xlu0 %v1674
    %v1676 = vpop.xlane.xlu0 %1675
    %v1677 = vsel %vm107, %v1643, 0.0
    %1678 = vadd.xlane.f32.xlu0 %v1677
    %v1679 = vpop.xlane.xlu0 %1678
    %v1680 = vsel %vm107, %v1644, 0.0
    %1681 = vadd.xlane.f32.xlu0 %v1680
    %v1682 = vpop.xlane.xlu0 %1681
    %v1683 = vsel %vm107, %v1645, 0.0
    %1684 = vadd.xlane.f32.xlu0 %v1683
    %v1685 = vpop.xlane.xlu0 %1684
    %v1686 = vsel %vm107, %v1646, 0.0
    %1687 = vadd.xlane.f32.xlu0 %v1686
    %v1688 = vpop.xlane.xlu0 %1687
    %v1689 = vsel %vm107, %v1647, 0.0
    %1690 = vadd.xlane.f32.xlu0 %v1689
    %v1691 = vpop.xlane.xlu0 %1690
    %v1692 = vsel %vm107, %v1648, 0.0
    %1693 = vadd.xlane.f32.xlu0 %v1692
    %v1694 = vpop.xlane.xlu0 %1693
    %v1695 = vsel %vm107, %v1649, 0.0
    %1696 = vadd.xlane.f32.xlu0 %v1695
    %v1697 = vpop.xlane.xlu0 %1696
    %v1698 = vsel %vm107, %v1650, 0.0
    %1699 = vadd.xlane.f32.xlu0 %v1698
    %v1700 = vpop.xlane.xlu0 %1699
    %v1701 = vsel %vm107, %v1651, 0.0
    %1702 = vadd.xlane.f32.xlu0 %v1701
    %v1703 = vpop.xlane.xlu0 %1702
    %v1704 = vsel %vm107, %v1652, 0.0
    %1705 = vadd.xlane.f32.xlu0 %v1704
    %v1706 = vpop.xlane.xlu0 %1705
    %v1707 = vsel %vm107, %v1653, 0.0
    %1708 = vadd.xlane.f32.xlu0 %v1707
    %v1709 = vpop.xlane.xlu0 %1708
    %v1710 = vsel %vm107, %v1654, 0.0
    %1711 = vadd.xlane.f32.xlu0 %v1710
    %v1712 = vpop.xlane.xlu0 %1711
    %v1713 = vsel %vm107, %v1655, 0.0
    %1714 = vadd.xlane.f32.xlu0 %v1713
    %v1715 = vpop.xlane.xlu0 %1714
    %v1716 = vsel %vm107, %v1656, 0.0
    %1717 = vadd.xlane.f32.xlu0 %v1716
    %v1718 = vpop.xlane.xlu0 %1717
    %v1719 = vsel %vm107, %v1657, 0.0
    %1720 = vadd.xlane.f32.xlu0 %v1719
    %v1721 = vpop.xlane.xlu0 %1720
    %v1722 = vsel %vm107, %v1658, 0.0
    %1723 = vadd.xlane.f32.xlu0 %v1722
    %v1724 = vpop.xlane.xlu0 %1723
    %v1725 = vsel %vm107, %v1659, 0.0
    %1726 = vadd.xlane.f32.xlu0 %v1725
    %v1727 = vpop.xlane.xlu0 %1726
    %v1728 = vsel %vm107, %v1660, 0.0
    %1729 = vadd.xlane.f32.xlu0 %v1728
    %v1730 = vpop.xlane.xlu0 %1729
    %v1731 = vsel %vm107, %v1661, 0.0
    %1732 = vadd.xlane.f32.xlu0 %v1731
    %v1733 = vpop.xlane.xlu0 %1732
    %v1734 = vsel %vm107, %v1662, 0.0
    %1735 = vadd.xlane.f32.xlu0 %v1734
    %v1736 = vpop.xlane.xlu0 %1735
    %v1737 = vsel %vm107, %v1663, 0.0
    %1738 = vadd.xlane.f32.xlu0 %v1737
    %v1739 = vpop.xlane.xlu0 %1738
    %v1740 = vsel %vm107, %v1664, 0.0
    %1741 = vadd.xlane.f32.xlu0 %v1740
    %v1742 = vpop.xlane.xlu0 %1741
    %v1743 = vsel %vm107, %v1665, 0.0
    %1744 = vadd.xlane.f32.xlu0 %v1743
    %v1745 = vpop.xlane.xlu0 %1744
    %v1746 = vsel %vm107, %v1666, 0.0
    %1747 = vadd.xlane.f32.xlu0 %v1746
    %v1748 = vpop.xlane.xlu0 %1747
    %v1749 = vsel %vm107, %v1667, 0.0
    %1750 = vadd.xlane.f32.xlu0 %v1749
    %v1751 = vpop.xlane.xlu0 %1750
    %v1752 = vsel %vm107, %v1668, 0.0
    %1753 = vadd.xlane.f32.xlu0 %v1752
    %v1754 = vpop.xlane.xlu0 %1753
    %v1755 = vsel %vm107, %v1669, 0.0
    %1756 = vadd.xlane.f32.xlu0 %v1755
    %v1757 = vpop.xlane.xlu0 %1756
    %v1758 = vsel %vm107, %v1670, 0.0
    %1759 = vadd.xlane.f32.xlu0 %v1758
    %v1760 = vpop.xlane.xlu0 %1759
    %v1761 = vsel %vm107, %v1671, 0.0
    %1762 = vadd.xlane.f32.xlu0 %v1761
    %v1763 = vpop.xlane.xlu0 %1762
    %v1764 = vsel %vm107, %v1672, 0.0
    %1765 = vadd.xlane.f32.xlu0 %v1764
    %v1766 = vpop.xlane.xlu0 %1765
    %v1767 = vsel %vm107, %v1673, 0.0
    %1768 = vadd.xlane.f32.xlu0 %v1767
    %v1769 = vpop.xlane.xlu0 %1768
    %v1770 = vld [vmem:[%s9] sm:$0xff]
    %v1771 = vld [vmem:[%s9 + $0x8] sm:$0xff]
    %v1772 = vld [vmem:[%s9 + $0x10] sm:$0xff]
    %v1773 = vld [vmem:[%s9 + $0x18] sm:$0xff]
    %v1774 = vld [vmem:[%s9 + $0x20] sm:$0xff]
    %v1775 = vld [vmem:[%s9 + $0x28] sm:$0xff]
    %v1776 = vld [vmem:[%s9 + $0x30] sm:$0xff]
    %v1777 = vld [vmem:[%s9 + $0x38] sm:$0xff]
    %v1778 = vld [vmem:[%s9 + $0x40] sm:$0xff]
    %v1779 = vld [vmem:[%s9 + $0x48] sm:$0xff]
    %v1780 = vld [vmem:[%s9 + $0x50] sm:$0xff]
    %v1781 = vld [vmem:[%s9 + $0x58] sm:$0xff]
    %v1782 = vld [vmem:[%s9 + $0x60] sm:$0xff]
    %v1783 = vld [vmem:[%s9 + $0x68] sm:$0xff]
    %v1784 = vld [vmem:[%s9 + $0x70] sm:$0xff]
    %v1785 = vld [vmem:[%s9 + $0x78] sm:$0xff]
    %v1786 = vmul.f32 %v1676, %v1770
    %v1787 = vmul.f32 %v1679, %v1771
    %v1788 = vmul.f32 %v1682, %v1772
    %v1789 = vmul.f32 %v1685, %v1773
    %v1790 = vmul.f32 %v1688, %v1774
    %v1791 = vmul.f32 %v1691, %v1775
    %v1792 = vmul.f32 %v1694, %v1776
    %v1793 = vmul.f32 %v1697, %v1777
    %v1794 = vmul.f32 %v1700, %v1778
    %v1795 = vmul.f32 %v1703, %v1779
    %v1796 = vmul.f32 %v1706, %v1780
    %v1797 = vmul.f32 %v1709, %v1781
    %v1798 = vmul.f32 %v1712, %v1782
    %v1799 = vmul.f32 %v1715, %v1783
    %v1800 = vmul.f32 %v1718, %v1784
    %v1801 = vmul.f32 %v1721, %v1785
    %v1802 = vmul.f32 %v1724, %v1770
    %v1803 = vmul.f32 %v1727, %v1771
    %v1804 = vmul.f32 %v1730, %v1772
    %v1805 = vmul.f32 %v1733, %v1773
    %v1806 = vmul.f32 %v1736, %v1774
    %v1807 = vmul.f32 %v1739, %v1775
    %v1808 = vmul.f32 %v1742, %v1776
    %v1809 = vmul.f32 %v1745, %v1777
    %v1810 = vmul.f32 %v1748, %v1778
    %v1811 = vmul.f32 %v1751, %v1779
    %v1812 = vmul.f32 %v1754, %v1780
    %v1813 = vmul.f32 %v1757, %v1781
    %v1814 = vmul.f32 %v1760, %v1782
    %v1815 = vmul.f32 %v1763, %v1783
    %v1816 = vmul.f32 %v1766, %v1784
    %v1817 = vmul.f32 %v1769, %v1785
    %v1818 = vadd.f32 %v1786, %v1642
    %v1819 = vadd.f32 %v1787, %v1643
    %v1820 = vadd.f32 %v1788, %v1644
    %v1821 = vadd.f32 %v1789, %v1645
    %v1822 = vadd.f32 %v1790, %v1646
    %v1823 = vadd.f32 %v1791, %v1647
    %v1824 = vadd.f32 %v1792, %v1648
    %v1825 = vadd.f32 %v1793, %v1649
    %v1826 = vadd.f32 %v1794, %v1650
    %v1827 = vadd.f32 %v1795, %v1651
    %v1828 = vadd.f32 %v1796, %v1652
    %v1829 = vadd.f32 %v1797, %v1653
    %v1830 = vadd.f32 %v1798, %v1654
    %v1831 = vadd.f32 %v1799, %v1655
    %v1832 = vadd.f32 %v1800, %v1656
    %v1833 = vadd.f32 %v1801, %v1657
    %v1834 = vadd.f32 %v1802, %v1658
    %v1835 = vadd.f32 %v1803, %v1659
    %v1836 = vadd.f32 %v1804, %v1660
    %v1837 = vadd.f32 %v1805, %v1661
    %v1838 = vadd.f32 %v1806, %v1662
    %v1839 = vadd.f32 %v1807, %v1663
    %v1840 = vadd.f32 %v1808, %v1664
    %v1841 = vadd.f32 %v1809, %v1665
    %v1842 = vadd.f32 %v1810, %v1666
    %v1843 = vadd.f32 %v1811, %v1667
    %v1844 = vadd.f32 %v1812, %v1668
    %v1845 = vadd.f32 %v1813, %v1669
    %v1846 = vadd.f32 %v1814, %v1670
    %v1847 = vadd.f32 %v1815, %v1671
    %v1848 = vadd.f32 %v1816, %v1672
    %v1849 = vadd.f32 %v1817, %v1673
    %v1851 = vsel %vm107, %v1818, 0
    %v1854 = vsel %vm107, %v1819, 0
    %v1857 = vsel %vm107, %v1820, 0
    %v1860 = vsel %vm107, %v1821, 0
    %v1863 = vsel %vm107, %v1822, 0
    %v1866 = vsel %vm107, %v1823, 0
    %v1869 = vsel %vm107, %v1824, 0
    %v1872 = vsel %vm107, %v1825, 0
    %v1875 = vsel %vm107, %v1826, 0
    %v1878 = vsel %vm107, %v1827, 0
    %v1881 = vsel %vm107, %v1828, 0
    %v1884 = vsel %vm107, %v1829, 0
    %v1887 = vsel %vm107, %v1830, 0
    %v1890 = vsel %vm107, %v1831, 0
    %v1893 = vsel %vm107, %v1832, 0
    %v1896 = vsel %vm107, %v1833, 0
    %1898 = vmatprep.subr.mxu0 0.0
    %1899 = vmatpush1.xpose.msra.mxu0 %v1896
    %1900 = vmatprep.subr.mxu0 0.0
    %1901 = vmatpush1.xpose.msra.mxu0 %v1893
    %1902 = vmatprep.subr.mxu0 0.0
    %1903 = vmatpush1.xpose.msra.mxu0 %v1890
    %1904 = vmatprep.subr.mxu0 0.0
    %1905 = vmatpush1.xpose.msra.mxu0 %v1887
    %1906 = vmatprep.subr.mxu0 0.0
    %1907 = vmatpush1.xpose.msra.mxu0 %v1884
    %1908 = vmatprep.subr.mxu0 0.0
    %1909 = vmatpush1.xpose.msra.mxu0 %v1881
    %1910 = vmatprep.subr.mxu0 0.0
    %1911 = vmatpush1.xpose.msra.mxu0 %v1878
    %1912 = vmatprep.subr.mxu0 0.0
    %1913 = vmatpush1.xpose.msra.mxu0 %v1875
    %1914 = vmatprep.subr.mxu0 0.0
    %1915 = vmatpush1.xpose.msra.mxu0 %v1872
    %1916 = vmatprep.subr.mxu0 0.0
    %1917 = vmatpush1.xpose.msra.mxu0 %v1869
    %1918 = vmatprep.subr.mxu0 0.0
    %1919 = vmatpush1.xpose.msra.mxu0 %v1866
    %1920 = vmatprep.subr.mxu0 0.0
    %1921 = vmatpush1.xpose.msra.mxu0 %v1863
    %1922 = vmatprep.subr.mxu0 0.0
    %1923 = vmatpush1.xpose.msra.mxu0 %v1860
    %1924 = vmatprep.subr.mxu0 0.0
    %1925 = vmatpush1.xpose.msra.mxu0 %v1857
    %1926 = vmatprep.subr.mxu0 0.0
    %1927 = vmatpush1.xpose.msra.mxu0 %v1854
    %1928 = vmatprep.subr.mxu0 0.0
    %1929 = vmatpush1.xpose.msra.mxu0 %v1851
    %1930 = vmatprep.subr.mxu0 0.0
    %1931 = vmatpush2.xpose.msra.mxu0 0.0
    %1932 = vmatprep.subr.mxu0 0.0
    %1933 = vmatpush2.xpose.msra.mxu0 0.0
    %1934 = vmatprep.subr.mxu0 0.0
    %1935 = vmatpush2.xpose.msra.mxu0 0.0
    %1936 = vmatprep.subr.mxu0 0.0
    %1937 = vmatpush2.xpose.msra.mxu0 0.0
    %1938 = vmatprep.subr.mxu0 0.0
    %1939 = vmatpush2.xpose.msra.mxu0 0.0
    %1940 = vmatprep.subr.mxu0 0.0
    %1941 = vmatpush2.xpose.msra.mxu0 0.0
    %1942 = vmatprep.subr.mxu0 0.0
    %1943 = vmatpush2.xpose.msra.mxu0 0.0
    %1944 = vmatprep.subr.mxu0 0.0
    %1945 = vmatpush2.xpose.msra.mxu0 0.0
    %1946 = vmatprep.subr.mxu0 0.0
    %1947 = vmatpush2.xpose.msra.mxu0 0.0
    %1948 = vmatprep.subr.mxu0 0.0
    %1949 = vmatpush2.xpose.msra.mxu0 0.0
    %1950 = vmatprep.subr.mxu0 0.0
    %1951 = vmatpush2.xpose.msra.mxu0 0.0
    %1952 = vmatprep.subr.mxu0 0.0
    %1953 = vmatpush2.xpose.msra.mxu0 0.0
    %1954 = vmatprep.subr.mxu0 0.0
    %1955 = vmatpush2.xpose.msra.mxu0 0.0
    %1956 = vmatprep.subr.mxu0 0.0
    %1957 = vmatpush2.xpose.msra.mxu0 0.0
    %1958 = vmatprep.subr.mxu0 0.0
    %1959 = vmatpush2.xpose.msra.mxu0 0.0
    %1960 = vmatprep.subr.mxu0 0.0
    %1961 = vmatpush2.xpose.msra.mxu0 0.0
    %1962 = vmatprep.mubr.f32.mxu0 0.0
    %1963 = vmatmul.mubr.f32.gmra.mxu0 %v1851
    %v1964 = vpop.f32.mrf.mxu0
    %v1965 = vadd.f32 0.0, %v1964
    %v1966 = vpop.f32.mrf.mxu0
    %1967 = vmatprep.mubr.f32.mxu0 0.0
    %1968 = vmatmul.mubr.f32.gmra.mxu0 %v1854
    %v1969 = vpop.f32.mrf.mxu0
    %v1970 = vadd.f32 0.0, %v1969
    %v1971 = vpop.f32.mrf.mxu0
    %1972 = vmatprep.mubr.f32.mxu0 0.0
    %1973 = vmatmul.mubr.f32.gmra.mxu0 %v1857
    %v1974 = vpop.f32.mrf.mxu0
    %v1975 = vadd.f32 0.0, %v1974
    %v1976 = vpop.f32.mrf.mxu0
    %1977 = vmatprep.mubr.f32.mxu0 0.0
    %1978 = vmatmul.mubr.f32.gmra.mxu0 %v1860
    %v1979 = vpop.f32.mrf.mxu0
    %v1980 = vadd.f32 0.0, %v1979
    %v1981 = vpop.f32.mrf.mxu0
    %1982 = vmatprep.mubr.f32.mxu0 0.0
    %1983 = vmatmul.mubr.f32.gmra.mxu0 %v1863
    %v1984 = vpop.f32.mrf.mxu0
    %v1985 = vadd.f32 0.0, %v1984
    %v1986 = vpop.f32.mrf.mxu0
    %1987 = vmatprep.mubr.f32.mxu0 0.0
    %1988 = vmatmul.mubr.f32.gmra.mxu0 %v1866
    %v1989 = vpop.f32.mrf.mxu0
    %v1990 = vadd.f32 0.0, %v1989
    %v1991 = vpop.f32.mrf.mxu0
    %1992 = vmatprep.mubr.f32.mxu0 0.0
    %1993 = vmatmul.mubr.f32.gmra.mxu0 %v1869
    %v1994 = vpop.f32.mrf.mxu0
    %v1995 = vadd.f32 0.0, %v1994
    %v1996 = vpop.f32.mrf.mxu0
    %1997 = vmatprep.mubr.f32.mxu0 0.0
    %1998 = vmatmul.mubr.f32.gmra.mxu0 %v1872
    %v1999 = vpop.f32.mrf.mxu0
    %v2000 = vadd.f32 0.0, %v1999
    %v2001 = vpop.f32.mrf.mxu0
    %2002 = vmatprep.mubr.f32.mxu0 0.0
    %2003 = vmatmul.mubr.f32.gmra.mxu0 %v1875
    %v2004 = vpop.f32.mrf.mxu0
    %v2005 = vadd.f32 0.0, %v2004
    %v2006 = vpop.f32.mrf.mxu0
    %2007 = vmatprep.mubr.f32.mxu0 0.0
    %2008 = vmatmul.mubr.f32.gmra.mxu0 %v1878
    %v2009 = vpop.f32.mrf.mxu0
    %v2010 = vadd.f32 0.0, %v2009
    %v2011 = vpop.f32.mrf.mxu0
    %2012 = vmatprep.mubr.f32.mxu0 0.0
    %2013 = vmatmul.mubr.f32.gmra.mxu0 %v1881
    %v2014 = vpop.f32.mrf.mxu0
    %v2015 = vadd.f32 0.0, %v2014
    %v2016 = vpop.f32.mrf.mxu0
    %2017 = vmatprep.mubr.f32.mxu0 0.0
    %2018 = vmatmul.mubr.f32.gmra.mxu0 %v1884
    %v2019 = vpop.f32.mrf.mxu0
    %v2020 = vadd.f32 0.0, %v2019
    %v2021 = vpop.f32.mrf.mxu0
    %2022 = vmatprep.mubr.f32.mxu0 0.0
    %2023 = vmatmul.mubr.f32.gmra.mxu0 %v1887
    %v2024 = vpop.f32.mrf.mxu0
    %v2025 = vadd.f32 0.0, %v2024
    %v2026 = vpop.f32.mrf.mxu0
    %2027 = vmatprep.mubr.f32.mxu0 0.0
    %2028 = vmatmul.mubr.f32.gmra.mxu0 %v1890
    %v2029 = vpop.f32.mrf.mxu0
    %v2030 = vadd.f32 0.0, %v2029
    %v2031 = vpop.f32.mrf.mxu0
    %2032 = vmatprep.mubr.f32.mxu0 0.0
    %2033 = vmatmul.mubr.f32.gmra.mxu0 %v1893
    %v2034 = vpop.f32.mrf.mxu0
    %v2035 = vadd.f32 0.0, %v2034
    %v2036 = vpop.f32.mrf.mxu0
    %2037 = vmatprep.mubr.f32.mxu0 0.0
    %2038 = vmatmul.mubr.f32.gmra.mxu0 %v1896
    %v2039 = vpop.f32.mrf.mxu0
    %v2040 = vadd.f32 0.0, %v2039
    %v2041 = vpop.f32.mrf.mxu0
    %2042 = vdwg.mxu0
    %v2044 = vsel %vm107, %v1834, 0
    %v2047 = vsel %vm107, %v1835, 0
    %v2050 = vsel %vm107, %v1836, 0
    %v2053 = vsel %vm107, %v1837, 0
    %v2056 = vsel %vm107, %v1838, 0
    %v2059 = vsel %vm107, %v1839, 0
    %v2062 = vsel %vm107, %v1840, 0
    %v2065 = vsel %vm107, %v1841, 0
    %v2068 = vsel %vm107, %v1842, 0
    %v2071 = vsel %vm107, %v1843, 0
    %v2074 = vsel %vm107, %v1844, 0
    %v2077 = vsel %vm107, %v1845, 0
    %v2080 = vsel %vm107, %v1846, 0
    %v2083 = vsel %vm107, %v1847, 0
    %v2086 = vsel %vm107, %v1848, 0
    %v2089 = vsel %vm107, %v1849, 0
    %2091 = vmatprep.subr.mxu0 0.0
    %2092 = vmatpush1.xpose.msra.mxu0 %v2089
    %2093 = vmatprep.subr.mxu0 0.0
    %2094 = vmatpush1.xpose.msra.mxu0 %v2086
    %2095 = vmatprep.subr.mxu0 0.0
    %2096 = vmatpush1.xpose.msra.mxu0 %v2083
    %2097 = vmatprep.subr.mxu0 0.0
    %2098 = vmatpush1.xpose.msra.mxu0 %v2080
    %2099 = vmatprep.subr.mxu0 0.0
    %2100 = vmatpush1.xpose.msra.mxu0 %v2077
    %2101 = vmatprep.subr.mxu0 0.0
    %2102 = vmatpush1.xpose.msra.mxu0 %v2074
    %2103 = vmatprep.subr.mxu0 0.0
    %2104 = vmatpush1.xpose.msra.mxu0 %v2071
    %2105 = vmatprep.subr.mxu0 0.0
    %2106 = vmatpush1.xpose.msra.mxu0 %v2068
    %2107 = vmatprep.subr.mxu0 0.0
    %2108 = vmatpush1.xpose.msra.mxu0 %v2065
    %2109 = vmatprep.subr.mxu0 0.0
    %2110 = vmatpush1.xpose.msra.mxu0 %v2062
    %2111 = vmatprep.subr.mxu0 0.0
    %2112 = vmatpush1.xpose.msra.mxu0 %v2059
    %2113 = vmatprep.subr.mxu0 0.0
    %2114 = vmatpush1.xpose.msra.mxu0 %v2056
    %2115 = vmatprep.subr.mxu0 0.0
    %2116 = vmatpush1.xpose.msra.mxu0 %v2053
    %2117 = vmatprep.subr.mxu0 0.0
    %2118 = vmatpush1.xpose.msra.mxu0 %v2050
    %2119 = vmatprep.subr.mxu0 0.0
    %2120 = vmatpush1.xpose.msra.mxu0 %v2047
    %2121 = vmatprep.subr.mxu0 0.0
    %2122 = vmatpush1.xpose.msra.mxu0 %v2044
    %2123 = vmatprep.subr.mxu0 0.0
    %2124 = vmatpush2.xpose.msra.mxu0 0.0
    %2125 = vmatprep.subr.mxu0 0.0
    %2126 = vmatpush2.xpose.msra.mxu0 0.0
    %2127 = vmatprep.subr.mxu0 0.0
    %2128 = vmatpush2.xpose.msra.mxu0 0.0
    %2129 = vmatprep.subr.mxu0 0.0
    %2130 = vmatpush2.xpose.msra.mxu0 0.0
    %2131 = vmatprep.subr.mxu0 0.0
    %2132 = vmatpush2.xpose.msra.mxu0 0.0
    %2133 = vmatprep.subr.mxu0 0.0
    %2134 = vmatpush2.xpose.msra.mxu0 0.0
    %2135 = vmatprep.subr.mxu0 0.0
    %2136 = vmatpush2.xpose.msra.mxu0 0.0
    %2137 = vmatprep.subr.mxu0 0.0
    %2138 = vmatpush2.xpose.msra.mxu0 0.0
    %2139 = vmatprep.subr.mxu0 0.0
    %2140 = vmatpush2.xpose.msra.mxu0 0.0
    %2141 = vmatprep.subr.mxu0 0.0
    %2142 = vmatpush2.xpose.msra.mxu0 0.0
    %2143 = vmatprep.subr.mxu0 0.0
    %2144 = vmatpush2.xpose.msra.mxu0 0.0
    %2145 = vmatprep.subr.mxu0 0.0
    %2146 = vmatpush2.xpose.msra.mxu0 0.0
    %2147 = vmatprep.subr.mxu0 0.0
    %2148 = vmatpush2.xpose.msra.mxu0 0.0
    %2149 = vmatprep.subr.mxu0 0.0
    %2150 = vmatpush2.xpose.msra.mxu0 0.0
    %2151 = vmatprep.subr.mxu0 0.0
    %2152 = vmatpush2.xpose.msra.mxu0 0.0
    %2153 = vmatprep.subr.mxu0 0.0
    %2154 = vmatpush2.xpose.msra.mxu0 0.0
    %2155 = vmatprep.mubr.f32.mxu0 0.0
    %2156 = vmatmul.mubr.f32.gmra.mxu0 %v2044
    %v2157 = vpop.f32.mrf.mxu0
    %v2158 = vadd.f32 0.0, %v2157
    %v2159 = vpop.f32.mrf.mxu0
    %2160 = vmatprep.mubr.f32.mxu0 0.0
    %2161 = vmatmul.mubr.f32.gmra.mxu0 %v2047
    %v2162 = vpop.f32.mrf.mxu0
    %v2163 = vadd.f32 0.0, %v2162
    %v2164 = vpop.f32.mrf.mxu0
    %2165 = vmatprep.mubr.f32.mxu0 0.0
    %2166 = vmatmul.mubr.f32.gmra.mxu0 %v2050
    %v2167 = vpop.f32.mrf.mxu0
    %v2168 = vadd.f32 0.0, %v2167
    %v2169 = vpop.f32.mrf.mxu0
    %2170 = vmatprep.mubr.f32.mxu0 0.0
    %2171 = vmatmul.mubr.f32.gmra.mxu0 %v2053
    %v2172 = vpop.f32.mrf.mxu0
    %v2173 = vadd.f32 0.0, %v2172
    %v2174 = vpop.f32.mrf.mxu0
    %2175 = vmatprep.mubr.f32.mxu0 0.0
    %2176 = vmatmul.mubr.f32.gmra.mxu0 %v2056
    %v2177 = vpop.f32.mrf.mxu0
    %v2178 = vadd.f32 0.0, %v2177
    %v2179 = vpop.f32.mrf.mxu0
    %2180 = vmatprep.mubr.f32.mxu0 0.0
    %2181 = vmatmul.mubr.f32.gmra.mxu0 %v2059
    %v2182 = vpop.f32.mrf.mxu0
    %v2183 = vadd.f32 0.0, %v2182
    %v2184 = vpop.f32.mrf.mxu0
    %2185 = vmatprep.mubr.f32.mxu0 0.0
    %2186 = vmatmul.mubr.f32.gmra.mxu0 %v2062
    %v2187 = vpop.f32.mrf.mxu0
    %v2188 = vadd.f32 0.0, %v2187
    %v2189 = vpop.f32.mrf.mxu0
    %2190 = vmatprep.mubr.f32.mxu0 0.0
    %2191 = vmatmul.mubr.f32.gmra.mxu0 %v2065
    %v2192 = vpop.f32.mrf.mxu0
    %v2193 = vadd.f32 0.0, %v2192
    %v2194 = vpop.f32.mrf.mxu0
    %2195 = vmatprep.mubr.f32.mxu0 0.0
    %2196 = vmatmul.mubr.f32.gmra.mxu0 %v2068
    %v2197 = vpop.f32.mrf.mxu0
    %v2198 = vadd.f32 0.0, %v2197
    %v2199 = vpop.f32.mrf.mxu0
    %2200 = vmatprep.mubr.f32.mxu0 0.0
    %2201 = vmatmul.mubr.f32.gmra.mxu0 %v2071
    %v2202 = vpop.f32.mrf.mxu0
    %v2203 = vadd.f32 0.0, %v2202
    %v2204 = vpop.f32.mrf.mxu0
    %2205 = vmatprep.mubr.f32.mxu0 0.0
    %2206 = vmatmul.mubr.f32.gmra.mxu0 %v2074
    %v2207 = vpop.f32.mrf.mxu0
    %v2208 = vadd.f32 0.0, %v2207
    %v2209 = vpop.f32.mrf.mxu0
    %2210 = vmatprep.mubr.f32.mxu0 0.0
    %2211 = vmatmul.mubr.f32.gmra.mxu0 %v2077
    %v2212 = vpop.f32.mrf.mxu0
    %v2213 = vadd.f32 0.0, %v2212
    %v2214 = vpop.f32.mrf.mxu0
    %2215 = vmatprep.mubr.f32.mxu0 0.0
    %2216 = vmatmul.mubr.f32.gmra.mxu0 %v2080
    %v2217 = vpop.f32.mrf.mxu0
    %v2218 = vadd.f32 0.0, %v2217
    %v2219 = vpop.f32.mrf.mxu0
    %2220 = vmatprep.mubr.f32.mxu0 0.0
    %2221 = vmatmul.mubr.f32.gmra.mxu0 %v2083
    %v2222 = vpop.f32.mrf.mxu0
    %v2223 = vadd.f32 0.0, %v2222
    %v2224 = vpop.f32.mrf.mxu0
    %2225 = vmatprep.mubr.f32.mxu0 0.0
    %2226 = vmatmul.mubr.f32.gmra.mxu0 %v2086
    %v2227 = vpop.f32.mrf.mxu0
    %v2228 = vadd.f32 0.0, %v2227
    %v2229 = vpop.f32.mrf.mxu0
    %2230 = vmatprep.mubr.f32.mxu0 0.0
    %2231 = vmatmul.mubr.f32.gmra.mxu0 %v2089
    %v2232 = vpop.f32.mrf.mxu0
    %v2233 = vadd.f32 0.0, %v2232
    %v2234 = vpop.f32.mrf.mxu0
    %2235 = vdwg.mxu0
    %v2236 = vld [vmem:[%s15] sm:$0x1]
    %v2237 = vld [vmem:[%s16] sm:$0x1]
    %2238 = vadd.xlane.f32.xlu0 %v1965
    %v2239 = vpop.xlane.xlu0 %2238
    %2240 = vadd.xlane.f32.xlu0 %v1970
    %v2241 = vpop.xlane.xlu0 %2240
    %2242 = vadd.xlane.f32.xlu0 %v1975
    %v2243 = vpop.xlane.xlu0 %2242
    %2244 = vadd.xlane.f32.xlu0 %v1980
    %v2245 = vpop.xlane.xlu0 %2244
    %2246 = vadd.xlane.f32.xlu0 %v1985
    %v2247 = vpop.xlane.xlu0 %2246
    %2248 = vadd.xlane.f32.xlu0 %v1990
    %v2249 = vpop.xlane.xlu0 %2248
    %2250 = vadd.xlane.f32.xlu0 %v1995
    %v2251 = vpop.xlane.xlu0 %2250
    %2252 = vadd.xlane.f32.xlu0 %v2000
    %v2253 = vpop.xlane.xlu0 %2252
    %2254 = vadd.xlane.f32.xlu0 %v2005
    %v2255 = vpop.xlane.xlu0 %2254
    %2256 = vadd.xlane.f32.xlu0 %v2010
    %v2257 = vpop.xlane.xlu0 %2256
    %2258 = vadd.xlane.f32.xlu0 %v2015
    %v2259 = vpop.xlane.xlu0 %2258
    %2260 = vadd.xlane.f32.xlu0 %v2020
    %v2261 = vpop.xlane.xlu0 %2260
    %2262 = vadd.xlane.f32.xlu0 %v2025
    %v2263 = vpop.xlane.xlu0 %2262
    %2264 = vadd.xlane.f32.xlu0 %v2030
    %v2265 = vpop.xlane.xlu0 %2264
    %2266 = vadd.xlane.f32.xlu0 %v2035
    %v2267 = vpop.xlane.xlu0 %2266
    %2268 = vadd.xlane.f32.xlu0 %v2040
    %v2269 = vpop.xlane.xlu0 %2268
    %2270 = vadd.xlane.f32.xlu0 %v2158
    %v2271 = vpop.xlane.xlu0 %2270
    %2272 = vadd.xlane.f32.xlu0 %v2163
    %v2273 = vpop.xlane.xlu0 %2272
    %2274 = vadd.xlane.f32.xlu0 %v2168
    %v2275 = vpop.xlane.xlu0 %2274
    %2276 = vadd.xlane.f32.xlu0 %v2173
    %v2277 = vpop.xlane.xlu0 %2276
    %2278 = vadd.xlane.f32.xlu0 %v2178
    %v2279 = vpop.xlane.xlu0 %2278
    %2280 = vadd.xlane.f32.xlu0 %v2183
    %v2281 = vpop.xlane.xlu0 %2280
    %2282 = vadd.xlane.f32.xlu0 %v2188
    %v2283 = vpop.xlane.xlu0 %2282
    %2284 = vadd.xlane.f32.xlu0 %v2193
    %v2285 = vpop.xlane.xlu0 %2284
    %2286 = vadd.xlane.f32.xlu0 %v2198
    %v2287 = vpop.xlane.xlu0 %2286
    %2288 = vadd.xlane.f32.xlu0 %v2203
    %v2289 = vpop.xlane.xlu0 %2288
    %2290 = vadd.xlane.f32.xlu0 %v2208
    %v2291 = vpop.xlane.xlu0 %2290
    %2292 = vadd.xlane.f32.xlu0 %v2213
    %v2293 = vpop.xlane.xlu0 %2292
    %2294 = vadd.xlane.f32.xlu0 %v2218
    %v2295 = vpop.xlane.xlu0 %2294
    %2296 = vadd.xlane.f32.xlu0 %v2223
    %v2297 = vpop.xlane.xlu0 %2296
    %2298 = vadd.xlane.f32.xlu0 %v2228
    %v2299 = vpop.xlane.xlu0 %2298
    %2300 = vadd.xlane.f32.xlu0 %v2233
    %v2301 = vpop.xlane.xlu0 %2300
    %v2302 = vmul.f32 %v2239, %v335
    %v2303 = vmul.f32 %v2241, %v335
    %v2304 = vmul.f32 %v2243, %v335
    %v2305 = vmul.f32 %v2245, %v335
    %v2306 = vmul.f32 %v2247, %v335
    %v2307 = vmul.f32 %v2249, %v335
    %v2308 = vmul.f32 %v2251, %v335
    %v2309 = vmul.f32 %v2253, %v335
    %v2310 = vmul.f32 %v2255, %v335
    %v2311 = vmul.f32 %v2257, %v335
    %v2312 = vmul.f32 %v2259, %v335
    %v2313 = vmul.f32 %v2261, %v335
    %v2314 = vmul.f32 %v2263, %v335
    %v2315 = vmul.f32 %v2265, %v335
    %v2316 = vmul.f32 %v2267, %v335
    %v2317 = vmul.f32 %v2269, %v335
    %v2318 = vmul.f32 %v2271, %v335
    %v2319 = vmul.f32 %v2273, %v335
    %v2320 = vmul.f32 %v2275, %v335
    %v2321 = vmul.f32 %v2277, %v335
    %v2322 = vmul.f32 %v2279, %v335
    %v2323 = vmul.f32 %v2281, %v335
    %v2324 = vmul.f32 %v2283, %v335
    %v2325 = vmul.f32 %v2285, %v335
    %v2326 = vmul.f32 %v2287, %v335
    %v2327 = vmul.f32 %v2289, %v335
    %v2328 = vmul.f32 %v2291, %v335
    %v2329 = vmul.f32 %v2293, %v335
    %v2330 = vmul.f32 %v2295, %v335
    %v2331 = vmul.f32 %v2297, %v335
    %v2332 = vmul.f32 %v2299, %v335
    %v2333 = vmul.f32 %v2301, %v335
    %v2334 = vsub.f32 %v1965, %v2302
    %v2335 = vsub.f32 %v1970, %v2303
    %v2336 = vsub.f32 %v1975, %v2304
    %v2337 = vsub.f32 %v1980, %v2305
    %v2338 = vsub.f32 %v1985, %v2306
    %v2339 = vsub.f32 %v1990, %v2307
    %v2340 = vsub.f32 %v1995, %v2308
    %v2341 = vsub.f32 %v2000, %v2309
    %v2342 = vsub.f32 %v2005, %v2310
    %v2343 = vsub.f32 %v2010, %v2311
    %v2344 = vsub.f32 %v2015, %v2312
    %v2345 = vsub.f32 %v2020, %v2313
    %v2346 = vsub.f32 %v2025, %v2314
    %v2347 = vsub.f32 %v2030, %v2315
    %v2348 = vsub.f32 %v2035, %v2316
    %v2349 = vsub.f32 %v2040, %v2317
    %v2350 = vsub.f32 %v2158, %v2318
    %v2351 = vsub.f32 %v2163, %v2319
    %v2352 = vsub.f32 %v2168, %v2320
    %v2353 = vsub.f32 %v2173, %v2321
    %v2354 = vsub.f32 %v2178, %v2322
    %v2355 = vsub.f32 %v2183, %v2323
    %v2356 = vsub.f32 %v2188, %v2324
    %v2357 = vsub.f32 %v2193, %v2325
    %v2358 = vsub.f32 %v2198, %v2326
    %v2359 = vsub.f32 %v2203, %v2327
    %v2360 = vsub.f32 %v2208, %v2328
    %v2361 = vsub.f32 %v2213, %v2329
    %v2362 = vsub.f32 %v2218, %v2330
    %v2363 = vsub.f32 %v2223, %v2331
    %v2364 = vsub.f32 %v2228, %v2332
    %v2365 = vsub.f32 %v2233, %v2333
    %v2366 = vmul.f32 %v2334, %v2334
    %v2367 = vmul.f32 %v2335, %v2335
    %v2368 = vmul.f32 %v2336, %v2336
    %v2369 = vmul.f32 %v2337, %v2337
    %v2370 = vmul.f32 %v2338, %v2338
    %v2371 = vmul.f32 %v2339, %v2339
    %v2372 = vmul.f32 %v2340, %v2340
    %v2373 = vmul.f32 %v2341, %v2341
    %v2374 = vmul.f32 %v2342, %v2342
    %v2375 = vmul.f32 %v2343, %v2343
    %v2376 = vmul.f32 %v2344, %v2344
    %v2377 = vmul.f32 %v2345, %v2345
    %v2378 = vmul.f32 %v2346, %v2346
    %v2379 = vmul.f32 %v2347, %v2347
    %v2380 = vmul.f32 %v2348, %v2348
    %v2381 = vmul.f32 %v2349, %v2349
    %v2382 = vmul.f32 %v2350, %v2350
    %v2383 = vmul.f32 %v2351, %v2351
    %v2384 = vmul.f32 %v2352, %v2352
    %v2385 = vmul.f32 %v2353, %v2353
    %v2386 = vmul.f32 %v2354, %v2354
    %v2387 = vmul.f32 %v2355, %v2355
    %v2388 = vmul.f32 %v2356, %v2356
    %v2389 = vmul.f32 %v2357, %v2357
    %v2390 = vmul.f32 %v2358, %v2358
    %v2391 = vmul.f32 %v2359, %v2359
    %v2392 = vmul.f32 %v2360, %v2360
    %v2393 = vmul.f32 %v2361, %v2361
    %v2394 = vmul.f32 %v2362, %v2362
    %v2395 = vmul.f32 %v2363, %v2363
    %v2396 = vmul.f32 %v2364, %v2364
    %v2397 = vmul.f32 %v2365, %v2365
    %2398 = vadd.xlane.f32.xlu0 %v2366
    %v2399 = vpop.xlane.xlu0 %2398
    %2400 = vadd.xlane.f32.xlu0 %v2367
    %v2401 = vpop.xlane.xlu0 %2400
    %2402 = vadd.xlane.f32.xlu0 %v2368
    %v2403 = vpop.xlane.xlu0 %2402
    %2404 = vadd.xlane.f32.xlu0 %v2369
    %v2405 = vpop.xlane.xlu0 %2404
    %2406 = vadd.xlane.f32.xlu0 %v2370
    %v2407 = vpop.xlane.xlu0 %2406
    %2408 = vadd.xlane.f32.xlu0 %v2371
    %v2409 = vpop.xlane.xlu0 %2408
    %2410 = vadd.xlane.f32.xlu0 %v2372
    %v2411 = vpop.xlane.xlu0 %2410
    %2412 = vadd.xlane.f32.xlu0 %v2373
    %v2413 = vpop.xlane.xlu0 %2412
    %2414 = vadd.xlane.f32.xlu0 %v2374
    %v2415 = vpop.xlane.xlu0 %2414
    %2416 = vadd.xlane.f32.xlu0 %v2375
    %v2417 = vpop.xlane.xlu0 %2416
    %2418 = vadd.xlane.f32.xlu0 %v2376
    %v2419 = vpop.xlane.xlu0 %2418
    %2420 = vadd.xlane.f32.xlu0 %v2377
    %v2421 = vpop.xlane.xlu0 %2420
    %2422 = vadd.xlane.f32.xlu0 %v2378
    %v2423 = vpop.xlane.xlu0 %2422
    %2424 = vadd.xlane.f32.xlu0 %v2379
    %v2425 = vpop.xlane.xlu0 %2424
    %2426 = vadd.xlane.f32.xlu0 %v2380
    %v2427 = vpop.xlane.xlu0 %2426
    %2428 = vadd.xlane.f32.xlu0 %v2381
    %v2429 = vpop.xlane.xlu0 %2428
    %2430 = vadd.xlane.f32.xlu0 %v2382
    %v2431 = vpop.xlane.xlu0 %2430
    %2432 = vadd.xlane.f32.xlu0 %v2383
    %v2433 = vpop.xlane.xlu0 %2432
    %2434 = vadd.xlane.f32.xlu0 %v2384
    %v2435 = vpop.xlane.xlu0 %2434
    %2436 = vadd.xlane.f32.xlu0 %v2385
    %v2437 = vpop.xlane.xlu0 %2436
    %2438 = vadd.xlane.f32.xlu0 %v2386
    %v2439 = vpop.xlane.xlu0 %2438
    %2440 = vadd.xlane.f32.xlu0 %v2387
    %v2441 = vpop.xlane.xlu0 %2440
    %2442 = vadd.xlane.f32.xlu0 %v2388
    %v2443 = vpop.xlane.xlu0 %2442
    %2444 = vadd.xlane.f32.xlu0 %v2389
    %v2445 = vpop.xlane.xlu0 %2444
    %2446 = vadd.xlane.f32.xlu0 %v2390
    %v2447 = vpop.xlane.xlu0 %2446
    %2448 = vadd.xlane.f32.xlu0 %v2391
    %v2449 = vpop.xlane.xlu0 %2448
    %2450 = vadd.xlane.f32.xlu0 %v2392
    %v2451 = vpop.xlane.xlu0 %2450
    %2452 = vadd.xlane.f32.xlu0 %v2393
    %v2453 = vpop.xlane.xlu0 %2452
    %2454 = vadd.xlane.f32.xlu0 %v2394
    %v2455 = vpop.xlane.xlu0 %2454
    %2456 = vadd.xlane.f32.xlu0 %v2395
    %v2457 = vpop.xlane.xlu0 %2456
    %2458 = vadd.xlane.f32.xlu0 %v2396
    %v2459 = vpop.xlane.xlu0 %2458
    %2460 = vadd.xlane.f32.xlu0 %v2397
    %v2461 = vpop.xlane.xlu0 %2460
    %v2462 = vmul.f32 %v2399, %v335
    %v2463 = vmul.f32 %v2401, %v335
    %v2464 = vmul.f32 %v2403, %v335
    %v2465 = vmul.f32 %v2405, %v335
    %v2466 = vmul.f32 %v2407, %v335
    %v2467 = vmul.f32 %v2409, %v335
    %v2468 = vmul.f32 %v2411, %v335
    %v2469 = vmul.f32 %v2413, %v335
    %v2470 = vmul.f32 %v2415, %v335
    %v2471 = vmul.f32 %v2417, %v335
    %v2472 = vmul.f32 %v2419, %v335
    %v2473 = vmul.f32 %v2421, %v335
    %v2474 = vmul.f32 %v2423, %v335
    %v2475 = vmul.f32 %v2425, %v335
    %v2476 = vmul.f32 %v2427, %v335
    %v2477 = vmul.f32 %v2429, %v335
    %v2478 = vmul.f32 %v2431, %v335
    %v2479 = vmul.f32 %v2433, %v335
    %v2480 = vmul.f32 %v2435, %v335
    %v2481 = vmul.f32 %v2437, %v335
    %v2482 = vmul.f32 %v2439, %v335
    %v2483 = vmul.f32 %v2441, %v335
    %v2484 = vmul.f32 %v2443, %v335
    %v2485 = vmul.f32 %v2445, %v335
    %v2486 = vmul.f32 %v2447, %v335
    %v2487 = vmul.f32 %v2449, %v335
    %v2488 = vmul.f32 %v2451, %v335
    %v2489 = vmul.f32 %v2453, %v335
    %v2490 = vmul.f32 %v2455, %v335
    %v2491 = vmul.f32 %v2457, %v335
    %v2492 = vmul.f32 %v2459, %v335
    %v2493 = vmul.f32 %v2461, %v335
    %v2494 = vadd.f32 %v2462, 1e-05
    %v2495 = vadd.f32 %v2463, 1e-05
    %v2496 = vadd.f32 %v2464, 1e-05
    %v2497 = vadd.f32 %v2465, 1e-05
    %v2498 = vadd.f32 %v2466, 1e-05
    %v2499 = vadd.f32 %v2467, 1e-05
    %v2500 = vadd.f32 %v2468, 1e-05
    %v2501 = vadd.f32 %v2469, 1e-05
    %v2502 = vadd.f32 %v2470, 1e-05
    %v2503 = vadd.f32 %v2471, 1e-05
    %v2504 = vadd.f32 %v2472, 1e-05
    %v2505 = vadd.f32 %v2473, 1e-05
    %v2506 = vadd.f32 %v2474, 1e-05
    %v2507 = vadd.f32 %v2475, 1e-05
    %v2508 = vadd.f32 %v2476, 1e-05
    %v2509 = vadd.f32 %v2477, 1e-05
    %v2510 = vadd.f32 %v2478, 1e-05
    %v2511 = vadd.f32 %v2479, 1e-05
    %v2512 = vadd.f32 %v2480, 1e-05
    %v2513 = vadd.f32 %v2481, 1e-05
    %v2514 = vadd.f32 %v2482, 1e-05
    %v2515 = vadd.f32 %v2483, 1e-05
    %v2516 = vadd.f32 %v2484, 1e-05
    %v2517 = vadd.f32 %v2485, 1e-05
    %v2518 = vadd.f32 %v2486, 1e-05
    %v2519 = vadd.f32 %v2487, 1e-05
    %v2520 = vadd.f32 %v2488, 1e-05
    %v2521 = vadd.f32 %v2489, 1e-05
    %v2522 = vadd.f32 %v2490, 1e-05
    %v2523 = vadd.f32 %v2491, 1e-05
    %v2524 = vadd.f32 %v2492, 1e-05
    %v2525 = vadd.f32 %v2493, 1e-05
    %v2526 = vrsqrt.pop %v2494
    %v2527 = vrsqrt.pop %v2495
    %v2528 = vrsqrt.pop %v2496
    %v2529 = vrsqrt.pop %v2497
    %v2530 = vrsqrt.pop %v2498
    %v2531 = vrsqrt.pop %v2499
    %v2532 = vrsqrt.pop %v2500
    %v2533 = vrsqrt.pop %v2501
    %v2534 = vrsqrt.pop %v2502
    %v2535 = vrsqrt.pop %v2503
    %v2536 = vrsqrt.pop %v2504
    %v2537 = vrsqrt.pop %v2505
    %v2538 = vrsqrt.pop %v2506
    %v2539 = vrsqrt.pop %v2507
    %v2540 = vrsqrt.pop %v2508
    %v2541 = vrsqrt.pop %v2509
    %v2542 = vrsqrt.pop %v2510
    %v2543 = vrsqrt.pop %v2511
    %v2544 = vrsqrt.pop %v2512
    %v2545 = vrsqrt.pop %v2513
    %v2546 = vrsqrt.pop %v2514
    %v2547 = vrsqrt.pop %v2515
    %v2548 = vrsqrt.pop %v2516
    %v2549 = vrsqrt.pop %v2517
    %v2550 = vrsqrt.pop %v2518
    %v2551 = vrsqrt.pop %v2519
    %v2552 = vrsqrt.pop %v2520
    %v2553 = vrsqrt.pop %v2521
    %v2554 = vrsqrt.pop %v2522
    %v2555 = vrsqrt.pop %v2523
    %v2556 = vrsqrt.pop %v2524
    %v2557 = vrsqrt.pop %v2525
    %v2558 = vmul.f32 %v2334, %v2526
    %v2559 = vmul.f32 %v2335, %v2527
    %v2560 = vmul.f32 %v2336, %v2528
    %v2561 = vmul.f32 %v2337, %v2529
    %v2562 = vmul.f32 %v2338, %v2530
    %v2563 = vmul.f32 %v2339, %v2531
    %v2564 = vmul.f32 %v2340, %v2532
    %v2565 = vmul.f32 %v2341, %v2533
    %v2566 = vmul.f32 %v2342, %v2534
    %v2567 = vmul.f32 %v2343, %v2535
    %v2568 = vmul.f32 %v2344, %v2536
    %v2569 = vmul.f32 %v2345, %v2537
    %v2570 = vmul.f32 %v2346, %v2538
    %v2571 = vmul.f32 %v2347, %v2539
    %v2572 = vmul.f32 %v2348, %v2540
    %v2573 = vmul.f32 %v2349, %v2541
    %v2574 = vmul.f32 %v2350, %v2542
    %v2575 = vmul.f32 %v2351, %v2543
    %v2576 = vmul.f32 %v2352, %v2544
    %v2577 = vmul.f32 %v2353, %v2545
    %v2578 = vmul.f32 %v2354, %v2546
    %v2579 = vmul.f32 %v2355, %v2547
    %v2580 = vmul.f32 %v2356, %v2548
    %v2581 = vmul.f32 %v2357, %v2549
    %v2582 = vmul.f32 %v2358, %v2550
    %v2583 = vmul.f32 %v2359, %v2551
    %v2584 = vmul.f32 %v2360, %v2552
    %v2585 = vmul.f32 %v2361, %v2553
    %v2586 = vmul.f32 %v2362, %v2554
    %v2587 = vmul.f32 %v2363, %v2555
    %v2588 = vmul.f32 %v2364, %v2556
    %v2589 = vmul.f32 %v2365, %v2557
    %v2591 = vlaneseq
    %v2592 = vshrl.u32 %v2591, 7
    %v2593 = vsub.s32 0, %v2592
    %v2594 = vrot.slane %v2236, %v2593
    %v2596 = vmul.f32 %v2558, %v2594
    %v2597 = vmul.f32 %v2559, %v2594
    %v2598 = vmul.f32 %v2560, %v2594
    %v2599 = vmul.f32 %v2561, %v2594
    %v2600 = vmul.f32 %v2562, %v2594
    %v2601 = vmul.f32 %v2563, %v2594
    %v2602 = vmul.f32 %v2564, %v2594
    %v2603 = vmul.f32 %v2565, %v2594
    %v2604 = vmul.f32 %v2566, %v2594
    %v2605 = vmul.f32 %v2567, %v2594
    %v2606 = vmul.f32 %v2568, %v2594
    %v2607 = vmul.f32 %v2569, %v2594
    %v2608 = vmul.f32 %v2570, %v2594
    %v2609 = vmul.f32 %v2571, %v2594
    %v2610 = vmul.f32 %v2572, %v2594
    %v2611 = vmul.f32 %v2573, %v2594
    %v2612 = vmul.f32 %v2574, %v2594
    %v2613 = vmul.f32 %v2575, %v2594
    %v2614 = vmul.f32 %v2576, %v2594
    %v2615 = vmul.f32 %v2577, %v2594
    %v2616 = vmul.f32 %v2578, %v2594
    %v2617 = vmul.f32 %v2579, %v2594
    %v2618 = vmul.f32 %v2580, %v2594
    %v2619 = vmul.f32 %v2581, %v2594
    %v2620 = vmul.f32 %v2582, %v2594
    %v2621 = vmul.f32 %v2583, %v2594
    %v2622 = vmul.f32 %v2584, %v2594
    %v2623 = vmul.f32 %v2585, %v2594
    %v2624 = vmul.f32 %v2586, %v2594
    %v2625 = vmul.f32 %v2587, %v2594
    %v2626 = vmul.f32 %v2588, %v2594
    %v2627 = vmul.f32 %v2589, %v2594
    %v2629 = vlaneseq
    %v2630 = vshrl.u32 %v2629, 7
    %v2631 = vsub.s32 0, %v2630
    %v2632 = vrot.slane %v2237, %v2631
    %v2634 = vadd.f32 %v2596, %v2632
    %v2635 = vadd.f32 %v2597, %v2632
    %v2636 = vadd.f32 %v2598, %v2632
    %v2637 = vadd.f32 %v2599, %v2632
    %v2638 = vadd.f32 %v2600, %v2632
    %v2639 = vadd.f32 %v2601, %v2632
    %v2640 = vadd.f32 %v2602, %v2632
    %v2641 = vadd.f32 %v2603, %v2632
    %v2642 = vadd.f32 %v2604, %v2632
    %v2643 = vadd.f32 %v2605, %v2632
    %v2644 = vadd.f32 %v2606, %v2632
    %v2645 = vadd.f32 %v2607, %v2632
    %v2646 = vadd.f32 %v2608, %v2632
    %v2647 = vadd.f32 %v2609, %v2632
    %v2648 = vadd.f32 %v2610, %v2632
    %v2649 = vadd.f32 %v2611, %v2632
    %v2650 = vadd.f32 %v2612, %v2632
    %v2651 = vadd.f32 %v2613, %v2632
    %v2652 = vadd.f32 %v2614, %v2632
    %v2653 = vadd.f32 %v2615, %v2632
    %v2654 = vadd.f32 %v2616, %v2632
    %v2655 = vadd.f32 %v2617, %v2632
    %v2656 = vadd.f32 %v2618, %v2632
    %v2657 = vadd.f32 %v2619, %v2632
    %v2658 = vadd.f32 %v2620, %v2632
    %v2659 = vadd.f32 %v2621, %v2632
    %v2660 = vadd.f32 %v2622, %v2632
    %v2661 = vadd.f32 %v2623, %v2632
    %v2662 = vadd.f32 %v2624, %v2632
    %v2663 = vadd.f32 %v2625, %v2632
    %v2664 = vadd.f32 %v2626, %v2632
    %v2665 = vadd.f32 %v2627, %v2632
    %v2666 = vld [vmem:[%s10] sm:$0xff]
    %v2667 = vld [vmem:[%s10 + $0x8] sm:$0xff]
    %v2668 = vld [vmem:[%s10 + $0x10] sm:$0xff]
    %v2669 = vld [vmem:[%s10 + $0x18] sm:$0xff]
    %v2670 = vld [vmem:[%s11] sm:$0x1]
    %v2672 = vlaneseq
    %v2673 = vshrl.u32 %v2672, 7
    %v2674 = vsub.s32 0, %v2673
    %v2675 = vrot.slane %v2670, %v2674
    %v2678 = vsel %vm107, %v1642, 0
    %v2681 = vsel %vm107, %v1643, 0
    %v2684 = vsel %vm107, %v1644, 0
    %v2687 = vsel %vm107, %v1645, 0
    %v2690 = vsel %vm107, %v1646, 0
    %v2693 = vsel %vm107, %v1647, 0
    %v2696 = vsel %vm107, %v1648, 0
    %v2699 = vsel %vm107, %v1649, 0
    %v2702 = vsel %vm107, %v1650, 0
    %v2705 = vsel %vm107, %v1651, 0
    %v2708 = vsel %vm107, %v1652, 0
    %v2711 = vsel %vm107, %v1653, 0
    %v2714 = vsel %vm107, %v1654, 0
    %v2717 = vsel %vm107, %v1655, 0
    %v2720 = vsel %vm107, %v1656, 0
    %v2723 = vsel %vm107, %v1657, 0
    %v2726 = vsel %vm107, %v1658, 0
    %v2729 = vsel %vm107, %v1659, 0
    %v2732 = vsel %vm107, %v1660, 0
    %v2735 = vsel %vm107, %v1661, 0
    %v2738 = vsel %vm107, %v1662, 0
    %v2741 = vsel %vm107, %v1663, 0
    %v2744 = vsel %vm107, %v1664, 0
    %v2747 = vsel %vm107, %v1665, 0
    %v2750 = vsel %vm107, %v1666, 0
    %v2753 = vsel %vm107, %v1667, 0
    %v2756 = vsel %vm107, %v1668, 0
    %v2759 = vsel %vm107, %v1669, 0
    %v2762 = vsel %vm107, %v1670, 0
    %v2765 = vsel %vm107, %v1671, 0
    %v2768 = vsel %vm107, %v1672, 0
    %v2771 = vsel %vm107, %v1673, 0
    %2773 = vmatprep.subr.mxu0 0.0
    %2774 = vmatpush1.msra.mxu0 0.0
    %2775 = vmatprep.subr.mxu0 0.0
    %2776 = vmatpush1.msra.mxu0 0.0
    %2777 = vmatprep.subr.mxu0 0.0
    %2778 = vmatpush1.msra.mxu0 0.0
    %2779 = vmatprep.subr.mxu0 0.0
    %2780 = vmatpush1.msra.mxu0 0.0
    %2781 = vmatprep.subr.mxu0 0.0
    %2782 = vmatpush1.msra.mxu0 0.0
    %2783 = vmatprep.subr.mxu0 0.0
    %2784 = vmatpush1.msra.mxu0 0.0
    %2785 = vmatprep.subr.mxu0 0.0
    %2786 = vmatpush1.msra.mxu0 0.0
    %2787 = vmatprep.subr.mxu0 0.0
    %2788 = vmatpush1.msra.mxu0 0.0
    %2789 = vmatprep.subr.mxu0 0.0
    %2790 = vmatpush1.msra.mxu0 0.0
    %2791 = vmatprep.subr.mxu0 0.0
    %2792 = vmatpush1.msra.mxu0 0.0
    %2793 = vmatprep.subr.mxu0 0.0
    %2794 = vmatpush1.msra.mxu0 0.0
    %2795 = vmatprep.subr.mxu0 0.0
    %2796 = vmatpush1.msra.mxu0 0.0
    %2797 = vmatprep.subr.mxu0 0.0
    %2798 = vmatpush1.msra.mxu0 %v2669
    %2799 = vmatprep.subr.mxu0 0.0
    %2800 = vmatpush1.msra.mxu0 %v2668
    %2801 = vmatprep.subr.mxu0 0.0
    %2802 = vmatpush1.msra.mxu0 %v2667
    %2803 = vmatprep.subr.mxu0 0.0
    %2804 = vmatpush1.msra.mxu0 %v2666
    %2805 = vmatprep.subr.mxu0 0.0
    %2806 = vmatpush2.msra.mxu0 0.0
    %2807 = vmatprep.subr.mxu0 0.0
    %2808 = vmatpush2.msra.mxu0 0.0
    %2809 = vmatprep.subr.mxu0 0.0
    %2810 = vmatpush2.msra.mxu0 0.0
    %2811 = vmatprep.subr.mxu0 0.0
    %2812 = vmatpush2.msra.mxu0 0.0
    %2813 = vmatprep.subr.mxu0 0.0
    %2814 = vmatpush2.msra.mxu0 0.0
    %2815 = vmatprep.subr.mxu0 0.0
    %2816 = vmatpush2.msra.mxu0 0.0
    %2817 = vmatprep.subr.mxu0 0.0
    %2818 = vmatpush2.msra.mxu0 0.0
    %2819 = vmatprep.subr.mxu0 0.0
    %2820 = vmatpush2.msra.mxu0 0.0
    %2821 = vmatprep.subr.mxu0 0.0
    %2822 = vmatpush2.msra.mxu0 0.0
    %2823 = vmatprep.subr.mxu0 0.0
    %2824 = vmatpush2.msra.mxu0 0.0
    %2825 = vmatprep.subr.mxu0 0.0
    %2826 = vmatpush2.msra.mxu0 0.0
    %2827 = vmatprep.subr.mxu0 0.0
    %2828 = vmatpush2.msra.mxu0 0.0
    %2829 = vmatprep.subr.mxu0 0.0
    %2830 = vmatpush2.msra.mxu0 0.0
    %2831 = vmatprep.subr.mxu0 0.0
    %2832 = vmatpush2.msra.mxu0 0.0
    %2833 = vmatprep.subr.mxu0 0.0
    %2834 = vmatpush2.msra.mxu0 0.0
    %2835 = vmatprep.subr.mxu0 0.0
    %2836 = vmatpush2.msra.mxu0 0.0
    %2837 = vmatprep.mubr.f32.mxu0 0.0
    %2838 = vmatmul.mubr.f32.gmra.mxu0 %v2678
    %v2839 = vpop.f32.mrf.mxu0
    %v2840 = vadd.f32 %v2675, %v2839
    %v2841 = vpop.f32.mrf.mxu0
    %2842 = vmatprep.mubr.f32.mxu0 0.0
    %2843 = vmatmul.mubr.f32.gmra.mxu0 %v2681
    %v2844 = vpop.f32.mrf.mxu0
    %v2845 = vadd.f32 %v2675, %v2844
    %v2846 = vpop.f32.mrf.mxu0
    %2847 = vmatprep.mubr.f32.mxu0 0.0
    %2848 = vmatmul.mubr.f32.gmra.mxu0 %v2684
    %v2849 = vpop.f32.mrf.mxu0
    %v2850 = vadd.f32 %v2675, %v2849
    %v2851 = vpop.f32.mrf.mxu0
    %2852 = vmatprep.mubr.f32.mxu0 0.0
    %2853 = vmatmul.mubr.f32.gmra.mxu0 %v2687
    %v2854 = vpop.f32.mrf.mxu0
    %v2855 = vadd.f32 %v2675, %v2854
    %v2856 = vpop.f32.mrf.mxu0
    %2857 = vmatprep.mubr.f32.mxu0 0.0
    %2858 = vmatmul.mubr.f32.gmra.mxu0 %v2690
    %v2859 = vpop.f32.mrf.mxu0
    %v2860 = vadd.f32 %v2675, %v2859
    %v2861 = vpop.f32.mrf.mxu0
    %2862 = vmatprep.mubr.f32.mxu0 0.0
    %2863 = vmatmul.mubr.f32.gmra.mxu0 %v2693
    %v2864 = vpop.f32.mrf.mxu0
    %v2865 = vadd.f32 %v2675, %v2864
    %v2866 = vpop.f32.mrf.mxu0
    %2867 = vmatprep.mubr.f32.mxu0 0.0
    %2868 = vmatmul.mubr.f32.gmra.mxu0 %v2696
    %v2869 = vpop.f32.mrf.mxu0
    %v2870 = vadd.f32 %v2675, %v2869
    %v2871 = vpop.f32.mrf.mxu0
    %2872 = vmatprep.mubr.f32.mxu0 0.0
    %2873 = vmatmul.mubr.f32.gmra.mxu0 %v2699
    %v2874 = vpop.f32.mrf.mxu0
    %v2875 = vadd.f32 %v2675, %v2874
    %v2876 = vpop.f32.mrf.mxu0
    %2877 = vmatprep.mubr.f32.mxu0 0.0
    %2878 = vmatmul.mubr.f32.gmra.mxu0 %v2702
    %v2879 = vpop.f32.mrf.mxu0
    %v2880 = vadd.f32 %v2675, %v2879
    %v2881 = vpop.f32.mrf.mxu0
    %2882 = vmatprep.mubr.f32.mxu0 0.0
    %2883 = vmatmul.mubr.f32.gmra.mxu0 %v2705
    %v2884 = vpop.f32.mrf.mxu0
    %v2885 = vadd.f32 %v2675, %v2884
    %v2886 = vpop.f32.mrf.mxu0
    %2887 = vmatprep.mubr.f32.mxu0 0.0
    %2888 = vmatmul.mubr.f32.gmra.mxu0 %v2708
    %v2889 = vpop.f32.mrf.mxu0
    %v2890 = vadd.f32 %v2675, %v2889
    %v2891 = vpop.f32.mrf.mxu0
    %2892 = vmatprep.mubr.f32.mxu0 0.0
    %2893 = vmatmul.mubr.f32.gmra.mxu0 %v2711
    %v2894 = vpop.f32.mrf.mxu0
    %v2895 = vadd.f32 %v2675, %v2894
    %v2896 = vpop.f32.mrf.mxu0
    %2897 = vmatprep.mubr.f32.mxu0 0.0
    %2898 = vmatmul.mubr.f32.gmra.mxu0 %v2714
    %v2899 = vpop.f32.mrf.mxu0
    %v2900 = vadd.f32 %v2675, %v2899
    %v2901 = vpop.f32.mrf.mxu0
    %2902 = vmatprep.mubr.f32.mxu0 0.0
    %2903 = vmatmul.mubr.f32.gmra.mxu0 %v2717
    %v2904 = vpop.f32.mrf.mxu0
    %v2905 = vadd.f32 %v2675, %v2904
    %v2906 = vpop.f32.mrf.mxu0
    %2907 = vmatprep.mubr.f32.mxu0 0.0
    %2908 = vmatmul.mubr.f32.gmra.mxu0 %v2720
    %v2909 = vpop.f32.mrf.mxu0
    %v2910 = vadd.f32 %v2675, %v2909
    %v2911 = vpop.f32.mrf.mxu0
    %2912 = vmatprep.mubr.f32.mxu0 0.0
    %2913 = vmatmul.mubr.f32.gmra.mxu0 %v2723
    %v2914 = vpop.f32.mrf.mxu0
    %v2915 = vadd.f32 %v2675, %v2914
    %v2916 = vpop.f32.mrf.mxu0
    %2917 = vmatprep.mubr.f32.mxu0 0.0
    %2918 = vmatmul.mubr.f32.gmra.mxu0 %v2726
    %v2919 = vpop.f32.mrf.mxu0
    %v2920 = vadd.f32 %v2675, %v2919
    %v2921 = vpop.f32.mrf.mxu0
    %2922 = vmatprep.mubr.f32.mxu0 0.0
    %2923 = vmatmul.mubr.f32.gmra.mxu0 %v2729
    %v2924 = vpop.f32.mrf.mxu0
    %v2925 = vadd.f32 %v2675, %v2924
    %v2926 = vpop.f32.mrf.mxu0
    %2927 = vmatprep.mubr.f32.mxu0 0.0
    %2928 = vmatmul.mubr.f32.gmra.mxu0 %v2732
    %v2929 = vpop.f32.mrf.mxu0
    %v2930 = vadd.f32 %v2675, %v2929
    %v2931 = vpop.f32.mrf.mxu0
    %2932 = vmatprep.mubr.f32.mxu0 0.0
    %2933 = vmatmul.mubr.f32.gmra.mxu0 %v2735
    %v2934 = vpop.f32.mrf.mxu0
    %v2935 = vadd.f32 %v2675, %v2934
    %v2936 = vpop.f32.mrf.mxu0
    %2937 = vmatprep.mubr.f32.mxu0 0.0
    %2938 = vmatmul.mubr.f32.gmra.mxu0 %v2738
    %v2939 = vpop.f32.mrf.mxu0
    %v2940 = vadd.f32 %v2675, %v2939
    %v2941 = vpop.f32.mrf.mxu0
    %2942 = vmatprep.mubr.f32.mxu0 0.0
    %2943 = vmatmul.mubr.f32.gmra.mxu0 %v2741
    %v2944 = vpop.f32.mrf.mxu0
    %v2945 = vadd.f32 %v2675, %v2944
    %v2946 = vpop.f32.mrf.mxu0
    %2947 = vmatprep.mubr.f32.mxu0 0.0
    %2948 = vmatmul.mubr.f32.gmra.mxu0 %v2744
    %v2949 = vpop.f32.mrf.mxu0
    %v2950 = vadd.f32 %v2675, %v2949
    %v2951 = vpop.f32.mrf.mxu0
    %2952 = vmatprep.mubr.f32.mxu0 0.0
    %2953 = vmatmul.mubr.f32.gmra.mxu0 %v2747
    %v2954 = vpop.f32.mrf.mxu0
    %v2955 = vadd.f32 %v2675, %v2954
    %v2956 = vpop.f32.mrf.mxu0
    %2957 = vmatprep.mubr.f32.mxu0 0.0
    %2958 = vmatmul.mubr.f32.gmra.mxu0 %v2750
    %v2959 = vpop.f32.mrf.mxu0
    %v2960 = vadd.f32 %v2675, %v2959
    %v2961 = vpop.f32.mrf.mxu0
    %2962 = vmatprep.mubr.f32.mxu0 0.0
    %2963 = vmatmul.mubr.f32.gmra.mxu0 %v2753
    %v2964 = vpop.f32.mrf.mxu0
    %v2965 = vadd.f32 %v2675, %v2964
    %v2966 = vpop.f32.mrf.mxu0
    %2967 = vmatprep.mubr.f32.mxu0 0.0
    %2968 = vmatmul.mubr.f32.gmra.mxu0 %v2756
    %v2969 = vpop.f32.mrf.mxu0
    %v2970 = vadd.f32 %v2675, %v2969
    %v2971 = vpop.f32.mrf.mxu0
    %2972 = vmatprep.mubr.f32.mxu0 0.0
    %2973 = vmatmul.mubr.f32.gmra.mxu0 %v2759
    %v2974 = vpop.f32.mrf.mxu0
    %v2975 = vadd.f32 %v2675, %v2974
    %v2976 = vpop.f32.mrf.mxu0
    %2977 = vmatprep.mubr.f32.mxu0 0.0
    %2978 = vmatmul.mubr.f32.gmra.mxu0 %v2762
    %v2979 = vpop.f32.mrf.mxu0
    %v2980 = vadd.f32 %v2675, %v2979
    %v2981 = vpop.f32.mrf.mxu0
    %2982 = vmatprep.mubr.f32.mxu0 0.0
    %2983 = vmatmul.mubr.f32.gmra.mxu0 %v2765
    %v2984 = vpop.f32.mrf.mxu0
    %v2985 = vadd.f32 %v2675, %v2984
    %v2986 = vpop.f32.mrf.mxu0
    %2987 = vmatprep.mubr.f32.mxu0 0.0
    %2988 = vmatmul.mubr.f32.gmra.mxu0 %v2768
    %v2989 = vpop.f32.mrf.mxu0
    %v2990 = vadd.f32 %v2675, %v2989
    %v2991 = vpop.f32.mrf.mxu0
    %2992 = vmatprep.mubr.f32.mxu0 0.0
    %2993 = vmatmul.mubr.f32.gmra.mxu0 %v2771
    %v2994 = vpop.f32.mrf.mxu0
    %v2995 = vadd.f32 %v2675, %v2994
    %v2996 = vpop.f32.mrf.mxu0
    %2997 = vdwg.mxu0
    %v2998 = vld [vmem:[%s12] sm:$0xff]
    %v2999 = vld [vmem:[%s12 + $0x8] sm:$0xff]
    %v3000 = vld [vmem:[%s12 + $0x10] sm:$0xff]
    %v3001 = vld [vmem:[%s12 + $0x18] sm:$0xff]
    %v3002 = vld [vmem:[%s13] sm:$0x1]
    %v3004 = vlaneseq
    %v3005 = vshrl.u32 %v3004, 7
    %v3006 = vsub.s32 0, %v3005
    %v3007 = vrot.slane %v3002, %v3006
    %3009 = vmatprep.subr.mxu0 0.0
    %3010 = vmatpush1.msra.mxu0 0.0
    %3011 = vmatprep.subr.mxu0 0.0
    %3012 = vmatpush1.msra.mxu0 0.0
    %3013 = vmatprep.subr.mxu0 0.0
    %3014 = vmatpush1.msra.mxu0 0.0
    %3015 = vmatprep.subr.mxu0 0.0
    %3016 = vmatpush1.msra.mxu0 0.0
    %3017 = vmatprep.subr.mxu0 0.0
    %3018 = vmatpush1.msra.mxu0 0.0
    %3019 = vmatprep.subr.mxu0 0.0
    %3020 = vmatpush1.msra.mxu0 0.0
    %3021 = vmatprep.subr.mxu0 0.0
    %3022 = vmatpush1.msra.mxu0 0.0
    %3023 = vmatprep.subr.mxu0 0.0
    %3024 = vmatpush1.msra.mxu0 0.0
    %3025 = vmatprep.subr.mxu0 0.0
    %3026 = vmatpush1.msra.mxu0 0.0
    %3027 = vmatprep.subr.mxu0 0.0
    %3028 = vmatpush1.msra.mxu0 0.0
    %3029 = vmatprep.subr.mxu0 0.0
    %3030 = vmatpush1.msra.mxu0 0.0
    %3031 = vmatprep.subr.mxu0 0.0
    %3032 = vmatpush1.msra.mxu0 0.0
    %3033 = vmatprep.subr.mxu0 0.0
    %3034 = vmatpush1.msra.mxu0 %v3001
    %3035 = vmatprep.subr.mxu0 0.0
    %3036 = vmatpush1.msra.mxu0 %v3000
    %3037 = vmatprep.subr.mxu0 0.0
    %3038 = vmatpush1.msra.mxu0 %v2999
    %3039 = vmatprep.subr.mxu0 0.0
    %3040 = vmatpush1.msra.mxu0 %v2998
    %3041 = vmatprep.subr.mxu0 0.0
    %3042 = vmatpush2.msra.mxu0 0.0
    %3043 = vmatprep.subr.mxu0 0.0
    %3044 = vmatpush2.msra.mxu0 0.0
    %3045 = vmatprep.subr.mxu0 0.0
    %3046 = vmatpush2.msra.mxu0 0.0
    %3047 = vmatprep.subr.mxu0 0.0
    %3048 = vmatpush2.msra.mxu0 0.0
    %3049 = vmatprep.subr.mxu0 0.0
    %3050 = vmatpush2.msra.mxu0 0.0
    %3051 = vmatprep.subr.mxu0 0.0
    %3052 = vmatpush2.msra.mxu0 0.0
    %3053 = vmatprep.subr.mxu0 0.0
    %3054 = vmatpush2.msra.mxu0 0.0
    %3055 = vmatprep.subr.mxu0 0.0
    %3056 = vmatpush2.msra.mxu0 0.0
    %3057 = vmatprep.subr.mxu0 0.0
    %3058 = vmatpush2.msra.mxu0 0.0
    %3059 = vmatprep.subr.mxu0 0.0
    %3060 = vmatpush2.msra.mxu0 0.0
    %3061 = vmatprep.subr.mxu0 0.0
    %3062 = vmatpush2.msra.mxu0 0.0
    %3063 = vmatprep.subr.mxu0 0.0
    %3064 = vmatpush2.msra.mxu0 0.0
    %3065 = vmatprep.subr.mxu0 0.0
    %3066 = vmatpush2.msra.mxu0 0.0
    %3067 = vmatprep.subr.mxu0 0.0
    %3068 = vmatpush2.msra.mxu0 0.0
    %3069 = vmatprep.subr.mxu0 0.0
    %3070 = vmatpush2.msra.mxu0 0.0
    %3071 = vmatprep.subr.mxu0 0.0
    %3072 = vmatpush2.msra.mxu0 0.0
    %3073 = vmatprep.mubr.f32.mxu0 0.0
    %3074 = vmatmul.mubr.f32.gmra.mxu0 %v2678
    %v3075 = vpop.f32.mrf.mxu0
    %v3076 = vadd.f32 %v3007, %v3075
    %v3077 = vpop.f32.mrf.mxu0
    %3078 = vmatprep.mubr.f32.mxu0 0.0
    %3079 = vmatmul.mubr.f32.gmra.mxu0 %v2681
    %v3080 = vpop.f32.mrf.mxu0
    %v3081 = vadd.f32 %v3007, %v3080
    %v3082 = vpop.f32.mrf.mxu0
    %3083 = vmatprep.mubr.f32.mxu0 0.0
    %3084 = vmatmul.mubr.f32.gmra.mxu0 %v2684
    %v3085 = vpop.f32.mrf.mxu0
    %v3086 = vadd.f32 %v3007, %v3085
    %v3087 = vpop.f32.mrf.mxu0
    %3088 = vmatprep.mubr.f32.mxu0 0.0
    %3089 = vmatmul.mubr.f32.gmra.mxu0 %v2687
    %v3090 = vpop.f32.mrf.mxu0
    %v3091 = vadd.f32 %v3007, %v3090
    %v3092 = vpop.f32.mrf.mxu0
    %3093 = vmatprep.mubr.f32.mxu0 0.0
    %3094 = vmatmul.mubr.f32.gmra.mxu0 %v2690
    %v3095 = vpop.f32.mrf.mxu0
    %v3096 = vadd.f32 %v3007, %v3095
    %v3097 = vpop.f32.mrf.mxu0
    %3098 = vmatprep.mubr.f32.mxu0 0.0
    %3099 = vmatmul.mubr.f32.gmra.mxu0 %v2693
    %v3100 = vpop.f32.mrf.mxu0
    %v3101 = vadd.f32 %v3007, %v3100
    %v3102 = vpop.f32.mrf.mxu0
    %3103 = vmatprep.mubr.f32.mxu0 0.0
    %3104 = vmatmul.mubr.f32.gmra.mxu0 %v2696
    %v3105 = vpop.f32.mrf.mxu0
    %v3106 = vadd.f32 %v3007, %v3105
    %v3107 = vpop.f32.mrf.mxu0
    %3108 = vmatprep.mubr.f32.mxu0 0.0
    %3109 = vmatmul.mubr.f32.gmra.mxu0 %v2699
    %v3110 = vpop.f32.mrf.mxu0
    %v3111 = vadd.f32 %v3007, %v3110
    %v3112 = vpop.f32.mrf.mxu0
    %3113 = vmatprep.mubr.f32.mxu0 0.0
    %3114 = vmatmul.mubr.f32.gmra.mxu0 %v2702
    %v3115 = vpop.f32.mrf.mxu0
    %v3116 = vadd.f32 %v3007, %v3115
    %v3117 = vpop.f32.mrf.mxu0
    %3118 = vmatprep.mubr.f32.mxu0 0.0
    %3119 = vmatmul.mubr.f32.gmra.mxu0 %v2705
    %v3120 = vpop.f32.mrf.mxu0
    %v3121 = vadd.f32 %v3007, %v3120
    %v3122 = vpop.f32.mrf.mxu0
    %3123 = vmatprep.mubr.f32.mxu0 0.0
    %3124 = vmatmul.mubr.f32.gmra.mxu0 %v2708
    %v3125 = vpop.f32.mrf.mxu0
    %v3126 = vadd.f32 %v3007, %v3125
    %v3127 = vpop.f32.mrf.mxu0
    %3128 = vmatprep.mubr.f32.mxu0 0.0
    %3129 = vmatmul.mubr.f32.gmra.mxu0 %v2711
    %v3130 = vpop.f32.mrf.mxu0
    %v3131 = vadd.f32 %v3007, %v3130
    %v3132 = vpop.f32.mrf.mxu0
    %3133 = vmatprep.mubr.f32.mxu0 0.0
    %3134 = vmatmul.mubr.f32.gmra.mxu0 %v2714
    %v3135 = vpop.f32.mrf.mxu0
    %v3136 = vadd.f32 %v3007, %v3135
    %v3137 = vpop.f32.mrf.mxu0
    %3138 = vmatprep.mubr.f32.mxu0 0.0
    %3139 = vmatmul.mubr.f32.gmra.mxu0 %v2717
    %v3140 = vpop.f32.mrf.mxu0
    %v3141 = vadd.f32 %v3007, %v3140
    %v3142 = vpop.f32.mrf.mxu0
    %3143 = vmatprep.mubr.f32.mxu0 0.0
    %3144 = vmatmul.mubr.f32.gmra.mxu0 %v2720
    %v3145 = vpop.f32.mrf.mxu0
    %v3146 = vadd.f32 %v3007, %v3145
    %v3147 = vpop.f32.mrf.mxu0
    %3148 = vmatprep.mubr.f32.mxu0 0.0
    %3149 = vmatmul.mubr.f32.gmra.mxu0 %v2723
    %v3150 = vpop.f32.mrf.mxu0
    %v3151 = vadd.f32 %v3007, %v3150
    %v3152 = vpop.f32.mrf.mxu0
    %3153 = vmatprep.mubr.f32.mxu0 0.0
    %3154 = vmatmul.mubr.f32.gmra.mxu0 %v2726
    %v3155 = vpop.f32.mrf.mxu0
    %v3156 = vadd.f32 %v3007, %v3155
    %v3157 = vpop.f32.mrf.mxu0
    %3158 = vmatprep.mubr.f32.mxu0 0.0
    %3159 = vmatmul.mubr.f32.gmra.mxu0 %v2729
    %v3160 = vpop.f32.mrf.mxu0
    %v3161 = vadd.f32 %v3007, %v3160
    %v3162 = vpop.f32.mrf.mxu0
    %3163 = vmatprep.mubr.f32.mxu0 0.0
    %3164 = vmatmul.mubr.f32.gmra.mxu0 %v2732
    %v3165 = vpop.f32.mrf.mxu0
    %v3166 = vadd.f32 %v3007, %v3165
    %v3167 = vpop.f32.mrf.mxu0
    %3168 = vmatprep.mubr.f32.mxu0 0.0
    %3169 = vmatmul.mubr.f32.gmra.mxu0 %v2735
    %v3170 = vpop.f32.mrf.mxu0
    %v3171 = vadd.f32 %v3007, %v3170
    %v3172 = vpop.f32.mrf.mxu0
    %3173 = vmatprep.mubr.f32.mxu0 0.0
    %3174 = vmatmul.mubr.f32.gmra.mxu0 %v2738
    %v3175 = vpop.f32.mrf.mxu0
    %v3176 = vadd.f32 %v3007, %v3175
    %v3177 = vpop.f32.mrf.mxu0
    %3178 = vmatprep.mubr.f32.mxu0 0.0
    %3179 = vmatmul.mubr.f32.gmra.mxu0 %v2741
    %v3180 = vpop.f32.mrf.mxu0
    %v3181 = vadd.f32 %v3007, %v3180
    %v3182 = vpop.f32.mrf.mxu0
    %3183 = vmatprep.mubr.f32.mxu0 0.0
    %3184 = vmatmul.mubr.f32.gmra.mxu0 %v2744
    %v3185 = vpop.f32.mrf.mxu0
    %v3186 = vadd.f32 %v3007, %v3185
    %v3187 = vpop.f32.mrf.mxu0
    %3188 = vmatprep.mubr.f32.mxu0 0.0
    %3189 = vmatmul.mubr.f32.gmra.mxu0 %v2747
    %v3190 = vpop.f32.mrf.mxu0
    %v3191 = vadd.f32 %v3007, %v3190
    %v3192 = vpop.f32.mrf.mxu0
    %3193 = vmatprep.mubr.f32.mxu0 0.0
    %3194 = vmatmul.mubr.f32.gmra.mxu0 %v2750
    %v3195 = vpop.f32.mrf.mxu0
    %v3196 = vadd.f32 %v3007, %v3195
    %v3197 = vpop.f32.mrf.mxu0
    %3198 = vmatprep.mubr.f32.mxu0 0.0
    %3199 = vmatmul.mubr.f32.gmra.mxu0 %v2753
    %v3200 = vpop.f32.mrf.mxu0
    %v3201 = vadd.f32 %v3007, %v3200
    %v3202 = vpop.f32.mrf.mxu0
    %3203 = vmatprep.mubr.f32.mxu0 0.0
    %3204 = vmatmul.mubr.f32.gmra.mxu0 %v2756
    %v3205 = vpop.f32.mrf.mxu0
    %v3206 = vadd.f32 %v3007, %v3205
    %v3207 = vpop.f32.mrf.mxu0
    %3208 = vmatprep.mubr.f32.mxu0 0.0
    %3209 = vmatmul.mubr.f32.gmra.mxu0 %v2759
    %v3210 = vpop.f32.mrf.mxu0
    %v3211 = vadd.f32 %v3007, %v3210
    %v3212 = vpop.f32.mrf.mxu0
    %3213 = vmatprep.mubr.f32.mxu0 0.0
    %3214 = vmatmul.mubr.f32.gmra.mxu0 %v2762
    %v3215 = vpop.f32.mrf.mxu0
    %v3216 = vadd.f32 %v3007, %v3215
    %v3217 = vpop.f32.mrf.mxu0
    %3218 = vmatprep.mubr.f32.mxu0 0.0
    %3219 = vmatmul.mubr.f32.gmra.mxu0 %v2765
    %v3220 = vpop.f32.mrf.mxu0
    %v3221 = vadd.f32 %v3007, %v3220
    %v3222 = vpop.f32.mrf.mxu0
    %3223 = vmatprep.mubr.f32.mxu0 0.0
    %3224 = vmatmul.mubr.f32.gmra.mxu0 %v2768
    %v3225 = vpop.f32.mrf.mxu0
    %v3226 = vadd.f32 %v3007, %v3225
    %v3227 = vpop.f32.mrf.mxu0
    %3228 = vmatprep.mubr.f32.mxu0 0.0
    %3229 = vmatmul.mubr.f32.gmra.mxu0 %v2771
    %v3230 = vpop.f32.mrf.mxu0
    %v3231 = vadd.f32 %v3007, %v3230
    %v3232 = vpop.f32.mrf.mxu0
    %3233 = vdwg.mxu0
    %s3234 = sld [smem:[#allocation2]]
    %v3235 = vstv %s3234
    %v3237 = vsel %vm107, %v2840, 0
    %v3240 = vsel %vm107, %v2845, 0
    %v3243 = vsel %vm107, %v2850, 0
    %v3246 = vsel %vm107, %v2855, 0
    %v3249 = vsel %vm107, %v2860, 0
    %v3252 = vsel %vm107, %v2865, 0
    %v3255 = vsel %vm107, %v2870, 0
    %v3258 = vsel %vm107, %v2875, 0
    %v3261 = vsel %vm107, %v2880, 0
    %v3264 = vsel %vm107, %v2885, 0
    %v3267 = vsel %vm107, %v2890, 0
    %v3270 = vsel %vm107, %v2895, 0
    %v3273 = vsel %vm107, %v2900, 0
    %v3276 = vsel %vm107, %v2905, 0
    %v3279 = vsel %vm107, %v2910, 0
    %v3282 = vsel %vm107, %v2915, 0
    %v3285 = vsel %vm107, %v3076, 0
    %v3288 = vsel %vm107, %v3081, 0
    %v3291 = vsel %vm107, %v3086, 0
    %v3294 = vsel %vm107, %v3091, 0
    %v3297 = vsel %vm107, %v3096, 0
    %v3300 = vsel %vm107, %v3101, 0
    %v3303 = vsel %vm107, %v3106, 0
    %v3306 = vsel %vm107, %v3111, 0
    %v3309 = vsel %vm107, %v3116, 0
    %v3312 = vsel %vm107, %v3121, 0
    %v3315 = vsel %vm107, %v3126, 0
    %v3318 = vsel %vm107, %v3131, 0
    %v3321 = vsel %vm107, %v3136, 0
    %v3324 = vsel %vm107, %v3141, 0
    %v3327 = vsel %vm107, %v3146, 0
    %v3330 = vsel %vm107, %v3151, 0
    %3332 = vmatprep.subr.mxu0 0.0
    %3333 = vmatpush1.xpose.msra.mxu0 %v3330
    %3334 = vmatprep.subr.mxu0 0.0
    %3335 = vmatpush1.xpose.msra.mxu0 %v3327
    %3336 = vmatprep.subr.mxu0 0.0
    %3337 = vmatpush1.xpose.msra.mxu0 %v3324
    %3338 = vmatprep.subr.mxu0 0.0
    %3339 = vmatpush1.xpose.msra.mxu0 %v3321
    %3340 = vmatprep.subr.mxu0 0.0
    %3341 = vmatpush1.xpose.msra.mxu0 %v3318
    %3342 = vmatprep.subr.mxu0 0.0
    %3343 = vmatpush1.xpose.msra.mxu0 %v3315
    %3344 = vmatprep.subr.mxu0 0.0
    %3345 = vmatpush1.xpose.msra.mxu0 %v3312
    %3346 = vmatprep.subr.mxu0 0.0
    %3347 = vmatpush1.xpose.msra.mxu0 %v3309
    %3348 = vmatprep.subr.mxu0 0.0
    %3349 = vmatpush1.xpose.msra.mxu0 %v3306
    %3350 = vmatprep.subr.mxu0 0.0
    %3351 = vmatpush1.xpose.msra.mxu0 %v3303
    %3352 = vmatprep.subr.mxu0 0.0
    %3353 = vmatpush1.xpose.msra.mxu0 %v3300
    %3354 = vmatprep.subr.mxu0 0.0
    %3355 = vmatpush1.xpose.msra.mxu0 %v3297
    %3356 = vmatprep.subr.mxu0 0.0
    %3357 = vmatpush1.xpose.msra.mxu0 %v3294
    %3358 = vmatprep.subr.mxu0 0.0
    %3359 = vmatpush1.xpose.msra.mxu0 %v3291
    %3360 = vmatprep.subr.mxu0 0.0
    %3361 = vmatpush1.xpose.msra.mxu0 %v3288
    %3362 = vmatprep.subr.mxu0 0.0
    %3363 = vmatpush1.xpose.msra.mxu0 %v3285
    %3364 = vmatprep.subr.mxu0 0.0
    %3365 = vmatpush2.xpose.msra.mxu0 0.0
    %3366 = vmatprep.subr.mxu0 0.0
    %3367 = vmatpush2.xpose.msra.mxu0 0.0
    %3368 = vmatprep.subr.mxu0 0.0
    %3369 = vmatpush2.xpose.msra.mxu0 0.0
    %3370 = vmatprep.subr.mxu0 0.0
    %3371 = vmatpush2.xpose.msra.mxu0 0.0
    %3372 = vmatprep.subr.mxu0 0.0
    %3373 = vmatpush2.xpose.msra.mxu0 0.0
    %3374 = vmatprep.subr.mxu0 0.0
    %3375 = vmatpush2.xpose.msra.mxu0 0.0
    %3376 = vmatprep.subr.mxu0 0.0
    %3377 = vmatpush2.xpose.msra.mxu0 0.0
    %3378 = vmatprep.subr.mxu0 0.0
    %3379 = vmatpush2.xpose.msra.mxu0 0.0
    %3380 = vmatprep.subr.mxu0 0.0
    %3381 = vmatpush2.xpose.msra.mxu0 0.0
    %3382 = vmatprep.subr.mxu0 0.0
    %3383 = vmatpush2.xpose.msra.mxu0 0.0
    %3384 = vmatprep.subr.mxu0 0.0
    %3385 = vmatpush2.xpose.msra.mxu0 0.0
    %3386 = vmatprep.subr.mxu0 0.0
    %3387 = vmatpush2.xpose.msra.mxu0 0.0
    %3388 = vmatprep.subr.mxu0 0.0
    %3389 = vmatpush2.xpose.msra.mxu0 0.0
    %3390 = vmatprep.subr.mxu0 0.0
    %3391 = vmatpush2.xpose.msra.mxu0 0.0
    %3392 = vmatprep.subr.mxu0 0.0
    %3393 = vmatpush2.xpose.msra.mxu0 0.0
    %3394 = vmatprep.subr.mxu0 0.0
    %3395 = vmatpush2.xpose.msra.mxu0 0.0
    %3396 = vmatprep.mubr.f32.mxu0 0.0
    %3397 = vmatmul.mubr.f32.gmra.mxu0 %v3237
    %v3398 = vpop.f32.mrf.mxu0
    %v3399 = vadd.f32 %v3235, %v3398
    %v3400 = vpop.f32.mrf.mxu0
    %3401 = vmatprep.mubr.f32.mxu0 0.0
    %3402 = vmatmul.mubr.f32.gmra.mxu0 %v3240
    %v3403 = vpop.f32.mrf.mxu0
    %v3404 = vadd.f32 %v3235, %v3403
    %v3405 = vpop.f32.mrf.mxu0
    %3406 = vmatprep.mubr.f32.mxu0 0.0
    %3407 = vmatmul.mubr.f32.gmra.mxu0 %v3243
    %v3408 = vpop.f32.mrf.mxu0
    %v3409 = vadd.f32 %v3235, %v3408
    %v3410 = vpop.f32.mrf.mxu0
    %3411 = vmatprep.mubr.f32.mxu0 0.0
    %3412 = vmatmul.mubr.f32.gmra.mxu0 %v3246
    %v3413 = vpop.f32.mrf.mxu0
    %v3414 = vadd.f32 %v3235, %v3413
    %v3415 = vpop.f32.mrf.mxu0
    %3416 = vmatprep.mubr.f32.mxu0 0.0
    %3417 = vmatmul.mubr.f32.gmra.mxu0 %v3249
    %v3418 = vpop.f32.mrf.mxu0
    %v3419 = vadd.f32 %v3235, %v3418
    %v3420 = vpop.f32.mrf.mxu0
    %3421 = vmatprep.mubr.f32.mxu0 0.0
    %3422 = vmatmul.mubr.f32.gmra.mxu0 %v3252
    %v3423 = vpop.f32.mrf.mxu0
    %v3424 = vadd.f32 %v3235, %v3423
    %v3425 = vpop.f32.mrf.mxu0
    %3426 = vmatprep.mubr.f32.mxu0 0.0
    %3427 = vmatmul.mubr.f32.gmra.mxu0 %v3255
    %v3428 = vpop.f32.mrf.mxu0
    %v3429 = vadd.f32 %v3235, %v3428
    %v3430 = vpop.f32.mrf.mxu0
    %3431 = vmatprep.mubr.f32.mxu0 0.0
    %3432 = vmatmul.mubr.f32.gmra.mxu0 %v3258
    %v3433 = vpop.f32.mrf.mxu0
    %v3434 = vadd.f32 %v3235, %v3433
    %v3435 = vpop.f32.mrf.mxu0
    %3436 = vmatprep.mubr.f32.mxu0 0.0
    %3437 = vmatmul.mubr.f32.gmra.mxu0 %v3261
    %v3438 = vpop.f32.mrf.mxu0
    %v3439 = vadd.f32 %v3235, %v3438
    %v3440 = vpop.f32.mrf.mxu0
    %3441 = vmatprep.mubr.f32.mxu0 0.0
    %3442 = vmatmul.mubr.f32.gmra.mxu0 %v3264
    %v3443 = vpop.f32.mrf.mxu0
    %v3444 = vadd.f32 %v3235, %v3443
    %v3445 = vpop.f32.mrf.mxu0
    %3446 = vmatprep.mubr.f32.mxu0 0.0
    %3447 = vmatmul.mubr.f32.gmra.mxu0 %v3267
    %v3448 = vpop.f32.mrf.mxu0
    %v3449 = vadd.f32 %v3235, %v3448
    %v3450 = vpop.f32.mrf.mxu0
    %3451 = vmatprep.mubr.f32.mxu0 0.0
    %3452 = vmatmul.mubr.f32.gmra.mxu0 %v3270
    %v3453 = vpop.f32.mrf.mxu0
    %v3454 = vadd.f32 %v3235, %v3453
    %v3455 = vpop.f32.mrf.mxu0
    %3456 = vmatprep.mubr.f32.mxu0 0.0
    %3457 = vmatmul.mubr.f32.gmra.mxu0 %v3273
    %v3458 = vpop.f32.mrf.mxu0
    %v3459 = vadd.f32 %v3235, %v3458
    %v3460 = vpop.f32.mrf.mxu0
    %3461 = vmatprep.mubr.f32.mxu0 0.0
    %3462 = vmatmul.mubr.f32.gmra.mxu0 %v3276
    %v3463 = vpop.f32.mrf.mxu0
    %v3464 = vadd.f32 %v3235, %v3463
    %v3465 = vpop.f32.mrf.mxu0
    %3466 = vmatprep.mubr.f32.mxu0 0.0
    %3467 = vmatmul.mubr.f32.gmra.mxu0 %v3279
    %v3468 = vpop.f32.mrf.mxu0
    %v3469 = vadd.f32 %v3235, %v3468
    %v3470 = vpop.f32.mrf.mxu0
    %3471 = vmatprep.mubr.f32.mxu0 0.0
    %3472 = vmatmul.mubr.f32.gmra.mxu0 %v3282
    %v3473 = vpop.f32.mrf.mxu0
    %v3474 = vadd.f32 %v3235, %v3473
    %v3475 = vpop.f32.mrf.mxu0
    %3476 = vdwg.mxu0
    %v3478 = vsel %vm107, %v2920, 0
    %v3481 = vsel %vm107, %v2925, 0
    %v3484 = vsel %vm107, %v2930, 0
    %v3487 = vsel %vm107, %v2935, 0
    %v3490 = vsel %vm107, %v2940, 0
    %v3493 = vsel %vm107, %v2945, 0
    %v3496 = vsel %vm107, %v2950, 0
    %v3499 = vsel %vm107, %v2955, 0
    %v3502 = vsel %vm107, %v2960, 0
    %v3505 = vsel %vm107, %v2965, 0
    %v3508 = vsel %vm107, %v2970, 0
    %v3511 = vsel %vm107, %v2975, 0
    %v3514 = vsel %vm107, %v2980, 0
    %v3517 = vsel %vm107, %v2985, 0
    %v3520 = vsel %vm107, %v2990, 0
    %v3523 = vsel %vm107, %v2995, 0
    %v3526 = vsel %vm107, %v3156, 0
    %v3529 = vsel %vm107, %v3161, 0
    %v3532 = vsel %vm107, %v3166, 0
    %v3535 = vsel %vm107, %v3171, 0
    %v3538 = vsel %vm107, %v3176, 0
    %v3541 = vsel %vm107, %v3181, 0
    %v3544 = vsel %vm107, %v3186, 0
    %v3547 = vsel %vm107, %v3191, 0
    %v3550 = vsel %vm107, %v3196, 0
    %v3553 = vsel %vm107, %v3201, 0
    %v3556 = vsel %vm107, %v3206, 0
    %v3559 = vsel %vm107, %v3211, 0
    %v3562 = vsel %vm107, %v3216, 0
    %v3565 = vsel %vm107, %v3221, 0
    %v3568 = vsel %vm107, %v3226, 0
    %v3571 = vsel %vm107, %v3231, 0
    %3573 = vmatprep.subr.mxu0 0.0
    %3574 = vmatpush1.xpose.msra.mxu0 %v3571
    %3575 = vmatprep.subr.mxu0 0.0
    %3576 = vmatpush1.xpose.msra.mxu0 %v3568
    %3577 = vmatprep.subr.mxu0 0.0
    %3578 = vmatpush1.xpose.msra.mxu0 %v3565
    %3579 = vmatprep.subr.mxu0 0.0
    %3580 = vmatpush1.xpose.msra.mxu0 %v3562
    %3581 = vmatprep.subr.mxu0 0.0
    %3582 = vmatpush1.xpose.msra.mxu0 %v3559
    %3583 = vmatprep.subr.mxu0 0.0
    %3584 = vmatpush1.xpose.msra.mxu0 %v3556
    %3585 = vmatprep.subr.mxu0 0.0
    %3586 = vmatpush1.xpose.msra.mxu0 %v3553
    %3587 = vmatprep.subr.mxu0 0.0
    %3588 = vmatpush1.xpose.msra.mxu0 %v3550
    %3589 = vmatprep.subr.mxu0 0.0
    %3590 = vmatpush1.xpose.msra.mxu0 %v3547
    %3591 = vmatprep.subr.mxu0 0.0
    %3592 = vmatpush1.xpose.msra.mxu0 %v3544
    %3593 = vmatprep.subr.mxu0 0.0
    %3594 = vmatpush1.xpose.msra.mxu0 %v3541
    %3595 = vmatprep.subr.mxu0 0.0
    %3596 = vmatpush1.xpose.msra.mxu0 %v3538
    %3597 = vmatprep.subr.mxu0 0.0
    %3598 = vmatpush1.xpose.msra.mxu0 %v3535
    %3599 = vmatprep.subr.mxu0 0.0
    %3600 = vmatpush1.xpose.msra.mxu0 %v3532
    %3601 = vmatprep.subr.mxu0 0.0
    %3602 = vmatpush1.xpose.msra.mxu0 %v3529
    %3603 = vmatprep.subr.mxu0 0.0
    %3604 = vmatpush1.xpose.msra.mxu0 %v3526
    %3605 = vmatprep.subr.mxu0 0.0
    %3606 = vmatpush2.xpose.msra.mxu0 0.0
    %3607 = vmatprep.subr.mxu0 0.0
    %3608 = vmatpush2.xpose.msra.mxu0 0.0
    %3609 = vmatprep.subr.mxu0 0.0
    %3610 = vmatpush2.xpose.msra.mxu0 0.0
    %3611 = vmatprep.subr.mxu0 0.0
    %3612 = vmatpush2.xpose.msra.mxu0 0.0
    %3613 = vmatprep.subr.mxu0 0.0
    %3614 = vmatpush2.xpose.msra.mxu0 0.0
    %3615 = vmatprep.subr.mxu0 0.0
    %3616 = vmatpush2.xpose.msra.mxu0 0.0
    %3617 = vmatprep.subr.mxu0 0.0
    %3618 = vmatpush2.xpose.msra.mxu0 0.0
    %3619 = vmatprep.subr.mxu0 0.0
    %3620 = vmatpush2.xpose.msra.mxu0 0.0
    %3621 = vmatprep.subr.mxu0 0.0
    %3622 = vmatpush2.xpose.msra.mxu0 0.0
    %3623 = vmatprep.subr.mxu0 0.0
    %3624 = vmatpush2.xpose.msra.mxu0 0.0
    %3625 = vmatprep.subr.mxu0 0.0
    %3626 = vmatpush2.xpose.msra.mxu0 0.0
    %3627 = vmatprep.subr.mxu0 0.0
    %3628 = vmatpush2.xpose.msra.mxu0 0.0
    %3629 = vmatprep.subr.mxu0 0.0
    %3630 = vmatpush2.xpose.msra.mxu0 0.0
    %3631 = vmatprep.subr.mxu0 0.0
    %3632 = vmatpush2.xpose.msra.mxu0 0.0
    %3633 = vmatprep.subr.mxu0 0.0
    %3634 = vmatpush2.xpose.msra.mxu0 0.0
    %3635 = vmatprep.subr.mxu0 0.0
    %3636 = vmatpush2.xpose.msra.mxu0 0.0
    %3637 = vmatprep.mubr.f32.mxu0 0.0
    %3638 = vmatmul.mubr.f32.gmra.mxu0 %v3478
    %v3639 = vpop.f32.mrf.mxu0
    %v3640 = vadd.f32 %v3235, %v3639
    %v3641 = vpop.f32.mrf.mxu0
    %3642 = vmatprep.mubr.f32.mxu0 0.0
    %3643 = vmatmul.mubr.f32.gmra.mxu0 %v3481
    %v3644 = vpop.f32.mrf.mxu0
    %v3645 = vadd.f32 %v3235, %v3644
    %v3646 = vpop.f32.mrf.mxu0
    %3647 = vmatprep.mubr.f32.mxu0 0.0
    %3648 = vmatmul.mubr.f32.gmra.mxu0 %v3484
    %v3649 = vpop.f32.mrf.mxu0
    %v3650 = vadd.f32 %v3235, %v3649
    %v3651 = vpop.f32.mrf.mxu0
    %3652 = vmatprep.mubr.f32.mxu0 0.0
    %3653 = vmatmul.mubr.f32.gmra.mxu0 %v3487
    %v3654 = vpop.f32.mrf.mxu0
    %v3655 = vadd.f32 %v3235, %v3654
    %v3656 = vpop.f32.mrf.mxu0
    %3657 = vmatprep.mubr.f32.mxu0 0.0
    %3658 = vmatmul.mubr.f32.gmra.mxu0 %v3490
    %v3659 = vpop.f32.mrf.mxu0
    %v3660 = vadd.f32 %v3235, %v3659
    %v3661 = vpop.f32.mrf.mxu0
    %3662 = vmatprep.mubr.f32.mxu0 0.0
    %3663 = vmatmul.mubr.f32.gmra.mxu0 %v3493
    %v3664 = vpop.f32.mrf.mxu0
    %v3665 = vadd.f32 %v3235, %v3664
    %v3666 = vpop.f32.mrf.mxu0
    %3667 = vmatprep.mubr.f32.mxu0 0.0
    %3668 = vmatmul.mubr.f32.gmra.mxu0 %v3496
    %v3669 = vpop.f32.mrf.mxu0
    %v3670 = vadd.f32 %v3235, %v3669
    %v3671 = vpop.f32.mrf.mxu0
    %3672 = vmatprep.mubr.f32.mxu0 0.0
    %3673 = vmatmul.mubr.f32.gmra.mxu0 %v3499
    %v3674 = vpop.f32.mrf.mxu0
    %v3675 = vadd.f32 %v3235, %v3674
    %v3676 = vpop.f32.mrf.mxu0
    %3677 = vmatprep.mubr.f32.mxu0 0.0
    %3678 = vmatmul.mubr.f32.gmra.mxu0 %v3502
    %v3679 = vpop.f32.mrf.mxu0
    %v3680 = vadd.f32 %v3235, %v3679
    %v3681 = vpop.f32.mrf.mxu0
    %3682 = vmatprep.mubr.f32.mxu0 0.0
    %3683 = vmatmul.mubr.f32.gmra.mxu0 %v3505
    %v3684 = vpop.f32.mrf.mxu0
    %v3685 = vadd.f32 %v3235, %v3684
    %v3686 = vpop.f32.mrf.mxu0
    %3687 = vmatprep.mubr.f32.mxu0 0.0
    %3688 = vmatmul.mubr.f32.gmra.mxu0 %v3508
    %v3689 = vpop.f32.mrf.mxu0
    %v3690 = vadd.f32 %v3235, %v3689
    %v3691 = vpop.f32.mrf.mxu0
    %3692 = vmatprep.mubr.f32.mxu0 0.0
    %3693 = vmatmul.mubr.f32.gmra.mxu0 %v3511
    %v3694 = vpop.f32.mrf.mxu0
    %v3695 = vadd.f32 %v3235, %v3694
    %v3696 = vpop.f32.mrf.mxu0
    %3697 = vmatprep.mubr.f32.mxu0 0.0
    %3698 = vmatmul.mubr.f32.gmra.mxu0 %v3514
    %v3699 = vpop.f32.mrf.mxu0
    %v3700 = vadd.f32 %v3235, %v3699
    %v3701 = vpop.f32.mrf.mxu0
    %3702 = vmatprep.mubr.f32.mxu0 0.0
    %3703 = vmatmul.mubr.f32.gmra.mxu0 %v3517
    %v3704 = vpop.f32.mrf.mxu0
    %v3705 = vadd.f32 %v3235, %v3704
    %v3706 = vpop.f32.mrf.mxu0
    %3707 = vmatprep.mubr.f32.mxu0 0.0
    %3708 = vmatmul.mubr.f32.gmra.mxu0 %v3520
    %v3709 = vpop.f32.mrf.mxu0
    %v3710 = vadd.f32 %v3235, %v3709
    %v3711 = vpop.f32.mrf.mxu0
    %3712 = vmatprep.mubr.f32.mxu0 0.0
    %3713 = vmatmul.mubr.f32.gmra.mxu0 %v3523
    %v3714 = vpop.f32.mrf.mxu0
    %v3715 = vadd.f32 %v3235, %v3714
    %v3716 = vpop.f32.mrf.mxu0
    %3717 = vdwg.mxu0
    %v3718 = vld [vmem:[%s17] sm:$0x1]
    %v3719 = vld [vmem:[%s18] sm:$0x1]
    %3720 = vadd.xlane.f32.xlu0 %v3399
    %v3721 = vpop.xlane.xlu0 %3720
    %3722 = vadd.xlane.f32.xlu0 %v3404
    %v3723 = vpop.xlane.xlu0 %3722
    %3724 = vadd.xlane.f32.xlu0 %v3409
    %v3725 = vpop.xlane.xlu0 %3724
    %3726 = vadd.xlane.f32.xlu0 %v3414
    %v3727 = vpop.xlane.xlu0 %3726
    %3728 = vadd.xlane.f32.xlu0 %v3419
    %v3729 = vpop.xlane.xlu0 %3728
    %3730 = vadd.xlane.f32.xlu0 %v3424
    %v3731 = vpop.xlane.xlu0 %3730
    %3732 = vadd.xlane.f32.xlu0 %v3429
    %v3733 = vpop.xlane.xlu0 %3732
    %3734 = vadd.xlane.f32.xlu0 %v3434
    %v3735 = vpop.xlane.xlu0 %3734
    %3736 = vadd.xlane.f32.xlu0 %v3439
    %v3737 = vpop.xlane.xlu0 %3736
    %3738 = vadd.xlane.f32.xlu0 %v3444
    %v3739 = vpop.xlane.xlu0 %3738
    %3740 = vadd.xlane.f32.xlu0 %v3449
    %v3741 = vpop.xlane.xlu0 %3740
    %3742 = vadd.xlane.f32.xlu0 %v3454
    %v3743 = vpop.xlane.xlu0 %3742
    %3744 = vadd.xlane.f32.xlu0 %v3459
    %v3745 = vpop.xlane.xlu0 %3744
    %3746 = vadd.xlane.f32.xlu0 %v3464
    %v3747 = vpop.xlane.xlu0 %3746
    %3748 = vadd.xlane.f32.xlu0 %v3469
    %v3749 = vpop.xlane.xlu0 %3748
    %3750 = vadd.xlane.f32.xlu0 %v3474
    %v3751 = vpop.xlane.xlu0 %3750
    %3752 = vadd.xlane.f32.xlu0 %v3640
    %v3753 = vpop.xlane.xlu0 %3752
    %3754 = vadd.xlane.f32.xlu0 %v3645
    %v3755 = vpop.xlane.xlu0 %3754
    %3756 = vadd.xlane.f32.xlu0 %v3650
    %v3757 = vpop.xlane.xlu0 %3756
    %3758 = vadd.xlane.f32.xlu0 %v3655
    %v3759 = vpop.xlane.xlu0 %3758
    %3760 = vadd.xlane.f32.xlu0 %v3660
    %v3761 = vpop.xlane.xlu0 %3760
    %3762 = vadd.xlane.f32.xlu0 %v3665
    %v3763 = vpop.xlane.xlu0 %3762
    %3764 = vadd.xlane.f32.xlu0 %v3670
    %v3765 = vpop.xlane.xlu0 %3764
    %3766 = vadd.xlane.f32.xlu0 %v3675
    %v3767 = vpop.xlane.xlu0 %3766
    %3768 = vadd.xlane.f32.xlu0 %v3680
    %v3769 = vpop.xlane.xlu0 %3768
    %3770 = vadd.xlane.f32.xlu0 %v3685
    %v3771 = vpop.xlane.xlu0 %3770
    %3772 = vadd.xlane.f32.xlu0 %v3690
    %v3773 = vpop.xlane.xlu0 %3772
    %3774 = vadd.xlane.f32.xlu0 %v3695
    %v3775 = vpop.xlane.xlu0 %3774
    %3776 = vadd.xlane.f32.xlu0 %v3700
    %v3777 = vpop.xlane.xlu0 %3776
    %3778 = vadd.xlane.f32.xlu0 %v3705
    %v3779 = vpop.xlane.xlu0 %3778
    %3780 = vadd.xlane.f32.xlu0 %v3710
    %v3781 = vpop.xlane.xlu0 %3780
    %3782 = vadd.xlane.f32.xlu0 %v3715
    %v3783 = vpop.xlane.xlu0 %3782
    %v3784 = vmul.f32 %v3721, %v335
    %v3785 = vmul.f32 %v3723, %v335
    %v3786 = vmul.f32 %v3725, %v335
    %v3787 = vmul.f32 %v3727, %v335
    %v3788 = vmul.f32 %v3729, %v335
    %v3789 = vmul.f32 %v3731, %v335
    %v3790 = vmul.f32 %v3733, %v335
    %v3791 = vmul.f32 %v3735, %v335
    %v3792 = vmul.f32 %v3737, %v335
    %v3793 = vmul.f32 %v3739, %v335
    %v3794 = vmul.f32 %v3741, %v335
    %v3795 = vmul.f32 %v3743, %v335
    %v3796 = vmul.f32 %v3745, %v335
    %v3797 = vmul.f32 %v3747, %v335
    %v3798 = vmul.f32 %v3749, %v335
    %v3799 = vmul.f32 %v3751, %v335
    %v3800 = vmul.f32 %v3753, %v335
    %v3801 = vmul.f32 %v3755, %v335
    %v3802 = vmul.f32 %v3757, %v335
    %v3803 = vmul.f32 %v3759, %v335
    %v3804 = vmul.f32 %v3761, %v335
    %v3805 = vmul.f32 %v3763, %v335
    %v3806 = vmul.f32 %v3765, %v335
    %v3807 = vmul.f32 %v3767, %v335
    %v3808 = vmul.f32 %v3769, %v335
    %v3809 = vmul.f32 %v3771, %v335
    %v3810 = vmul.f32 %v3773, %v335
    %v3811 = vmul.f32 %v3775, %v335
    %v3812 = vmul.f32 %v3777, %v335
    %v3813 = vmul.f32 %v3779, %v335
    %v3814 = vmul.f32 %v3781, %v335
    %v3815 = vmul.f32 %v3783, %v335
    %v3816 = vsub.f32 %v3399, %v3784
    %v3817 = vsub.f32 %v3404, %v3785
    %v3818 = vsub.f32 %v3409, %v3786
    %v3819 = vsub.f32 %v3414, %v3787
    %v3820 = vsub.f32 %v3419, %v3788
    %v3821 = vsub.f32 %v3424, %v3789
    %v3822 = vsub.f32 %v3429, %v3790
    %v3823 = vsub.f32 %v3434, %v3791
    %v3824 = vsub.f32 %v3439, %v3792
    %v3825 = vsub.f32 %v3444, %v3793
    %v3826 = vsub.f32 %v3449, %v3794
    %v3827 = vsub.f32 %v3454, %v3795
    %v3828 = vsub.f32 %v3459, %v3796
    %v3829 = vsub.f32 %v3464, %v3797
    %v3830 = vsub.f32 %v3469, %v3798
    %v3831 = vsub.f32 %v3474, %v3799
    %v3832 = vsub.f32 %v3640, %v3800
    %v3833 = vsub.f32 %v3645, %v3801
    %v3834 = vsub.f32 %v3650, %v3802
    %v3835 = vsub.f32 %v3655, %v3803
    %v3836 = vsub.f32 %v3660, %v3804
    %v3837 = vsub.f32 %v3665, %v3805
    %v3838 = vsub.f32 %v3670, %v3806
    %v3839 = vsub.f32 %v3675, %v3807
    %v3840 = vsub.f32 %v3680, %v3808
    %v3841 = vsub.f32 %v3685, %v3809
    %v3842 = vsub.f32 %v3690, %v3810
    %v3843 = vsub.f32 %v3695, %v3811
    %v3844 = vsub.f32 %v3700, %v3812
    %v3845 = vsub.f32 %v3705, %v3813
    %v3846 = vsub.f32 %v3710, %v3814
    %v3847 = vsub.f32 %v3715, %v3815
    %v3848 = vmul.f32 %v3816, %v3816
    %v3849 = vmul.f32 %v3817, %v3817
    %v3850 = vmul.f32 %v3818, %v3818
    %v3851 = vmul.f32 %v3819, %v3819
    %v3852 = vmul.f32 %v3820, %v3820
    %v3853 = vmul.f32 %v3821, %v3821
    %v3854 = vmul.f32 %v3822, %v3822
    %v3855 = vmul.f32 %v3823, %v3823
    %v3856 = vmul.f32 %v3824, %v3824
    %v3857 = vmul.f32 %v3825, %v3825
    %v3858 = vmul.f32 %v3826, %v3826
    %v3859 = vmul.f32 %v3827, %v3827
    %v3860 = vmul.f32 %v3828, %v3828
    %v3861 = vmul.f32 %v3829, %v3829
    %v3862 = vmul.f32 %v3830, %v3830
    %v3863 = vmul.f32 %v3831, %v3831
    %v3864 = vmul.f32 %v3832, %v3832
    %v3865 = vmul.f32 %v3833, %v3833
    %v3866 = vmul.f32 %v3834, %v3834
    %v3867 = vmul.f32 %v3835, %v3835
    %v3868 = vmul.f32 %v3836, %v3836
    %v3869 = vmul.f32 %v3837, %v3837
    %v3870 = vmul.f32 %v3838, %v3838
    %v3871 = vmul.f32 %v3839, %v3839
    %v3872 = vmul.f32 %v3840, %v3840
    %v3873 = vmul.f32 %v3841, %v3841
    %v3874 = vmul.f32 %v3842, %v3842
    %v3875 = vmul.f32 %v3843, %v3843
    %v3876 = vmul.f32 %v3844, %v3844
    %v3877 = vmul.f32 %v3845, %v3845
    %v3878 = vmul.f32 %v3846, %v3846
    %v3879 = vmul.f32 %v3847, %v3847
    %3880 = vadd.xlane.f32.xlu0 %v3848
    %v3881 = vpop.xlane.xlu0 %3880
    %3882 = vadd.xlane.f32.xlu0 %v3849
    %v3883 = vpop.xlane.xlu0 %3882
    %3884 = vadd.xlane.f32.xlu0 %v3850
    %v3885 = vpop.xlane.xlu0 %3884
    %3886 = vadd.xlane.f32.xlu0 %v3851
    %v3887 = vpop.xlane.xlu0 %3886
    %3888 = vadd.xlane.f32.xlu0 %v3852
    %v3889 = vpop.xlane.xlu0 %3888
    %3890 = vadd.xlane.f32.xlu0 %v3853
    %v3891 = vpop.xlane.xlu0 %3890
    %3892 = vadd.xlane.f32.xlu0 %v3854
    %v3893 = vpop.xlane.xlu0 %3892
    %3894 = vadd.xlane.f32.xlu0 %v3855
    %v3895 = vpop.xlane.xlu0 %3894
    %3896 = vadd.xlane.f32.xlu0 %v3856
    %v3897 = vpop.xlane.xlu0 %3896
    %3898 = vadd.xlane.f32.xlu0 %v3857
    %v3899 = vpop.xlane.xlu0 %3898
    %3900 = vadd.xlane.f32.xlu0 %v3858
    %v3901 = vpop.xlane.xlu0 %3900
    %3902 = vadd.xlane.f32.xlu0 %v3859
    %v3903 = vpop.xlane.xlu0 %3902
    %3904 = vadd.xlane.f32.xlu0 %v3860
    %v3905 = vpop.xlane.xlu0 %3904
    %3906 = vadd.xlane.f32.xlu0 %v3861
    %v3907 = vpop.xlane.xlu0 %3906
    %3908 = vadd.xlane.f32.xlu0 %v3862
    %v3909 = vpop.xlane.xlu0 %3908
    %3910 = vadd.xlane.f32.xlu0 %v3863
    %v3911 = vpop.xlane.xlu0 %3910
    %3912 = vadd.xlane.f32.xlu0 %v3864
    %v3913 = vpop.xlane.xlu0 %3912
    %3914 = vadd.xlane.f32.xlu0 %v3865
    %v3915 = vpop.xlane.xlu0 %3914
    %3916 = vadd.xlane.f32.xlu0 %v3866
    %v3917 = vpop.xlane.xlu0 %3916
    %3918 = vadd.xlane.f32.xlu0 %v3867
    %v3919 = vpop.xlane.xlu0 %3918
    %3920 = vadd.xlane.f32.xlu0 %v3868
    %v3921 = vpop.xlane.xlu0 %3920
    %3922 = vadd.xlane.f32.xlu0 %v3869
    %v3923 = vpop.xlane.xlu0 %3922
    %3924 = vadd.xlane.f32.xlu0 %v3870
    %v3925 = vpop.xlane.xlu0 %3924
    %3926 = vadd.xlane.f32.xlu0 %v3871
    %v3927 = vpop.xlane.xlu0 %3926
    %3928 = vadd.xlane.f32.xlu0 %v3872
    %v3929 = vpop.xlane.xlu0 %3928
    %3930 = vadd.xlane.f32.xlu0 %v3873
    %v3931 = vpop.xlane.xlu0 %3930
    %3932 = vadd.xlane.f32.xlu0 %v3874
    %v3933 = vpop.xlane.xlu0 %3932
    %3934 = vadd.xlane.f32.xlu0 %v3875
    %v3935 = vpop.xlane.xlu0 %3934
    %3936 = vadd.xlane.f32.xlu0 %v3876
    %v3937 = vpop.xlane.xlu0 %3936
    %3938 = vadd.xlane.f32.xlu0 %v3877
    %v3939 = vpop.xlane.xlu0 %3938
    %3940 = vadd.xlane.f32.xlu0 %v3878
    %v3941 = vpop.xlane.xlu0 %3940
    %3942 = vadd.xlane.f32.xlu0 %v3879
    %v3943 = vpop.xlane.xlu0 %3942
    %v3944 = vmul.f32 %v3881, %v335
    %v3945 = vmul.f32 %v3883, %v335
    %v3946 = vmul.f32 %v3885, %v335
    %v3947 = vmul.f32 %v3887, %v335
    %v3948 = vmul.f32 %v3889, %v335
    %v3949 = vmul.f32 %v3891, %v335
    %v3950 = vmul.f32 %v3893, %v335
    %v3951 = vmul.f32 %v3895, %v335
    %v3952 = vmul.f32 %v3897, %v335
    %v3953 = vmul.f32 %v3899, %v335
    %v3954 = vmul.f32 %v3901, %v335
    %v3955 = vmul.f32 %v3903, %v335
    %v3956 = vmul.f32 %v3905, %v335
    %v3957 = vmul.f32 %v3907, %v335
    %v3958 = vmul.f32 %v3909, %v335
    %v3959 = vmul.f32 %v3911, %v335
    %v3960 = vmul.f32 %v3913, %v335
    %v3961 = vmul.f32 %v3915, %v335
    %v3962 = vmul.f32 %v3917, %v335
    %v3963 = vmul.f32 %v3919, %v335
    %v3964 = vmul.f32 %v3921, %v335
    %v3965 = vmul.f32 %v3923, %v335
    %v3966 = vmul.f32 %v3925, %v335
    %v3967 = vmul.f32 %v3927, %v335
    %v3968 = vmul.f32 %v3929, %v335
    %v3969 = vmul.f32 %v3931, %v335
    %v3970 = vmul.f32 %v3933, %v335
    %v3971 = vmul.f32 %v3935, %v335
    %v3972 = vmul.f32 %v3937, %v335
    %v3973 = vmul.f32 %v3939, %v335
    %v3974 = vmul.f32 %v3941, %v335
    %v3975 = vmul.f32 %v3943, %v335
    %v3976 = vadd.f32 %v3944, 1e-05
    %v3977 = vadd.f32 %v3945, 1e-05
    %v3978 = vadd.f32 %v3946, 1e-05
    %v3979 = vadd.f32 %v3947, 1e-05
    %v3980 = vadd.f32 %v3948, 1e-05
    %v3981 = vadd.f32 %v3949, 1e-05
    %v3982 = vadd.f32 %v3950, 1e-05
    %v3983 = vadd.f32 %v3951, 1e-05
    %v3984 = vadd.f32 %v3952, 1e-05
    %v3985 = vadd.f32 %v3953, 1e-05
    %v3986 = vadd.f32 %v3954, 1e-05
    %v3987 = vadd.f32 %v3955, 1e-05
    %v3988 = vadd.f32 %v3956, 1e-05
    %v3989 = vadd.f32 %v3957, 1e-05
    %v3990 = vadd.f32 %v3958, 1e-05
    %v3991 = vadd.f32 %v3959, 1e-05
    %v3992 = vadd.f32 %v3960, 1e-05
    %v3993 = vadd.f32 %v3961, 1e-05
    %v3994 = vadd.f32 %v3962, 1e-05
    %v3995 = vadd.f32 %v3963, 1e-05
    %v3996 = vadd.f32 %v3964, 1e-05
    %v3997 = vadd.f32 %v3965, 1e-05
    %v3998 = vadd.f32 %v3966, 1e-05
    %v3999 = vadd.f32 %v3967, 1e-05
    %v4000 = vadd.f32 %v3968, 1e-05
    %v4001 = vadd.f32 %v3969, 1e-05
    %v4002 = vadd.f32 %v3970, 1e-05
    %v4003 = vadd.f32 %v3971, 1e-05
    %v4004 = vadd.f32 %v3972, 1e-05
    %v4005 = vadd.f32 %v3973, 1e-05
    %v4006 = vadd.f32 %v3974, 1e-05
    %v4007 = vadd.f32 %v3975, 1e-05
    %v4008 = vrsqrt.pop %v3976
    %v4009 = vrsqrt.pop %v3977
    %v4010 = vrsqrt.pop %v3978
    %v4011 = vrsqrt.pop %v3979
    %v4012 = vrsqrt.pop %v3980
    %v4013 = vrsqrt.pop %v3981
    %v4014 = vrsqrt.pop %v3982
    %v4015 = vrsqrt.pop %v3983
    %v4016 = vrsqrt.pop %v3984
    %v4017 = vrsqrt.pop %v3985
    %v4018 = vrsqrt.pop %v3986
    %v4019 = vrsqrt.pop %v3987
    %v4020 = vrsqrt.pop %v3988
    %v4021 = vrsqrt.pop %v3989
    %v4022 = vrsqrt.pop %v3990
    %v4023 = vrsqrt.pop %v3991
    %v4024 = vrsqrt.pop %v3992
    %v4025 = vrsqrt.pop %v3993
    %v4026 = vrsqrt.pop %v3994
    %v4027 = vrsqrt.pop %v3995
    %v4028 = vrsqrt.pop %v3996
    %v4029 = vrsqrt.pop %v3997
    %v4030 = vrsqrt.pop %v3998
    %v4031 = vrsqrt.pop %v3999
    %v4032 = vrsqrt.pop %v4000
    %v4033 = vrsqrt.pop %v4001
    %v4034 = vrsqrt.pop %v4002
    %v4035 = vrsqrt.pop %v4003
    %v4036 = vrsqrt.pop %v4004
    %v4037 = vrsqrt.pop %v4005
    %v4038 = vrsqrt.pop %v4006
    %v4039 = vrsqrt.pop %v4007
    %v4040 = vmul.f32 %v3816, %v4008
    %v4041 = vmul.f32 %v3817, %v4009
    %v4042 = vmul.f32 %v3818, %v4010
    %v4043 = vmul.f32 %v3819, %v4011
    %v4044 = vmul.f32 %v3820, %v4012
    %v4045 = vmul.f32 %v3821, %v4013
    %v4046 = vmul.f32 %v3822, %v4014
    %v4047 = vmul.f32 %v3823, %v4015
    %v4048 = vmul.f32 %v3824, %v4016
    %v4049 = vmul.f32 %v3825, %v4017
    %v4050 = vmul.f32 %v3826, %v4018
    %v4051 = vmul.f32 %v3827, %v4019
    %v4052 = vmul.f32 %v3828, %v4020
    %v4053 = vmul.f32 %v3829, %v4021
    %v4054 = vmul.f32 %v3830, %v4022
    %v4055 = vmul.f32 %v3831, %v4023
    %v4056 = vmul.f32 %v3832, %v4024
    %v4057 = vmul.f32 %v3833, %v4025
    %v4058 = vmul.f32 %v3834, %v4026
    %v4059 = vmul.f32 %v3835, %v4027
    %v4060 = vmul.f32 %v3836, %v4028
    %v4061 = vmul.f32 %v3837, %v4029
    %v4062 = vmul.f32 %v3838, %v4030
    %v4063 = vmul.f32 %v3839, %v4031
    %v4064 = vmul.f32 %v3840, %v4032
    %v4065 = vmul.f32 %v3841, %v4033
    %v4066 = vmul.f32 %v3842, %v4034
    %v4067 = vmul.f32 %v3843, %v4035
    %v4068 = vmul.f32 %v3844, %v4036
    %v4069 = vmul.f32 %v3845, %v4037
    %v4070 = vmul.f32 %v3846, %v4038
    %v4071 = vmul.f32 %v3847, %v4039
    %v4073 = vlaneseq
    %v4074 = vshrl.u32 %v4073, 7
    %v4075 = vsub.s32 0, %v4074
    %v4076 = vrot.slane %v3718, %v4075
    %v4078 = vmul.f32 %v4040, %v4076
    %v4079 = vmul.f32 %v4041, %v4076
    %v4080 = vmul.f32 %v4042, %v4076
    %v4081 = vmul.f32 %v4043, %v4076
    %v4082 = vmul.f32 %v4044, %v4076
    %v4083 = vmul.f32 %v4045, %v4076
    %v4084 = vmul.f32 %v4046, %v4076
    %v4085 = vmul.f32 %v4047, %v4076
    %v4086 = vmul.f32 %v4048, %v4076
    %v4087 = vmul.f32 %v4049, %v4076
    %v4088 = vmul.f32 %v4050, %v4076
    %v4089 = vmul.f32 %v4051, %v4076
    %v4090 = vmul.f32 %v4052, %v4076
    %v4091 = vmul.f32 %v4053, %v4076
    %v4092 = vmul.f32 %v4054, %v4076
    %v4093 = vmul.f32 %v4055, %v4076
    %v4094 = vmul.f32 %v4056, %v4076
    %v4095 = vmul.f32 %v4057, %v4076
    %v4096 = vmul.f32 %v4058, %v4076
    %v4097 = vmul.f32 %v4059, %v4076
    %v4098 = vmul.f32 %v4060, %v4076
    %v4099 = vmul.f32 %v4061, %v4076
    %v4100 = vmul.f32 %v4062, %v4076
    %v4101 = vmul.f32 %v4063, %v4076
    %v4102 = vmul.f32 %v4064, %v4076
    %v4103 = vmul.f32 %v4065, %v4076
    %v4104 = vmul.f32 %v4066, %v4076
    %v4105 = vmul.f32 %v4067, %v4076
    %v4106 = vmul.f32 %v4068, %v4076
    %v4107 = vmul.f32 %v4069, %v4076
    %v4108 = vmul.f32 %v4070, %v4076
    %v4109 = vmul.f32 %v4071, %v4076
    %v4111 = vlaneseq
    %v4112 = vshrl.u32 %v4111, 7
    %v4113 = vsub.s32 0, %v4112
    %v4114 = vrot.slane %v3719, %v4113
    %v4116 = vadd.f32 %v4078, %v4114
    %v4117 = vadd.f32 %v4079, %v4114
    %v4118 = vadd.f32 %v4080, %v4114
    %v4119 = vadd.f32 %v4081, %v4114
    %v4120 = vadd.f32 %v4082, %v4114
    %v4121 = vadd.f32 %v4083, %v4114
    %v4122 = vadd.f32 %v4084, %v4114
    %v4123 = vadd.f32 %v4085, %v4114
    %v4124 = vadd.f32 %v4086, %v4114
    %v4125 = vadd.f32 %v4087, %v4114
    %v4126 = vadd.f32 %v4088, %v4114
    %v4127 = vadd.f32 %v4089, %v4114
    %v4128 = vadd.f32 %v4090, %v4114
    %v4129 = vadd.f32 %v4091, %v4114
    %v4130 = vadd.f32 %v4092, %v4114
    %v4131 = vadd.f32 %v4093, %v4114
    %v4132 = vadd.f32 %v4094, %v4114
    %v4133 = vadd.f32 %v4095, %v4114
    %v4134 = vadd.f32 %v4096, %v4114
    %v4135 = vadd.f32 %v4097, %v4114
    %v4136 = vadd.f32 %v4098, %v4114
    %v4137 = vadd.f32 %v4099, %v4114
    %v4138 = vadd.f32 %v4100, %v4114
    %v4139 = vadd.f32 %v4101, %v4114
    %v4140 = vadd.f32 %v4102, %v4114
    %v4141 = vadd.f32 %v4103, %v4114
    %v4142 = vadd.f32 %v4104, %v4114
    %v4143 = vadd.f32 %v4105, %v4114
    %v4144 = vadd.f32 %v4106, %v4114
    %v4145 = vadd.f32 %v4107, %v4114
    %v4146 = vadd.f32 %v4108, %v4114
    %v4147 = vadd.f32 %v4109, %v4114
    %v4148 = vadd.f32 %v4116, %v2634
    %v4149 = vadd.f32 %v4117, %v2635
    %v4150 = vadd.f32 %v4118, %v2636
    %v4151 = vadd.f32 %v4119, %v2637
    %v4152 = vadd.f32 %v4120, %v2638
    %v4153 = vadd.f32 %v4121, %v2639
    %v4154 = vadd.f32 %v4122, %v2640
    %v4155 = vadd.f32 %v4123, %v2641
    %v4156 = vadd.f32 %v4124, %v2642
    %v4157 = vadd.f32 %v4125, %v2643
    %v4158 = vadd.f32 %v4126, %v2644
    %v4159 = vadd.f32 %v4127, %v2645
    %v4160 = vadd.f32 %v4128, %v2646
    %v4161 = vadd.f32 %v4129, %v2647
    %v4162 = vadd.f32 %v4130, %v2648
    %v4163 = vadd.f32 %v4131, %v2649
    %v4164 = vadd.f32 %v4132, %v2650
    %v4165 = vadd.f32 %v4133, %v2651
    %v4166 = vadd.f32 %v4134, %v2652
    %v4167 = vadd.f32 %v4135, %v2653
    %v4168 = vadd.f32 %v4136, %v2654
    %v4169 = vadd.f32 %v4137, %v2655
    %v4170 = vadd.f32 %v4138, %v2656
    %v4171 = vadd.f32 %v4139, %v2657
    %v4172 = vadd.f32 %v4140, %v2658
    %v4173 = vadd.f32 %v4141, %v2659
    %v4174 = vadd.f32 %v4142, %v2660
    %v4175 = vadd.f32 %v4143, %v2661
    %v4176 = vadd.f32 %v4144, %v2662
    %v4177 = vadd.f32 %v4145, %v2663
    %v4178 = vadd.f32 %v4146, %v2664
    %v4179 = vadd.f32 %v4147, %v2665
    %v4180 = vld [vmem:[%s19] sm:$0x1]
    %v4181 = vld [vmem:[%s20] sm:$0x1]
    %4182 = vadd.xlane.f32.xlu0 %v4148
    %v4183 = vpop.xlane.xlu0 %4182
    %4184 = vadd.xlane.f32.xlu0 %v4149
    %v4185 = vpop.xlane.xlu0 %4184
    %4186 = vadd.xlane.f32.xlu0 %v4150
    %v4187 = vpop.xlane.xlu0 %4186
    %4188 = vadd.xlane.f32.xlu0 %v4151
    %v4189 = vpop.xlane.xlu0 %4188
    %4190 = vadd.xlane.f32.xlu0 %v4152
    %v4191 = vpop.xlane.xlu0 %4190
    %4192 = vadd.xlane.f32.xlu0 %v4153
    %v4193 = vpop.xlane.xlu0 %4192
    %4194 = vadd.xlane.f32.xlu0 %v4154
    %v4195 = vpop.xlane.xlu0 %4194
    %4196 = vadd.xlane.f32.xlu0 %v4155
    %v4197 = vpop.xlane.xlu0 %4196
    %4198 = vadd.xlane.f32.xlu0 %v4156
    %v4199 = vpop.xlane.xlu0 %4198
    %4200 = vadd.xlane.f32.xlu0 %v4157
    %v4201 = vpop.xlane.xlu0 %4200
    %4202 = vadd.xlane.f32.xlu0 %v4158
    %v4203 = vpop.xlane.xlu0 %4202
    %4204 = vadd.xlane.f32.xlu0 %v4159
    %v4205 = vpop.xlane.xlu0 %4204
    %4206 = vadd.xlane.f32.xlu0 %v4160
    %v4207 = vpop.xlane.xlu0 %4206
    %4208 = vadd.xlane.f32.xlu0 %v4161
    %v4209 = vpop.xlane.xlu0 %4208
    %4210 = vadd.xlane.f32.xlu0 %v4162
    %v4211 = vpop.xlane.xlu0 %4210
    %4212 = vadd.xlane.f32.xlu0 %v4163
    %v4213 = vpop.xlane.xlu0 %4212
    %4214 = vadd.xlane.f32.xlu0 %v4164
    %v4215 = vpop.xlane.xlu0 %4214
    %4216 = vadd.xlane.f32.xlu0 %v4165
    %v4217 = vpop.xlane.xlu0 %4216
    %4218 = vadd.xlane.f32.xlu0 %v4166
    %v4219 = vpop.xlane.xlu0 %4218
    %4220 = vadd.xlane.f32.xlu0 %v4167
    %v4221 = vpop.xlane.xlu0 %4220
    %4222 = vadd.xlane.f32.xlu0 %v4168
    %v4223 = vpop.xlane.xlu0 %4222
    %4224 = vadd.xlane.f32.xlu0 %v4169
    %v4225 = vpop.xlane.xlu0 %4224
    %4226 = vadd.xlane.f32.xlu0 %v4170
    %v4227 = vpop.xlane.xlu0 %4226
    %4228 = vadd.xlane.f32.xlu0 %v4171
    %v4229 = vpop.xlane.xlu0 %4228
    %4230 = vadd.xlane.f32.xlu0 %v4172
    %v4231 = vpop.xlane.xlu0 %4230
    %4232 = vadd.xlane.f32.xlu0 %v4173
    %v4233 = vpop.xlane.xlu0 %4232
    %4234 = vadd.xlane.f32.xlu0 %v4174
    %v4235 = vpop.xlane.xlu0 %4234
    %4236 = vadd.xlane.f32.xlu0 %v4175
    %v4237 = vpop.xlane.xlu0 %4236
    %4238 = vadd.xlane.f32.xlu0 %v4176
    %v4239 = vpop.xlane.xlu0 %4238
    %4240 = vadd.xlane.f32.xlu0 %v4177
    %v4241 = vpop.xlane.xlu0 %4240
    %4242 = vadd.xlane.f32.xlu0 %v4178
    %v4243 = vpop.xlane.xlu0 %4242
    %4244 = vadd.xlane.f32.xlu0 %v4179
    %v4245 = vpop.xlane.xlu0 %4244
    %v4246 = vmul.f32 %v4183, %v335
    %v4247 = vmul.f32 %v4185, %v335
    %v4248 = vmul.f32 %v4187, %v335
    %v4249 = vmul.f32 %v4189, %v335
    %v4250 = vmul.f32 %v4191, %v335
    %v4251 = vmul.f32 %v4193, %v335
    %v4252 = vmul.f32 %v4195, %v335
    %v4253 = vmul.f32 %v4197, %v335
    %v4254 = vmul.f32 %v4199, %v335
    %v4255 = vmul.f32 %v4201, %v335
    %v4256 = vmul.f32 %v4203, %v335
    %v4257 = vmul.f32 %v4205, %v335
    %v4258 = vmul.f32 %v4207, %v335
    %v4259 = vmul.f32 %v4209, %v335
    %v4260 = vmul.f32 %v4211, %v335
    %v4261 = vmul.f32 %v4213, %v335
    %v4262 = vmul.f32 %v4215, %v335
    %v4263 = vmul.f32 %v4217, %v335
    %v4264 = vmul.f32 %v4219, %v335
    %v4265 = vmul.f32 %v4221, %v335
    %v4266 = vmul.f32 %v4223, %v335
    %v4267 = vmul.f32 %v4225, %v335
    %v4268 = vmul.f32 %v4227, %v335
    %v4269 = vmul.f32 %v4229, %v335
    %v4270 = vmul.f32 %v4231, %v335
    %v4271 = vmul.f32 %v4233, %v335
    %v4272 = vmul.f32 %v4235, %v335
    %v4273 = vmul.f32 %v4237, %v335
    %v4274 = vmul.f32 %v4239, %v335
    %v4275 = vmul.f32 %v4241, %v335
    %v4276 = vmul.f32 %v4243, %v335
    %v4277 = vmul.f32 %v4245, %v335
    %v4278 = vsub.f32 %v4148, %v4246
    %v4279 = vsub.f32 %v4149, %v4247
    %v4280 = vsub.f32 %v4150, %v4248
    %v4281 = vsub.f32 %v4151, %v4249
    %v4282 = vsub.f32 %v4152, %v4250
    %v4283 = vsub.f32 %v4153, %v4251
    %v4284 = vsub.f32 %v4154, %v4252
    %v4285 = vsub.f32 %v4155, %v4253
    %v4286 = vsub.f32 %v4156, %v4254
    %v4287 = vsub.f32 %v4157, %v4255
    %v4288 = vsub.f32 %v4158, %v4256
    %v4289 = vsub.f32 %v4159, %v4257
    %v4290 = vsub.f32 %v4160, %v4258
    %v4291 = vsub.f32 %v4161, %v4259
    %v4292 = vsub.f32 %v4162, %v4260
    %v4293 = vsub.f32 %v4163, %v4261
    %v4294 = vsub.f32 %v4164, %v4262
    %v4295 = vsub.f32 %v4165, %v4263
    %v4296 = vsub.f32 %v4166, %v4264
    %v4297 = vsub.f32 %v4167, %v4265
    %v4298 = vsub.f32 %v4168, %v4266
    %v4299 = vsub.f32 %v4169, %v4267
    %v4300 = vsub.f32 %v4170, %v4268
    %v4301 = vsub.f32 %v4171, %v4269
    %v4302 = vsub.f32 %v4172, %v4270
    %v4303 = vsub.f32 %v4173, %v4271
    %v4304 = vsub.f32 %v4174, %v4272
    %v4305 = vsub.f32 %v4175, %v4273
    %v4306 = vsub.f32 %v4176, %v4274
    %v4307 = vsub.f32 %v4177, %v4275
    %v4308 = vsub.f32 %v4178, %v4276
    %v4309 = vsub.f32 %v4179, %v4277
    %v4310 = vmul.f32 %v4278, %v4278
    %v4311 = vmul.f32 %v4279, %v4279
    %v4312 = vmul.f32 %v4280, %v4280
    %v4313 = vmul.f32 %v4281, %v4281
    %v4314 = vmul.f32 %v4282, %v4282
    %v4315 = vmul.f32 %v4283, %v4283
    %v4316 = vmul.f32 %v4284, %v4284
    %v4317 = vmul.f32 %v4285, %v4285
    %v4318 = vmul.f32 %v4286, %v4286
    %v4319 = vmul.f32 %v4287, %v4287
    %v4320 = vmul.f32 %v4288, %v4288
    %v4321 = vmul.f32 %v4289, %v4289
    %v4322 = vmul.f32 %v4290, %v4290
    %v4323 = vmul.f32 %v4291, %v4291
    %v4324 = vmul.f32 %v4292, %v4292
    %v4325 = vmul.f32 %v4293, %v4293
    %v4326 = vmul.f32 %v4294, %v4294
    %v4327 = vmul.f32 %v4295, %v4295
    %v4328 = vmul.f32 %v4296, %v4296
    %v4329 = vmul.f32 %v4297, %v4297
    %v4330 = vmul.f32 %v4298, %v4298
    %v4331 = vmul.f32 %v4299, %v4299
    %v4332 = vmul.f32 %v4300, %v4300
    %v4333 = vmul.f32 %v4301, %v4301
    %v4334 = vmul.f32 %v4302, %v4302
    %v4335 = vmul.f32 %v4303, %v4303
    %v4336 = vmul.f32 %v4304, %v4304
    %v4337 = vmul.f32 %v4305, %v4305
    %v4338 = vmul.f32 %v4306, %v4306
    %v4339 = vmul.f32 %v4307, %v4307
    %v4340 = vmul.f32 %v4308, %v4308
    %v4341 = vmul.f32 %v4309, %v4309
    %4342 = vadd.xlane.f32.xlu0 %v4310
    %v4343 = vpop.xlane.xlu0 %4342
    %4344 = vadd.xlane.f32.xlu0 %v4311
    %v4345 = vpop.xlane.xlu0 %4344
    %4346 = vadd.xlane.f32.xlu0 %v4312
    %v4347 = vpop.xlane.xlu0 %4346
    %4348 = vadd.xlane.f32.xlu0 %v4313
    %v4349 = vpop.xlane.xlu0 %4348
    %4350 = vadd.xlane.f32.xlu0 %v4314
    %v4351 = vpop.xlane.xlu0 %4350
    %4352 = vadd.xlane.f32.xlu0 %v4315
    %v4353 = vpop.xlane.xlu0 %4352
    %4354 = vadd.xlane.f32.xlu0 %v4316
    %v4355 = vpop.xlane.xlu0 %4354
    %4356 = vadd.xlane.f32.xlu0 %v4317
    %v4357 = vpop.xlane.xlu0 %4356
    %4358 = vadd.xlane.f32.xlu0 %v4318
    %v4359 = vpop.xlane.xlu0 %4358
    %4360 = vadd.xlane.f32.xlu0 %v4319
    %v4361 = vpop.xlane.xlu0 %4360
    %4362 = vadd.xlane.f32.xlu0 %v4320
    %v4363 = vpop.xlane.xlu0 %4362
    %4364 = vadd.xlane.f32.xlu0 %v4321
    %v4365 = vpop.xlane.xlu0 %4364
    %4366 = vadd.xlane.f32.xlu0 %v4322
    %v4367 = vpop.xlane.xlu0 %4366
    %4368 = vadd.xlane.f32.xlu0 %v4323
    %v4369 = vpop.xlane.xlu0 %4368
    %4370 = vadd.xlane.f32.xlu0 %v4324
    %v4371 = vpop.xlane.xlu0 %4370
    %4372 = vadd.xlane.f32.xlu0 %v4325
    %v4373 = vpop.xlane.xlu0 %4372
    %4374 = vadd.xlane.f32.xlu0 %v4326
    %v4375 = vpop.xlane.xlu0 %4374
    %4376 = vadd.xlane.f32.xlu0 %v4327
    %v4377 = vpop.xlane.xlu0 %4376
    %4378 = vadd.xlane.f32.xlu0 %v4328
    %v4379 = vpop.xlane.xlu0 %4378
    %4380 = vadd.xlane.f32.xlu0 %v4329
    %v4381 = vpop.xlane.xlu0 %4380
    %4382 = vadd.xlane.f32.xlu0 %v4330
    %v4383 = vpop.xlane.xlu0 %4382
    %4384 = vadd.xlane.f32.xlu0 %v4331
    %v4385 = vpop.xlane.xlu0 %4384
    %4386 = vadd.xlane.f32.xlu0 %v4332
    %v4387 = vpop.xlane.xlu0 %4386
    %4388 = vadd.xlane.f32.xlu0 %v4333
    %v4389 = vpop.xlane.xlu0 %4388
    %4390 = vadd.xlane.f32.xlu0 %v4334
    %v4391 = vpop.xlane.xlu0 %4390
    %4392 = vadd.xlane.f32.xlu0 %v4335
    %v4393 = vpop.xlane.xlu0 %4392
    %4394 = vadd.xlane.f32.xlu0 %v4336
    %v4395 = vpop.xlane.xlu0 %4394
    %4396 = vadd.xlane.f32.xlu0 %v4337
    %v4397 = vpop.xlane.xlu0 %4396
    %4398 = vadd.xlane.f32.xlu0 %v4338
    %v4399 = vpop.xlane.xlu0 %4398
    %4400 = vadd.xlane.f32.xlu0 %v4339
    %v4401 = vpop.xlane.xlu0 %4400
    %4402 = vadd.xlane.f32.xlu0 %v4340
    %v4403 = vpop.xlane.xlu0 %4402
    %4404 = vadd.xlane.f32.xlu0 %v4341
    %v4405 = vpop.xlane.xlu0 %4404
    %v4406 = vmul.f32 %v4343, %v335
    %v4407 = vmul.f32 %v4345, %v335
    %v4408 = vmul.f32 %v4347, %v335
    %v4409 = vmul.f32 %v4349, %v335
    %v4410 = vmul.f32 %v4351, %v335
    %v4411 = vmul.f32 %v4353, %v335
    %v4412 = vmul.f32 %v4355, %v335
    %v4413 = vmul.f32 %v4357, %v335
    %v4414 = vmul.f32 %v4359, %v335
    %v4415 = vmul.f32 %v4361, %v335
    %v4416 = vmul.f32 %v4363, %v335
    %v4417 = vmul.f32 %v4365, %v335
    %v4418 = vmul.f32 %v4367, %v335
    %v4419 = vmul.f32 %v4369, %v335
    %v4420 = vmul.f32 %v4371, %v335
    %v4421 = vmul.f32 %v4373, %v335
    %v4422 = vmul.f32 %v4375, %v335
    %v4423 = vmul.f32 %v4377, %v335
    %v4424 = vmul.f32 %v4379, %v335
    %v4425 = vmul.f32 %v4381, %v335
    %v4426 = vmul.f32 %v4383, %v335
    %v4427 = vmul.f32 %v4385, %v335
    %v4428 = vmul.f32 %v4387, %v335
    %v4429 = vmul.f32 %v4389, %v335
    %v4430 = vmul.f32 %v4391, %v335
    %v4431 = vmul.f32 %v4393, %v335
    %v4432 = vmul.f32 %v4395, %v335
    %v4433 = vmul.f32 %v4397, %v335
    %v4434 = vmul.f32 %v4399, %v335
    %v4435 = vmul.f32 %v4401, %v335
    %v4436 = vmul.f32 %v4403, %v335
    %v4437 = vmul.f32 %v4405, %v335
    %v4438 = vadd.f32 %v4406, 1e-05
    %v4439 = vadd.f32 %v4407, 1e-05
    %v4440 = vadd.f32 %v4408, 1e-05
    %v4441 = vadd.f32 %v4409, 1e-05
    %v4442 = vadd.f32 %v4410, 1e-05
    %v4443 = vadd.f32 %v4411, 1e-05
    %v4444 = vadd.f32 %v4412, 1e-05
    %v4445 = vadd.f32 %v4413, 1e-05
    %v4446 = vadd.f32 %v4414, 1e-05
    %v4447 = vadd.f32 %v4415, 1e-05
    %v4448 = vadd.f32 %v4416, 1e-05
    %v4449 = vadd.f32 %v4417, 1e-05
    %v4450 = vadd.f32 %v4418, 1e-05
    %v4451 = vadd.f32 %v4419, 1e-05
    %v4452 = vadd.f32 %v4420, 1e-05
    %v4453 = vadd.f32 %v4421, 1e-05
    %v4454 = vadd.f32 %v4422, 1e-05
    %v4455 = vadd.f32 %v4423, 1e-05
    %v4456 = vadd.f32 %v4424, 1e-05
    %v4457 = vadd.f32 %v4425, 1e-05
    %v4458 = vadd.f32 %v4426, 1e-05
    %v4459 = vadd.f32 %v4427, 1e-05
    %v4460 = vadd.f32 %v4428, 1e-05
    %v4461 = vadd.f32 %v4429, 1e-05
    %v4462 = vadd.f32 %v4430, 1e-05
    %v4463 = vadd.f32 %v4431, 1e-05
    %v4464 = vadd.f32 %v4432, 1e-05
    %v4465 = vadd.f32 %v4433, 1e-05
    %v4466 = vadd.f32 %v4434, 1e-05
    %v4467 = vadd.f32 %v4435, 1e-05
    %v4468 = vadd.f32 %v4436, 1e-05
    %v4469 = vadd.f32 %v4437, 1e-05
    %v4470 = vrsqrt.pop %v4438
    %v4471 = vrsqrt.pop %v4439
    %v4472 = vrsqrt.pop %v4440
    %v4473 = vrsqrt.pop %v4441
    %v4474 = vrsqrt.pop %v4442
    %v4475 = vrsqrt.pop %v4443
    %v4476 = vrsqrt.pop %v4444
    %v4477 = vrsqrt.pop %v4445
    %v4478 = vrsqrt.pop %v4446
    %v4479 = vrsqrt.pop %v4447
    %v4480 = vrsqrt.pop %v4448
    %v4481 = vrsqrt.pop %v4449
    %v4482 = vrsqrt.pop %v4450
    %v4483 = vrsqrt.pop %v4451
    %v4484 = vrsqrt.pop %v4452
    %v4485 = vrsqrt.pop %v4453
    %v4486 = vrsqrt.pop %v4454
    %v4487 = vrsqrt.pop %v4455
    %v4488 = vrsqrt.pop %v4456
    %v4489 = vrsqrt.pop %v4457
    %v4490 = vrsqrt.pop %v4458
    %v4491 = vrsqrt.pop %v4459
    %v4492 = vrsqrt.pop %v4460
    %v4493 = vrsqrt.pop %v4461
    %v4494 = vrsqrt.pop %v4462
    %v4495 = vrsqrt.pop %v4463
    %v4496 = vrsqrt.pop %v4464
    %v4497 = vrsqrt.pop %v4465
    %v4498 = vrsqrt.pop %v4466
    %v4499 = vrsqrt.pop %v4467
    %v4500 = vrsqrt.pop %v4468
    %v4501 = vrsqrt.pop %v4469
    %v4502 = vmul.f32 %v4278, %v4470
    %v4503 = vmul.f32 %v4279, %v4471
    %v4504 = vmul.f32 %v4280, %v4472
    %v4505 = vmul.f32 %v4281, %v4473
    %v4506 = vmul.f32 %v4282, %v4474
    %v4507 = vmul.f32 %v4283, %v4475
    %v4508 = vmul.f32 %v4284, %v4476
    %v4509 = vmul.f32 %v4285, %v4477
    %v4510 = vmul.f32 %v4286, %v4478
    %v4511 = vmul.f32 %v4287, %v4479
    %v4512 = vmul.f32 %v4288, %v4480
    %v4513 = vmul.f32 %v4289, %v4481
    %v4514 = vmul.f32 %v4290, %v4482
    %v4515 = vmul.f32 %v4291, %v4483
    %v4516 = vmul.f32 %v4292, %v4484
    %v4517 = vmul.f32 %v4293, %v4485
    %v4518 = vmul.f32 %v4294, %v4486
    %v4519 = vmul.f32 %v4295, %v4487
    %v4520 = vmul.f32 %v4296, %v4488
    %v4521 = vmul.f32 %v4297, %v4489
    %v4522 = vmul.f32 %v4298, %v4490
    %v4523 = vmul.f32 %v4299, %v4491
    %v4524 = vmul.f32 %v4300, %v4492
    %v4525 = vmul.f32 %v4301, %v4493
    %v4526 = vmul.f32 %v4302, %v4494
    %v4527 = vmul.f32 %v4303, %v4495
    %v4528 = vmul.f32 %v4304, %v4496
    %v4529 = vmul.f32 %v4305, %v4497
    %v4530 = vmul.f32 %v4306, %v4498
    %v4531 = vmul.f32 %v4307, %v4499
    %v4532 = vmul.f32 %v4308, %v4500
    %v4533 = vmul.f32 %v4309, %v4501
    %v4535 = vlaneseq
    %v4536 = vshrl.u32 %v4535, 7
    %v4537 = vsub.s32 0, %v4536
    %v4538 = vrot.slane %v4180, %v4537
    %v4540 = vmul.f32 %v4502, %v4538
    %v4541 = vmul.f32 %v4503, %v4538
    %v4542 = vmul.f32 %v4504, %v4538
    %v4543 = vmul.f32 %v4505, %v4538
    %v4544 = vmul.f32 %v4506, %v4538
    %v4545 = vmul.f32 %v4507, %v4538
    %v4546 = vmul.f32 %v4508, %v4538
    %v4547 = vmul.f32 %v4509, %v4538
    %v4548 = vmul.f32 %v4510, %v4538
    %v4549 = vmul.f32 %v4511, %v4538
    %v4550 = vmul.f32 %v4512, %v4538
    %v4551 = vmul.f32 %v4513, %v4538
    %v4552 = vmul.f32 %v4514, %v4538
    %v4553 = vmul.f32 %v4515, %v4538
    %v4554 = vmul.f32 %v4516, %v4538
    %v4555 = vmul.f32 %v4517, %v4538
    %v4556 = vmul.f32 %v4518, %v4538
    %v4557 = vmul.f32 %v4519, %v4538
    %v4558 = vmul.f32 %v4520, %v4538
    %v4559 = vmul.f32 %v4521, %v4538
    %v4560 = vmul.f32 %v4522, %v4538
    %v4561 = vmul.f32 %v4523, %v4538
    %v4562 = vmul.f32 %v4524, %v4538
    %v4563 = vmul.f32 %v4525, %v4538
    %v4564 = vmul.f32 %v4526, %v4538
    %v4565 = vmul.f32 %v4527, %v4538
    %v4566 = vmul.f32 %v4528, %v4538
    %v4567 = vmul.f32 %v4529, %v4538
    %v4568 = vmul.f32 %v4530, %v4538
    %v4569 = vmul.f32 %v4531, %v4538
    %v4570 = vmul.f32 %v4532, %v4538
    %v4571 = vmul.f32 %v4533, %v4538
    %v4573 = vlaneseq
    %v4574 = vshrl.u32 %v4573, 7
    %v4575 = vsub.s32 0, %v4574
    %v4576 = vrot.slane %v4181, %v4575
    %v4578 = vadd.f32 %v4540, %v4576
    %v4579 = vadd.f32 %v4541, %v4576
    %v4580 = vadd.f32 %v4542, %v4576
    %v4581 = vadd.f32 %v4543, %v4576
    %v4582 = vadd.f32 %v4544, %v4576
    %v4583 = vadd.f32 %v4545, %v4576
    %v4584 = vadd.f32 %v4546, %v4576
    %v4585 = vadd.f32 %v4547, %v4576
    %v4586 = vadd.f32 %v4548, %v4576
    %v4587 = vadd.f32 %v4549, %v4576
    %v4588 = vadd.f32 %v4550, %v4576
    %v4589 = vadd.f32 %v4551, %v4576
    %v4590 = vadd.f32 %v4552, %v4576
    %v4591 = vadd.f32 %v4553, %v4576
    %v4592 = vadd.f32 %v4554, %v4576
    %v4593 = vadd.f32 %v4555, %v4576
    %v4594 = vadd.f32 %v4556, %v4576
    %v4595 = vadd.f32 %v4557, %v4576
    %v4596 = vadd.f32 %v4558, %v4576
    %v4597 = vadd.f32 %v4559, %v4576
    %v4598 = vadd.f32 %v4560, %v4576
    %v4599 = vadd.f32 %v4561, %v4576
    %v4600 = vadd.f32 %v4562, %v4576
    %v4601 = vadd.f32 %v4563, %v4576
    %v4602 = vadd.f32 %v4564, %v4576
    %v4603 = vadd.f32 %v4565, %v4576
    %v4604 = vadd.f32 %v4566, %v4576
    %v4605 = vadd.f32 %v4567, %v4576
    %v4606 = vadd.f32 %v4568, %v4576
    %v4607 = vadd.f32 %v4569, %v4576
    %v4608 = vadd.f32 %v4570, %v4576
    %v4609 = vadd.f32 %v4571, %v4576
    %v4610 = vld [vmem:[%s21] sm:$0xff]
    %v4611 = vld [vmem:[%s21 + $0x8] sm:$0xff]
    %v4612 = vld [vmem:[%s21 + $0x10] sm:$0xff]
    %v4613 = vld [vmem:[%s21 + $0x18] sm:$0xff]
    %v4614 = vld [vmem:[%s21 + $0x20] sm:$0xff]
    %v4615 = vld [vmem:[%s21 + $0x28] sm:$0xff]
    %v4616 = vld [vmem:[%s21 + $0x30] sm:$0xff]
    %v4617 = vld [vmem:[%s21 + $0x38] sm:$0xff]
    %v4618 = vld [vmem:[%s21 + $0x40] sm:$0xff]
    %v4619 = vld [vmem:[%s21 + $0x48] sm:$0xff]
    %v4620 = vld [vmem:[%s21 + $0x50] sm:$0xff]
    %v4621 = vld [vmem:[%s21 + $0x58] sm:$0xff]
    %v4622 = vld [vmem:[%s21 + $0x60] sm:$0xff]
    %v4623 = vld [vmem:[%s21 + $0x68] sm:$0xff]
    %v4624 = vld [vmem:[%s21 + $0x70] sm:$0xff]
    %v4625 = vld [vmem:[%s21 + $0x78] sm:$0xff]
    %4626 = vmatprep.subr.mxu0 0.0
    %4627 = vmatpush1.msra.mxu0 %v4625
    %4628 = vmatprep.subr.mxu0 0.0
    %4629 = vmatpush1.msra.mxu0 %v4624
    %4630 = vmatprep.subr.mxu0 0.0
    %4631 = vmatpush1.msra.mxu0 %v4623
    %4632 = vmatprep.subr.mxu0 0.0
    %4633 = vmatpush1.msra.mxu0 %v4622
    %4634 = vmatprep.subr.mxu0 0.0
    %4635 = vmatpush1.msra.mxu0 %v4621
    %4636 = vmatprep.subr.mxu0 0.0
    %4637 = vmatpush1.msra.mxu0 %v4620
    %4638 = vmatprep.subr.mxu0 0.0
    %4639 = vmatpush1.msra.mxu0 %v4619
    %4640 = vmatprep.subr.mxu0 0.0
    %4641 = vmatpush1.msra.mxu0 %v4618
    %4642 = vmatprep.subr.mxu0 0.0
    %4643 = vmatpush1.msra.mxu0 %v4617
    %4644 = vmatprep.subr.mxu0 0.0
    %4645 = vmatpush1.msra.mxu0 %v4616
    %4646 = vmatprep.subr.mxu0 0.0
    %4647 = vmatpush1.msra.mxu0 %v4615
    %4648 = vmatprep.subr.mxu0 0.0
    %4649 = vmatpush1.msra.mxu0 %v4614
    %4650 = vmatprep.subr.mxu0 0.0
    %4651 = vmatpush1.msra.mxu0 %v4613
    %4652 = vmatprep.subr.mxu0 0.0
    %4653 = vmatpush1.msra.mxu0 %v4612
    %4654 = vmatprep.subr.mxu0 0.0
    %4655 = vmatpush1.msra.mxu0 %v4611
    %4656 = vmatprep.subr.mxu0 0.0
    %4657 = vmatpush1.msra.mxu0 %v4610
    %4658 = vmatprep.subr.mxu0 0.0
    %4659 = vmatpush2.msra.mxu0 0.0
    %4660 = vmatprep.subr.mxu0 0.0
    %4661 = vmatpush2.msra.mxu0 0.0
    %4662 = vmatprep.subr.mxu0 0.0
    %4663 = vmatpush2.msra.mxu0 0.0
    %4664 = vmatprep.subr.mxu0 0.0
    %4665 = vmatpush2.msra.mxu0 0.0
    %4666 = vmatprep.subr.mxu0 0.0
    %4667 = vmatpush2.msra.mxu0 0.0
    %4668 = vmatprep.subr.mxu0 0.0
    %4669 = vmatpush2.msra.mxu0 0.0
    %4670 = vmatprep.subr.mxu0 0.0
    %4671 = vmatpush2.msra.mxu0 0.0
    %4672 = vmatprep.subr.mxu0 0.0
    %4673 = vmatpush2.msra.mxu0 0.0
    %4674 = vmatprep.subr.mxu0 0.0
    %4675 = vmatpush2.msra.mxu0 0.0
    %4676 = vmatprep.subr.mxu0 0.0
    %4677 = vmatpush2.msra.mxu0 0.0
    %4678 = vmatprep.subr.mxu0 0.0
    %4679 = vmatpush2.msra.mxu0 0.0
    %4680 = vmatprep.subr.mxu0 0.0
    %4681 = vmatpush2.msra.mxu0 0.0
    %4682 = vmatprep.subr.mxu0 0.0
    %4683 = vmatpush2.msra.mxu0 0.0
    %4684 = vmatprep.subr.mxu0 0.0
    %4685 = vmatpush2.msra.mxu0 0.0
    %4686 = vmatprep.subr.mxu0 0.0
    %4687 = vmatpush2.msra.mxu0 0.0
    %4688 = vmatprep.subr.mxu0 0.0
    %4689 = vmatpush2.msra.mxu0 0.0
    %4690 = vmatprep.mubr.f32.mxu0 0.0
    %4691 = vmatmul.mubr.f32.gmra.mxu0 %v4578
    %v4692 = vpop.f32.mrf.mxu0
    %v4693 = vadd.f32 0.0, %v4692
    %v4694 = vpop.f32.mrf.mxu0
    %4695 = vmatprep.mubr.f32.mxu0 0.0
    %4696 = vmatmul.mubr.f32.gmra.mxu0 %v4579
    %v4697 = vpop.f32.mrf.mxu0
    %v4698 = vadd.f32 0.0, %v4697
    %v4699 = vpop.f32.mrf.mxu0
    %4700 = vmatprep.mubr.f32.mxu0 0.0
    %4701 = vmatmul.mubr.f32.gmra.mxu0 %v4580
    %v4702 = vpop.f32.mrf.mxu0
    %v4703 = vadd.f32 0.0, %v4702
    %v4704 = vpop.f32.mrf.mxu0
    %4705 = vmatprep.mubr.f32.mxu0 0.0
    %4706 = vmatmul.mubr.f32.gmra.mxu0 %v4581
    %v4707 = vpop.f32.mrf.mxu0
    %v4708 = vadd.f32 0.0, %v4707
    %v4709 = vpop.f32.mrf.mxu0
    %4710 = vmatprep.mubr.f32.mxu0 0.0
    %4711 = vmatmul.mubr.f32.gmra.mxu0 %v4582
    %v4712 = vpop.f32.mrf.mxu0
    %v4713 = vadd.f32 0.0, %v4712
    %v4714 = vpop.f32.mrf.mxu0
    %4715 = vmatprep.mubr.f32.mxu0 0.0
    %4716 = vmatmul.mubr.f32.gmra.mxu0 %v4583
    %v4717 = vpop.f32.mrf.mxu0
    %v4718 = vadd.f32 0.0, %v4717
    %v4719 = vpop.f32.mrf.mxu0
    %4720 = vmatprep.mubr.f32.mxu0 0.0
    %4721 = vmatmul.mubr.f32.gmra.mxu0 %v4584
    %v4722 = vpop.f32.mrf.mxu0
    %v4723 = vadd.f32 0.0, %v4722
    %v4724 = vpop.f32.mrf.mxu0
    %4725 = vmatprep.mubr.f32.mxu0 0.0
    %4726 = vmatmul.mubr.f32.gmra.mxu0 %v4585
    %v4727 = vpop.f32.mrf.mxu0
    %v4728 = vadd.f32 0.0, %v4727
    %v4729 = vpop.f32.mrf.mxu0
    %4730 = vmatprep.mubr.f32.mxu0 0.0
    %4731 = vmatmul.mubr.f32.gmra.mxu0 %v4586
    %v4732 = vpop.f32.mrf.mxu0
    %v4733 = vadd.f32 0.0, %v4732
    %v4734 = vpop.f32.mrf.mxu0
    %4735 = vmatprep.mubr.f32.mxu0 0.0
    %4736 = vmatmul.mubr.f32.gmra.mxu0 %v4587
    %v4737 = vpop.f32.mrf.mxu0
    %v4738 = vadd.f32 0.0, %v4737
    %v4739 = vpop.f32.mrf.mxu0
    %4740 = vmatprep.mubr.f32.mxu0 0.0
    %4741 = vmatmul.mubr.f32.gmra.mxu0 %v4588
    %v4742 = vpop.f32.mrf.mxu0
    %v4743 = vadd.f32 0.0, %v4742
    %v4744 = vpop.f32.mrf.mxu0
    %4745 = vmatprep.mubr.f32.mxu0 0.0
    %4746 = vmatmul.mubr.f32.gmra.mxu0 %v4589
    %v4747 = vpop.f32.mrf.mxu0
    %v4748 = vadd.f32 0.0, %v4747
    %v4749 = vpop.f32.mrf.mxu0
    %4750 = vmatprep.mubr.f32.mxu0 0.0
    %4751 = vmatmul.mubr.f32.gmra.mxu0 %v4590
    %v4752 = vpop.f32.mrf.mxu0
    %v4753 = vadd.f32 0.0, %v4752
    %v4754 = vpop.f32.mrf.mxu0
    %4755 = vmatprep.mubr.f32.mxu0 0.0
    %4756 = vmatmul.mubr.f32.gmra.mxu0 %v4591
    %v4757 = vpop.f32.mrf.mxu0
    %v4758 = vadd.f32 0.0, %v4757
    %v4759 = vpop.f32.mrf.mxu0
    %4760 = vmatprep.mubr.f32.mxu0 0.0
    %4761 = vmatmul.mubr.f32.gmra.mxu0 %v4592
    %v4762 = vpop.f32.mrf.mxu0
    %v4763 = vadd.f32 0.0, %v4762
    %v4764 = vpop.f32.mrf.mxu0
    %4765 = vmatprep.mubr.f32.mxu0 0.0
    %4766 = vmatmul.mubr.f32.gmra.mxu0 %v4593
    %v4767 = vpop.f32.mrf.mxu0
    %v4768 = vadd.f32 0.0, %v4767
    %v4769 = vpop.f32.mrf.mxu0
    %4770 = vmatprep.mubr.f32.mxu0 0.0
    %4771 = vmatmul.mubr.f32.gmra.mxu0 %v4594
    %v4772 = vpop.f32.mrf.mxu0
    %v4773 = vadd.f32 0.0, %v4772
    %v4774 = vpop.f32.mrf.mxu0
    %4775 = vmatprep.mubr.f32.mxu0 0.0
    %4776 = vmatmul.mubr.f32.gmra.mxu0 %v4595
    %v4777 = vpop.f32.mrf.mxu0
    %v4778 = vadd.f32 0.0, %v4777
    %v4779 = vpop.f32.mrf.mxu0
    %4780 = vmatprep.mubr.f32.mxu0 0.0
    %4781 = vmatmul.mubr.f32.gmra.mxu0 %v4596
    %v4782 = vpop.f32.mrf.mxu0
    %v4783 = vadd.f32 0.0, %v4782
    %v4784 = vpop.f32.mrf.mxu0
    %4785 = vmatprep.mubr.f32.mxu0 0.0
    %4786 = vmatmul.mubr.f32.gmra.mxu0 %v4597
    %v4787 = vpop.f32.mrf.mxu0
    %v4788 = vadd.f32 0.0, %v4787
    %v4789 = vpop.f32.mrf.mxu0
    %4790 = vmatprep.mubr.f32.mxu0 0.0
    %4791 = vmatmul.mubr.f32.gmra.mxu0 %v4598
    %v4792 = vpop.f32.mrf.mxu0
    %v4793 = vadd.f32 0.0, %v4792
    %v4794 = vpop.f32.mrf.mxu0
    %4795 = vmatprep.mubr.f32.mxu0 0.0
    %4796 = vmatmul.mubr.f32.gmra.mxu0 %v4599
    %v4797 = vpop.f32.mrf.mxu0
    %v4798 = vadd.f32 0.0, %v4797
    %v4799 = vpop.f32.mrf.mxu0
    %4800 = vmatprep.mubr.f32.mxu0 0.0
    %4801 = vmatmul.mubr.f32.gmra.mxu0 %v4600
    %v4802 = vpop.f32.mrf.mxu0
    %v4803 = vadd.f32 0.0, %v4802
    %v4804 = vpop.f32.mrf.mxu0
    %4805 = vmatprep.mubr.f32.mxu0 0.0
    %4806 = vmatmul.mubr.f32.gmra.mxu0 %v4601
    %v4807 = vpop.f32.mrf.mxu0
    %v4808 = vadd.f32 0.0, %v4807
    %v4809 = vpop.f32.mrf.mxu0
    %4810 = vmatprep.mubr.f32.mxu0 0.0
    %4811 = vmatmul.mubr.f32.gmra.mxu0 %v4602
    %v4812 = vpop.f32.mrf.mxu0
    %v4813 = vadd.f32 0.0, %v4812
    %v4814 = vpop.f32.mrf.mxu0
    %4815 = vmatprep.mubr.f32.mxu0 0.0
    %4816 = vmatmul.mubr.f32.gmra.mxu0 %v4603
    %v4817 = vpop.f32.mrf.mxu0
    %v4818 = vadd.f32 0.0, %v4817
    %v4819 = vpop.f32.mrf.mxu0
    %4820 = vmatprep.mubr.f32.mxu0 0.0
    %4821 = vmatmul.mubr.f32.gmra.mxu0 %v4604
    %v4822 = vpop.f32.mrf.mxu0
    %v4823 = vadd.f32 0.0, %v4822
    %v4824 = vpop.f32.mrf.mxu0
    %4825 = vmatprep.mubr.f32.mxu0 0.0
    %4826 = vmatmul.mubr.f32.gmra.mxu0 %v4605
    %v4827 = vpop.f32.mrf.mxu0
    %v4828 = vadd.f32 0.0, %v4827
    %v4829 = vpop.f32.mrf.mxu0
    %4830 = vmatprep.mubr.f32.mxu0 0.0
    %4831 = vmatmul.mubr.f32.gmra.mxu0 %v4606
    %v4832 = vpop.f32.mrf.mxu0
    %v4833 = vadd.f32 0.0, %v4832
    %v4834 = vpop.f32.mrf.mxu0
    %4835 = vmatprep.mubr.f32.mxu0 0.0
    %4836 = vmatmul.mubr.f32.gmra.mxu0 %v4607
    %v4837 = vpop.f32.mrf.mxu0
    %v4838 = vadd.f32 0.0, %v4837
    %v4839 = vpop.f32.mrf.mxu0
    %4840 = vmatprep.mubr.f32.mxu0 0.0
    %4841 = vmatmul.mubr.f32.gmra.mxu0 %v4608
    %v4842 = vpop.f32.mrf.mxu0
    %v4843 = vadd.f32 0.0, %v4842
    %v4844 = vpop.f32.mrf.mxu0
    %4845 = vmatprep.mubr.f32.mxu0 0.0
    %4846 = vmatmul.mubr.f32.gmra.mxu0 %v4609
    %v4847 = vpop.f32.mrf.mxu0
    %v4848 = vadd.f32 0.0, %v4847
    %v4849 = vpop.f32.mrf.mxu0
    %4850 = vdwg.mxu0
    %v4851 = vmax.f32 %v4693, 0.0
    %v4852 = vmax.f32 %v4698, 0.0
    %v4853 = vmax.f32 %v4703, 0.0
    %v4854 = vmax.f32 %v4708, 0.0
    %v4855 = vmax.f32 %v4713, 0.0
    %v4856 = vmax.f32 %v4718, 0.0
    %v4857 = vmax.f32 %v4723, 0.0
    %v4858 = vmax.f32 %v4728, 0.0
    %v4859 = vmax.f32 %v4733, 0.0
    %v4860 = vmax.f32 %v4738, 0.0
    %v4861 = vmax.f32 %v4743, 0.0
    %v4862 = vmax.f32 %v4748, 0.0
    %v4863 = vmax.f32 %v4753, 0.0
    %v4864 = vmax.f32 %v4758, 0.0
    %v4865 = vmax.f32 %v4763, 0.0
    %v4866 = vmax.f32 %v4768, 0.0
    %v4867 = vmax.f32 %v4773, 0.0
    %v4868 = vmax.f32 %v4778, 0.0
    %v4869 = vmax.f32 %v4783, 0.0
    %v4870 = vmax.f32 %v4788, 0.0
    %v4871 = vmax.f32 %v4793, 0.0
    %v4872 = vmax.f32 %v4798, 0.0
    %v4873 = vmax.f32 %v4803, 0.0
    %v4874 = vmax.f32 %v4808, 0.0
    %v4875 = vmax.f32 %v4813, 0.0
    %v4876 = vmax.f32 %v4818, 0.0
    %v4877 = vmax.f32 %v4823, 0.0
    %v4878 = vmax.f32 %v4828, 0.0
    %v4879 = vmax.f32 %v4833, 0.0
    %v4880 = vmax.f32 %v4838, 0.0
    %v4881 = vmax.f32 %v4843, 0.0
    %v4882 = vmax.f32 %v4848, 0.0
    %v4883 = vld [vmem:[%s22] sm:$0xff]
    %v4884 = vld [vmem:[%s22 + $0x8] sm:$0xff]
    %v4885 = vld [vmem:[%s22 + $0x10] sm:$0xff]
    %v4886 = vld [vmem:[%s22 + $0x18] sm:$0xff]
    %v4887 = vld [vmem:[%s22 + $0x20] sm:$0xff]
    %v4888 = vld [vmem:[%s22 + $0x28] sm:$0xff]
    %v4889 = vld [vmem:[%s22 + $0x30] sm:$0xff]
    %v4890 = vld [vmem:[%s22 + $0x38] sm:$0xff]
    %v4891 = vld [vmem:[%s22 + $0x40] sm:$0xff]
    %v4892 = vld [vmem:[%s22 + $0x48] sm:$0xff]
    %v4893 = vld [vmem:[%s22 + $0x50] sm:$0xff]
    %v4894 = vld [vmem:[%s22 + $0x58] sm:$0xff]
    %v4895 = vld [vmem:[%s22 + $0x60] sm:$0xff]
    %v4896 = vld [vmem:[%s22 + $0x68] sm:$0xff]
    %v4897 = vld [vmem:[%s22 + $0x70] sm:$0xff]
    %v4898 = vld [vmem:[%s22 + $0x78] sm:$0xff]
    %4899 = vmatprep.subr.mxu0 0.0
    %4900 = vmatpush1.msra.mxu0 %v4898
    %4901 = vmatprep.subr.mxu0 0.0
    %4902 = vmatpush1.msra.mxu0 %v4897
    %4903 = vmatprep.subr.mxu0 0.0
    %4904 = vmatpush1.msra.mxu0 %v4896
    %4905 = vmatprep.subr.mxu0 0.0
    %4906 = vmatpush1.msra.mxu0 %v4895
    %4907 = vmatprep.subr.mxu0 0.0
    %4908 = vmatpush1.msra.mxu0 %v4894
    %4909 = vmatprep.subr.mxu0 0.0
    %4910 = vmatpush1.msra.mxu0 %v4893
    %4911 = vmatprep.subr.mxu0 0.0
    %4912 = vmatpush1.msra.mxu0 %v4892
    %4913 = vmatprep.subr.mxu0 0.0
    %4914 = vmatpush1.msra.mxu0 %v4891
    %4915 = vmatprep.subr.mxu0 0.0
    %4916 = vmatpush1.msra.mxu0 %v4890
    %4917 = vmatprep.subr.mxu0 0.0
    %4918 = vmatpush1.msra.mxu0 %v4889
    %4919 = vmatprep.subr.mxu0 0.0
    %4920 = vmatpush1.msra.mxu0 %v4888
    %4921 = vmatprep.subr.mxu0 0.0
    %4922 = vmatpush1.msra.mxu0 %v4887
    %4923 = vmatprep.subr.mxu0 0.0
    %4924 = vmatpush1.msra.mxu0 %v4886
    %4925 = vmatprep.subr.mxu0 0.0
    %4926 = vmatpush1.msra.mxu0 %v4885
    %4927 = vmatprep.subr.mxu0 0.0
    %4928 = vmatpush1.msra.mxu0 %v4884
    %4929 = vmatprep.subr.mxu0 0.0
    %4930 = vmatpush1.msra.mxu0 %v4883
    %4931 = vmatprep.subr.mxu0 0.0
    %4932 = vmatpush2.msra.mxu0 0.0
    %4933 = vmatprep.subr.mxu0 0.0
    %4934 = vmatpush2.msra.mxu0 0.0
    %4935 = vmatprep.subr.mxu0 0.0
    %4936 = vmatpush2.msra.mxu0 0.0
    %4937 = vmatprep.subr.mxu0 0.0
    %4938 = vmatpush2.msra.mxu0 0.0
    %4939 = vmatprep.subr.mxu0 0.0
    %4940 = vmatpush2.msra.mxu0 0.0
    %4941 = vmatprep.subr.mxu0 0.0
    %4942 = vmatpush2.msra.mxu0 0.0
    %4943 = vmatprep.subr.mxu0 0.0
    %4944 = vmatpush2.msra.mxu0 0.0
    %4945 = vmatprep.subr.mxu0 0.0
    %4946 = vmatpush2.msra.mxu0 0.0
    %4947 = vmatprep.subr.mxu0 0.0
    %4948 = vmatpush2.msra.mxu0 0.0
    %4949 = vmatprep.subr.mxu0 0.0
    %4950 = vmatpush2.msra.mxu0 0.0
    %4951 = vmatprep.subr.mxu0 0.0
    %4952 = vmatpush2.msra.mxu0 0.0
    %4953 = vmatprep.subr.mxu0 0.0
    %4954 = vmatpush2.msra.mxu0 0.0
    %4955 = vmatprep.subr.mxu0 0.0
    %4956 = vmatpush2.msra.mxu0 0.0
    %4957 = vmatprep.subr.mxu0 0.0
    %4958 = vmatpush2.msra.mxu0 0.0
    %4959 = vmatprep.subr.mxu0 0.0
    %4960 = vmatpush2.msra.mxu0 0.0
    %4961 = vmatprep.subr.mxu0 0.0
    %4962 = vmatpush2.msra.mxu0 0.0
    %4963 = vmatprep.mubr.f32.mxu0 0.0
    %4964 = vmatmul.mubr.f32.gmra.mxu0 %v4851
    %v4965 = vpop.f32.mrf.mxu0
    %v4966 = vadd.f32 0.0, %v4965
    %v4967 = vpop.f32.mrf.mxu0
    %4968 = vmatprep.mubr.f32.mxu0 0.0
    %4969 = vmatmul.mubr.f32.gmra.mxu0 %v4852
    %v4970 = vpop.f32.mrf.mxu0
    %v4971 = vadd.f32 0.0, %v4970
    %v4972 = vpop.f32.mrf.mxu0
    %4973 = vmatprep.mubr.f32.mxu0 0.0
    %4974 = vmatmul.mubr.f32.gmra.mxu0 %v4853
    %v4975 = vpop.f32.mrf.mxu0
    %v4976 = vadd.f32 0.0, %v4975
    %v4977 = vpop.f32.mrf.mxu0
    %4978 = vmatprep.mubr.f32.mxu0 0.0
    %4979 = vmatmul.mubr.f32.gmra.mxu0 %v4854
    %v4980 = vpop.f32.mrf.mxu0
    %v4981 = vadd.f32 0.0, %v4980
    %v4982 = vpop.f32.mrf.mxu0
    %4983 = vmatprep.mubr.f32.mxu0 0.0
    %4984 = vmatmul.mubr.f32.gmra.mxu0 %v4855
    %v4985 = vpop.f32.mrf.mxu0
    %v4986 = vadd.f32 0.0, %v4985
    %v4987 = vpop.f32.mrf.mxu0
    %4988 = vmatprep.mubr.f32.mxu0 0.0
    %4989 = vmatmul.mubr.f32.gmra.mxu0 %v4856
    %v4990 = vpop.f32.mrf.mxu0
    %v4991 = vadd.f32 0.0, %v4990
    %v4992 = vpop.f32.mrf.mxu0
    %4993 = vmatprep.mubr.f32.mxu0 0.0
    %4994 = vmatmul.mubr.f32.gmra.mxu0 %v4857
    %v4995 = vpop.f32.mrf.mxu0
    %v4996 = vadd.f32 0.0, %v4995
    %v4997 = vpop.f32.mrf.mxu0
    %4998 = vmatprep.mubr.f32.mxu0 0.0
    %4999 = vmatmul.mubr.f32.gmra.mxu0 %v4858
    %v5000 = vpop.f32.mrf.mxu0
    %v5001 = vadd.f32 0.0, %v5000
    %v5002 = vpop.f32.mrf.mxu0
    %5003 = vmatprep.mubr.f32.mxu0 0.0
    %5004 = vmatmul.mubr.f32.gmra.mxu0 %v4859
    %v5005 = vpop.f32.mrf.mxu0
    %v5006 = vadd.f32 0.0, %v5005
    %v5007 = vpop.f32.mrf.mxu0
    %5008 = vmatprep.mubr.f32.mxu0 0.0
    %5009 = vmatmul.mubr.f32.gmra.mxu0 %v4860
    %v5010 = vpop.f32.mrf.mxu0
    %v5011 = vadd.f32 0.0, %v5010
    %v5012 = vpop.f32.mrf.mxu0
    %5013 = vmatprep.mubr.f32.mxu0 0.0
    %5014 = vmatmul.mubr.f32.gmra.mxu0 %v4861
    %v5015 = vpop.f32.mrf.mxu0
    %v5016 = vadd.f32 0.0, %v5015
    %v5017 = vpop.f32.mrf.mxu0
    %5018 = vmatprep.mubr.f32.mxu0 0.0
    %5019 = vmatmul.mubr.f32.gmra.mxu0 %v4862
    %v5020 = vpop.f32.mrf.mxu0
    %v5021 = vadd.f32 0.0, %v5020
    %v5022 = vpop.f32.mrf.mxu0
    %5023 = vmatprep.mubr.f32.mxu0 0.0
    %5024 = vmatmul.mubr.f32.gmra.mxu0 %v4863
    %v5025 = vpop.f32.mrf.mxu0
    %v5026 = vadd.f32 0.0, %v5025
    %v5027 = vpop.f32.mrf.mxu0
    %5028 = vmatprep.mubr.f32.mxu0 0.0
    %5029 = vmatmul.mubr.f32.gmra.mxu0 %v4864
    %v5030 = vpop.f32.mrf.mxu0
    %v5031 = vadd.f32 0.0, %v5030
    %v5032 = vpop.f32.mrf.mxu0
    %5033 = vmatprep.mubr.f32.mxu0 0.0
    %5034 = vmatmul.mubr.f32.gmra.mxu0 %v4865
    %v5035 = vpop.f32.mrf.mxu0
    %v5036 = vadd.f32 0.0, %v5035
    %v5037 = vpop.f32.mrf.mxu0
    %5038 = vmatprep.mubr.f32.mxu0 0.0
    %5039 = vmatmul.mubr.f32.gmra.mxu0 %v4866
    %v5040 = vpop.f32.mrf.mxu0
    %v5041 = vadd.f32 0.0, %v5040
    %v5042 = vpop.f32.mrf.mxu0
    %5043 = vmatprep.mubr.f32.mxu0 0.0
    %5044 = vmatmul.mubr.f32.gmra.mxu0 %v4867
    %v5045 = vpop.f32.mrf.mxu0
    %v5046 = vadd.f32 0.0, %v5045
    %v5047 = vpop.f32.mrf.mxu0
    %5048 = vmatprep.mubr.f32.mxu0 0.0
    %5049 = vmatmul.mubr.f32.gmra.mxu0 %v4868
    %v5050 = vpop.f32.mrf.mxu0
    %v5051 = vadd.f32 0.0, %v5050
    %v5052 = vpop.f32.mrf.mxu0
    %5053 = vmatprep.mubr.f32.mxu0 0.0
    %5054 = vmatmul.mubr.f32.gmra.mxu0 %v4869
    %v5055 = vpop.f32.mrf.mxu0
    %v5056 = vadd.f32 0.0, %v5055
    %v5057 = vpop.f32.mrf.mxu0
    %5058 = vmatprep.mubr.f32.mxu0 0.0
    %5059 = vmatmul.mubr.f32.gmra.mxu0 %v4870
    %v5060 = vpop.f32.mrf.mxu0
    %v5061 = vadd.f32 0.0, %v5060
    %v5062 = vpop.f32.mrf.mxu0
    %5063 = vmatprep.mubr.f32.mxu0 0.0
    %5064 = vmatmul.mubr.f32.gmra.mxu0 %v4871
    %v5065 = vpop.f32.mrf.mxu0
    %v5066 = vadd.f32 0.0, %v5065
    %v5067 = vpop.f32.mrf.mxu0
    %5068 = vmatprep.mubr.f32.mxu0 0.0
    %5069 = vmatmul.mubr.f32.gmra.mxu0 %v4872
    %v5070 = vpop.f32.mrf.mxu0
    %v5071 = vadd.f32 0.0, %v5070
    %v5072 = vpop.f32.mrf.mxu0
    %5073 = vmatprep.mubr.f32.mxu0 0.0
    %5074 = vmatmul.mubr.f32.gmra.mxu0 %v4873
    %v5075 = vpop.f32.mrf.mxu0
    %v5076 = vadd.f32 0.0, %v5075
    %v5077 = vpop.f32.mrf.mxu0
    %5078 = vmatprep.mubr.f32.mxu0 0.0
    %5079 = vmatmul.mubr.f32.gmra.mxu0 %v4874
    %v5080 = vpop.f32.mrf.mxu0
    %v5081 = vadd.f32 0.0, %v5080
    %v5082 = vpop.f32.mrf.mxu0
    %5083 = vmatprep.mubr.f32.mxu0 0.0
    %5084 = vmatmul.mubr.f32.gmra.mxu0 %v4875
    %v5085 = vpop.f32.mrf.mxu0
    %v5086 = vadd.f32 0.0, %v5085
    %v5087 = vpop.f32.mrf.mxu0
    %5088 = vmatprep.mubr.f32.mxu0 0.0
    %5089 = vmatmul.mubr.f32.gmra.mxu0 %v4876
    %v5090 = vpop.f32.mrf.mxu0
    %v5091 = vadd.f32 0.0, %v5090
    %v5092 = vpop.f32.mrf.mxu0
    %5093 = vmatprep.mubr.f32.mxu0 0.0
    %5094 = vmatmul.mubr.f32.gmra.mxu0 %v4877
    %v5095 = vpop.f32.mrf.mxu0
    %v5096 = vadd.f32 0.0, %v5095
    %v5097 = vpop.f32.mrf.mxu0
    %5098 = vmatprep.mubr.f32.mxu0 0.0
    %5099 = vmatmul.mubr.f32.gmra.mxu0 %v4878
    %v5100 = vpop.f32.mrf.mxu0
    %v5101 = vadd.f32 0.0, %v5100
    %v5102 = vpop.f32.mrf.mxu0
    %5103 = vmatprep.mubr.f32.mxu0 0.0
    %5104 = vmatmul.mubr.f32.gmra.mxu0 %v4879
    %v5105 = vpop.f32.mrf.mxu0
    %v5106 = vadd.f32 0.0, %v5105
    %v5107 = vpop.f32.mrf.mxu0
    %5108 = vmatprep.mubr.f32.mxu0 0.0
    %5109 = vmatmul.mubr.f32.gmra.mxu0 %v4880
    %v5110 = vpop.f32.mrf.mxu0
    %v5111 = vadd.f32 0.0, %v5110
    %v5112 = vpop.f32.mrf.mxu0
    %5113 = vmatprep.mubr.f32.mxu0 0.0
    %5114 = vmatmul.mubr.f32.gmra.mxu0 %v4881
    %v5115 = vpop.f32.mrf.mxu0
    %v5116 = vadd.f32 0.0, %v5115
    %v5117 = vpop.f32.mrf.mxu0
    %5118 = vmatprep.mubr.f32.mxu0 0.0
    %5119 = vmatmul.mubr.f32.gmra.mxu0 %v4882
    %v5120 = vpop.f32.mrf.mxu0
    %v5121 = vadd.f32 0.0, %v5120
    %v5122 = vpop.f32.mrf.mxu0
    %5123 = vdwg.mxu0
    %v5124 = vadd.f32 %v4966, %v4148
    %v5125 = vadd.f32 %v4971, %v4149
    %v5126 = vadd.f32 %v4976, %v4150
    %v5127 = vadd.f32 %v4981, %v4151
    %v5128 = vadd.f32 %v4986, %v4152
    %v5129 = vadd.f32 %v4991, %v4153
    %v5130 = vadd.f32 %v4996, %v4154
    %v5131 = vadd.f32 %v5001, %v4155
    %v5132 = vadd.f32 %v5006, %v4156
    %v5133 = vadd.f32 %v5011, %v4157
    %v5134 = vadd.f32 %v5016, %v4158
    %v5135 = vadd.f32 %v5021, %v4159
    %v5136 = vadd.f32 %v5026, %v4160
    %v5137 = vadd.f32 %v5031, %v4161
    %v5138 = vadd.f32 %v5036, %v4162
    %v5139 = vadd.f32 %v5041, %v4163
    %v5140 = vadd.f32 %v5046, %v4164
    %v5141 = vadd.f32 %v5051, %v4165
    %v5142 = vadd.f32 %v5056, %v4166
    %v5143 = vadd.f32 %v5061, %v4167
    %v5144 = vadd.f32 %v5066, %v4168
    %v5145 = vadd.f32 %v5071, %v4169
    %v5146 = vadd.f32 %v5076, %v4170
    %v5147 = vadd.f32 %v5081, %v4171
    %v5148 = vadd.f32 %v5086, %v4172
    %v5149 = vadd.f32 %v5091, %v4173
    %v5150 = vadd.f32 %v5096, %v4174
    %v5151 = vadd.f32 %v5101, %v4175
    %v5152 = vadd.f32 %v5106, %v4176
    %v5153 = vadd.f32 %v5111, %v4177
    %v5154 = vadd.f32 %v5116, %v4178
    %v5155 = vadd.f32 %v5121, %v4179
    %v5156 = vld [vmem:[%s23] sm:$0x1]
    %v5157 = vld [vmem:[%s24] sm:$0x1]
    %5158 = vadd.xlane.f32.xlu0 %v5124
    %v5159 = vpop.xlane.xlu0 %5158
    %5160 = vadd.xlane.f32.xlu0 %v5125
    %v5161 = vpop.xlane.xlu0 %5160
    %5162 = vadd.xlane.f32.xlu0 %v5126
    %v5163 = vpop.xlane.xlu0 %5162
    %5164 = vadd.xlane.f32.xlu0 %v5127
    %v5165 = vpop.xlane.xlu0 %5164
    %5166 = vadd.xlane.f32.xlu0 %v5128
    %v5167 = vpop.xlane.xlu0 %5166
    %5168 = vadd.xlane.f32.xlu0 %v5129
    %v5169 = vpop.xlane.xlu0 %5168
    %5170 = vadd.xlane.f32.xlu0 %v5130
    %v5171 = vpop.xlane.xlu0 %5170
    %5172 = vadd.xlane.f32.xlu0 %v5131
    %v5173 = vpop.xlane.xlu0 %5172
    %5174 = vadd.xlane.f32.xlu0 %v5132
    %v5175 = vpop.xlane.xlu0 %5174
    %5176 = vadd.xlane.f32.xlu0 %v5133
    %v5177 = vpop.xlane.xlu0 %5176
    %5178 = vadd.xlane.f32.xlu0 %v5134
    %v5179 = vpop.xlane.xlu0 %5178
    %5180 = vadd.xlane.f32.xlu0 %v5135
    %v5181 = vpop.xlane.xlu0 %5180
    %5182 = vadd.xlane.f32.xlu0 %v5136
    %v5183 = vpop.xlane.xlu0 %5182
    %5184 = vadd.xlane.f32.xlu0 %v5137
    %v5185 = vpop.xlane.xlu0 %5184
    %5186 = vadd.xlane.f32.xlu0 %v5138
    %v5187 = vpop.xlane.xlu0 %5186
    %5188 = vadd.xlane.f32.xlu0 %v5139
    %v5189 = vpop.xlane.xlu0 %5188
    %5190 = vadd.xlane.f32.xlu0 %v5140
    %v5191 = vpop.xlane.xlu0 %5190
    %5192 = vadd.xlane.f32.xlu0 %v5141
    %v5193 = vpop.xlane.xlu0 %5192
    %5194 = vadd.xlane.f32.xlu0 %v5142
    %v5195 = vpop.xlane.xlu0 %5194
    %5196 = vadd.xlane.f32.xlu0 %v5143
    %v5197 = vpop.xlane.xlu0 %5196
    %5198 = vadd.xlane.f32.xlu0 %v5144
    %v5199 = vpop.xlane.xlu0 %5198
    %5200 = vadd.xlane.f32.xlu0 %v5145
    %v5201 = vpop.xlane.xlu0 %5200
    %5202 = vadd.xlane.f32.xlu0 %v5146
    %v5203 = vpop.xlane.xlu0 %5202
    %5204 = vadd.xlane.f32.xlu0 %v5147
    %v5205 = vpop.xlane.xlu0 %5204
    %5206 = vadd.xlane.f32.xlu0 %v5148
    %v5207 = vpop.xlane.xlu0 %5206
    %5208 = vadd.xlane.f32.xlu0 %v5149
    %v5209 = vpop.xlane.xlu0 %5208
    %5210 = vadd.xlane.f32.xlu0 %v5150
    %v5211 = vpop.xlane.xlu0 %5210
    %5212 = vadd.xlane.f32.xlu0 %v5151
    %v5213 = vpop.xlane.xlu0 %5212
    %5214 = vadd.xlane.f32.xlu0 %v5152
    %v5215 = vpop.xlane.xlu0 %5214
    %5216 = vadd.xlane.f32.xlu0 %v5153
    %v5217 = vpop.xlane.xlu0 %5216
    %5218 = vadd.xlane.f32.xlu0 %v5154
    %v5219 = vpop.xlane.xlu0 %5218
    %5220 = vadd.xlane.f32.xlu0 %v5155
    %v5221 = vpop.xlane.xlu0 %5220
    %v5222 = vmul.f32 %v5159, %v335
    %v5223 = vmul.f32 %v5161, %v335
    %v5224 = vmul.f32 %v5163, %v335
    %v5225 = vmul.f32 %v5165, %v335
    %v5226 = vmul.f32 %v5167, %v335
    %v5227 = vmul.f32 %v5169, %v335
    %v5228 = vmul.f32 %v5171, %v335
    %v5229 = vmul.f32 %v5173, %v335
    %v5230 = vmul.f32 %v5175, %v335
    %v5231 = vmul.f32 %v5177, %v335
    %v5232 = vmul.f32 %v5179, %v335
    %v5233 = vmul.f32 %v5181, %v335
    %v5234 = vmul.f32 %v5183, %v335
    %v5235 = vmul.f32 %v5185, %v335
    %v5236 = vmul.f32 %v5187, %v335
    %v5237 = vmul.f32 %v5189, %v335
    %v5238 = vmul.f32 %v5191, %v335
    %v5239 = vmul.f32 %v5193, %v335
    %v5240 = vmul.f32 %v5195, %v335
    %v5241 = vmul.f32 %v5197, %v335
    %v5242 = vmul.f32 %v5199, %v335
    %v5243 = vmul.f32 %v5201, %v335
    %v5244 = vmul.f32 %v5203, %v335
    %v5245 = vmul.f32 %v5205, %v335
    %v5246 = vmul.f32 %v5207, %v335
    %v5247 = vmul.f32 %v5209, %v335
    %v5248 = vmul.f32 %v5211, %v335
    %v5249 = vmul.f32 %v5213, %v335
    %v5250 = vmul.f32 %v5215, %v335
    %v5251 = vmul.f32 %v5217, %v335
    %v5252 = vmul.f32 %v5219, %v335
    %v5253 = vmul.f32 %v5221, %v335
    %v5254 = vsub.f32 %v5124, %v5222
    %v5255 = vsub.f32 %v5125, %v5223
    %v5256 = vsub.f32 %v5126, %v5224
    %v5257 = vsub.f32 %v5127, %v5225
    %v5258 = vsub.f32 %v5128, %v5226
    %v5259 = vsub.f32 %v5129, %v5227
    %v5260 = vsub.f32 %v5130, %v5228
    %v5261 = vsub.f32 %v5131, %v5229
    %v5262 = vsub.f32 %v5132, %v5230
    %v5263 = vsub.f32 %v5133, %v5231
    %v5264 = vsub.f32 %v5134, %v5232
    %v5265 = vsub.f32 %v5135, %v5233
    %v5266 = vsub.f32 %v5136, %v5234
    %v5267 = vsub.f32 %v5137, %v5235
    %v5268 = vsub.f32 %v5138, %v5236
    %v5269 = vsub.f32 %v5139, %v5237
    %v5270 = vsub.f32 %v5140, %v5238
    %v5271 = vsub.f32 %v5141, %v5239
    %v5272 = vsub.f32 %v5142, %v5240
    %v5273 = vsub.f32 %v5143, %v5241
    %v5274 = vsub.f32 %v5144, %v5242
    %v5275 = vsub.f32 %v5145, %v5243
    %v5276 = vsub.f32 %v5146, %v5244
    %v5277 = vsub.f32 %v5147, %v5245
    %v5278 = vsub.f32 %v5148, %v5246
    %v5279 = vsub.f32 %v5149, %v5247
    %v5280 = vsub.f32 %v5150, %v5248
    %v5281 = vsub.f32 %v5151, %v5249
    %v5282 = vsub.f32 %v5152, %v5250
    %v5283 = vsub.f32 %v5153, %v5251
    %v5284 = vsub.f32 %v5154, %v5252
    %v5285 = vsub.f32 %v5155, %v5253
    %v5286 = vmul.f32 %v5254, %v5254
    %v5287 = vmul.f32 %v5255, %v5255
    %v5288 = vmul.f32 %v5256, %v5256
    %v5289 = vmul.f32 %v5257, %v5257
    %v5290 = vmul.f32 %v5258, %v5258
    %v5291 = vmul.f32 %v5259, %v5259
    %v5292 = vmul.f32 %v5260, %v5260
    %v5293 = vmul.f32 %v5261, %v5261
    %v5294 = vmul.f32 %v5262, %v5262
    %v5295 = vmul.f32 %v5263, %v5263
    %v5296 = vmul.f32 %v5264, %v5264
    %v5297 = vmul.f32 %v5265, %v5265
    %v5298 = vmul.f32 %v5266, %v5266
    %v5299 = vmul.f32 %v5267, %v5267
    %v5300 = vmul.f32 %v5268, %v5268
    %v5301 = vmul.f32 %v5269, %v5269
    %v5302 = vmul.f32 %v5270, %v5270
    %v5303 = vmul.f32 %v5271, %v5271
    %v5304 = vmul.f32 %v5272, %v5272
    %v5305 = vmul.f32 %v5273, %v5273
    %v5306 = vmul.f32 %v5274, %v5274
    %v5307 = vmul.f32 %v5275, %v5275
    %v5308 = vmul.f32 %v5276, %v5276
    %v5309 = vmul.f32 %v5277, %v5277
    %v5310 = vmul.f32 %v5278, %v5278
    %v5311 = vmul.f32 %v5279, %v5279
    %v5312 = vmul.f32 %v5280, %v5280
    %v5313 = vmul.f32 %v5281, %v5281
    %v5314 = vmul.f32 %v5282, %v5282
    %v5315 = vmul.f32 %v5283, %v5283
    %v5316 = vmul.f32 %v5284, %v5284
    %v5317 = vmul.f32 %v5285, %v5285
    %5318 = vadd.xlane.f32.xlu0 %v5286
    %v5319 = vpop.xlane.xlu0 %5318
    %5320 = vadd.xlane.f32.xlu0 %v5287
    %v5321 = vpop.xlane.xlu0 %5320
    %5322 = vadd.xlane.f32.xlu0 %v5288
    %v5323 = vpop.xlane.xlu0 %5322
    %5324 = vadd.xlane.f32.xlu0 %v5289
    %v5325 = vpop.xlane.xlu0 %5324
    %5326 = vadd.xlane.f32.xlu0 %v5290
    %v5327 = vpop.xlane.xlu0 %5326
    %5328 = vadd.xlane.f32.xlu0 %v5291
    %v5329 = vpop.xlane.xlu0 %5328
    %5330 = vadd.xlane.f32.xlu0 %v5292
    %v5331 = vpop.xlane.xlu0 %5330
    %5332 = vadd.xlane.f32.xlu0 %v5293
    %v5333 = vpop.xlane.xlu0 %5332
    %5334 = vadd.xlane.f32.xlu0 %v5294
    %v5335 = vpop.xlane.xlu0 %5334
    %5336 = vadd.xlane.f32.xlu0 %v5295
    %v5337 = vpop.xlane.xlu0 %5336
    %5338 = vadd.xlane.f32.xlu0 %v5296
    %v5339 = vpop.xlane.xlu0 %5338
    %5340 = vadd.xlane.f32.xlu0 %v5297
    %v5341 = vpop.xlane.xlu0 %5340
    %5342 = vadd.xlane.f32.xlu0 %v5298
    %v5343 = vpop.xlane.xlu0 %5342
    %5344 = vadd.xlane.f32.xlu0 %v5299
    %v5345 = vpop.xlane.xlu0 %5344
    %5346 = vadd.xlane.f32.xlu0 %v5300
    %v5347 = vpop.xlane.xlu0 %5346
    %5348 = vadd.xlane.f32.xlu0 %v5301
    %v5349 = vpop.xlane.xlu0 %5348
    %5350 = vadd.xlane.f32.xlu0 %v5302
    %v5351 = vpop.xlane.xlu0 %5350
    %5352 = vadd.xlane.f32.xlu0 %v5303
    %v5353 = vpop.xlane.xlu0 %5352
    %5354 = vadd.xlane.f32.xlu0 %v5304
    %v5355 = vpop.xlane.xlu0 %5354
    %5356 = vadd.xlane.f32.xlu0 %v5305
    %v5357 = vpop.xlane.xlu0 %5356
    %5358 = vadd.xlane.f32.xlu0 %v5306
    %v5359 = vpop.xlane.xlu0 %5358
    %5360 = vadd.xlane.f32.xlu0 %v5307
    %v5361 = vpop.xlane.xlu0 %5360
    %5362 = vadd.xlane.f32.xlu0 %v5308
    %v5363 = vpop.xlane.xlu0 %5362
    %5364 = vadd.xlane.f32.xlu0 %v5309
    %v5365 = vpop.xlane.xlu0 %5364
    %5366 = vadd.xlane.f32.xlu0 %v5310
    %v5367 = vpop.xlane.xlu0 %5366
    %5368 = vadd.xlane.f32.xlu0 %v5311
    %v5369 = vpop.xlane.xlu0 %5368
    %5370 = vadd.xlane.f32.xlu0 %v5312
    %v5371 = vpop.xlane.xlu0 %5370
    %5372 = vadd.xlane.f32.xlu0 %v5313
    %v5373 = vpop.xlane.xlu0 %5372
    %5374 = vadd.xlane.f32.xlu0 %v5314
    %v5375 = vpop.xlane.xlu0 %5374
    %5376 = vadd.xlane.f32.xlu0 %v5315
    %v5377 = vpop.xlane.xlu0 %5376
    %5378 = vadd.xlane.f32.xlu0 %v5316
    %v5379 = vpop.xlane.xlu0 %5378
    %5380 = vadd.xlane.f32.xlu0 %v5317
    %v5381 = vpop.xlane.xlu0 %5380
    %v5382 = vmul.f32 %v5319, %v335
    %v5383 = vmul.f32 %v5321, %v335
    %v5384 = vmul.f32 %v5323, %v335
    %v5385 = vmul.f32 %v5325, %v335
    %v5386 = vmul.f32 %v5327, %v335
    %v5387 = vmul.f32 %v5329, %v335
    %v5388 = vmul.f32 %v5331, %v335
    %v5389 = vmul.f32 %v5333, %v335
    %v5390 = vmul.f32 %v5335, %v335
    %v5391 = vmul.f32 %v5337, %v335
    %v5392 = vmul.f32 %v5339, %v335
    %v5393 = vmul.f32 %v5341, %v335
    %v5394 = vmul.f32 %v5343, %v335
    %v5395 = vmul.f32 %v5345, %v335
    %v5396 = vmul.f32 %v5347, %v335
    %v5397 = vmul.f32 %v5349, %v335
    %v5398 = vmul.f32 %v5351, %v335
    %v5399 = vmul.f32 %v5353, %v335
    %v5400 = vmul.f32 %v5355, %v335
    %v5401 = vmul.f32 %v5357, %v335
    %v5402 = vmul.f32 %v5359, %v335
    %v5403 = vmul.f32 %v5361, %v335
    %v5404 = vmul.f32 %v5363, %v335
    %v5405 = vmul.f32 %v5365, %v335
    %v5406 = vmul.f32 %v5367, %v335
    %v5407 = vmul.f32 %v5369, %v335
    %v5408 = vmul.f32 %v5371, %v335
    %v5409 = vmul.f32 %v5373, %v335
    %v5410 = vmul.f32 %v5375, %v335
    %v5411 = vmul.f32 %v5377, %v335
    %v5412 = vmul.f32 %v5379, %v335
    %v5413 = vmul.f32 %v5381, %v335
    %v5414 = vadd.f32 %v5382, 1e-05
    %v5415 = vadd.f32 %v5383, 1e-05
    %v5416 = vadd.f32 %v5384, 1e-05
    %v5417 = vadd.f32 %v5385, 1e-05
    %v5418 = vadd.f32 %v5386, 1e-05
    %v5419 = vadd.f32 %v5387, 1e-05
    %v5420 = vadd.f32 %v5388, 1e-05
    %v5421 = vadd.f32 %v5389, 1e-05
    %v5422 = vadd.f32 %v5390, 1e-05
    %v5423 = vadd.f32 %v5391, 1e-05
    %v5424 = vadd.f32 %v5392, 1e-05
    %v5425 = vadd.f32 %v5393, 1e-05
    %v5426 = vadd.f32 %v5394, 1e-05
    %v5427 = vadd.f32 %v5395, 1e-05
    %v5428 = vadd.f32 %v5396, 1e-05
    %v5429 = vadd.f32 %v5397, 1e-05
    %v5430 = vadd.f32 %v5398, 1e-05
    %v5431 = vadd.f32 %v5399, 1e-05
    %v5432 = vadd.f32 %v5400, 1e-05
    %v5433 = vadd.f32 %v5401, 1e-05
    %v5434 = vadd.f32 %v5402, 1e-05
    %v5435 = vadd.f32 %v5403, 1e-05
    %v5436 = vadd.f32 %v5404, 1e-05
    %v5437 = vadd.f32 %v5405, 1e-05
    %v5438 = vadd.f32 %v5406, 1e-05
    %v5439 = vadd.f32 %v5407, 1e-05
    %v5440 = vadd.f32 %v5408, 1e-05
    %v5441 = vadd.f32 %v5409, 1e-05
    %v5442 = vadd.f32 %v5410, 1e-05
    %v5443 = vadd.f32 %v5411, 1e-05
    %v5444 = vadd.f32 %v5412, 1e-05
    %v5445 = vadd.f32 %v5413, 1e-05
    %v5446 = vrsqrt.pop %v5414
    %v5447 = vrsqrt.pop %v5415
    %v5448 = vrsqrt.pop %v5416
    %v5449 = vrsqrt.pop %v5417
    %v5450 = vrsqrt.pop %v5418
    %v5451 = vrsqrt.pop %v5419
    %v5452 = vrsqrt.pop %v5420
    %v5453 = vrsqrt.pop %v5421
    %v5454 = vrsqrt.pop %v5422
    %v5455 = vrsqrt.pop %v5423
    %v5456 = vrsqrt.pop %v5424
    %v5457 = vrsqrt.pop %v5425
    %v5458 = vrsqrt.pop %v5426
    %v5459 = vrsqrt.pop %v5427
    %v5460 = vrsqrt.pop %v5428
    %v5461 = vrsqrt.pop %v5429
    %v5462 = vrsqrt.pop %v5430
    %v5463 = vrsqrt.pop %v5431
    %v5464 = vrsqrt.pop %v5432
    %v5465 = vrsqrt.pop %v5433
    %v5466 = vrsqrt.pop %v5434
    %v5467 = vrsqrt.pop %v5435
    %v5468 = vrsqrt.pop %v5436
    %v5469 = vrsqrt.pop %v5437
    %v5470 = vrsqrt.pop %v5438
    %v5471 = vrsqrt.pop %v5439
    %v5472 = vrsqrt.pop %v5440
    %v5473 = vrsqrt.pop %v5441
    %v5474 = vrsqrt.pop %v5442
    %v5475 = vrsqrt.pop %v5443
    %v5476 = vrsqrt.pop %v5444
    %v5477 = vrsqrt.pop %v5445
    %v5478 = vmul.f32 %v5254, %v5446
    %v5479 = vmul.f32 %v5255, %v5447
    %v5480 = vmul.f32 %v5256, %v5448
    %v5481 = vmul.f32 %v5257, %v5449
    %v5482 = vmul.f32 %v5258, %v5450
    %v5483 = vmul.f32 %v5259, %v5451
    %v5484 = vmul.f32 %v5260, %v5452
    %v5485 = vmul.f32 %v5261, %v5453
    %v5486 = vmul.f32 %v5262, %v5454
    %v5487 = vmul.f32 %v5263, %v5455
    %v5488 = vmul.f32 %v5264, %v5456
    %v5489 = vmul.f32 %v5265, %v5457
    %v5490 = vmul.f32 %v5266, %v5458
    %v5491 = vmul.f32 %v5267, %v5459
    %v5492 = vmul.f32 %v5268, %v5460
    %v5493 = vmul.f32 %v5269, %v5461
    %v5494 = vmul.f32 %v5270, %v5462
    %v5495 = vmul.f32 %v5271, %v5463
    %v5496 = vmul.f32 %v5272, %v5464
    %v5497 = vmul.f32 %v5273, %v5465
    %v5498 = vmul.f32 %v5274, %v5466
    %v5499 = vmul.f32 %v5275, %v5467
    %v5500 = vmul.f32 %v5276, %v5468
    %v5501 = vmul.f32 %v5277, %v5469
    %v5502 = vmul.f32 %v5278, %v5470
    %v5503 = vmul.f32 %v5279, %v5471
    %v5504 = vmul.f32 %v5280, %v5472
    %v5505 = vmul.f32 %v5281, %v5473
    %v5506 = vmul.f32 %v5282, %v5474
    %v5507 = vmul.f32 %v5283, %v5475
    %v5508 = vmul.f32 %v5284, %v5476
    %v5509 = vmul.f32 %v5285, %v5477
    %v5511 = vlaneseq
    %v5512 = vshrl.u32 %v5511, 7
    %v5513 = vsub.s32 0, %v5512
    %v5514 = vrot.slane %v5156, %v5513
    %v5516 = vmul.f32 %v5478, %v5514
    %v5517 = vmul.f32 %v5479, %v5514
    %v5518 = vmul.f32 %v5480, %v5514
    %v5519 = vmul.f32 %v5481, %v5514
    %v5520 = vmul.f32 %v5482, %v5514
    %v5521 = vmul.f32 %v5483, %v5514
    %v5522 = vmul.f32 %v5484, %v5514
    %v5523 = vmul.f32 %v5485, %v5514
    %v5524 = vmul.f32 %v5486, %v5514
    %v5525 = vmul.f32 %v5487, %v5514
    %v5526 = vmul.f32 %v5488, %v5514
    %v5527 = vmul.f32 %v5489, %v5514
    %v5528 = vmul.f32 %v5490, %v5514
    %v5529 = vmul.f32 %v5491, %v5514
    %v5530 = vmul.f32 %v5492, %v5514
    %v5531 = vmul.f32 %v5493, %v5514
    %v5532 = vmul.f32 %v5494, %v5514
    %v5533 = vmul.f32 %v5495, %v5514
    %v5534 = vmul.f32 %v5496, %v5514
    %v5535 = vmul.f32 %v5497, %v5514
    %v5536 = vmul.f32 %v5498, %v5514
    %v5537 = vmul.f32 %v5499, %v5514
    %v5538 = vmul.f32 %v5500, %v5514
    %v5539 = vmul.f32 %v5501, %v5514
    %v5540 = vmul.f32 %v5502, %v5514
    %v5541 = vmul.f32 %v5503, %v5514
    %v5542 = vmul.f32 %v5504, %v5514
    %v5543 = vmul.f32 %v5505, %v5514
    %v5544 = vmul.f32 %v5506, %v5514
    %v5545 = vmul.f32 %v5507, %v5514
    %v5546 = vmul.f32 %v5508, %v5514
    %v5547 = vmul.f32 %v5509, %v5514
    %v5549 = vlaneseq
    %v5550 = vshrl.u32 %v5549, 7
    %v5551 = vsub.s32 0, %v5550
    %v5552 = vrot.slane %v5157, %v5551
    %v5554 = vadd.f32 %v5516, %v5552
    %v5555 = vadd.f32 %v5517, %v5552
    %v5556 = vadd.f32 %v5518, %v5552
    %v5557 = vadd.f32 %v5519, %v5552
    %v5558 = vadd.f32 %v5520, %v5552
    %v5559 = vadd.f32 %v5521, %v5552
    %v5560 = vadd.f32 %v5522, %v5552
    %v5561 = vadd.f32 %v5523, %v5552
    %v5562 = vadd.f32 %v5524, %v5552
    %v5563 = vadd.f32 %v5525, %v5552
    %v5564 = vadd.f32 %v5526, %v5552
    %v5565 = vadd.f32 %v5527, %v5552
    %v5566 = vadd.f32 %v5528, %v5552
    %v5567 = vadd.f32 %v5529, %v5552
    %v5568 = vadd.f32 %v5530, %v5552
    %v5569 = vadd.f32 %v5531, %v5552
    %v5570 = vadd.f32 %v5532, %v5552
    %v5571 = vadd.f32 %v5533, %v5552
    %v5572 = vadd.f32 %v5534, %v5552
    %v5573 = vadd.f32 %v5535, %v5552
    %v5574 = vadd.f32 %v5536, %v5552
    %v5575 = vadd.f32 %v5537, %v5552
    %v5576 = vadd.f32 %v5538, %v5552
    %v5577 = vadd.f32 %v5539, %v5552
    %v5578 = vadd.f32 %v5540, %v5552
    %v5579 = vadd.f32 %v5541, %v5552
    %v5580 = vadd.f32 %v5542, %v5552
    %v5581 = vadd.f32 %v5543, %v5552
    %v5582 = vadd.f32 %v5544, %v5552
    %v5583 = vadd.f32 %v5545, %v5552
    %v5584 = vadd.f32 %v5546, %v5552
    %v5585 = vadd.f32 %v5547, %v5552
    %v5586 = vadd.f32 %v5554, %v1131
    %v5587 = vadd.f32 %v5555, %v1132
    %v5588 = vadd.f32 %v5556, %v1133
    %v5589 = vadd.f32 %v5557, %v1134
    %v5590 = vadd.f32 %v5558, %v1135
    %v5591 = vadd.f32 %v5559, %v1136
    %v5592 = vadd.f32 %v5560, %v1137
    %v5593 = vadd.f32 %v5561, %v1138
    %v5594 = vadd.f32 %v5562, %v1139
    %v5595 = vadd.f32 %v5563, %v1140
    %v5596 = vadd.f32 %v5564, %v1141
    %v5597 = vadd.f32 %v5565, %v1142
    %v5598 = vadd.f32 %v5566, %v1143
    %v5599 = vadd.f32 %v5567, %v1144
    %v5600 = vadd.f32 %v5568, %v1145
    %v5601 = vadd.f32 %v5569, %v1146
    %v5602 = vadd.f32 %v5570, %v1131
    %v5603 = vadd.f32 %v5571, %v1132
    %v5604 = vadd.f32 %v5572, %v1133
    %v5605 = vadd.f32 %v5573, %v1134
    %v5606 = vadd.f32 %v5574, %v1135
    %v5607 = vadd.f32 %v5575, %v1136
    %v5608 = vadd.f32 %v5576, %v1137
    %v5609 = vadd.f32 %v5577, %v1138
    %v5610 = vadd.f32 %v5578, %v1139
    %v5611 = vadd.f32 %v5579, %v1140
    %v5612 = vadd.f32 %v5580, %v1141
    %v5613 = vadd.f32 %v5581, %v1142
    %v5614 = vadd.f32 %v5582, %v1143
    %v5615 = vadd.f32 %v5583, %v1144
    %v5616 = vadd.f32 %v5584, %v1145
    %v5617 = vadd.f32 %v5585, %v1146
    %v5618 = vld [vmem:[%s25] sm:$0x1]
    %v5619 = vld [vmem:[%s26] sm:$0x1]
    %5620 = vadd.xlane.f32.xlu0 %v5586
    %v5621 = vpop.xlane.xlu0 %5620
    %5622 = vadd.xlane.f32.xlu0 %v5587
    %v5623 = vpop.xlane.xlu0 %5622
    %5624 = vadd.xlane.f32.xlu0 %v5588
    %v5625 = vpop.xlane.xlu0 %5624
    %5626 = vadd.xlane.f32.xlu0 %v5589
    %v5627 = vpop.xlane.xlu0 %5626
    %5628 = vadd.xlane.f32.xlu0 %v5590
    %v5629 = vpop.xlane.xlu0 %5628
    %5630 = vadd.xlane.f32.xlu0 %v5591
    %v5631 = vpop.xlane.xlu0 %5630
    %5632 = vadd.xlane.f32.xlu0 %v5592
    %v5633 = vpop.xlane.xlu0 %5632
    %5634 = vadd.xlane.f32.xlu0 %v5593
    %v5635 = vpop.xlane.xlu0 %5634
    %5636 = vadd.xlane.f32.xlu0 %v5594
    %v5637 = vpop.xlane.xlu0 %5636
    %5638 = vadd.xlane.f32.xlu0 %v5595
    %v5639 = vpop.xlane.xlu0 %5638
    %5640 = vadd.xlane.f32.xlu0 %v5596
    %v5641 = vpop.xlane.xlu0 %5640
    %5642 = vadd.xlane.f32.xlu0 %v5597
    %v5643 = vpop.xlane.xlu0 %5642
    %5644 = vadd.xlane.f32.xlu0 %v5598
    %v5645 = vpop.xlane.xlu0 %5644
    %5646 = vadd.xlane.f32.xlu0 %v5599
    %v5647 = vpop.xlane.xlu0 %5646
    %5648 = vadd.xlane.f32.xlu0 %v5600
    %v5649 = vpop.xlane.xlu0 %5648
    %5650 = vadd.xlane.f32.xlu0 %v5601
    %v5651 = vpop.xlane.xlu0 %5650
    %5652 = vadd.xlane.f32.xlu0 %v5602
    %v5653 = vpop.xlane.xlu0 %5652
    %5654 = vadd.xlane.f32.xlu0 %v5603
    %v5655 = vpop.xlane.xlu0 %5654
    %5656 = vadd.xlane.f32.xlu0 %v5604
    %v5657 = vpop.xlane.xlu0 %5656
    %5658 = vadd.xlane.f32.xlu0 %v5605
    %v5659 = vpop.xlane.xlu0 %5658
    %5660 = vadd.xlane.f32.xlu0 %v5606
    %v5661 = vpop.xlane.xlu0 %5660
    %5662 = vadd.xlane.f32.xlu0 %v5607
    %v5663 = vpop.xlane.xlu0 %5662
    %5664 = vadd.xlane.f32.xlu0 %v5608
    %v5665 = vpop.xlane.xlu0 %5664
    %5666 = vadd.xlane.f32.xlu0 %v5609
    %v5667 = vpop.xlane.xlu0 %5666
    %5668 = vadd.xlane.f32.xlu0 %v5610
    %v5669 = vpop.xlane.xlu0 %5668
    %5670 = vadd.xlane.f32.xlu0 %v5611
    %v5671 = vpop.xlane.xlu0 %5670
    %5672 = vadd.xlane.f32.xlu0 %v5612
    %v5673 = vpop.xlane.xlu0 %5672
    %5674 = vadd.xlane.f32.xlu0 %v5613
    %v5675 = vpop.xlane.xlu0 %5674
    %5676 = vadd.xlane.f32.xlu0 %v5614
    %v5677 = vpop.xlane.xlu0 %5676
    %5678 = vadd.xlane.f32.xlu0 %v5615
    %v5679 = vpop.xlane.xlu0 %5678
    %5680 = vadd.xlane.f32.xlu0 %v5616
    %v5681 = vpop.xlane.xlu0 %5680
    %5682 = vadd.xlane.f32.xlu0 %v5617
    %v5683 = vpop.xlane.xlu0 %5682
    %v5684 = vmul.f32 %v5621, %v335
    %v5685 = vmul.f32 %v5623, %v335
    %v5686 = vmul.f32 %v5625, %v335
    %v5687 = vmul.f32 %v5627, %v335
    %v5688 = vmul.f32 %v5629, %v335
    %v5689 = vmul.f32 %v5631, %v335
    %v5690 = vmul.f32 %v5633, %v335
    %v5691 = vmul.f32 %v5635, %v335
    %v5692 = vmul.f32 %v5637, %v335
    %v5693 = vmul.f32 %v5639, %v335
    %v5694 = vmul.f32 %v5641, %v335
    %v5695 = vmul.f32 %v5643, %v335
    %v5696 = vmul.f32 %v5645, %v335
    %v5697 = vmul.f32 %v5647, %v335
    %v5698 = vmul.f32 %v5649, %v335
    %v5699 = vmul.f32 %v5651, %v335
    %v5700 = vmul.f32 %v5653, %v335
    %v5701 = vmul.f32 %v5655, %v335
    %v5702 = vmul.f32 %v5657, %v335
    %v5703 = vmul.f32 %v5659, %v335
    %v5704 = vmul.f32 %v5661, %v335
    %v5705 = vmul.f32 %v5663, %v335
    %v5706 = vmul.f32 %v5665, %v335
    %v5707 = vmul.f32 %v5667, %v335
    %v5708 = vmul.f32 %v5669, %v335
    %v5709 = vmul.f32 %v5671, %v335
    %v5710 = vmul.f32 %v5673, %v335
    %v5711 = vmul.f32 %v5675, %v335
    %v5712 = vmul.f32 %v5677, %v335
    %v5713 = vmul.f32 %v5679, %v335
    %v5714 = vmul.f32 %v5681, %v335
    %v5715 = vmul.f32 %v5683, %v335
    %v5716 = vsub.f32 %v5586, %v5684
    %v5717 = vsub.f32 %v5587, %v5685
    %v5718 = vsub.f32 %v5588, %v5686
    %v5719 = vsub.f32 %v5589, %v5687
    %v5720 = vsub.f32 %v5590, %v5688
    %v5721 = vsub.f32 %v5591, %v5689
    %v5722 = vsub.f32 %v5592, %v5690
    %v5723 = vsub.f32 %v5593, %v5691
    %v5724 = vsub.f32 %v5594, %v5692
    %v5725 = vsub.f32 %v5595, %v5693
    %v5726 = vsub.f32 %v5596, %v5694
    %v5727 = vsub.f32 %v5597, %v5695
    %v5728 = vsub.f32 %v5598, %v5696
    %v5729 = vsub.f32 %v5599, %v5697
    %v5730 = vsub.f32 %v5600, %v5698
    %v5731 = vsub.f32 %v5601, %v5699
    %v5732 = vsub.f32 %v5602, %v5700
    %v5733 = vsub.f32 %v5603, %v5701
    %v5734 = vsub.f32 %v5604, %v5702
    %v5735 = vsub.f32 %v5605, %v5703
    %v5736 = vsub.f32 %v5606, %v5704
    %v5737 = vsub.f32 %v5607, %v5705
    %v5738 = vsub.f32 %v5608, %v5706
    %v5739 = vsub.f32 %v5609, %v5707
    %v5740 = vsub.f32 %v5610, %v5708
    %v5741 = vsub.f32 %v5611, %v5709
    %v5742 = vsub.f32 %v5612, %v5710
    %v5743 = vsub.f32 %v5613, %v5711
    %v5744 = vsub.f32 %v5614, %v5712
    %v5745 = vsub.f32 %v5615, %v5713
    %v5746 = vsub.f32 %v5616, %v5714
    %v5747 = vsub.f32 %v5617, %v5715
    %v5748 = vmul.f32 %v5716, %v5716
    %v5749 = vmul.f32 %v5717, %v5717
    %v5750 = vmul.f32 %v5718, %v5718
    %v5751 = vmul.f32 %v5719, %v5719
    %v5752 = vmul.f32 %v5720, %v5720
    %v5753 = vmul.f32 %v5721, %v5721
    %v5754 = vmul.f32 %v5722, %v5722
    %v5755 = vmul.f32 %v5723, %v5723
    %v5756 = vmul.f32 %v5724, %v5724
    %v5757 = vmul.f32 %v5725, %v5725
    %v5758 = vmul.f32 %v5726, %v5726
    %v5759 = vmul.f32 %v5727, %v5727
    %v5760 = vmul.f32 %v5728, %v5728
    %v5761 = vmul.f32 %v5729, %v5729
    %v5762 = vmul.f32 %v5730, %v5730
    %v5763 = vmul.f32 %v5731, %v5731
    %v5764 = vmul.f32 %v5732, %v5732
    %v5765 = vmul.f32 %v5733, %v5733
    %v5766 = vmul.f32 %v5734, %v5734
    %v5767 = vmul.f32 %v5735, %v5735
    %v5768 = vmul.f32 %v5736, %v5736
    %v5769 = vmul.f32 %v5737, %v5737
    %v5770 = vmul.f32 %v5738, %v5738
    %v5771 = vmul.f32 %v5739, %v5739
    %v5772 = vmul.f32 %v5740, %v5740
    %v5773 = vmul.f32 %v5741, %v5741
    %v5774 = vmul.f32 %v5742, %v5742
    %v5775 = vmul.f32 %v5743, %v5743
    %v5776 = vmul.f32 %v5744, %v5744
    %v5777 = vmul.f32 %v5745, %v5745
    %v5778 = vmul.f32 %v5746, %v5746
    %v5779 = vmul.f32 %v5747, %v5747
    %5780 = vadd.xlane.f32.xlu0 %v5748
    %v5781 = vpop.xlane.xlu0 %5780
    %5782 = vadd.xlane.f32.xlu0 %v5749
    %v5783 = vpop.xlane.xlu0 %5782
    %5784 = vadd.xlane.f32.xlu0 %v5750
    %v5785 = vpop.xlane.xlu0 %5784
    %5786 = vadd.xlane.f32.xlu0 %v5751
    %v5787 = vpop.xlane.xlu0 %5786
    %5788 = vadd.xlane.f32.xlu0 %v5752
    %v5789 = vpop.xlane.xlu0 %5788
    %5790 = vadd.xlane.f32.xlu0 %v5753
    %v5791 = vpop.xlane.xlu0 %5790
    %5792 = vadd.xlane.f32.xlu0 %v5754
    %v5793 = vpop.xlane.xlu0 %5792
    %5794 = vadd.xlane.f32.xlu0 %v5755
    %v5795 = vpop.xlane.xlu0 %5794
    %5796 = vadd.xlane.f32.xlu0 %v5756
    %v5797 = vpop.xlane.xlu0 %5796
    %5798 = vadd.xlane.f32.xlu0 %v5757
    %v5799 = vpop.xlane.xlu0 %5798
    %5800 = vadd.xlane.f32.xlu0 %v5758
    %v5801 = vpop.xlane.xlu0 %5800
    %5802 = vadd.xlane.f32.xlu0 %v5759
    %v5803 = vpop.xlane.xlu0 %5802
    %5804 = vadd.xlane.f32.xlu0 %v5760
    %v5805 = vpop.xlane.xlu0 %5804
    %5806 = vadd.xlane.f32.xlu0 %v5761
    %v5807 = vpop.xlane.xlu0 %5806
    %5808 = vadd.xlane.f32.xlu0 %v5762
    %v5809 = vpop.xlane.xlu0 %5808
    %5810 = vadd.xlane.f32.xlu0 %v5763
    %v5811 = vpop.xlane.xlu0 %5810
    %5812 = vadd.xlane.f32.xlu0 %v5764
    %v5813 = vpop.xlane.xlu0 %5812
    %5814 = vadd.xlane.f32.xlu0 %v5765
    %v5815 = vpop.xlane.xlu0 %5814
    %5816 = vadd.xlane.f32.xlu0 %v5766
    %v5817 = vpop.xlane.xlu0 %5816
    %5818 = vadd.xlane.f32.xlu0 %v5767
    %v5819 = vpop.xlane.xlu0 %5818
    %5820 = vadd.xlane.f32.xlu0 %v5768
    %v5821 = vpop.xlane.xlu0 %5820
    %5822 = vadd.xlane.f32.xlu0 %v5769
    %v5823 = vpop.xlane.xlu0 %5822
    %5824 = vadd.xlane.f32.xlu0 %v5770
    %v5825 = vpop.xlane.xlu0 %5824
    %5826 = vadd.xlane.f32.xlu0 %v5771
    %v5827 = vpop.xlane.xlu0 %5826
    %5828 = vadd.xlane.f32.xlu0 %v5772
    %v5829 = vpop.xlane.xlu0 %5828
    %5830 = vadd.xlane.f32.xlu0 %v5773
    %v5831 = vpop.xlane.xlu0 %5830
    %5832 = vadd.xlane.f32.xlu0 %v5774
    %v5833 = vpop.xlane.xlu0 %5832
    %5834 = vadd.xlane.f32.xlu0 %v5775
    %v5835 = vpop.xlane.xlu0 %5834
    %5836 = vadd.xlane.f32.xlu0 %v5776
    %v5837 = vpop.xlane.xlu0 %5836
    %5838 = vadd.xlane.f32.xlu0 %v5777
    %v5839 = vpop.xlane.xlu0 %5838
    %5840 = vadd.xlane.f32.xlu0 %v5778
    %v5841 = vpop.xlane.xlu0 %5840
    %5842 = vadd.xlane.f32.xlu0 %v5779
    %v5843 = vpop.xlane.xlu0 %5842
    %v5844 = vmul.f32 %v5781, %v335
    %v5845 = vmul.f32 %v5783, %v335
    %v5846 = vmul.f32 %v5785, %v335
    %v5847 = vmul.f32 %v5787, %v335
    %v5848 = vmul.f32 %v5789, %v335
    %v5849 = vmul.f32 %v5791, %v335
    %v5850 = vmul.f32 %v5793, %v335
    %v5851 = vmul.f32 %v5795, %v335
    %v5852 = vmul.f32 %v5797, %v335
    %v5853 = vmul.f32 %v5799, %v335
    %v5854 = vmul.f32 %v5801, %v335
    %v5855 = vmul.f32 %v5803, %v335
    %v5856 = vmul.f32 %v5805, %v335
    %v5857 = vmul.f32 %v5807, %v335
    %v5858 = vmul.f32 %v5809, %v335
    %v5859 = vmul.f32 %v5811, %v335
    %v5860 = vmul.f32 %v5813, %v335
    %v5861 = vmul.f32 %v5815, %v335
    %v5862 = vmul.f32 %v5817, %v335
    %v5863 = vmul.f32 %v5819, %v335
    %v5864 = vmul.f32 %v5821, %v335
    %v5865 = vmul.f32 %v5823, %v335
    %v5866 = vmul.f32 %v5825, %v335
    %v5867 = vmul.f32 %v5827, %v335
    %v5868 = vmul.f32 %v5829, %v335
    %v5869 = vmul.f32 %v5831, %v335
    %v5870 = vmul.f32 %v5833, %v335
    %v5871 = vmul.f32 %v5835, %v335
    %v5872 = vmul.f32 %v5837, %v335
    %v5873 = vmul.f32 %v5839, %v335
    %v5874 = vmul.f32 %v5841, %v335
    %v5875 = vmul.f32 %v5843, %v335
    %v5876 = vadd.f32 %v5844, 1e-05
    %v5877 = vadd.f32 %v5845, 1e-05
    %v5878 = vadd.f32 %v5846, 1e-05
    %v5879 = vadd.f32 %v5847, 1e-05
    %v5880 = vadd.f32 %v5848, 1e-05
    %v5881 = vadd.f32 %v5849, 1e-05
    %v5882 = vadd.f32 %v5850, 1e-05
    %v5883 = vadd.f32 %v5851, 1e-05
    %v5884 = vadd.f32 %v5852, 1e-05
    %v5885 = vadd.f32 %v5853, 1e-05
    %v5886 = vadd.f32 %v5854, 1e-05
    %v5887 = vadd.f32 %v5855, 1e-05
    %v5888 = vadd.f32 %v5856, 1e-05
    %v5889 = vadd.f32 %v5857, 1e-05
    %v5890 = vadd.f32 %v5858, 1e-05
    %v5891 = vadd.f32 %v5859, 1e-05
    %v5892 = vadd.f32 %v5860, 1e-05
    %v5893 = vadd.f32 %v5861, 1e-05
    %v5894 = vadd.f32 %v5862, 1e-05
    %v5895 = vadd.f32 %v5863, 1e-05
    %v5896 = vadd.f32 %v5864, 1e-05
    %v5897 = vadd.f32 %v5865, 1e-05
    %v5898 = vadd.f32 %v5866, 1e-05
    %v5899 = vadd.f32 %v5867, 1e-05
    %v5900 = vadd.f32 %v5868, 1e-05
    %v5901 = vadd.f32 %v5869, 1e-05
    %v5902 = vadd.f32 %v5870, 1e-05
    %v5903 = vadd.f32 %v5871, 1e-05
    %v5904 = vadd.f32 %v5872, 1e-05
    %v5905 = vadd.f32 %v5873, 1e-05
    %v5906 = vadd.f32 %v5874, 1e-05
    %v5907 = vadd.f32 %v5875, 1e-05
    %v5908 = vrsqrt.pop %v5876
    %v5909 = vrsqrt.pop %v5877
    %v5910 = vrsqrt.pop %v5878
    %v5911 = vrsqrt.pop %v5879
    %v5912 = vrsqrt.pop %v5880
    %v5913 = vrsqrt.pop %v5881
    %v5914 = vrsqrt.pop %v5882
    %v5915 = vrsqrt.pop %v5883
    %v5916 = vrsqrt.pop %v5884
    %v5917 = vrsqrt.pop %v5885
    %v5918 = vrsqrt.pop %v5886
    %v5919 = vrsqrt.pop %v5887
    %v5920 = vrsqrt.pop %v5888
    %v5921 = vrsqrt.pop %v5889
    %v5922 = vrsqrt.pop %v5890
    %v5923 = vrsqrt.pop %v5891
    %v5924 = vrsqrt.pop %v5892
    %v5925 = vrsqrt.pop %v5893
    %v5926 = vrsqrt.pop %v5894
    %v5927 = vrsqrt.pop %v5895
    %v5928 = vrsqrt.pop %v5896
    %v5929 = vrsqrt.pop %v5897
    %v5930 = vrsqrt.pop %v5898
    %v5931 = vrsqrt.pop %v5899
    %v5932 = vrsqrt.pop %v5900
    %v5933 = vrsqrt.pop %v5901
    %v5934 = vrsqrt.pop %v5902
    %v5935 = vrsqrt.pop %v5903
    %v5936 = vrsqrt.pop %v5904
    %v5937 = vrsqrt.pop %v5905
    %v5938 = vrsqrt.pop %v5906
    %v5939 = vrsqrt.pop %v5907
    %v5940 = vmul.f32 %v5716, %v5908
    %v5941 = vmul.f32 %v5717, %v5909
    %v5942 = vmul.f32 %v5718, %v5910
    %v5943 = vmul.f32 %v5719, %v5911
    %v5944 = vmul.f32 %v5720, %v5912
    %v5945 = vmul.f32 %v5721, %v5913
    %v5946 = vmul.f32 %v5722, %v5914
    %v5947 = vmul.f32 %v5723, %v5915
    %v5948 = vmul.f32 %v5724, %v5916
    %v5949 = vmul.f32 %v5725, %v5917
    %v5950 = vmul.f32 %v5726, %v5918
    %v5951 = vmul.f32 %v5727, %v5919
    %v5952 = vmul.f32 %v5728, %v5920
    %v5953 = vmul.f32 %v5729, %v5921
    %v5954 = vmul.f32 %v5730, %v5922
    %v5955 = vmul.f32 %v5731, %v5923
    %v5956 = vmul.f32 %v5732, %v5924
    %v5957 = vmul.f32 %v5733, %v5925
    %v5958 = vmul.f32 %v5734, %v5926
    %v5959 = vmul.f32 %v5735, %v5927
    %v5960 = vmul.f32 %v5736, %v5928
    %v5961 = vmul.f32 %v5737, %v5929
    %v5962 = vmul.f32 %v5738, %v5930
    %v5963 = vmul.f32 %v5739, %v5931
    %v5964 = vmul.f32 %v5740, %v5932
    %v5965 = vmul.f32 %v5741, %v5933
    %v5966 = vmul.f32 %v5742, %v5934
    %v5967 = vmul.f32 %v5743, %v5935
    %v5968 = vmul.f32 %v5744, %v5936
    %v5969 = vmul.f32 %v5745, %v5937
    %v5970 = vmul.f32 %v5746, %v5938
    %v5971 = vmul.f32 %v5747, %v5939
    %v5973 = vlaneseq
    %v5974 = vshrl.u32 %v5973, 7
    %v5975 = vsub.s32 0, %v5974
    %v5976 = vrot.slane %v5618, %v5975
    %v5978 = vmul.f32 %v5940, %v5976
    %v5979 = vmul.f32 %v5941, %v5976
    %v5980 = vmul.f32 %v5942, %v5976
    %v5981 = vmul.f32 %v5943, %v5976
    %v5982 = vmul.f32 %v5944, %v5976
    %v5983 = vmul.f32 %v5945, %v5976
    %v5984 = vmul.f32 %v5946, %v5976
    %v5985 = vmul.f32 %v5947, %v5976
    %v5986 = vmul.f32 %v5948, %v5976
    %v5987 = vmul.f32 %v5949, %v5976
    %v5988 = vmul.f32 %v5950, %v5976
    %v5989 = vmul.f32 %v5951, %v5976
    %v5990 = vmul.f32 %v5952, %v5976
    %v5991 = vmul.f32 %v5953, %v5976
    %v5992 = vmul.f32 %v5954, %v5976
    %v5993 = vmul.f32 %v5955, %v5976
    %v5994 = vmul.f32 %v5956, %v5976
    %v5995 = vmul.f32 %v5957, %v5976
    %v5996 = vmul.f32 %v5958, %v5976
    %v5997 = vmul.f32 %v5959, %v5976
    %v5998 = vmul.f32 %v5960, %v5976
    %v5999 = vmul.f32 %v5961, %v5976
    %v6000 = vmul.f32 %v5962, %v5976
    %v6001 = vmul.f32 %v5963, %v5976
    %v6002 = vmul.f32 %v5964, %v5976
    %v6003 = vmul.f32 %v5965, %v5976
    %v6004 = vmul.f32 %v5966, %v5976
    %v6005 = vmul.f32 %v5967, %v5976
    %v6006 = vmul.f32 %v5968, %v5976
    %v6007 = vmul.f32 %v5969, %v5976
    %v6008 = vmul.f32 %v5970, %v5976
    %v6009 = vmul.f32 %v5971, %v5976
    %v6011 = vlaneseq
    %v6012 = vshrl.u32 %v6011, 7
    %v6013 = vsub.s32 0, %v6012
    %v6014 = vrot.slane %v5619, %v6013
    %v6016 = vadd.f32 %v5978, %v6014
    %v6017 = vadd.f32 %v5979, %v6014
    %v6018 = vadd.f32 %v5980, %v6014
    %v6019 = vadd.f32 %v5981, %v6014
    %v6020 = vadd.f32 %v5982, %v6014
    %v6021 = vadd.f32 %v5983, %v6014
    %v6022 = vadd.f32 %v5984, %v6014
    %v6023 = vadd.f32 %v5985, %v6014
    %v6024 = vadd.f32 %v5986, %v6014
    %v6025 = vadd.f32 %v5987, %v6014
    %v6026 = vadd.f32 %v5988, %v6014
    %v6027 = vadd.f32 %v5989, %v6014
    %v6028 = vadd.f32 %v5990, %v6014
    %v6029 = vadd.f32 %v5991, %v6014
    %v6030 = vadd.f32 %v5992, %v6014
    %v6031 = vadd.f32 %v5993, %v6014
    %v6032 = vadd.f32 %v5994, %v6014
    %v6033 = vadd.f32 %v5995, %v6014
    %v6034 = vadd.f32 %v5996, %v6014
    %v6035 = vadd.f32 %v5997, %v6014
    %v6036 = vadd.f32 %v5998, %v6014
    %v6037 = vadd.f32 %v5999, %v6014
    %v6038 = vadd.f32 %v6000, %v6014
    %v6039 = vadd.f32 %v6001, %v6014
    %v6040 = vadd.f32 %v6002, %v6014
    %v6041 = vadd.f32 %v6003, %v6014
    %v6042 = vadd.f32 %v6004, %v6014
    %v6043 = vadd.f32 %v6005, %v6014
    %v6044 = vadd.f32 %v6006, %v6014
    %v6045 = vadd.f32 %v6007, %v6014
    %v6046 = vadd.f32 %v6008, %v6014
    %v6047 = vadd.f32 %v6009, %v6014
    %v6048 = vmax.f32 %v6016, 0.0
    %v6049 = vmax.f32 %v6017, 0.0
    %v6050 = vmax.f32 %v6018, 0.0
    %v6051 = vmax.f32 %v6019, 0.0
    %v6052 = vmax.f32 %v6020, 0.0
    %v6053 = vmax.f32 %v6021, 0.0
    %v6054 = vmax.f32 %v6022, 0.0
    %v6055 = vmax.f32 %v6023, 0.0
    %v6056 = vmax.f32 %v6024, 0.0
    %v6057 = vmax.f32 %v6025, 0.0
    %v6058 = vmax.f32 %v6026, 0.0
    %v6059 = vmax.f32 %v6027, 0.0
    %v6060 = vmax.f32 %v6028, 0.0
    %v6061 = vmax.f32 %v6029, 0.0
    %v6062 = vmax.f32 %v6030, 0.0
    %v6063 = vmax.f32 %v6031, 0.0
    %v6064 = vmax.f32 %v6032, 0.0
    %v6065 = vmax.f32 %v6033, 0.0
    %v6066 = vmax.f32 %v6034, 0.0
    %v6067 = vmax.f32 %v6035, 0.0
    %v6068 = vmax.f32 %v6036, 0.0
    %v6069 = vmax.f32 %v6037, 0.0
    %v6070 = vmax.f32 %v6038, 0.0
    %v6071 = vmax.f32 %v6039, 0.0
    %v6072 = vmax.f32 %v6040, 0.0
    %v6073 = vmax.f32 %v6041, 0.0
    %v6074 = vmax.f32 %v6042, 0.0
    %v6075 = vmax.f32 %v6043, 0.0
    %v6076 = vmax.f32 %v6044, 0.0
    %v6077 = vmax.f32 %v6045, 0.0
    %v6078 = vmax.f32 %v6046, 0.0
    %v6079 = vmax.f32 %v6047, 0.0
    %6080 = vmax.xlane.f32.xlu0 %v6048
    %v6081 = vpop.xlane.xlu0 %6080
    %6082 = vmax.xlane.f32.xlu0 %v6049
    %v6083 = vpop.xlane.xlu0 %6082
    %6084 = vmax.xlane.f32.xlu0 %v6050
    %v6085 = vpop.xlane.xlu0 %6084
    %6086 = vmax.xlane.f32.xlu0 %v6051
    %v6087 = vpop.xlane.xlu0 %6086
    %6088 = vmax.xlane.f32.xlu0 %v6052
    %v6089 = vpop.xlane.xlu0 %6088
    %6090 = vmax.xlane.f32.xlu0 %v6053
    %v6091 = vpop.xlane.xlu0 %6090
    %6092 = vmax.xlane.f32.xlu0 %v6054
    %v6093 = vpop.xlane.xlu0 %6092
    %6094 = vmax.xlane.f32.xlu0 %v6055
    %v6095 = vpop.xlane.xlu0 %6094
    %6096 = vmax.xlane.f32.xlu0 %v6056
    %v6097 = vpop.xlane.xlu0 %6096
    %6098 = vmax.xlane.f32.xlu0 %v6057
    %v6099 = vpop.xlane.xlu0 %6098
    %6100 = vmax.xlane.f32.xlu0 %v6058
    %v6101 = vpop.xlane.xlu0 %6100
    %6102 = vmax.xlane.f32.xlu0 %v6059
    %v6103 = vpop.xlane.xlu0 %6102
    %6104 = vmax.xlane.f32.xlu0 %v6060
    %v6105 = vpop.xlane.xlu0 %6104
    %6106 = vmax.xlane.f32.xlu0 %v6061
    %v6107 = vpop.xlane.xlu0 %6106
    %6108 = vmax.xlane.f32.xlu0 %v6062
    %v6109 = vpop.xlane.xlu0 %6108
    %6110 = vmax.xlane.f32.xlu0 %v6063
    %v6111 = vpop.xlane.xlu0 %6110
    %6112 = vmax.xlane.f32.xlu0 %v6064
    %v6113 = vpop.xlane.xlu0 %6112
    %6114 = vmax.xlane.f32.xlu0 %v6065
    %v6115 = vpop.xlane.xlu0 %6114
    %6116 = vmax.xlane.f32.xlu0 %v6066
    %v6117 = vpop.xlane.xlu0 %6116
    %6118 = vmax.xlane.f32.xlu0 %v6067
    %v6119 = vpop.xlane.xlu0 %6118
    %6120 = vmax.xlane.f32.xlu0 %v6068
    %v6121 = vpop.xlane.xlu0 %6120
    %6122 = vmax.xlane.f32.xlu0 %v6069
    %v6123 = vpop.xlane.xlu0 %6122
    %6124 = vmax.xlane.f32.xlu0 %v6070
    %v6125 = vpop.xlane.xlu0 %6124
    %6126 = vmax.xlane.f32.xlu0 %v6071
    %v6127 = vpop.xlane.xlu0 %6126
    %6128 = vmax.xlane.f32.xlu0 %v6072
    %v6129 = vpop.xlane.xlu0 %6128
    %6130 = vmax.xlane.f32.xlu0 %v6073
    %v6131 = vpop.xlane.xlu0 %6130
    %6132 = vmax.xlane.f32.xlu0 %v6074
    %v6133 = vpop.xlane.xlu0 %6132
    %6134 = vmax.xlane.f32.xlu0 %v6075
    %v6135 = vpop.xlane.xlu0 %6134
    %6136 = vmax.xlane.f32.xlu0 %v6076
    %v6137 = vpop.xlane.xlu0 %6136
    %6138 = vmax.xlane.f32.xlu0 %v6077
    %v6139 = vpop.xlane.xlu0 %6138
    %6140 = vmax.xlane.f32.xlu0 %v6078
    %v6141 = vpop.xlane.xlu0 %6140
    %6142 = vmax.xlane.f32.xlu0 %v6079
    %v6143 = vpop.xlane.xlu0 %6142
    %v6144 = vsub.f32 %v6048, %v6081
    %v6145 = vsub.f32 %v6049, %v6083
    %v6146 = vsub.f32 %v6050, %v6085
    %v6147 = vsub.f32 %v6051, %v6087
    %v6148 = vsub.f32 %v6052, %v6089
    %v6149 = vsub.f32 %v6053, %v6091
    %v6150 = vsub.f32 %v6054, %v6093
    %v6151 = vsub.f32 %v6055, %v6095
    %v6152 = vsub.f32 %v6056, %v6097
    %v6153 = vsub.f32 %v6057, %v6099
    %v6154 = vsub.f32 %v6058, %v6101
    %v6155 = vsub.f32 %v6059, %v6103
    %v6156 = vsub.f32 %v6060, %v6105
    %v6157 = vsub.f32 %v6061, %v6107
    %v6158 = vsub.f32 %v6062, %v6109
    %v6159 = vsub.f32 %v6063, %v6111
    %v6160 = vsub.f32 %v6064, %v6113
    %v6161 = vsub.f32 %v6065, %v6115
    %v6162 = vsub.f32 %v6066, %v6117
    %v6163 = vsub.f32 %v6067, %v6119
    %v6164 = vsub.f32 %v6068, %v6121
    %v6165 = vsub.f32 %v6069, %v6123
    %v6166 = vsub.f32 %v6070, %v6125
    %v6167 = vsub.f32 %v6071, %v6127
    %v6168 = vsub.f32 %v6072, %v6129
    %v6169 = vsub.f32 %v6073, %v6131
    %v6170 = vsub.f32 %v6074, %v6133
    %v6171 = vsub.f32 %v6075, %v6135
    %v6172 = vsub.f32 %v6076, %v6137
    %v6173 = vsub.f32 %v6077, %v6139
    %v6174 = vsub.f32 %v6078, %v6141
    %v6175 = vsub.f32 %v6079, %v6143
    %v6176 = vmul.f32 %v6144, 1.442695
    %v6177 = vpow.pop %v6176
    %v6178 = vmul.f32 %v6145, 1.442695
    %v6179 = vpow.pop %v6178
    %v6180 = vmul.f32 %v6146, 1.442695
    %v6181 = vpow.pop %v6180
    %v6182 = vmul.f32 %v6147, 1.442695
    %v6183 = vpow.pop %v6182
    %v6184 = vmul.f32 %v6148, 1.442695
    %v6185 = vpow.pop %v6184
    %v6186 = vmul.f32 %v6149, 1.442695
    %v6187 = vpow.pop %v6186
    %v6188 = vmul.f32 %v6150, 1.442695
    %v6189 = vpow.pop %v6188
    %v6190 = vmul.f32 %v6151, 1.442695
    %v6191 = vpow.pop %v6190
    %v6192 = vmul.f32 %v6152, 1.442695
    %v6193 = vpow.pop %v6192
    %v6194 = vmul.f32 %v6153, 1.442695
    %v6195 = vpow.pop %v6194
    %v6196 = vmul.f32 %v6154, 1.442695
    %v6197 = vpow.pop %v6196
    %v6198 = vmul.f32 %v6155, 1.442695
    %v6199 = vpow.pop %v6198
    %v6200 = vmul.f32 %v6156, 1.442695
    %v6201 = vpow.pop %v6200
    %v6202 = vmul.f32 %v6157, 1.442695
    %v6203 = vpow.pop %v6202
    %v6204 = vmul.f32 %v6158, 1.442695
    %v6205 = vpow.pop %v6204
    %v6206 = vmul.f32 %v6159, 1.442695
    %v6207 = vpow.pop %v6206
    %v6208 = vmul.f32 %v6160, 1.442695
    %v6209 = vpow.pop %v6208
    %v6210 = vmul.f32 %v6161, 1.442695
    %v6211 = vpow.pop %v6210
    %v6212 = vmul.f32 %v6162, 1.442695
    %v6213 = vpow.pop %v6212
    %v6214 = vmul.f32 %v6163, 1.442695
    %v6215 = vpow.pop %v6214
    %v6216 = vmul.f32 %v6164, 1.442695
    %v6217 = vpow.pop %v6216
    %v6218 = vmul.f32 %v6165, 1.442695
    %v6219 = vpow.pop %v6218
    %v6220 = vmul.f32 %v6166, 1.442695
    %v6221 = vpow.pop %v6220
    %v6222 = vmul.f32 %v6167, 1.442695
    %v6223 = vpow.pop %v6222
    %v6224 = vmul.f32 %v6168, 1.442695
    %v6225 = vpow.pop %v6224
    %v6226 = vmul.f32 %v6169, 1.442695
    %v6227 = vpow.pop %v6226
    %v6228 = vmul.f32 %v6170, 1.442695
    %v6229 = vpow.pop %v6228
    %v6230 = vmul.f32 %v6171, 1.442695
    %v6231 = vpow.pop %v6230
    %v6232 = vmul.f32 %v6172, 1.442695
    %v6233 = vpow.pop %v6232
    %v6234 = vmul.f32 %v6173, 1.442695
    %v6235 = vpow.pop %v6234
    %v6236 = vmul.f32 %v6174, 1.442695
    %v6237 = vpow.pop %v6236
    %v6238 = vmul.f32 %v6175, 1.442695
    %v6239 = vpow.pop %v6238
    %6240 = vadd.xlane.f32.xlu0 %v6177
    %v6241 = vpop.xlane.xlu0 %6240
    %6242 = vadd.xlane.f32.xlu0 %v6179
    %v6243 = vpop.xlane.xlu0 %6242
    %6244 = vadd.xlane.f32.xlu0 %v6181
    %v6245 = vpop.xlane.xlu0 %6244
    %6246 = vadd.xlane.f32.xlu0 %v6183
    %v6247 = vpop.xlane.xlu0 %6246
    %6248 = vadd.xlane.f32.xlu0 %v6185
    %v6249 = vpop.xlane.xlu0 %6248
    %6250 = vadd.xlane.f32.xlu0 %v6187
    %v6251 = vpop.xlane.xlu0 %6250
    %6252 = vadd.xlane.f32.xlu0 %v6189
    %v6253 = vpop.xlane.xlu0 %6252
    %6254 = vadd.xlane.f32.xlu0 %v6191
    %v6255 = vpop.xlane.xlu0 %6254
    %6256 = vadd.xlane.f32.xlu0 %v6193
    %v6257 = vpop.xlane.xlu0 %6256
    %6258 = vadd.xlane.f32.xlu0 %v6195
    %v6259 = vpop.xlane.xlu0 %6258
    %6260 = vadd.xlane.f32.xlu0 %v6197
    %v6261 = vpop.xlane.xlu0 %6260
    %6262 = vadd.xlane.f32.xlu0 %v6199
    %v6263 = vpop.xlane.xlu0 %6262
    %6264 = vadd.xlane.f32.xlu0 %v6201
    %v6265 = vpop.xlane.xlu0 %6264
    %6266 = vadd.xlane.f32.xlu0 %v6203
    %v6267 = vpop.xlane.xlu0 %6266
    %6268 = vadd.xlane.f32.xlu0 %v6205
    %v6269 = vpop.xlane.xlu0 %6268
    %6270 = vadd.xlane.f32.xlu0 %v6207
    %v6271 = vpop.xlane.xlu0 %6270
    %6272 = vadd.xlane.f32.xlu0 %v6209
    %v6273 = vpop.xlane.xlu0 %6272
    %6274 = vadd.xlane.f32.xlu0 %v6211
    %v6275 = vpop.xlane.xlu0 %6274
    %6276 = vadd.xlane.f32.xlu0 %v6213
    %v6277 = vpop.xlane.xlu0 %6276
    %6278 = vadd.xlane.f32.xlu0 %v6215
    %v6279 = vpop.xlane.xlu0 %6278
    %6280 = vadd.xlane.f32.xlu0 %v6217
    %v6281 = vpop.xlane.xlu0 %6280
    %6282 = vadd.xlane.f32.xlu0 %v6219
    %v6283 = vpop.xlane.xlu0 %6282
    %6284 = vadd.xlane.f32.xlu0 %v6221
    %v6285 = vpop.xlane.xlu0 %6284
    %6286 = vadd.xlane.f32.xlu0 %v6223
    %v6287 = vpop.xlane.xlu0 %6286
    %6288 = vadd.xlane.f32.xlu0 %v6225
    %v6289 = vpop.xlane.xlu0 %6288
    %6290 = vadd.xlane.f32.xlu0 %v6227
    %v6291 = vpop.xlane.xlu0 %6290
    %6292 = vadd.xlane.f32.xlu0 %v6229
    %v6293 = vpop.xlane.xlu0 %6292
    %6294 = vadd.xlane.f32.xlu0 %v6231
    %v6295 = vpop.xlane.xlu0 %6294
    %6296 = vadd.xlane.f32.xlu0 %v6233
    %v6297 = vpop.xlane.xlu0 %6296
    %6298 = vadd.xlane.f32.xlu0 %v6235
    %v6299 = vpop.xlane.xlu0 %6298
    %6300 = vadd.xlane.f32.xlu0 %v6237
    %v6301 = vpop.xlane.xlu0 %6300
    %6302 = vadd.xlane.f32.xlu0 %v6239
    %v6303 = vpop.xlane.xlu0 %6302
    %v6304 = vrcp.pop %v6241
    %v6305 = vrcp.pop %v6243
    %v6306 = vrcp.pop %v6245
    %v6307 = vrcp.pop %v6247
    %v6308 = vrcp.pop %v6249
    %v6309 = vrcp.pop %v6251
    %v6310 = vrcp.pop %v6253
    %v6311 = vrcp.pop %v6255
    %v6312 = vrcp.pop %v6257
    %v6313 = vrcp.pop %v6259
    %v6314 = vrcp.pop %v6261
    %v6315 = vrcp.pop %v6263
    %v6316 = vrcp.pop %v6265
    %v6317 = vrcp.pop %v6267
    %v6318 = vrcp.pop %v6269
    %v6319 = vrcp.pop %v6271
    %v6320 = vrcp.pop %v6273
    %v6321 = vrcp.pop %v6275
    %v6322 = vrcp.pop %v6277
    %v6323 = vrcp.pop %v6279
    %v6324 = vrcp.pop %v6281
    %v6325 = vrcp.pop %v6283
    %v6326 = vrcp.pop %v6285
    %v6327 = vrcp.pop %v6287
    %v6328 = vrcp.pop %v6289
    %v6329 = vrcp.pop %v6291
    %v6330 = vrcp.pop %v6293
    %v6331 = vrcp.pop %v6295
    %v6332 = vrcp.pop %v6297
    %v6333 = vrcp.pop %v6299
    %v6334 = vrcp.pop %v6301
    %v6335 = vrcp.pop %v6303
    %v6336 = vmul.f32 %v6177, %v6304
    %v6337 = vmul.f32 %v6179, %v6305
    %v6338 = vmul.f32 %v6181, %v6306
    %v6339 = vmul.f32 %v6183, %v6307
    %v6340 = vmul.f32 %v6185, %v6308
    %v6341 = vmul.f32 %v6187, %v6309
    %v6342 = vmul.f32 %v6189, %v6310
    %v6343 = vmul.f32 %v6191, %v6311
    %v6344 = vmul.f32 %v6193, %v6312
    %v6345 = vmul.f32 %v6195, %v6313
    %v6346 = vmul.f32 %v6197, %v6314
    %v6347 = vmul.f32 %v6199, %v6315
    %v6348 = vmul.f32 %v6201, %v6316
    %v6349 = vmul.f32 %v6203, %v6317
    %v6350 = vmul.f32 %v6205, %v6318
    %v6351 = vmul.f32 %v6207, %v6319
    %v6352 = vmul.f32 %v6209, %v6320
    %v6353 = vmul.f32 %v6211, %v6321
    %v6354 = vmul.f32 %v6213, %v6322
    %v6355 = vmul.f32 %v6215, %v6323
    %v6356 = vmul.f32 %v6217, %v6324
    %v6357 = vmul.f32 %v6219, %v6325
    %v6358 = vmul.f32 %v6221, %v6326
    %v6359 = vmul.f32 %v6223, %v6327
    %v6360 = vmul.f32 %v6225, %v6328
    %v6361 = vmul.f32 %v6227, %v6329
    %v6362 = vmul.f32 %v6229, %v6330
    %v6363 = vmul.f32 %v6231, %v6331
    %v6364 = vmul.f32 %v6233, %v6332
    %v6365 = vmul.f32 %v6235, %v6333
    %v6366 = vmul.f32 %v6237, %v6334
    %v6367 = vmul.f32 %v6239, %v6335
    %6368 = vst [vmem:[#allocation3] sm:$0xff] %v6336
    %6369 = vst [vmem:[#allocation3 + $0x8] sm:$0xff] %v6337
    %6370 = vst [vmem:[#allocation3 + $0x10] sm:$0xff] %v6338
    %6371 = vst [vmem:[#allocation3 + $0x18] sm:$0xff] %v6339
    %6372 = vst [vmem:[#allocation3 + $0x20] sm:$0xff] %v6340
    %6373 = vst [vmem:[#allocation3 + $0x28] sm:$0xff] %v6341
    %6374 = vst [vmem:[#allocation3 + $0x30] sm:$0xff] %v6342
    %6375 = vst [vmem:[#allocation3 + $0x38] sm:$0xff] %v6343
    %6376 = vst [vmem:[#allocation3 + $0x40] sm:$0xff] %v6344
    %6377 = vst [vmem:[#allocation3 + $0x48] sm:$0xff] %v6345
    %6378 = vst [vmem:[#allocation3 + $0x50] sm:$0xff] %v6346
    %6379 = vst [vmem:[#allocation3 + $0x58] sm:$0xff] %v6347
    %6380 = vst [vmem:[#allocation3 + $0x60] sm:$0xff] %v6348
    %6381 = vst [vmem:[#allocation3 + $0x68] sm:$0xff] %v6349
    %6382 = vst [vmem:[#allocation3 + $0x70] sm:$0xff] %v6350
    %6383 = vst [vmem:[#allocation3 + $0x78] sm:$0xff] %v6351
    %6384 = vst [vmem:[#allocation3 + $0x80] sm:$0xff] %v6352
    %6385 = vst [vmem:[#allocation3 + $0x88] sm:$0xff] %v6353
    %6386 = vst [vmem:[#allocation3 + $0x90] sm:$0xff] %v6354
    %6387 = vst [vmem:[#allocation3 + $0x98] sm:$0xff] %v6355
    %6388 = vst [vmem:[#allocation3 + $0xa0] sm:$0xff] %v6356
    %6389 = vst [vmem:[#allocation3 + $0xa8] sm:$0xff] %v6357
    %6390 = vst [vmem:[#allocation3 + $0xb0] sm:$0xff] %v6358
    %6391 = vst [vmem:[#allocation3 + $0xb8] sm:$0xff] %v6359
    %6392 = vst [vmem:[#allocation3 + $0xc0] sm:$0xff] %v6360
    %6393 = vst [vmem:[#allocation3 + $0xc8] sm:$0xff] %v6361
    %6394 = vst [vmem:[#allocation3 + $0xd0] sm:$0xff] %v6362
    %6395 = vst [vmem:[#allocation3 + $0xd8] sm:$0xff] %v6363
    %6396 = vst [vmem:[#allocation3 + $0xe0] sm:$0xff] %v6364
    %6397 = vst [vmem:[#allocation3 + $0xe8] sm:$0xff] %v6365
    %6398 = vst [vmem:[#allocation3 + $0xf0] sm:$0xff] %v6366
    %6399 = vst [vmem:[#allocation3 + $0xf8] sm:$0xff] %v6367
    // Predicated region
    $region110: #{tpu_custom_call.1} parent=1 // pred_check
      _
    $region111: #{tpu_custom_call.1} parent=1 // pred_check_branch
      %6401 = sbr.rel (0) target = $region113
    $region112: #{tpu_custom_call.1} parent=1 // pred_region
      %s6403 = ssub.s32 4096, 4096
      %6404 = vsyncadd [#allocation4], %s6403
      %s6405 = sshll.u32 [#allocation3], 4
      %s6406 = int_to_ptr.vmem [resolvable:$true] %s6405
      %6411 = dma.vmem_to_hbm [thread:$0]  %s6406, 4096, %s27, [#allocation4], 128, 128, 8
    $region113: #{tpu_custom_call.1} parent=1 // pred_fallthru
      _
    // Predicated region
    $region114: #{tpu_custom_call.1} parent=1 // pred_check
      _
    $region115: #{tpu_custom_call.1} parent=1 // pred_check_branch
      %6413 = sbr.rel (0) target = $region117
    $region116: #{tpu_custom_call.1} parent=1 // pred_region
      %s6415 = ssub.s32 4096, 4096
      %6416 = vsyncadd [#allocation6], %s6415
      %s6417 = sshll.u32 [#allocation5], 4
      %s6418 = int_to_ptr.vmem [resolvable:$true] %s6417
      %6423 = dma.vmem_to_hbm [thread:$0]  %s6418, 4096, %s28, [#allocation6], 128, 128, 8
    $region117: #{tpu_custom_call.1} parent=1 // pred_fallthru
      _
    // Predicated region
    $region118: #{tpu_custom_call.1} parent=1 // pred_check
      _
    $region119: #{tpu_custom_call.1} parent=1 // pred_check_branch
      %6425 = sbr.rel (0) target = $region121
    $region120: #{tpu_custom_call.1} parent=1 // pred_region
      %6426 = dma.done [#allocation4], 4096
    $region121: #{tpu_custom_call.1} parent=1 // pred_fallthru
      _
    // Predicated region
    $region122: #{tpu_custom_call.1} parent=1 // pred_check
      _
    $region123: #{tpu_custom_call.1} parent=1 // pred_check_branch
      %6428 = sbr.rel (0) target = $region125
    $region124: #{tpu_custom_call.1} parent=1 // pred_region
      %6429 = dma.done [#allocation6], 4096
    $region125: #{tpu_custom_call.1} parent=1 // pred_fallthru
      _
    %6430 = vsyncpa [#allocation4], 1
    %6431 = vsyncpa [#allocation6], 1

</llo_original>
